<compile_context>
chip_gen: v6e
topology: v6e:2x2x1
jax: 0.10.0
libtpu: 0.0.40
codegen_flags: <defaults>
</compile_context>

<pallas_src>
import functools

import jax
import jax.numpy as jnp
from jax.experimental import pallas as pl
from jax.experimental.pallas import tpu as pltpu


# ---------------------------------------------------------------------------
# Fused kernel
# ---------------------------------------------------------------------------

def _make_fused_kernel(*, num_layers, n_heads, batch, seq_len, dim):
    B, N, D = batch, seq_len, dim
    H = n_heads
    M = B * N
    inv_m = 1.0 / M

    def _mm(a_bf16, w):
        # bf16 operands, f32 accumulation on the MXU.
        return jnp.dot(a_bf16, w, preferred_element_type=jnp.float32)

    def _bn_relu(y, g, beta):
        # BatchNorm1d, training mode, one-pass biased stats (f32, clamped).
        mean = jnp.sum(y, axis=0, keepdims=True) * inv_m
        mean_sq = jnp.sum(y * y, axis=0, keepdims=True) * inv_m
        var = jnp.maximum(mean_sq - mean * mean, 0.0)
        y = (y - mean) * jax.lax.rsqrt(var + 1e-5) * g + beta
        return jnp.maximum(y, 0.0)

    def kernel(*refs):
        desc_ref, off_ref = refs[-2], refs[-1]
        it = iter(refs[:-2])
        rd = lambda: next(it)[...]

        x = rd()                                   # (M, first_dim+2) f32
        hmask = rd()                               # (H, 1, 1, D) bf16 head mask

        # ---------------- conv_init: conv+BN+ReLU, conv+BN+ReLU, conv --------
        w, b, g, be = rd(), rd(), rd(), rd()
        x = _bn_relu(_mm(x.astype(jnp.bfloat16), w) + b, g, be)
        w, b, g, be = rd(), rd(), rd(), rd()
        x = _bn_relu(_mm(x.astype(jnp.bfloat16), w) + b, g, be)
        w, b = rd(), rd()
        x = _mm(x.astype(jnp.bfloat16), w) + b     # (M, D) f32

        # ---------------- AttentionalPropagation layers ----------------------
        for _ in range(num_layers):
            wqkv, bqkv, wm, bm = rd(), rd(), rd(), rd()
            w0x, w0m, b0, g0, be0, w1, b1 = (rd(), rd(), rd(), rd(), rd(),
                                             rd(), rd())

            x_bf = x.astype(jnp.bfloat16)          # one cast, reused QKV + MLP

            # Fused Q/K/V projection (1/sqrt(dh) folded into Q at build time).
            qkv = (_mm(x_bf, wqkv) + bqkv).astype(jnp.bfloat16)   # (M, 3D)
            q = qkv[:, :D].reshape(B, N, D)
            k = qkv[:, D:2 * D].reshape(B, N, D)
            v = qkv[:, 2 * D:].reshape(B, N, D)

            # Batched heads on the leading axis: head h only sees its own dh
            # channels because q and v are masked per head (k left intact).
            qh = (q[None] * hmask).reshape(H * B, N, D)
            kh = jnp.broadcast_to(k[None], (H, B, N, D)).reshape(H * B, N, D)
            vh = (v[None] * hmask).reshape(H * B, N, D)

            s = jnp.einsum('aqd,akd->aqk', qh, kh,
                           preferred_element_type=jnp.float32)    # (HB, N, N)
            s = s - jnp.max(s, axis=-1, keepdims=True)
            e = jnp.exp(s)
            p = e * pl.reciprocal(jnp.sum(e, axis=-1, keepdims=True),
                                  approx=True)
            o = jnp.einsum('aqk,akd->aqd', p.astype(jnp.bfloat16), vh,
                           preferred_element_type=jnp.float32)    # (HB, N, D)
            # Masked-v channels are disjoint per head -> sum over heads
            # assembles the concatenated multi-head output.
            attn = jnp.sum(o.reshape(H, B, N, D), axis=0).reshape(M, D)

            msg = _mm(attn.astype(jnp.bfloat16), wm) + bm          # K=D merge

            # MLP on concat([x, msg]) without materializing the concat.
            h1 = _bn_relu(_mm(x_bf, w0x) + _mm(msg.astype(jnp.bfloat16), w0m)
                          + b0, g0, be0)
            x = x + (_mm(h1.astype(jnp.bfloat16), w1) + b1)        # residual

        # ---------------- fused conv_desc + conv_offset ----------------------
        # stage 1: (D, 2D) concatenated weights; stage 2: (2D, 2D) block-diag;
        # final offset conv zero-padded to (2D, 2).
        x_bf = x.astype(jnp.bfloat16)
        w, b, g, be = rd(), rd(), rd(), rd()
        y = _bn_relu(_mm(x_bf, w) + b, g, be)                      # (M, 2D)
        w, b, g, be = rd(), rd(), rd(), rd()
        y = _bn_relu(_mm(y.astype(jnp.bfloat16), w) + b, g, be)    # (M, 2D)
        w, b = rd(), rd()
        off = _mm(y.astype(jnp.bfloat16), w) + b                   # (M, 2)

        desc_ref[...] = y[:, :D]                                   # desc branch
        off_ref[...] = jnp.clip(off, -1.0, 1.0)                    # nn.Hardtanh

    return kernel


# ---------------------------------------------------------------------------
# Deterministic parameter construction (synthetic weights, no checkpoint)
# ---------------------------------------------------------------------------

def build_params(key, first_dim, feature_dim, num_layers, n_heads=4):
    """Returns (flat kernel params in kernel read order, raw torch-layout params).

    Kernel-side layout transforms (done here, not in the kernel):
      * Conv1d weights (Cout, Cin) -> (Cin, Cout), cast to bf16.
      * Q/K/V output channels permuted so each head's channels are contiguous;
        the merge weight's input channels permuted to match.
      * 1/sqrt(head_dim) folded into the Q projection weights/bias.
      * Q/K/V fused into one (D, 3D) weight / (1, 3D) bias.
      * MLP first weight split into x-part / message-part (no runtime concat).
      * conv_desc / conv_offset fused: stage-1 (D, 2D), stage-2 block-diag
        (2D, 2D), final offset conv zero-padded to (2D, 2).
      * Last MLP bias = 0 (nn.init.constant_(mlp[-1].bias, 0.0)).
    """
    D = feature_dim
    dh = D // n_heads
    scale = dh ** -0.5
    perm = jnp.array([d * n_heads + h for h in range(n_heads)
                      for d in range(dh)], jnp.int32)

    keys = iter(jax.random.split(key, 8 + 6 * num_layers))

    def conv(cin, cout):   # torch Conv1d default init, torch layout (Cout, Cin)
        kw, kb = jax.random.split(next(keys))
        bound = cin ** -0.5
        w = jax.random.uniform(kw, (cout, cin), jnp.float32, -bound, bound)
        b = jax.random.uniform(kb, (cout,), jnp.float32, -bound, bound)
        # Round weights through bf16 so kernel (bf16) and reference (f32) use
        # identical weight values (weights quantized once; inference only).
        w = w.astype(jnp.bfloat16).astype(jnp.float32)
        return w, b

    raw = {'conv_init': [conv(first_dim + 2, D), conv(D, D), conv(D, D)],
           'layers': [], 'conv_desc': [], 'conv_offset': []}
    for _ in range(num_layers):
        L = {'q': conv(D, D), 'k': conv(D, D), 'v': conv(D, D),
             'merge': conv(D, D), 'mlp0': conv(2 * D, 2 * D)}
        w1, b1 = conv(2 * D, D)
        L['mlp1'] = (w1, jnp.zeros_like(b1))          # bias init constant 0.0
        raw['layers'].append(L)
    raw['conv_desc'] = [conv(D, D), conv(D, D)]
    raw['conv_offset'] = [conv(D, D), conv(D, D), conv(D, 2)]

    as_w = lambda w: jnp.asarray(w.T, jnp.bfloat16)
    as_b = lambda b: jnp.asarray(b, jnp.float32).reshape(1, -1)
    ones = lambda c: jnp.ones((1, c), jnp.float32)     # BN gamma default
    zeros = lambda c: jnp.zeros((1, c), jnp.float32)   # BN beta default

    head_mask = ((jnp.arange(D)[None, :] // dh) == jnp.arange(n_heads)[:, None])
    head_mask = head_mask.astype(jnp.bfloat16).reshape(n_heads, 1, 1, D)

    flat = [head_mask]

    (w, b) = raw['conv_init'][0]; flat += [as_w(w), as_b(b), ones(D), zeros(D)]
    (w, b) = raw['conv_init'][1]; flat += [as_w(w), as_b(b), ones(D), zeros(D)]
    (w, b) = raw['conv_init'][2]; flat += [as_w(w), as_b(b)]

    for L in raw['layers']:
        wq, bq = L['q']; wk, bk = L['k']; wv, bv = L['v']; wm, bm = L['merge']
        wqkv = jnp.concatenate([(wq.T)[:, perm] * scale,
                                (wk.T)[:, perm],
                                (wv.T)[:, perm]], axis=1)          # (D, 3D)
        bqkv = jnp.concatenate([bq[perm] * scale, bk[perm], bv[perm]], axis=0)
        flat += [jnp.asarray(wqkv, jnp.bfloat16), as_b(bqkv),
                 jnp.asarray((wm.T)[perm, :], jnp.bfloat16), as_b(bm)]

        w0, b0 = L['mlp0']; w1, b1 = L['mlp1']
        w0t = w0.T                                                 # (2D, 2D)
        flat += [jnp.asarray(w0t[:D, :], jnp.bfloat16),            # multiplies x
                 jnp.asarray(w0t[D:, :], jnp.bfloat16),            # multiplies msg
                 as_b(b0), ones(2 * D), zeros(2 * D),
                 as_w(w1), as_b(b1)]

    (wd1, bd1), (wd2, bd2) = raw['conv_desc']
    (wo1, bo1), (wo2, bo2), (wo3, bo3) = raw['conv_offset']
    w_s1 = jnp.concatenate([wd1.T, wo1.T], axis=1)                 # (D, 2D)
    b_s1 = jnp.concatenate([bd1, bo1], axis=0)
    flat += [jnp.asarray(w_s1, jnp.bfloat16), as_b(b_s1),
             ones(2 * D), zeros(2 * D)]
    w_s2 = jnp.zeros((2 * D, 2 * D), jnp.float32)
    w_s2 = w_s2.at[:D, :D].set(wd2.T).at[D:, D:].set(wo2.T)        # block-diag
    b_s2 = jnp.concatenate([bd2, bo2], axis=0)
    flat += [jnp.asarray(w_s2, jnp.bfloat16), as_b(b_s2),
             ones(2 * D), zeros(2 * D)]
    w_s3 = jnp.zeros((2 * D, 2), jnp.float32).at[D:, :].set(wo3.T)
    flat += [jnp.asarray(w_s3, jnp.bfloat16), as_b(bo3)]

    return flat, raw


# ---------------------------------------------------------------------------
# Forward pass (wrapper: layout transposes + one grid-less pallas_call)
# ---------------------------------------------------------------------------

def attentional_gnn_forward(flat_params, feat, graph, *, feature_dim,
                            num_layers, n_heads):
    """feat (B, first_dim, N), graph (B, 2, N) -> desc (B, D, N), offset (B, N, 2)."""
    B, C0, N = feat.shape
    D = feature_dim
    M = B * N

    x = jnp.concatenate([feat, graph], axis=1)                  # (B, C0+2, N)
    x = jnp.transpose(x, (0, 2, 1)).reshape(M, C0 + 2)          # -> (B*N, C)

    kernel = _make_fused_kernel(num_layers=num_layers, n_heads=n_heads,
                                batch=B, seq_len=N, dim=D)

    args = [x, *flat_params]
    vmem = pl.BlockSpec(memory_space=pltpu.MemorySpace.VMEM)
    desc, off = pl.pallas_call(
        kernel,
        in_specs=[vmem] * len(args),
        out_specs=(vmem, vmem),
        out_shape=(jax.ShapeDtypeStruct((M, D), jnp.float32),
                   jax.ShapeDtypeStruct((M, 2), jnp.float32)),
        compiler_params=pltpu.CompilerParams(
            vmem_limit_bytes=32 * 1024 * 1024),
    )(*args)

    # TODO(synk): keep (B, N, D) downstream (or fold this transpose into the
    # kernel's final store) to avoid the extra XLA transpose over HBM.
    desc = desc.reshape(B, N, D).transpose(0, 2, 1)             # torch (B, D, N)
    offset = off.reshape(B, N, 2)                               # torch (B, N, 2)
    return desc, offset


# ---------------------------------------------------------------------------
# Pure-JAX f32 reference of the PyTorch module (for a loose correctness check)
# ---------------------------------------------------------------------------

def reference_forward(raw, feat, graph, n_heads):
    B = feat.shape[0]
    x = jnp.transpose(jnp.concatenate([feat, graph], axis=1), (0, 2, 1))

    conv = lambda t, wb: t @ wb[0].T + wb[1]

    def bn_relu(t):
        m = t.reshape(-1, t.shape[-1])
        mean = jnp.mean(m, axis=0)
        var = jnp.mean((m - mean) ** 2, axis=0)
        return jax.nn.relu((t - mean) * jax.lax.rsqrt(var + 1e-5))

    c0, c1, c2 = raw['conv_init']
    x = bn_relu(conv(x, c0)); x = bn_relu(conv(x, c1)); x = conv(x, c2)

    D = x.shape[-1]
    dh = D // n_heads
    for L in raw['layers']:
        q, k, v = conv(x, L['q']), conv(x, L['k']), conv(x, L['v'])
        split = lambda t: jnp.transpose(t.reshape(B, -1, dh, n_heads),
                                        (0, 3, 1, 2))            # (B, H, N, dh)
        qh, kh, vh = split(q), split(k), split(v)
        s = jnp.einsum('bhnd,bhmd->bhnm', qh, kh) / (dh ** 0.5)
        p = jax.nn.softmax(s, axis=-1)
        o = jnp.einsum('bhnm,bhmd->bhnd', p, vh)
        o = jnp.transpose(o, (0, 2, 3, 1)).reshape(B, -1, D)     # torch channel order
        msg = conv(o, L['merge'])
        h = bn_relu(conv(jnp.concatenate([x, msg], axis=-1), L['mlp0']))
        x = x + conv(h, L['mlp1'])

    d0, d1 = raw['conv_desc']
    d = bn_relu(conv(bn_relu(conv(x, d0)), d1))
    o0, o1, o2 = raw['conv_offset']
    t = conv(bn_relu(conv(bn_relu(conv(x, o0)), o1)), o2)
    return jnp.transpose(d, (0, 2, 1)), jnp.clip(t, -1.0, 1.0)


# ---------------------------------------------------------------------------

if __name__ == "__main__":
    B, first_dim, N = 2, 6, 64
    feature_dim, num_layers, n_heads = 32, 2, 4

    key = jax.random.PRNGKey(0)
    kp, kf, kg = jax.random.split(key, 3)
    flat_params, raw_params = build_params(kp, first_dim, feature_dim,
                                           num_layers, n_heads)
    feat = jax.random.normal(kf, (B, first_dim, N), jnp.float32)
    graph = jax.random.normal(kg, (B, 2, N), jnp.float32)

    fwd = jax.jit(functools.partial(attentional_gnn_forward,
                                    feature_dim=feature_dim,
                                    num_layers=num_layers,
                                    n_heads=n_heads))
    desc, offset = fwd(flat_params, feat, graph)
    jax.block_until_ready((desc, offset))

    assert desc.shape == (B, feature_dim, N), desc.shape
    assert offset.shape == (B, N, 2), offset.shape
    assert bool(jnp.all(jnp.isfinite(desc))) and bool(jnp.all(jnp.isfinite(offset)))
    assert bool(jnp.all(offset >= -1.0)) and bool(jnp.all(offset <= 1.0))

    # Loose check vs. the f32 reference (bf16 matmuls + approx softmax
    # reciprocal in the kernel -> tolerance check, not bit-exactness).
    desc_ref, off_ref = reference_forward(raw_params, feat, graph, n_heads)
    derr = float(jnp.mean(jnp.abs(desc - desc_ref))
                 / (jnp.mean(jnp.abs(desc_ref)) + 1e-6))
    oerr = float(jnp.mean(jnp.abs(offset - off_ref))
                 / (jnp.mean(jnp.abs(off_ref)) + 1e-6))
    assert derr < 0.15 and oerr < 0.15, (derr, oerr)

    print("KERNEL_OK")
</pallas_src>

<mosaic_0001>
module attributes {stable_mosaic.version = 11 : i64} {
  func.func @kernel(%arg0: memref<128x8xf32, #tpu.memory_space<vmem>>, %arg1: memref<4x1x1x32xbf16, #tpu.memory_space<vmem>>, %arg2: memref<8x32xbf16, #tpu.memory_space<vmem>>, %arg3: memref<1x32xf32, #tpu.memory_space<vmem>>, %arg4: memref<1x32xf32, #tpu.memory_space<vmem>>, %arg5: memref<1x32xf32, #tpu.memory_space<vmem>>, %arg6: memref<32x32xbf16, #tpu.memory_space<vmem>>, %arg7: memref<1x32xf32, #tpu.memory_space<vmem>>, %arg8: memref<1x32xf32, #tpu.memory_space<vmem>>, %arg9: memref<1x32xf32, #tpu.memory_space<vmem>>, %arg10: memref<32x32xbf16, #tpu.memory_space<vmem>>, %arg11: memref<1x32xf32, #tpu.memory_space<vmem>>, %arg12: memref<32x96xbf16, #tpu.memory_space<vmem>>, %arg13: memref<1x96xf32, #tpu.memory_space<vmem>>, %arg14: memref<32x32xbf16, #tpu.memory_space<vmem>>, %arg15: memref<1x32xf32, #tpu.memory_space<vmem>>, %arg16: memref<32x64xbf16, #tpu.memory_space<vmem>>, %arg17: memref<32x64xbf16, #tpu.memory_space<vmem>>, %arg18: memref<1x64xf32, #tpu.memory_space<vmem>>, %arg19: memref<1x64xf32, #tpu.memory_space<vmem>>, %arg20: memref<1x64xf32, #tpu.memory_space<vmem>>, %arg21: memref<64x32xbf16, #tpu.memory_space<vmem>>, %arg22: memref<1x32xf32, #tpu.memory_space<vmem>>, %arg23: memref<32x96xbf16, #tpu.memory_space<vmem>>, %arg24: memref<1x96xf32, #tpu.memory_space<vmem>>, %arg25: memref<32x32xbf16, #tpu.memory_space<vmem>>, %arg26: memref<1x32xf32, #tpu.memory_space<vmem>>, %arg27: memref<32x64xbf16, #tpu.memory_space<vmem>>, %arg28: memref<32x64xbf16, #tpu.memory_space<vmem>>, %arg29: memref<1x64xf32, #tpu.memory_space<vmem>>, %arg30: memref<1x64xf32, #tpu.memory_space<vmem>>, %arg31: memref<1x64xf32, #tpu.memory_space<vmem>>, %arg32: memref<64x32xbf16, #tpu.memory_space<vmem>>, %arg33: memref<1x32xf32, #tpu.memory_space<vmem>>, %arg34: memref<32x64xbf16, #tpu.memory_space<vmem>>, %arg35: memref<1x64xf32, #tpu.memory_space<vmem>>, %arg36: memref<1x64xf32, #tpu.memory_space<vmem>>, %arg37: memref<1x64xf32, #tpu.memory_space<vmem>>, %arg38: memref<64x64xbf16, #tpu.memory_space<vmem>>, %arg39: memref<1x64xf32, #tpu.memory_space<vmem>>, %arg40: memref<1x64xf32, #tpu.memory_space<vmem>>, %arg41: memref<1x64xf32, #tpu.memory_space<vmem>>, %arg42: memref<64x2xbf16, #tpu.memory_space<vmem>>, %arg43: memref<1x2xf32, #tpu.memory_space<vmem>>, %arg44: memref<128x32xf32, #tpu.memory_space<vmem>>, %arg45: memref<128x2xf32, #tpu.memory_space<vmem>>) attributes {dimension_semantics = [], scalar_prefetch = 0 : i64, scratch_operands = 0 : i64, tpu.core_type = #tpu.core_type<tc>} {
    %c0 = arith.constant 0 : index
    %c0_0 = arith.constant 0 : index
    %0 = vector.load %arg0[%c0, %c0_0] : memref<128x8xf32, #tpu.memory_space<vmem>>, vector<128x8xf32>
    %c0_1 = arith.constant 0 : index
    %c0_2 = arith.constant 0 : index
    %c0_3 = arith.constant 0 : index
    %c0_4 = arith.constant 0 : index
    %1 = vector.load %arg1[%c0_1, %c0_2, %c0_3, %c0_4] : memref<4x1x1x32xbf16, #tpu.memory_space<vmem>>, vector<4x1x1x32xbf16>
    %c0_5 = arith.constant 0 : index
    %c0_6 = arith.constant 0 : index
    %2 = vector.load %arg2[%c0_5, %c0_6] : memref<8x32xbf16, #tpu.memory_space<vmem>>, vector<8x32xbf16>
    %c0_7 = arith.constant 0 : index
    %c0_8 = arith.constant 0 : index
    %3 = vector.load %arg3[%c0_7, %c0_8] : memref<1x32xf32, #tpu.memory_space<vmem>>, vector<1x32xf32>
    %c0_9 = arith.constant 0 : index
    %c0_10 = arith.constant 0 : index
    %4 = vector.load %arg4[%c0_9, %c0_10] : memref<1x32xf32, #tpu.memory_space<vmem>>, vector<1x32xf32>
    %c0_11 = arith.constant 0 : index
    %c0_12 = arith.constant 0 : index
    %5 = vector.load %arg5[%c0_11, %c0_12] : memref<1x32xf32, #tpu.memory_space<vmem>>, vector<1x32xf32>
    %6 = arith.truncf %0 : vector<128x8xf32> to vector<128x8xbf16>
    %cst = arith.constant dense<0.000000e+00> : vector<128x32xf32>
    %7 = tpu.matmul %6, %2, %cst {dimension_numbers = #tpu.dot_dimension_numbers<[1], [0], [0], [1], [0, 0, 1, 1], [], []>} : vector<128x8xbf16>, vector<8x32xbf16>, vector<128x32xf32> -> vector<128x32xf32>
    %8 = vector.broadcast %3 : vector<1x32xf32> to vector<128x32xf32>
    %9 = arith.addf %7, %8 : vector<128x32xf32>
    %cst_13 = arith.constant dense<0.000000e+00> : vector<32xf32>
    %10 = vector.multi_reduction <add>, %9, %cst_13 [0] : vector<128x32xf32> to vector<32xf32>
    %11 = vector.shape_cast %10 : vector<32xf32> to vector<1x32xf32>
    %cst_14 = arith.constant 7.812500e-03 : f32
    %12 = vector.broadcast %cst_14 : f32 to vector<1x32xf32>
    %13 = arith.mulf %11, %12 : vector<1x32xf32>
    %14 = arith.mulf %9, %9 : vector<128x32xf32>
    %cst_15 = arith.constant dense<0.000000e+00> : vector<32xf32>
    %15 = vector.multi_reduction <add>, %14, %cst_15 [0] : vector<128x32xf32> to vector<32xf32>
    %16 = vector.shape_cast %15 : vector<32xf32> to vector<1x32xf32>
    %cst_16 = arith.constant 7.812500e-03 : f32
    %17 = vector.broadcast %cst_16 : f32 to vector<1x32xf32>
    %18 = arith.mulf %16, %17 : vector<1x32xf32>
    %19 = arith.mulf %13, %13 : vector<1x32xf32>
    %20 = arith.subf %18, %19 : vector<1x32xf32>
    %cst_17 = arith.constant 0.000000e+00 : f32
    %21 = vector.broadcast %cst_17 : f32 to vector<1x32xf32>
    %22 = arith.maximumf %20, %21 : vector<1x32xf32>
    %23 = vector.broadcast %13 : vector<1x32xf32> to vector<128x32xf32>
    %24 = arith.subf %9, %23 : vector<128x32xf32>
    %cst_18 = arith.constant 9.99999974E-6 : f32
    %25 = vector.broadcast %cst_18 : f32 to vector<1x32xf32>
    %26 = arith.addf %22, %25 : vector<1x32xf32>
    %27 = math.rsqrt %26 : vector<1x32xf32>
    %28 = vector.broadcast %27 : vector<1x32xf32> to vector<128x32xf32>
    %29 = arith.mulf %24, %28 : vector<128x32xf32>
    %30 = vector.broadcast %4 : vector<1x32xf32> to vector<128x32xf32>
    %31 = arith.mulf %29, %30 : vector<128x32xf32>
    %32 = vector.broadcast %5 : vector<1x32xf32> to vector<128x32xf32>
    %33 = arith.addf %31, %32 : vector<128x32xf32>
    %cst_19 = arith.constant 0.000000e+00 : f32
    %34 = vector.broadcast %cst_19 : f32 to vector<128x32xf32>
    %35 = arith.maximumf %33, %34 : vector<128x32xf32>
    %c0_20 = arith.constant 0 : index
    %c0_21 = arith.constant 0 : index
    %36 = vector.load %arg6[%c0_20, %c0_21] : memref<32x32xbf16, #tpu.memory_space<vmem>>, vector<32x32xbf16>
    %c0_22 = arith.constant 0 : index
    %c0_23 = arith.constant 0 : index
    %37 = vector.load %arg7[%c0_22, %c0_23] : memref<1x32xf32, #tpu.memory_space<vmem>>, vector<1x32xf32>
    %c0_24 = arith.constant 0 : index
    %c0_25 = arith.constant 0 : index
    %38 = vector.load %arg8[%c0_24, %c0_25] : memref<1x32xf32, #tpu.memory_space<vmem>>, vector<1x32xf32>
    %c0_26 = arith.constant 0 : index
    %c0_27 = arith.constant 0 : index
    %39 = vector.load %arg9[%c0_26, %c0_27] : memref<1x32xf32, #tpu.memory_space<vmem>>, vector<1x32xf32>
    %40 = arith.truncf %35 : vector<128x32xf32> to vector<128x32xbf16>
    %cst_28 = arith.constant dense<0.000000e+00> : vector<128x32xf32>
    %41 = tpu.matmul %40, %36, %cst_28 {dimension_numbers = #tpu.dot_dimension_numbers<[1], [0], [0], [1], [0, 0, 1, 1], [], []>} : vector<128x32xbf16>, vector<32x32xbf16>, vector<128x32xf32> -> vector<128x32xf32>
    %42 = vector.broadcast %37 : vector<1x32xf32> to vector<128x32xf32>
    %43 = arith.addf %41, %42 : vector<128x32xf32>
    %cst_29 = arith.constant dense<0.000000e+00> : vector<32xf32>
    %44 = vector.multi_reduction <add>, %43, %cst_29 [0] : vector<128x32xf32> to vector<32xf32>
    %45 = vector.shape_cast %44 : vector<32xf32> to vector<1x32xf32>
    %cst_30 = arith.constant 7.812500e-03 : f32
    %46 = vector.broadcast %cst_30 : f32 to vector<1x32xf32>
    %47 = arith.mulf %45, %46 : vector<1x32xf32>
    %48 = arith.mulf %43, %43 : vector<128x32xf32>
    %cst_31 = arith.constant dense<0.000000e+00> : vector<32xf32>
    %49 = vector.multi_reduction <add>, %48, %cst_31 [0] : vector<128x32xf32> to vector<32xf32>
    %50 = vector.shape_cast %49 : vector<32xf32> to vector<1x32xf32>
    %cst_32 = arith.constant 7.812500e-03 : f32
    %51 = vector.broadcast %cst_32 : f32 to vector<1x32xf32>
    %52 = arith.mulf %50, %51 : vector<1x32xf32>
    %53 = arith.mulf %47, %47 : vector<1x32xf32>
    %54 = arith.subf %52, %53 : vector<1x32xf32>
    %cst_33 = arith.constant 0.000000e+00 : f32
    %55 = vector.broadcast %cst_33 : f32 to vector<1x32xf32>
    %56 = arith.maximumf %54, %55 : vector<1x32xf32>
    %57 = vector.broadcast %47 : vector<1x32xf32> to vector<128x32xf32>
    %58 = arith.subf %43, %57 : vector<128x32xf32>
    %cst_34 = arith.constant 9.99999974E-6 : f32
    %59 = vector.broadcast %cst_34 : f32 to vector<1x32xf32>
    %60 = arith.addf %56, %59 : vector<1x32xf32>
    %61 = math.rsqrt %60 : vector<1x32xf32>
    %62 = vector.broadcast %61 : vector<1x32xf32> to vector<128x32xf32>
    %63 = arith.mulf %58, %62 : vector<128x32xf32>
    %64 = vector.broadcast %38 : vector<1x32xf32> to vector<128x32xf32>
    %65 = arith.mulf %63, %64 : vector<128x32xf32>
    %66 = vector.broadcast %39 : vector<1x32xf32> to vector<128x32xf32>
    %67 = arith.addf %65, %66 : vector<128x32xf32>
    %cst_35 = arith.constant 0.000000e+00 : f32
    %68 = vector.broadcast %cst_35 : f32 to vector<128x32xf32>
    %69 = arith.maximumf %67, %68 : vector<128x32xf32>
    %c0_36 = arith.constant 0 : index
    %c0_37 = arith.constant 0 : index
    %70 = vector.load %arg10[%c0_36, %c0_37] : memref<32x32xbf16, #tpu.memory_space<vmem>>, vector<32x32xbf16>
    %c0_38 = arith.constant 0 : index
    %c0_39 = arith.constant 0 : index
    %71 = vector.load %arg11[%c0_38, %c0_39] : memref<1x32xf32, #tpu.memory_space<vmem>>, vector<1x32xf32>
    %72 = arith.truncf %69 : vector<128x32xf32> to vector<128x32xbf16>
    %cst_40 = arith.constant dense<0.000000e+00> : vector<128x32xf32>
    %73 = tpu.matmul %72, %70, %cst_40 {dimension_numbers = #tpu.dot_dimension_numbers<[1], [0], [0], [1], [0, 0, 1, 1], [], []>} : vector<128x32xbf16>, vector<32x32xbf16>, vector<128x32xf32> -> vector<128x32xf32>
    %74 = vector.broadcast %71 : vector<1x32xf32> to vector<128x32xf32>
    %75 = arith.addf %73, %74 : vector<128x32xf32>
    %c0_41 = arith.constant 0 : index
    %c0_42 = arith.constant 0 : index
    %76 = vector.load %arg12[%c0_41, %c0_42] : memref<32x96xbf16, #tpu.memory_space<vmem>>, vector<32x96xbf16>
    %c0_43 = arith.constant 0 : index
    %c0_44 = arith.constant 0 : index
    %77 = vector.load %arg13[%c0_43, %c0_44] : memref<1x96xf32, #tpu.memory_space<vmem>>, vector<1x96xf32>
    %c0_45 = arith.constant 0 : index
    %c0_46 = arith.constant 0 : index
    %78 = vector.load %arg14[%c0_45, %c0_46] : memref<32x32xbf16, #tpu.memory_space<vmem>>, vector<32x32xbf16>
    %c0_47 = arith.constant 0 : index
    %c0_48 = arith.constant 0 : index
    %79 = vector.load %arg15[%c0_47, %c0_48] : memref<1x32xf32, #tpu.memory_space<vmem>>, vector<1x32xf32>
    %c0_49 = arith.constant 0 : index
    %c0_50 = arith.constant 0 : index
    %80 = vector.load %arg16[%c0_49, %c0_50] : memref<32x64xbf16, #tpu.memory_space<vmem>>, vector<32x64xbf16>
    %c0_51 = arith.constant 0 : index
    %c0_52 = arith.constant 0 : index
    %81 = vector.load %arg17[%c0_51, %c0_52] : memref<32x64xbf16, #tpu.memory_space<vmem>>, vector<32x64xbf16>
    %c0_53 = arith.constant 0 : index
    %c0_54 = arith.constant 0 : index
    %82 = vector.load %arg18[%c0_53, %c0_54] : memref<1x64xf32, #tpu.memory_space<vmem>>, vector<1x64xf32>
    %c0_55 = arith.constant 0 : index
    %c0_56 = arith.constant 0 : index
    %83 = vector.load %arg19[%c0_55, %c0_56] : memref<1x64xf32, #tpu.memory_space<vmem>>, vector<1x64xf32>
    %c0_57 = arith.constant 0 : index
    %c0_58 = arith.constant 0 : index
    %84 = vector.load %arg20[%c0_57, %c0_58] : memref<1x64xf32, #tpu.memory_space<vmem>>, vector<1x64xf32>
    %c0_59 = arith.constant 0 : index
    %c0_60 = arith.constant 0 : index
    %85 = vector.load %arg21[%c0_59, %c0_60] : memref<64x32xbf16, #tpu.memory_space<vmem>>, vector<64x32xbf16>
    %c0_61 = arith.constant 0 : index
    %c0_62 = arith.constant 0 : index
    %86 = vector.load %arg22[%c0_61, %c0_62] : memref<1x32xf32, #tpu.memory_space<vmem>>, vector<1x32xf32>
    %87 = arith.truncf %75 : vector<128x32xf32> to vector<128x32xbf16>
    %cst_63 = arith.constant dense<0.000000e+00> : vector<128x96xf32>
    %88 = tpu.matmul %87, %76, %cst_63 {dimension_numbers = #tpu.dot_dimension_numbers<[1], [0], [0], [1], [0, 0, 1, 1], [], []>} : vector<128x32xbf16>, vector<32x96xbf16>, vector<128x96xf32> -> vector<128x96xf32>
    %89 = vector.broadcast %77 : vector<1x96xf32> to vector<128x96xf32>
    %90 = arith.addf %88, %89 : vector<128x96xf32>
    %91 = arith.truncf %90 : vector<128x96xf32> to vector<128x96xbf16>
    %92 = vector.extract_strided_slice %91 {offsets = [0, 0], sizes = [128, 32], strides = [1, 1]} : vector<128x96xbf16> to vector<128x32xbf16>
    %93 = vector.shape_cast %92 : vector<128x32xbf16> to vector<2x64x32xbf16>
    %94 = vector.extract_strided_slice %91 {offsets = [0, 32], sizes = [128, 32], strides = [1, 1]} : vector<128x96xbf16> to vector<128x32xbf16>
    %95 = vector.shape_cast %94 : vector<128x32xbf16> to vector<2x64x32xbf16>
    %96 = vector.extract_strided_slice %91 {offsets = [0, 64], sizes = [128, 32], strides = [1, 1]} : vector<128x96xbf16> to vector<128x32xbf16>
    %97 = vector.shape_cast %96 : vector<128x32xbf16> to vector<2x64x32xbf16>
    %98 = vector.shape_cast %93 : vector<2x64x32xbf16> to vector<1x2x64x32xbf16>
    %99 = vector.broadcast %98 : vector<1x2x64x32xbf16> to vector<4x2x64x32xbf16>
    %100 = vector.broadcast %1 : vector<4x1x1x32xbf16> to vector<4x2x64x32xbf16>
    %101 = arith.mulf %99, %100 : vector<4x2x64x32xbf16>
    %102 = vector.shape_cast %101 : vector<4x2x64x32xbf16> to vector<8x64x32xbf16>
    %103 = vector.shape_cast %95 : vector<2x64x32xbf16> to vector<1x2x64x32xbf16>
    %104 = vector.shape_cast %103 : vector<1x2x64x32xbf16> to vector<1x2x64x32xbf16>
    %105 = vector.broadcast %104 : vector<1x2x64x32xbf16> to vector<4x2x64x32xbf16>
    %106 = vector.shape_cast %105 : vector<4x2x64x32xbf16> to vector<8x64x32xbf16>
    %107 = vector.shape_cast %97 : vector<2x64x32xbf16> to vector<1x2x64x32xbf16>
    %108 = vector.broadcast %107 : vector<1x2x64x32xbf16> to vector<4x2x64x32xbf16>
    %109 = vector.broadcast %1 : vector<4x1x1x32xbf16> to vector<4x2x64x32xbf16>
    %110 = arith.mulf %108, %109 : vector<4x2x64x32xbf16>
    %111 = vector.shape_cast %110 : vector<4x2x64x32xbf16> to vector<8x64x32xbf16>
    "tpu.trace_start"() <{level = 10 : i32, message = "aqd,akd->aqk"}> : () -> ()
    %cst_64 = arith.constant dense<0.000000e+00> : vector<8x64x64xf32>
    %112 = tpu.matmul %102, %106, %cst_64 {dimension_numbers = #tpu.dot_dimension_numbers<[2], [2], [1], [1], [0, 0, 0, 1, 1, 1], [0], [0]>} : vector<8x64x32xbf16>, vector<8x64x32xbf16>, vector<8x64x64xf32> -> vector<8x64x64xf32>
    "tpu.trace_stop"() : () -> ()
    %cst_65 = arith.constant dense<0xFF800000> : vector<8x64xf32>
    %113 = vector.multi_reduction <maximumf>, %112, %cst_65 [2] : vector<8x64x64xf32> to vector<8x64xf32>
    %114 = vector.shape_cast %113 : vector<8x64xf32> to vector<8x64x1xf32>
    %115 = vector.broadcast %114 : vector<8x64x1xf32> to vector<8x64x64xf32>
    %116 = arith.subf %112, %115 : vector<8x64x64xf32>
    %117 = math.exp %116 : vector<8x64x64xf32>
    %cst_66 = arith.constant dense<0.000000e+00> : vector<8x64xf32>
    %118 = vector.multi_reduction <add>, %117, %cst_66 [2] : vector<8x64x64xf32> to vector<8x64xf32>
    %119 = vector.shape_cast %118 : vector<8x64xf32> to vector<8x64x1xf32>
    %120 = tpu.reciprocal %119 {approx = true} : vector<8x64x1xf32> -> vector<8x64x1xf32>
    %121 = vector.broadcast %120 : vector<8x64x1xf32> to vector<8x64x64xf32>
    %122 = arith.mulf %117, %121 : vector<8x64x64xf32>
    %123 = arith.truncf %122 : vector<8x64x64xf32> to vector<8x64x64xbf16>
    "tpu.trace_start"() <{level = 10 : i32, message = "aqk,akd->aqd"}> : () -> ()
    %cst_67 = arith.constant dense<0.000000e+00> : vector<8x64x32xf32>
    %124 = tpu.matmul %123, %111, %cst_67 {dimension_numbers = #tpu.dot_dimension_numbers<[2], [1], [1], [2], [0, 0, 0, 1, 1, 2], [0], [0]>} : vector<8x64x64xbf16>, vector<8x64x32xbf16>, vector<8x64x32xf32> -> vector<8x64x32xf32>
    "tpu.trace_stop"() : () -> ()
    %125 = vector.shape_cast %124 : vector<8x64x32xf32> to vector<4x2x64x32xf32>
    %cst_68 = arith.constant dense<0.000000e+00> : vector<2x64x32xf32>
    %126 = vector.multi_reduction <add>, %125, %cst_68 [0] : vector<4x2x64x32xf32> to vector<2x64x32xf32>
    %127 = vector.shape_cast %126 : vector<2x64x32xf32> to vector<128x32xf32>
    %128 = arith.truncf %127 : vector<128x32xf32> to vector<128x32xbf16>
    %cst_69 = arith.constant dense<0.000000e+00> : vector<128x32xf32>
    %129 = tpu.matmul %128, %78, %cst_69 {dimension_numbers = #tpu.dot_dimension_numbers<[1], [0], [0], [1], [0, 0, 1, 1], [], []>} : vector<128x32xbf16>, vector<32x32xbf16>, vector<128x32xf32> -> vector<128x32xf32>
    %130 = vector.broadcast %79 : vector<1x32xf32> to vector<128x32xf32>
    %131 = arith.addf %129, %130 : vector<128x32xf32>
    %cst_70 = arith.constant dense<0.000000e+00> : vector<128x64xf32>
    %132 = tpu.matmul %87, %80, %cst_70 {dimension_numbers = #tpu.dot_dimension_numbers<[1], [0], [0], [1], [0, 0, 1, 1], [], []>} : vector<128x32xbf16>, vector<32x64xbf16>, vector<128x64xf32> -> vector<128x64xf32>
    %133 = arith.truncf %131 : vector<128x32xf32> to vector<128x32xbf16>
    %cst_71 = arith.constant dense<0.000000e+00> : vector<128x64xf32>
    %134 = tpu.matmul %133, %81, %cst_71 {dimension_numbers = #tpu.dot_dimension_numbers<[1], [0], [0], [1], [0, 0, 1, 1], [], []>} : vector<128x32xbf16>, vector<32x64xbf16>, vector<128x64xf32> -> vector<128x64xf32>
    %135 = arith.addf %132, %134 : vector<128x64xf32>
    %136 = vector.broadcast %82 : vector<1x64xf32> to vector<128x64xf32>
    %137 = arith.addf %135, %136 : vector<128x64xf32>
    %cst_72 = arith.constant dense<0.000000e+00> : vector<64xf32>
    %138 = vector.multi_reduction <add>, %137, %cst_72 [0] : vector<128x64xf32> to vector<64xf32>
    %139 = vector.shape_cast %138 : vector<64xf32> to vector<1x64xf32>
    %cst_73 = arith.constant 7.812500e-03 : f32
    %140 = vector.broadcast %cst_73 : f32 to vector<1x64xf32>
    %141 = arith.mulf %139, %140 : vector<1x64xf32>
    %142 = arith.mulf %137, %137 : vector<128x64xf32>
    %cst_74 = arith.constant dense<0.000000e+00> : vector<64xf32>
    %143 = vector.multi_reduction <add>, %142, %cst_74 [0] : vector<128x64xf32> to vector<64xf32>
    %144 = vector.shape_cast %143 : vector<64xf32> to vector<1x64xf32>
    %cst_75 = arith.constant 7.812500e-03 : f32
    %145 = vector.broadcast %cst_75 : f32 to vector<1x64xf32>
    %146 = arith.mulf %144, %145 : vector<1x64xf32>
    %147 = arith.mulf %141, %141 : vector<1x64xf32>
    %148 = arith.subf %146, %147 : vector<1x64xf32>
    %cst_76 = arith.constant 0.000000e+00 : f32
    %149 = vector.broadcast %cst_76 : f32 to vector<1x64xf32>
    %150 = arith.maximumf %148, %149 : vector<1x64xf32>
    %151 = vector.broadcast %141 : vector<1x64xf32> to vector<128x64xf32>
    %152 = arith.subf %137, %151 : vector<128x64xf32>
    %cst_77 = arith.constant 9.99999974E-6 : f32
    %153 = vector.broadcast %cst_77 : f32 to vector<1x64xf32>
    %154 = arith.addf %150, %153 : vector<1x64xf32>
    %155 = math.rsqrt %154 : vector<1x64xf32>
    %156 = vector.broadcast %155 : vector<1x64xf32> to vector<128x64xf32>
    %157 = arith.mulf %152, %156 : vector<128x64xf32>
    %158 = vector.broadcast %83 : vector<1x64xf32> to vector<128x64xf32>
    %159 = arith.mulf %157, %158 : vector<128x64xf32>
    %160 = vector.broadcast %84 : vector<1x64xf32> to vector<128x64xf32>
    %161 = arith.addf %159, %160 : vector<128x64xf32>
    %cst_78 = arith.constant 0.000000e+00 : f32
    %162 = vector.broadcast %cst_78 : f32 to vector<128x64xf32>
    %163 = arith.maximumf %161, %162 : vector<128x64xf32>
    %164 = arith.truncf %163 : vector<128x64xf32> to vector<128x64xbf16>
    %cst_79 = arith.constant dense<0.000000e+00> : vector<128x32xf32>
    %165 = tpu.matmul %164, %85, %cst_79 {dimension_numbers = #tpu.dot_dimension_numbers<[1], [0], [0], [1], [0, 0, 1, 1], [], []>} : vector<128x64xbf16>, vector<64x32xbf16>, vector<128x32xf32> -> vector<128x32xf32>
    %166 = vector.broadcast %86 : vector<1x32xf32> to vector<128x32xf32>
    %167 = arith.addf %165, %166 : vector<128x32xf32>
    %168 = arith.addf %75, %167 : vector<128x32xf32>
    %c0_80 = arith.constant 0 : index
    %c0_81 = arith.constant 0 : index
    %169 = vector.load %arg23[%c0_80, %c0_81] : memref<32x96xbf16, #tpu.memory_space<vmem>>, vector<32x96xbf16>
    %c0_82 = arith.constant 0 : index
    %c0_83 = arith.constant 0 : index
    %170 = vector.load %arg24[%c0_82, %c0_83] : memref<1x96xf32, #tpu.memory_space<vmem>>, vector<1x96xf32>
    %c0_84 = arith.constant 0 : index
    %c0_85 = arith.constant 0 : index
    %171 = vector.load %arg25[%c0_84, %c0_85] : memref<32x32xbf16, #tpu.memory_space<vmem>>, vector<32x32xbf16>
    %c0_86 = arith.constant 0 : index
    %c0_87 = arith.constant 0 : index
    %172 = vector.load %arg26[%c0_86, %c0_87] : memref<1x32xf32, #tpu.memory_space<vmem>>, vector<1x32xf32>
    %c0_88 = arith.constant 0 : index
    %c0_89 = arith.constant 0 : index
    %173 = vector.load %arg27[%c0_88, %c0_89] : memref<32x64xbf16, #tpu.memory_space<vmem>>, vector<32x64xbf16>
    %c0_90 = arith.constant 0 : index
    %c0_91 = arith.constant 0 : index
    %174 = vector.load %arg28[%c0_90, %c0_91] : memref<32x64xbf16, #tpu.memory_space<vmem>>, vector<32x64xbf16>
    %c0_92 = arith.constant 0 : index
    %c0_93 = arith.constant 0 : index
    %175 = vector.load %arg29[%c0_92, %c0_93] : memref<1x64xf32, #tpu.memory_space<vmem>>, vector<1x64xf32>
    %c0_94 = arith.constant 0 : index
    %c0_95 = arith.constant 0 : index
    %176 = vector.load %arg30[%c0_94, %c0_95] : memref<1x64xf32, #tpu.memory_space<vmem>>, vector<1x64xf32>
    %c0_96 = arith.constant 0 : index
    %c0_97 = arith.constant 0 : index
    %177 = vector.load %arg31[%c0_96, %c0_97] : memref<1x64xf32, #tpu.memory_space<vmem>>, vector<1x64xf32>
    %c0_98 = arith.constant 0 : index
    %c0_99 = arith.constant 0 : index
    %178 = vector.load %arg32[%c0_98, %c0_99] : memref<64x32xbf16, #tpu.memory_space<vmem>>, vector<64x32xbf16>
    %c0_100 = arith.constant 0 : index
    %c0_101 = arith.constant 0 : index
    %179 = vector.load %arg33[%c0_100, %c0_101] : memref<1x32xf32, #tpu.memory_space<vmem>>, vector<1x32xf32>
    %180 = arith.truncf %168 : vector<128x32xf32> to vector<128x32xbf16>
    %cst_102 = arith.constant dense<0.000000e+00> : vector<128x96xf32>
    %181 = tpu.matmul %180, %169, %cst_102 {dimension_numbers = #tpu.dot_dimension_numbers<[1], [0], [0], [1], [0, 0, 1, 1], [], []>} : vector<128x32xbf16>, vector<32x96xbf16>, vector<128x96xf32> -> vector<128x96xf32>
    %182 = vector.broadcast %170 : vector<1x96xf32> to vector<128x96xf32>
    %183 = arith.addf %181, %182 : vector<128x96xf32>
    %184 = arith.truncf %183 : vector<128x96xf32> to vector<128x96xbf16>
    %185 = vector.extract_strided_slice %184 {offsets = [0, 0], sizes = [128, 32], strides = [1, 1]} : vector<128x96xbf16> to vector<128x32xbf16>
    %186 = vector.shape_cast %185 : vector<128x32xbf16> to vector<2x64x32xbf16>
    %187 = vector.extract_strided_slice %184 {offsets = [0, 32], sizes = [128, 32], strides = [1, 1]} : vector<128x96xbf16> to vector<128x32xbf16>
    %188 = vector.shape_cast %187 : vector<128x32xbf16> to vector<2x64x32xbf16>
    %189 = vector.extract_strided_slice %184 {offsets = [0, 64], sizes = [128, 32], strides = [1, 1]} : vector<128x96xbf16> to vector<128x32xbf16>
    %190 = vector.shape_cast %189 : vector<128x32xbf16> to vector<2x64x32xbf16>
    %191 = vector.shape_cast %186 : vector<2x64x32xbf16> to vector<1x2x64x32xbf16>
    %192 = vector.broadcast %191 : vector<1x2x64x32xbf16> to vector<4x2x64x32xbf16>
    %193 = vector.broadcast %1 : vector<4x1x1x32xbf16> to vector<4x2x64x32xbf16>
    %194 = arith.mulf %192, %193 : vector<4x2x64x32xbf16>
    %195 = vector.shape_cast %194 : vector<4x2x64x32xbf16> to vector<8x64x32xbf16>
    %196 = vector.shape_cast %188 : vector<2x64x32xbf16> to vector<1x2x64x32xbf16>
    %197 = vector.shape_cast %196 : vector<1x2x64x32xbf16> to vector<1x2x64x32xbf16>
    %198 = vector.broadcast %197 : vector<1x2x64x32xbf16> to vector<4x2x64x32xbf16>
    %199 = vector.shape_cast %198 : vector<4x2x64x32xbf16> to vector<8x64x32xbf16>
    %200 = vector.shape_cast %190 : vector<2x64x32xbf16> to vector<1x2x64x32xbf16>
    %201 = vector.broadcast %200 : vector<1x2x64x32xbf16> to vector<4x2x64x32xbf16>
    %202 = vector.broadcast %1 : vector<4x1x1x32xbf16> to vector<4x2x64x32xbf16>
    %203 = arith.mulf %201, %202 : vector<4x2x64x32xbf16>
    %204 = vector.shape_cast %203 : vector<4x2x64x32xbf16> to vector<8x64x32xbf16>
    "tpu.trace_start"() <{level = 10 : i32, message = "aqd,akd->aqk"}> : () -> ()
    %cst_103 = arith.constant dense<0.000000e+00> : vector<8x64x64xf32>
    %205 = tpu.matmul %195, %199, %cst_103 {dimension_numbers = #tpu.dot_dimension_numbers<[2], [2], [1], [1], [0, 0, 0, 1, 1, 1], [0], [0]>} : vector<8x64x32xbf16>, vector<8x64x32xbf16>, vector<8x64x64xf32> -> vector<8x64x64xf32>
    "tpu.trace_stop"() : () -> ()
    %cst_104 = arith.constant dense<0xFF800000> : vector<8x64xf32>
    %206 = vector.multi_reduction <maximumf>, %205, %cst_104 [2] : vector<8x64x64xf32> to vector<8x64xf32>
    %207 = vector.shape_cast %206 : vector<8x64xf32> to vector<8x64x1xf32>
    %208 = vector.broadcast %207 : vector<8x64x1xf32> to vector<8x64x64xf32>
    %209 = arith.subf %205, %208 : vector<8x64x64xf32>
    %210 = math.exp %209 : vector<8x64x64xf32>
    %cst_105 = arith.constant dense<0.000000e+00> : vector<8x64xf32>
    %211 = vector.multi_reduction <add>, %210, %cst_105 [2] : vector<8x64x64xf32> to vector<8x64xf32>
    %212 = vector.shape_cast %211 : vector<8x64xf32> to vector<8x64x1xf32>
    %213 = tpu.reciprocal %212 {approx = true} : vector<8x64x1xf32> -> vector<8x64x1xf32>
    %214 = vector.broadcast %213 : vector<8x64x1xf32> to vector<8x64x64xf32>
    %215 = arith.mulf %210, %214 : vector<8x64x64xf32>
    %216 = arith.truncf %215 : vector<8x64x64xf32> to vector<8x64x64xbf16>
    "tpu.trace_start"() <{level = 10 : i32, message = "aqk,akd->aqd"}> : () -> ()
    %cst_106 = arith.constant dense<0.000000e+00> : vector<8x64x32xf32>
    %217 = tpu.matmul %216, %204, %cst_106 {dimension_numbers = #tpu.dot_dimension_numbers<[2], [1], [1], [2], [0, 0, 0, 1, 1, 2], [0], [0]>} : vector<8x64x64xbf16>, vector<8x64x32xbf16>, vector<8x64x32xf32> -> vector<8x64x32xf32>
    "tpu.trace_stop"() : () -> ()
    %218 = vector.shape_cast %217 : vector<8x64x32xf32> to vector<4x2x64x32xf32>
    %cst_107 = arith.constant dense<0.000000e+00> : vector<2x64x32xf32>
    %219 = vector.multi_reduction <add>, %218, %cst_107 [0] : vector<4x2x64x32xf32> to vector<2x64x32xf32>
    %220 = vector.shape_cast %219 : vector<2x64x32xf32> to vector<128x32xf32>
    %221 = arith.truncf %220 : vector<128x32xf32> to vector<128x32xbf16>
    %cst_108 = arith.constant dense<0.000000e+00> : vector<128x32xf32>
    %222 = tpu.matmul %221, %171, %cst_108 {dimension_numbers = #tpu.dot_dimension_numbers<[1], [0], [0], [1], [0, 0, 1, 1], [], []>} : vector<128x32xbf16>, vector<32x32xbf16>, vector<128x32xf32> -> vector<128x32xf32>
    %223 = vector.broadcast %172 : vector<1x32xf32> to vector<128x32xf32>
    %224 = arith.addf %222, %223 : vector<128x32xf32>
    %cst_109 = arith.constant dense<0.000000e+00> : vector<128x64xf32>
    %225 = tpu.matmul %180, %173, %cst_109 {dimension_numbers = #tpu.dot_dimension_numbers<[1], [0], [0], [1], [0, 0, 1, 1], [], []>} : vector<128x32xbf16>, vector<32x64xbf16>, vector<128x64xf32> -> vector<128x64xf32>
    %226 = arith.truncf %224 : vector<128x32xf32> to vector<128x32xbf16>
    %cst_110 = arith.constant dense<0.000000e+00> : vector<128x64xf32>
    %227 = tpu.matmul %226, %174, %cst_110 {dimension_numbers = #tpu.dot_dimension_numbers<[1], [0], [0], [1], [0, 0, 1, 1], [], []>} : vector<128x32xbf16>, vector<32x64xbf16>, vector<128x64xf32> -> vector<128x64xf32>
    %228 = arith.addf %225, %227 : vector<128x64xf32>
    %229 = vector.broadcast %175 : vector<1x64xf32> to vector<128x64xf32>
    %230 = arith.addf %228, %229 : vector<128x64xf32>
    %cst_111 = arith.constant dense<0.000000e+00> : vector<64xf32>
    %231 = vector.multi_reduction <add>, %230, %cst_111 [0] : vector<128x64xf32> to vector<64xf32>
    %232 = vector.shape_cast %231 : vector<64xf32> to vector<1x64xf32>
    %cst_112 = arith.constant 7.812500e-03 : f32
    %233 = vector.broadcast %cst_112 : f32 to vector<1x64xf32>
    %234 = arith.mulf %232, %233 : vector<1x64xf32>
    %235 = arith.mulf %230, %230 : vector<128x64xf32>
    %cst_113 = arith.constant dense<0.000000e+00> : vector<64xf32>
    %236 = vector.multi_reduction <add>, %235, %cst_113 [0] : vector<128x64xf32> to vector<64xf32>
    %237 = vector.shape_cast %236 : vector<64xf32> to vector<1x64xf32>
    %cst_114 = arith.constant 7.812500e-03 : f32
    %238 = vector.broadcast %cst_114 : f32 to vector<1x64xf32>
    %239 = arith.mulf %237, %238 : vector<1x64xf32>
    %240 = arith.mulf %234, %234 : vector<1x64xf32>
    %241 = arith.subf %239, %240 : vector<1x64xf32>
    %cst_115 = arith.constant 0.000000e+00 : f32
    %242 = vector.broadcast %cst_115 : f32 to vector<1x64xf32>
    %243 = arith.maximumf %241, %242 : vector<1x64xf32>
    %244 = vector.broadcast %234 : vector<1x64xf32> to vector<128x64xf32>
    %245 = arith.subf %230, %244 : vector<128x64xf32>
    %cst_116 = arith.constant 9.99999974E-6 : f32
    %246 = vector.broadcast %cst_116 : f32 to vector<1x64xf32>
    %247 = arith.addf %243, %246 : vector<1x64xf32>
    %248 = math.rsqrt %247 : vector<1x64xf32>
    %249 = vector.broadcast %248 : vector<1x64xf32> to vector<128x64xf32>
    %250 = arith.mulf %245, %249 : vector<128x64xf32>
    %251 = vector.broadcast %176 : vector<1x64xf32> to vector<128x64xf32>
    %252 = arith.mulf %250, %251 : vector<128x64xf32>
    %253 = vector.broadcast %177 : vector<1x64xf32> to vector<128x64xf32>
    %254 = arith.addf %252, %253 : vector<128x64xf32>
    %cst_117 = arith.constant 0.000000e+00 : f32
    %255 = vector.broadcast %cst_117 : f32 to vector<128x64xf32>
    %256 = arith.maximumf %254, %255 : vector<128x64xf32>
    %257 = arith.truncf %256 : vector<128x64xf32> to vector<128x64xbf16>
    %cst_118 = arith.constant dense<0.000000e+00> : vector<128x32xf32>
    %258 = tpu.matmul %257, %178, %cst_118 {dimension_numbers = #tpu.dot_dimension_numbers<[1], [0], [0], [1], [0, 0, 1, 1], [], []>} : vector<128x64xbf16>, vector<64x32xbf16>, vector<128x32xf32> -> vector<128x32xf32>
    %259 = vector.broadcast %179 : vector<1x32xf32> to vector<128x32xf32>
    %260 = arith.addf %258, %259 : vector<128x32xf32>
    %261 = arith.addf %168, %260 : vector<128x32xf32>
    %262 = arith.truncf %261 : vector<128x32xf32> to vector<128x32xbf16>
    %c0_119 = arith.constant 0 : index
    %c0_120 = arith.constant 0 : index
    %263 = vector.load %arg34[%c0_119, %c0_120] : memref<32x64xbf16, #tpu.memory_space<vmem>>, vector<32x64xbf16>
    %c0_121 = arith.constant 0 : index
    %c0_122 = arith.constant 0 : index
    %264 = vector.load %arg35[%c0_121, %c0_122] : memref<1x64xf32, #tpu.memory_space<vmem>>, vector<1x64xf32>
    %c0_123 = arith.constant 0 : index
    %c0_124 = arith.constant 0 : index
    %265 = vector.load %arg36[%c0_123, %c0_124] : memref<1x64xf32, #tpu.memory_space<vmem>>, vector<1x64xf32>
    %c0_125 = arith.constant 0 : index
    %c0_126 = arith.constant 0 : index
    %266 = vector.load %arg37[%c0_125, %c0_126] : memref<1x64xf32, #tpu.memory_space<vmem>>, vector<1x64xf32>
    %cst_127 = arith.constant dense<0.000000e+00> : vector<128x64xf32>
    %267 = tpu.matmul %262, %263, %cst_127 {dimension_numbers = #tpu.dot_dimension_numbers<[1], [0], [0], [1], [0, 0, 1, 1], [], []>} : vector<128x32xbf16>, vector<32x64xbf16>, vector<128x64xf32> -> vector<128x64xf32>
    %268 = vector.broadcast %264 : vector<1x64xf32> to vector<128x64xf32>
    %269 = arith.addf %267, %268 : vector<128x64xf32>
    %cst_128 = arith.constant dense<0.000000e+00> : vector<64xf32>
    %270 = vector.multi_reduction <add>, %269, %cst_128 [0] : vector<128x64xf32> to vector<64xf32>
    %271 = vector.shape_cast %270 : vector<64xf32> to vector<1x64xf32>
    %cst_129 = arith.constant 7.812500e-03 : f32
    %272 = vector.broadcast %cst_129 : f32 to vector<1x64xf32>
    %273 = arith.mulf %271, %272 : vector<1x64xf32>
    %274 = arith.mulf %269, %269 : vector<128x64xf32>
    %cst_130 = arith.constant dense<0.000000e+00> : vector<64xf32>
    %275 = vector.multi_reduction <add>, %274, %cst_130 [0] : vector<128x64xf32> to vector<64xf32>
    %276 = vector.shape_cast %275 : vector<64xf32> to vector<1x64xf32>
    %cst_131 = arith.constant 7.812500e-03 : f32
    %277 = vector.broadcast %cst_131 : f32 to vector<1x64xf32>
    %278 = arith.mulf %276, %277 : vector<1x64xf32>
    %279 = arith.mulf %273, %273 : vector<1x64xf32>
    %280 = arith.subf %278, %279 : vector<1x64xf32>
    %cst_132 = arith.constant 0.000000e+00 : f32
    %281 = vector.broadcast %cst_132 : f32 to vector<1x64xf32>
    %282 = arith.maximumf %280, %281 : vector<1x64xf32>
    %283 = vector.broadcast %273 : vector<1x64xf32> to vector<128x64xf32>
    %284 = arith.subf %269, %283 : vector<128x64xf32>
    %cst_133 = arith.constant 9.99999974E-6 : f32
    %285 = vector.broadcast %cst_133 : f32 to vector<1x64xf32>
    %286 = arith.addf %282, %285 : vector<1x64xf32>
    %287 = math.rsqrt %286 : vector<1x64xf32>
    %288 = vector.broadcast %287 : vector<1x64xf32> to vector<128x64xf32>
    %289 = arith.mulf %284, %288 : vector<128x64xf32>
    %290 = vector.broadcast %265 : vector<1x64xf32> to vector<128x64xf32>
    %291 = arith.mulf %289, %290 : vector<128x64xf32>
    %292 = vector.broadcast %266 : vector<1x64xf32> to vector<128x64xf32>
    %293 = arith.addf %291, %292 : vector<128x64xf32>
    %cst_134 = arith.constant 0.000000e+00 : f32
    %294 = vector.broadcast %cst_134 : f32 to vector<128x64xf32>
    %295 = arith.maximumf %293, %294 : vector<128x64xf32>
    %c0_135 = arith.constant 0 : index
    %c0_136 = arith.constant 0 : index
    %296 = vector.load %arg38[%c0_135, %c0_136] : memref<64x64xbf16, #tpu.memory_space<vmem>>, vector<64x64xbf16>
    %c0_137 = arith.constant 0 : index
    %c0_138 = arith.constant 0 : index
    %297 = vector.load %arg39[%c0_137, %c0_138] : memref<1x64xf32, #tpu.memory_space<vmem>>, vector<1x64xf32>
    %c0_139 = arith.constant 0 : index
    %c0_140 = arith.constant 0 : index
    %298 = vector.load %arg40[%c0_139, %c0_140] : memref<1x64xf32, #tpu.memory_space<vmem>>, vector<1x64xf32>
    %c0_141 = arith.constant 0 : index
    %c0_142 = arith.constant 0 : index
    %299 = vector.load %arg41[%c0_141, %c0_142] : memref<1x64xf32, #tpu.memory_space<vmem>>, vector<1x64xf32>
    %300 = arith.truncf %295 : vector<128x64xf32> to vector<128x64xbf16>
    %cst_143 = arith.constant dense<0.000000e+00> : vector<128x64xf32>
    %301 = tpu.matmul %300, %296, %cst_143 {dimension_numbers = #tpu.dot_dimension_numbers<[1], [0], [0], [1], [0, 0, 1, 1], [], []>} : vector<128x64xbf16>, vector<64x64xbf16>, vector<128x64xf32> -> vector<128x64xf32>
    %302 = vector.broadcast %297 : vector<1x64xf32> to vector<128x64xf32>
    %303 = arith.addf %301, %302 : vector<128x64xf32>
    %cst_144 = arith.constant dense<0.000000e+00> : vector<64xf32>
    %304 = vector.multi_reduction <add>, %303, %cst_144 [0] : vector<128x64xf32> to vector<64xf32>
    %305 = vector.shape_cast %304 : vector<64xf32> to vector<1x64xf32>
    %cst_145 = arith.constant 7.812500e-03 : f32
    %306 = vector.broadcast %cst_145 : f32 to vector<1x64xf32>
    %307 = arith.mulf %305, %306 : vector<1x64xf32>
    %308 = arith.mulf %303, %303 : vector<128x64xf32>
    %cst_146 = arith.constant dense<0.000000e+00> : vector<64xf32>
    %309 = vector.multi_reduction <add>, %308, %cst_146 [0] : vector<128x64xf32> to vector<64xf32>
    %310 = vector.shape_cast %309 : vector<64xf32> to vector<1x64xf32>
    %cst_147 = arith.constant 7.812500e-03 : f32
    %311 = vector.broadcast %cst_147 : f32 to vector<1x64xf32>
    %312 = arith.mulf %310, %311 : vector<1x64xf32>
    %313 = arith.mulf %307, %307 : vector<1x64xf32>
    %314 = arith.subf %312, %313 : vector<1x64xf32>
    %cst_148 = arith.constant 0.000000e+00 : f32
    %315 = vector.broadcast %cst_148 : f32 to vector<1x64xf32>
    %316 = arith.maximumf %314, %315 : vector<1x64xf32>
    %317 = vector.broadcast %307 : vector<1x64xf32> to vector<128x64xf32>
    %318 = arith.subf %303, %317 : vector<128x64xf32>
    %cst_149 = arith.constant 9.99999974E-6 : f32
    %319 = vector.broadcast %cst_149 : f32 to vector<1x64xf32>
    %320 = arith.addf %316, %319 : vector<1x64xf32>
    %321 = math.rsqrt %320 : vector<1x64xf32>
    %322 = vector.broadcast %321 : vector<1x64xf32> to vector<128x64xf32>
    %323 = arith.mulf %318, %322 : vector<128x64xf32>
    %324 = vector.broadcast %298 : vector<1x64xf32> to vector<128x64xf32>
    %325 = arith.mulf %323, %324 : vector<128x64xf32>
    %326 = vector.broadcast %299 : vector<1x64xf32> to vector<128x64xf32>
    %327 = arith.addf %325, %326 : vector<128x64xf32>
    %cst_150 = arith.constant 0.000000e+00 : f32
    %328 = vector.broadcast %cst_150 : f32 to vector<128x64xf32>
    %329 = arith.maximumf %327, %328 : vector<128x64xf32>
    %c0_151 = arith.constant 0 : index
    %c0_152 = arith.constant 0 : index
    %330 = vector.load %arg42[%c0_151, %c0_152] : memref<64x2xbf16, #tpu.memory_space<vmem>>, vector<64x2xbf16>
    %c0_153 = arith.constant 0 : index
    %c0_154 = arith.constant 0 : index
    %331 = vector.load %arg43[%c0_153, %c0_154] : memref<1x2xf32, #tpu.memory_space<vmem>>, vector<1x2xf32>
    %332 = arith.truncf %329 : vector<128x64xf32> to vector<128x64xbf16>
    %cst_155 = arith.constant dense<0.000000e+00> : vector<128x2xf32>
    %333 = tpu.matmul %332, %330, %cst_155 {dimension_numbers = #tpu.dot_dimension_numbers<[1], [0], [0], [1], [0, 0, 1, 1], [], []>} : vector<128x64xbf16>, vector<64x2xbf16>, vector<128x2xf32> -> vector<128x2xf32>
    %334 = vector.broadcast %331 : vector<1x2xf32> to vector<128x2xf32>
    %335 = arith.addf %333, %334 : vector<128x2xf32>
    %336 = vector.extract_strided_slice %329 {offsets = [0, 0], sizes = [128, 32], strides = [1, 1]} : vector<128x64xf32> to vector<128x32xf32>
    %c0_156 = arith.constant 0 : index
    %c0_157 = arith.constant 0 : index
    %337 = vector.load %arg44[%c0_156, %c0_157] : memref<128x32xf32, #tpu.memory_space<vmem>>, vector<128x32xf32>
    tpu.vector_store %arg44[%c0_156, %c0_157], %336 {strides = array<i32>} : memref<128x32xf32, #tpu.memory_space<vmem>>, vector<128x32xf32>,
    %cst_158 = arith.constant -1.000000e+00 : f32
    %cst_159 = arith.constant 1.000000e+00 : f32
    %338 = vector.broadcast %cst_158 : f32 to vector<128x2xf32>
    %339 = arith.maximumf %338, %335 : vector<128x2xf32>
    %340 = vector.broadcast %cst_159 : f32 to vector<128x2xf32>
    %341 = arith.minimumf %340, %339 : vector<128x2xf32>
    %c0_160 = arith.constant 0 : index
    %c0_161 = arith.constant 0 : index
    %342 = vector.load %arg45[%c0_160, %c0_161] : memref<128x2xf32, #tpu.memory_space<vmem>>, vector<128x2xf32>
    tpu.vector_store %arg45[%c0_160, %c0_161], %341 {strides = array<i32>} : memref<128x2xf32, #tpu.memory_space<vmem>>, vector<128x2xf32>,
    return
  }
}

</mosaic_0001>

<llo_original>
// kernel: attentional_gnn_forward.1
$region0: #{attentional_gnn_forward.1}
  #allocation0 [shape = 'u32[]', space=smem, size = 0x4, offset = 0x4, fixed_abs, tag = 'smem constant byte address 0x4 - core index']
  #allocation1 [shape = 'u32[144,128]{1,0:T(1,128)}', space=vmem, size = 0x12000, scoped, tag = 'internal scratch']
  %s0 = inlined_call_operand.smem [shape: u32[46], index: -1, kind: input, shape index: {}]
  %s1 = sld [smem:[%s0]]
  %s2 = scalar_lea.smem %s0, 1
  %s3 = sld [smem:[%s2]]
  %s4 = scalar_lea.smem %s0, 2
  %s5 = sld [smem:[%s4]]
  %s6 = scalar_lea.smem %s0, 3
  %s7 = sld [smem:[%s6]]
  %s8 = scalar_lea.smem %s0, 4
  %s9 = sld [smem:[%s8]]
  %s10 = scalar_lea.smem %s0, 5
  %s11 = sld [smem:[%s10]]
  %s12 = scalar_lea.smem %s0, 6
  %s13 = sld [smem:[%s12]]
  %s14 = scalar_lea.smem %s0, 7
  %s15 = sld [smem:[%s14]]
  %s16 = scalar_lea.smem %s0, 8
  %s17 = sld [smem:[%s16]]
  %s18 = scalar_lea.smem %s0, 9
  %s19 = sld [smem:[%s18]]
  %s20 = scalar_lea.smem %s0, 10
  %s21 = sld [smem:[%s20]]
  %s22 = scalar_lea.smem %s0, 11
  %s23 = sld [smem:[%s22]]
  %s24 = scalar_lea.smem %s0, 12
  %s25 = sld [smem:[%s24]]
  %s26 = scalar_lea.smem %s0, 13
  %s27 = sld [smem:[%s26]]
  %s28 = scalar_lea.smem %s0, 14
  %s29 = sld [smem:[%s28]]
  %s30 = scalar_lea.smem %s0, 15
  %s31 = sld [smem:[%s30]]
  %s32 = scalar_lea.smem %s0, 16
  %s33 = sld [smem:[%s32]]
  %s34 = scalar_lea.smem %s0, 17
  %s35 = sld [smem:[%s34]]
  %s36 = scalar_lea.smem %s0, 18
  %s37 = sld [smem:[%s36]]
  %s38 = scalar_lea.smem %s0, 19
  %s39 = sld [smem:[%s38]]
  %s40 = scalar_lea.smem %s0, 20
  %s41 = sld [smem:[%s40]]
  %s42 = scalar_lea.smem %s0, 21
  %s43 = sld [smem:[%s42]]
  %s44 = scalar_lea.smem %s0, 22
  %s45 = sld [smem:[%s44]]
  %s46 = scalar_lea.smem %s0, 23
  %s47 = sld [smem:[%s46]]
  %s48 = scalar_lea.smem %s0, 24
  %s49 = sld [smem:[%s48]]
  %s50 = scalar_lea.smem %s0, 25
  %s51 = sld [smem:[%s50]]
  %s52 = scalar_lea.smem %s0, 26
  %s53 = sld [smem:[%s52]]
  %s54 = scalar_lea.smem %s0, 27
  %s55 = sld [smem:[%s54]]
  %s56 = scalar_lea.smem %s0, 28
  %s57 = sld [smem:[%s56]]
  %s58 = scalar_lea.smem %s0, 29
  %s59 = sld [smem:[%s58]]
  %s60 = scalar_lea.smem %s0, 30
  %s61 = sld [smem:[%s60]]
  %s62 = scalar_lea.smem %s0, 31
  %s63 = sld [smem:[%s62]]
  %s64 = scalar_lea.smem %s0, 32
  %s65 = sld [smem:[%s64]]
  %s66 = scalar_lea.smem %s0, 33
  %s67 = sld [smem:[%s66]]
  %s68 = scalar_lea.smem %s0, 34
  %s69 = sld [smem:[%s68]]
  %s70 = scalar_lea.smem %s0, 35
  %s71 = sld [smem:[%s70]]
  %s72 = scalar_lea.smem %s0, 36
  %s73 = sld [smem:[%s72]]
  %s74 = scalar_lea.smem %s0, 37
  %s75 = sld [smem:[%s74]]
  %s76 = scalar_lea.smem %s0, 38
  %s77 = sld [smem:[%s76]]
  %s78 = scalar_lea.smem %s0, 39
  %s79 = sld [smem:[%s78]]
  %s80 = scalar_lea.smem %s0, 40
  %s81 = sld [smem:[%s80]]
  %s82 = scalar_lea.smem %s0, 41
  %s83 = sld [smem:[%s82]]
  %s84 = scalar_lea.smem %s0, 42
  %s85 = sld [smem:[%s84]]
  %s86 = scalar_lea.smem %s0, 43
  %s87 = sld [smem:[%s86]]
  %s88 = scalar_lea.smem %s0, 44
  %s89 = sld [smem:[%s88]]
  %s90 = scalar_lea.smem %s0, 45
  %s91 = sld [smem:[%s90]]
  %92 = xla_tuple %s89, %s91
  %s93 = sld [smem:[#allocation0]]
  $region202: #{attentional_gnn_forward.1} parent=0
    _
  %s95 = ssub.s32 1, %s93
  %s96 = scalar_select 0, %s95, %s93
  $region1: #{attentional_gnn_forward.1} parent=0
    #allocation2 [shape = 'u8[512]{0}', space=vmem, size = 0x400, scoped, tag = 'input window, operand 41, single buffered']
    #allocation3 [shape = 's32[1]{0}', space=sflag, size = 0x4, scoped, tag = 'scoped memory for attentional_gnn_forward.1']
    #allocation4 [shape = 'u8[512]{0}', space=vmem, size = 0x400, scoped, tag = 'input window, operand 43, single buffered']
    #allocation5 [shape = 's32[1]{0}', space=sflag, size = 0x4, scoped, tag = 'scoped memory for attentional_gnn_forward.1']
    %97 = vsyncpa [#allocation3], 0
    %98 = vsyncpa [#allocation5], 0
    // Predicated region
    $region2: #{attentional_gnn_forward.1} parent=1 // pred_check
      _
    $region3: #{attentional_gnn_forward.1} parent=1 // pred_check_branch
      %100 = sbr.rel (0) target = $region5
    $region4: #{attentional_gnn_forward.1} parent=1 // pred_region
      _
    $region5: #{attentional_gnn_forward.1} parent=1 // pred_fallthru
      _
    // Predicated region
    $region6: #{attentional_gnn_forward.1} parent=1 // pred_check
      _
    $region7: #{attentional_gnn_forward.1} parent=1 // pred_check_branch
      %102 = sbr.rel (0) target = $region9
    $region8: #{attentional_gnn_forward.1} parent=1 // pred_region
      _
    $region9: #{attentional_gnn_forward.1} parent=1 // pred_fallthru
      _
    // Predicated region
    $region10: #{attentional_gnn_forward.1} parent=1 // pred_check
      _
    $region11: #{attentional_gnn_forward.1} parent=1 // pred_check_branch
      %104 = sbr.rel (0) target = $region13
    $region12: #{attentional_gnn_forward.1} parent=1 // pred_region
      _
    $region13: #{attentional_gnn_forward.1} parent=1 // pred_fallthru
      _
    // Predicated region
    $region14: #{attentional_gnn_forward.1} parent=1 // pred_check
      _
    $region15: #{attentional_gnn_forward.1} parent=1 // pred_check_branch
      %106 = sbr.rel (0) target = $region17
    $region16: #{attentional_gnn_forward.1} parent=1 // pred_region
      _
    $region17: #{attentional_gnn_forward.1} parent=1 // pred_fallthru
      _
    // Predicated region
    $region18: #{attentional_gnn_forward.1} parent=1 // pred_check
      _
    $region19: #{attentional_gnn_forward.1} parent=1 // pred_check_branch
      %108 = sbr.rel (0) target = $region21
    $region20: #{attentional_gnn_forward.1} parent=1 // pred_region
      _
    $region21: #{attentional_gnn_forward.1} parent=1 // pred_fallthru
      _
    // Predicated region
    $region22: #{attentional_gnn_forward.1} parent=1 // pred_check
      _
    $region23: #{attentional_gnn_forward.1} parent=1 // pred_check_branch
      %110 = sbr.rel (0) target = $region25
    $region24: #{attentional_gnn_forward.1} parent=1 // pred_region
      _
    $region25: #{attentional_gnn_forward.1} parent=1 // pred_fallthru
      _
    // Predicated region
    $region26: #{attentional_gnn_forward.1} parent=1 // pred_check
      _
    $region27: #{attentional_gnn_forward.1} parent=1 // pred_check_branch
      %112 = sbr.rel (0) target = $region29
    $region28: #{attentional_gnn_forward.1} parent=1 // pred_region
      _
    $region29: #{attentional_gnn_forward.1} parent=1 // pred_fallthru
      _
    // Predicated region
    $region30: #{attentional_gnn_forward.1} parent=1 // pred_check
      _
    $region31: #{attentional_gnn_forward.1} parent=1 // pred_check_branch
      %114 = sbr.rel (0) target = $region33
    $region32: #{attentional_gnn_forward.1} parent=1 // pred_region
      _
    $region33: #{attentional_gnn_forward.1} parent=1 // pred_fallthru
      _
    // Predicated region
    $region34: #{attentional_gnn_forward.1} parent=1 // pred_check
      _
    $region35: #{attentional_gnn_forward.1} parent=1 // pred_check_branch
      %116 = sbr.rel (0) target = $region37
    $region36: #{attentional_gnn_forward.1} parent=1 // pred_region
      _
    $region37: #{attentional_gnn_forward.1} parent=1 // pred_fallthru
      _
    // Predicated region
    $region38: #{attentional_gnn_forward.1} parent=1 // pred_check
      _
    $region39: #{attentional_gnn_forward.1} parent=1 // pred_check_branch
      %118 = sbr.rel (0) target = $region41
    $region40: #{attentional_gnn_forward.1} parent=1 // pred_region
      _
    $region41: #{attentional_gnn_forward.1} parent=1 // pred_fallthru
      _
    // Predicated region
    $region42: #{attentional_gnn_forward.1} parent=1 // pred_check
      _
    $region43: #{attentional_gnn_forward.1} parent=1 // pred_check_branch
      %120 = sbr.rel (0) target = $region45
    $region44: #{attentional_gnn_forward.1} parent=1 // pred_region
      _
    $region45: #{attentional_gnn_forward.1} parent=1 // pred_fallthru
      _
    // Predicated region
    $region46: #{attentional_gnn_forward.1} parent=1 // pred_check
      _
    $region47: #{attentional_gnn_forward.1} parent=1 // pred_check_branch
      %122 = sbr.rel (0) target = $region49
    $region48: #{attentional_gnn_forward.1} parent=1 // pred_region
      _
    $region49: #{attentional_gnn_forward.1} parent=1 // pred_fallthru
      _
    // Predicated region
    $region50: #{attentional_gnn_forward.1} parent=1 // pred_check
      _
    $region51: #{attentional_gnn_forward.1} parent=1 // pred_check_branch
      %124 = sbr.rel (0) target = $region53
    $region52: #{attentional_gnn_forward.1} parent=1 // pred_region
      _
    $region53: #{attentional_gnn_forward.1} parent=1 // pred_fallthru
      _
    // Predicated region
    $region54: #{attentional_gnn_forward.1} parent=1 // pred_check
      _
    $region55: #{attentional_gnn_forward.1} parent=1 // pred_check_branch
      %126 = sbr.rel (0) target = $region57
    $region56: #{attentional_gnn_forward.1} parent=1 // pred_region
      _
    $region57: #{attentional_gnn_forward.1} parent=1 // pred_fallthru
      _
    // Predicated region
    $region58: #{attentional_gnn_forward.1} parent=1 // pred_check
      _
    $region59: #{attentional_gnn_forward.1} parent=1 // pred_check_branch
      %128 = sbr.rel (0) target = $region61
    $region60: #{attentional_gnn_forward.1} parent=1 // pred_region
      _
    $region61: #{attentional_gnn_forward.1} parent=1 // pred_fallthru
      _
    // Predicated region
    $region62: #{attentional_gnn_forward.1} parent=1 // pred_check
      _
    $region63: #{attentional_gnn_forward.1} parent=1 // pred_check_branch
      %130 = sbr.rel (0) target = $region65
    $region64: #{attentional_gnn_forward.1} parent=1 // pred_region
      _
    $region65: #{attentional_gnn_forward.1} parent=1 // pred_fallthru
      _
    // Predicated region
    $region66: #{attentional_gnn_forward.1} parent=1 // pred_check
      _
    $region67: #{attentional_gnn_forward.1} parent=1 // pred_check_branch
      %132 = sbr.rel (0) target = $region69
    $region68: #{attentional_gnn_forward.1} parent=1 // pred_region
      _
    $region69: #{attentional_gnn_forward.1} parent=1 // pred_fallthru
      _
    // Predicated region
    $region70: #{attentional_gnn_forward.1} parent=1 // pred_check
      _
    $region71: #{attentional_gnn_forward.1} parent=1 // pred_check_branch
      %134 = sbr.rel (0) target = $region73
    $region72: #{attentional_gnn_forward.1} parent=1 // pred_region
      _
    $region73: #{attentional_gnn_forward.1} parent=1 // pred_fallthru
      _
    // Predicated region
    $region74: #{attentional_gnn_forward.1} parent=1 // pred_check
      _
    $region75: #{attentional_gnn_forward.1} parent=1 // pred_check_branch
      %136 = sbr.rel (0) target = $region77
    $region76: #{attentional_gnn_forward.1} parent=1 // pred_region
      _
    $region77: #{attentional_gnn_forward.1} parent=1 // pred_fallthru
      _
    // Predicated region
    $region78: #{attentional_gnn_forward.1} parent=1 // pred_check
      _
    $region79: #{attentional_gnn_forward.1} parent=1 // pred_check_branch
      %138 = sbr.rel (0) target = $region81
    $region80: #{attentional_gnn_forward.1} parent=1 // pred_region
      _
    $region81: #{attentional_gnn_forward.1} parent=1 // pred_fallthru
      _
    // Predicated region
    $region82: #{attentional_gnn_forward.1} parent=1 // pred_check
      _
    $region83: #{attentional_gnn_forward.1} parent=1 // pred_check_branch
      %140 = sbr.rel (0) target = $region85
    $region84: #{attentional_gnn_forward.1} parent=1 // pred_region
      _
    $region85: #{attentional_gnn_forward.1} parent=1 // pred_fallthru
      _
    // Predicated region
    $region86: #{attentional_gnn_forward.1} parent=1 // pred_check
      _
    $region87: #{attentional_gnn_forward.1} parent=1 // pred_check_branch
      %142 = sbr.rel (0) target = $region89
    $region88: #{attentional_gnn_forward.1} parent=1 // pred_region
      _
    $region89: #{attentional_gnn_forward.1} parent=1 // pred_fallthru
      _
    // Predicated region
    $region90: #{attentional_gnn_forward.1} parent=1 // pred_check
      _
    $region91: #{attentional_gnn_forward.1} parent=1 // pred_check_branch
      %144 = sbr.rel (0) target = $region93
    $region92: #{attentional_gnn_forward.1} parent=1 // pred_region
      _
    $region93: #{attentional_gnn_forward.1} parent=1 // pred_fallthru
      _
    // Predicated region
    $region94: #{attentional_gnn_forward.1} parent=1 // pred_check
      _
    $region95: #{attentional_gnn_forward.1} parent=1 // pred_check_branch
      %146 = sbr.rel (0) target = $region97
    $region96: #{attentional_gnn_forward.1} parent=1 // pred_region
      _
    $region97: #{attentional_gnn_forward.1} parent=1 // pred_fallthru
      _
    // Predicated region
    $region98: #{attentional_gnn_forward.1} parent=1 // pred_check
      _
    $region99: #{attentional_gnn_forward.1} parent=1 // pred_check_branch
      %148 = sbr.rel (0) target = $region101
    $region100: #{attentional_gnn_forward.1} parent=1 // pred_region
      _
    $region101: #{attentional_gnn_forward.1} parent=1 // pred_fallthru
      _
    // Predicated region
    $region102: #{attentional_gnn_forward.1} parent=1 // pred_check
      _
    $region103: #{attentional_gnn_forward.1} parent=1 // pred_check_branch
      %150 = sbr.rel (0) target = $region105
    $region104: #{attentional_gnn_forward.1} parent=1 // pred_region
      _
    $region105: #{attentional_gnn_forward.1} parent=1 // pred_fallthru
      _
    // Predicated region
    $region106: #{attentional_gnn_forward.1} parent=1 // pred_check
      _
    $region107: #{attentional_gnn_forward.1} parent=1 // pred_check_branch
      %152 = sbr.rel (0) target = $region109
    $region108: #{attentional_gnn_forward.1} parent=1 // pred_region
      _
    $region109: #{attentional_gnn_forward.1} parent=1 // pred_fallthru
      _
    // Predicated region
    $region110: #{attentional_gnn_forward.1} parent=1 // pred_check
      _
    $region111: #{attentional_gnn_forward.1} parent=1 // pred_check_branch
      %154 = sbr.rel (0) target = $region113
    $region112: #{attentional_gnn_forward.1} parent=1 // pred_region
      _
    $region113: #{attentional_gnn_forward.1} parent=1 // pred_fallthru
      _
    // Predicated region
    $region114: #{attentional_gnn_forward.1} parent=1 // pred_check
      _
    $region115: #{attentional_gnn_forward.1} parent=1 // pred_check_branch
      %156 = sbr.rel (0) target = $region117
    $region116: #{attentional_gnn_forward.1} parent=1 // pred_region
      _
    $region117: #{attentional_gnn_forward.1} parent=1 // pred_fallthru
      _
    // Predicated region
    $region118: #{attentional_gnn_forward.1} parent=1 // pred_check
      _
    $region119: #{attentional_gnn_forward.1} parent=1 // pred_check_branch
      %158 = sbr.rel (0) target = $region121
    $region120: #{attentional_gnn_forward.1} parent=1 // pred_region
      _
    $region121: #{attentional_gnn_forward.1} parent=1 // pred_fallthru
      _
    // Predicated region
    $region122: #{attentional_gnn_forward.1} parent=1 // pred_check
      _
    $region123: #{attentional_gnn_forward.1} parent=1 // pred_check_branch
      %160 = sbr.rel (0) target = $region125
    $region124: #{attentional_gnn_forward.1} parent=1 // pred_region
      _
    $region125: #{attentional_gnn_forward.1} parent=1 // pred_fallthru
      _
    // Predicated region
    $region126: #{attentional_gnn_forward.1} parent=1 // pred_check
      _
    $region127: #{attentional_gnn_forward.1} parent=1 // pred_check_branch
      %162 = sbr.rel (0) target = $region129
    $region128: #{attentional_gnn_forward.1} parent=1 // pred_region
      _
    $region129: #{attentional_gnn_forward.1} parent=1 // pred_fallthru
      _
    // Predicated region
    $region130: #{attentional_gnn_forward.1} parent=1 // pred_check
      _
    $region131: #{attentional_gnn_forward.1} parent=1 // pred_check_branch
      %164 = sbr.rel (0) target = $region133
    $region132: #{attentional_gnn_forward.1} parent=1 // pred_region
      _
    $region133: #{attentional_gnn_forward.1} parent=1 // pred_fallthru
      _
    // Predicated region
    $region134: #{attentional_gnn_forward.1} parent=1 // pred_check
      _
    $region135: #{attentional_gnn_forward.1} parent=1 // pred_check_branch
      %166 = sbr.rel (0) target = $region137
    $region136: #{attentional_gnn_forward.1} parent=1 // pred_region
      _
    $region137: #{attentional_gnn_forward.1} parent=1 // pred_fallthru
      _
    // Predicated region
    $region138: #{attentional_gnn_forward.1} parent=1 // pred_check
      _
    $region139: #{attentional_gnn_forward.1} parent=1 // pred_check_branch
      %168 = sbr.rel (0) target = $region141
    $region140: #{attentional_gnn_forward.1} parent=1 // pred_region
      _
    $region141: #{attentional_gnn_forward.1} parent=1 // pred_fallthru
      _
    // Predicated region
    $region142: #{attentional_gnn_forward.1} parent=1 // pred_check
      _
    $region143: #{attentional_gnn_forward.1} parent=1 // pred_check_branch
      %170 = sbr.rel (0) target = $region145
    $region144: #{attentional_gnn_forward.1} parent=1 // pred_region
      _
    $region145: #{attentional_gnn_forward.1} parent=1 // pred_fallthru
      _
    // Predicated region
    $region146: #{attentional_gnn_forward.1} parent=1 // pred_check
      _
    $region147: #{attentional_gnn_forward.1} parent=1 // pred_check_branch
      %172 = sbr.rel (0) target = $region149
    $region148: #{attentional_gnn_forward.1} parent=1 // pred_region
      _
    $region149: #{attentional_gnn_forward.1} parent=1 // pred_fallthru
      _
    // Predicated region
    $region150: #{attentional_gnn_forward.1} parent=1 // pred_check
      _
    $region151: #{attentional_gnn_forward.1} parent=1 // pred_check_branch
      %174 = sbr.rel (0) target = $region153
    $region152: #{attentional_gnn_forward.1} parent=1 // pred_region
      _
    $region153: #{attentional_gnn_forward.1} parent=1 // pred_fallthru
      _
    // Predicated region
    $region154: #{attentional_gnn_forward.1} parent=1 // pred_check
      _
    $region155: #{attentional_gnn_forward.1} parent=1 // pred_check_branch
      %176 = sbr.rel (0) target = $region157
    $region156: #{attentional_gnn_forward.1} parent=1 // pred_region
      _
    $region157: #{attentional_gnn_forward.1} parent=1 // pred_fallthru
      _
    // Predicated region
    $region158: #{attentional_gnn_forward.1} parent=1 // pred_check
      _
    $region159: #{attentional_gnn_forward.1} parent=1 // pred_check_branch
      %178 = sbr.rel (0) target = $region161
    $region160: #{attentional_gnn_forward.1} parent=1 // pred_region
      _
    $region161: #{attentional_gnn_forward.1} parent=1 // pred_fallthru
      _
    // Predicated region
    $region162: #{attentional_gnn_forward.1} parent=1 // pred_check
      _
    $region163: #{attentional_gnn_forward.1} parent=1 // pred_check_branch
      %180 = sbr.rel (0) target = $region165
    $region164: #{attentional_gnn_forward.1} parent=1 // pred_region
      _
    $region165: #{attentional_gnn_forward.1} parent=1 // pred_fallthru
      _
    // Predicated region
    $region166: #{attentional_gnn_forward.1} parent=1 // pred_check
      _
    $region167: #{attentional_gnn_forward.1} parent=1 // pred_check_branch
      %182 = sbr.rel (0) target = $region169
    $region168: #{attentional_gnn_forward.1} parent=1 // pred_region
      %s184 = ssub.s32 16, 16
      %185 = vsyncadd [#allocation3], %s184
      %s187 = sshll.u32 [#allocation2], 4
      %s188 = int_to_ptr.vmem [resolvable:$true] %s187
      %190 = dma.hbm_to_vmem [thread:$0]  %s83, 16, %s188, [#allocation3]
    $region169: #{attentional_gnn_forward.1} parent=1 // pred_fallthru
      _
    // Predicated region
    $region170: #{attentional_gnn_forward.1} parent=1 // pred_check
      _
    $region171: #{attentional_gnn_forward.1} parent=1 // pred_check_branch
      %192 = sbr.rel (0) target = $region173
    $region172: #{attentional_gnn_forward.1} parent=1 // pred_region
      _
    $region173: #{attentional_gnn_forward.1} parent=1 // pred_fallthru
      _
    // Predicated region
    $region174: #{attentional_gnn_forward.1} parent=1 // pred_check
      _
    $region175: #{attentional_gnn_forward.1} parent=1 // pred_check_branch
      %194 = sbr.rel (0) target = $region177
    $region176: #{attentional_gnn_forward.1} parent=1 // pred_region
      %s196 = ssub.s32 16, 16
      %197 = vsyncadd [#allocation5], %s196
      %s199 = sshll.u32 [#allocation4], 4
      %s200 = int_to_ptr.vmem [resolvable:$true] %s199
      %202 = dma.hbm_to_vmem [thread:$0]  %s87, 16, %s200, [#allocation5]
    $region177: #{attentional_gnn_forward.1} parent=1 // pred_fallthru
      _
    // Predicated region
    $region178: #{attentional_gnn_forward.1} parent=1 // pred_check
      _
    $region179: #{attentional_gnn_forward.1} parent=1 // pred_check_branch
      %204 = sbr.rel (0) target = $region181
    $region180: #{attentional_gnn_forward.1} parent=1 // pred_region
      %205 = dma.done [#allocation3], 16
    $region181: #{attentional_gnn_forward.1} parent=1 // pred_fallthru
      _
    // Predicated region
    $region182: #{attentional_gnn_forward.1} parent=1 // pred_check
      _
    $region183: #{attentional_gnn_forward.1} parent=1 // pred_check_branch
      %207 = sbr.rel (0) target = $region185
    $region184: #{attentional_gnn_forward.1} parent=1 // pred_region
      %208 = dma.done [#allocation5], 16
    $region185: #{attentional_gnn_forward.1} parent=1 // pred_fallthru
      _
    %v210 = vld [vmem:[%s1] sm:$0xff]
    %v211 = vld [vmem:[%s1 + $0x8] sm:$0xff]
    %v212 = vld [vmem:[%s1 + $0x10] sm:$0xff]
    %v213 = vld [vmem:[%s1 + $0x18] sm:$0xff]
    %v214 = vld [vmem:[%s1 + $0x20] sm:$0xff]
    %v215 = vld [vmem:[%s1 + $0x28] sm:$0xff]
    %v216 = vld [vmem:[%s1 + $0x30] sm:$0xff]
    %v217 = vld [vmem:[%s1 + $0x38] sm:$0xff]
    %v218 = vld [vmem:[%s1 + $0x40] sm:$0xff]
    %v219 = vld [vmem:[%s1 + $0x48] sm:$0xff]
    %v220 = vld [vmem:[%s1 + $0x50] sm:$0xff]
    %v221 = vld [vmem:[%s1 + $0x58] sm:$0xff]
    %v222 = vld [vmem:[%s1 + $0x60] sm:$0xff]
    %v223 = vld [vmem:[%s1 + $0x68] sm:$0xff]
    %v224 = vld [vmem:[%s1 + $0x70] sm:$0xff]
    %v225 = vld [vmem:[%s1 + $0x78] sm:$0xff]
    %v226 = vld [vmem:[%s3] sm:$0x1]
    %v227 = vld [vmem:[%s3 + $0x1] sm:$0x1]
    %v228 = vld [vmem:[%s3 + $0x2] sm:$0x1]
    %v229 = vld [vmem:[%s3 + $0x3] sm:$0x1]
    %v230 = vld [vmem:[%s5] sm:$0xf]
    %v231 = vld [vmem:[%s7] sm:$0x1]
    %v232 = vld [vmem:[%s9] sm:$0x1]
    %v233 = vld [vmem:[%s11] sm:$0x1]
    %v234 = vpack.c.bf16 %v211, %v210
    %v235 = vpack.c.bf16 %v213, %v212
    %v236 = vpack.c.bf16 %v215, %v214
    %v237 = vpack.c.bf16 %v217, %v216
    %v238 = vpack.c.bf16 %v219, %v218
    %v239 = vpack.c.bf16 %v221, %v220
    %v240 = vpack.c.bf16 %v223, %v222
    %v241 = vpack.c.bf16 %v225, %v224
    %v243 = vlaneseq
    %v244 = vshrl.u32 %v243, 7
    %v245 = vsub.s32 0, %v244
    %v246 = vrot.slane %v231, %v245
    %vm248 = vcmask 64512
    %v250 = vsel %vm248, %v234, 0
    %v253 = vsel %vm248, %v235, 0
    %v256 = vsel %vm248, %v236, 0
    %v259 = vsel %vm248, %v237, 0
    %v262 = vsel %vm248, %v238, 0
    %v265 = vsel %vm248, %v239, 0
    %v268 = vsel %vm248, %v240, 0
    %v271 = vsel %vm248, %v241, 0
    %vm273 = vcmask 1043456
    %v275 = vsel %vm273, %v230, 0
    %277 = vmatprep.subr.bf16.mxu0 0
    %278 = vmatpush1.bf16.msra.mxu0 0
    %279 = vmatprep.subr.bf16.mxu0 0
    %280 = vmatpush1.bf16.msra.mxu0 0
    %281 = vmatprep.subr.bf16.mxu0 0
    %282 = vmatpush1.bf16.msra.mxu0 0
    %283 = vmatprep.subr.bf16.mxu0 0
    %284 = vmatpush1.bf16.msra.mxu0 0
    %285 = vmatprep.subr.bf16.mxu0 0
    %286 = vmatpush1.bf16.msra.mxu0 0
    %287 = vmatprep.subr.bf16.mxu0 0
    %288 = vmatpush1.bf16.msra.mxu0 0
    %289 = vmatprep.subr.bf16.mxu0 0
    %290 = vmatpush1.bf16.msra.mxu0 0
    %291 = vmatprep.subr.bf16.mxu0 0
    %292 = vmatpush1.bf16.msra.mxu0 %v275
    %293 = vmatprep.subr.bf16.mxu0 0
    %294 = vmatpush2.bf16.msra.mxu0 0
    %295 = vmatprep.subr.bf16.mxu0 0
    %296 = vmatpush2.bf16.msra.mxu0 0
    %297 = vmatprep.subr.bf16.mxu0 0
    %298 = vmatpush2.bf16.msra.mxu0 0
    %299 = vmatprep.subr.bf16.mxu0 0
    %300 = vmatpush2.bf16.msra.mxu0 0
    %301 = vmatprep.subr.bf16.mxu0 0
    %302 = vmatpush2.bf16.msra.mxu0 0
    %303 = vmatprep.subr.bf16.mxu0 0
    %304 = vmatpush2.bf16.msra.mxu0 0
    %305 = vmatprep.subr.bf16.mxu0 0
    %306 = vmatpush2.bf16.msra.mxu0 0
    %307 = vmatprep.subr.bf16.mxu0 0
    %308 = vmatpush2.bf16.msra.mxu0 0
    %309 = vmatprep.mubr.bf16.mxu0 0
    %310 = vmatmul.mubr.bf16.gmra.mxu0 %v250
    %v311 = vpop.f32.mrf.mxu0
    %v312 = vadd.f32 %v246, %v311
    %v313 = vpop.f32.mrf.mxu0
    %v314 = vpop.f32.mrf.mxu0
    %v315 = vadd.f32 %v246, %v314
    %v316 = vpop.f32.mrf.mxu0
    %317 = vmatprep.mubr.bf16.mxu0 0
    %318 = vmatmul.mubr.bf16.gmra.mxu0 %v253
    %v319 = vpop.f32.mrf.mxu0
    %v320 = vadd.f32 %v246, %v319
    %v321 = vpop.f32.mrf.mxu0
    %v322 = vpop.f32.mrf.mxu0
    %v323 = vadd.f32 %v246, %v322
    %v324 = vpop.f32.mrf.mxu0
    %325 = vmatprep.mubr.bf16.mxu0 0
    %326 = vmatmul.mubr.bf16.gmra.mxu0 %v256
    %v327 = vpop.f32.mrf.mxu0
    %v328 = vadd.f32 %v246, %v327
    %v329 = vpop.f32.mrf.mxu0
    %v330 = vpop.f32.mrf.mxu0
    %v331 = vadd.f32 %v246, %v330
    %v332 = vpop.f32.mrf.mxu0
    %333 = vmatprep.mubr.bf16.mxu0 0
    %334 = vmatmul.mubr.bf16.gmra.mxu0 %v259
    %v335 = vpop.f32.mrf.mxu0
    %v336 = vadd.f32 %v246, %v335
    %v337 = vpop.f32.mrf.mxu0
    %v338 = vpop.f32.mrf.mxu0
    %v339 = vadd.f32 %v246, %v338
    %v340 = vpop.f32.mrf.mxu0
    %341 = vmatprep.mubr.bf16.mxu0 0
    %342 = vmatmul.mubr.bf16.gmra.mxu0 %v262
    %v343 = vpop.f32.mrf.mxu0
    %v344 = vadd.f32 %v246, %v343
    %v345 = vpop.f32.mrf.mxu0
    %v346 = vpop.f32.mrf.mxu0
    %v347 = vadd.f32 %v246, %v346
    %v348 = vpop.f32.mrf.mxu0
    %349 = vmatprep.mubr.bf16.mxu0 0
    %350 = vmatmul.mubr.bf16.gmra.mxu0 %v265
    %v351 = vpop.f32.mrf.mxu0
    %v352 = vadd.f32 %v246, %v351
    %v353 = vpop.f32.mrf.mxu0
    %v354 = vpop.f32.mrf.mxu0
    %v355 = vadd.f32 %v246, %v354
    %v356 = vpop.f32.mrf.mxu0
    %357 = vmatprep.mubr.bf16.mxu0 0
    %358 = vmatmul.mubr.bf16.gmra.mxu0 %v268
    %v359 = vpop.f32.mrf.mxu0
    %v360 = vadd.f32 %v246, %v359
    %v361 = vpop.f32.mrf.mxu0
    %v362 = vpop.f32.mrf.mxu0
    %v363 = vadd.f32 %v246, %v362
    %v364 = vpop.f32.mrf.mxu0
    %365 = vmatprep.mubr.bf16.mxu0 0
    %366 = vmatmul.mubr.bf16.gmra.mxu0 %v271
    %v367 = vpop.f32.mrf.mxu0
    %v368 = vadd.f32 %v246, %v367
    %v369 = vpop.f32.mrf.mxu0
    %v370 = vpop.f32.mrf.mxu0
    %v371 = vadd.f32 %v246, %v370
    %v372 = vpop.f32.mrf.mxu0
    %373 = vdwg.mxu0
    %vm374 = vcmask 261120
    %v375 = vsel %vm374, %v312, 0.0
    %v376 = vsel %vm374, %v315, 0.0
    %v377 = vadd.f32 %v375, %v376
    %v378 = vsel %vm374, %v320, 0.0
    %v379 = vadd.f32 %v377, %v378
    %v380 = vsel %vm374, %v323, 0.0
    %v381 = vadd.f32 %v379, %v380
    %v382 = vsel %vm374, %v328, 0.0
    %v383 = vadd.f32 %v381, %v382
    %v384 = vsel %vm374, %v331, 0.0
    %v385 = vadd.f32 %v383, %v384
    %v386 = vsel %vm374, %v336, 0.0
    %v387 = vadd.f32 %v385, %v386
    %v388 = vsel %vm374, %v339, 0.0
    %v389 = vadd.f32 %v387, %v388
    %v390 = vsel %vm374, %v344, 0.0
    %v391 = vadd.f32 %v389, %v390
    %v392 = vsel %vm374, %v347, 0.0
    %v393 = vadd.f32 %v391, %v392
    %v394 = vsel %vm374, %v352, 0.0
    %v395 = vadd.f32 %v393, %v394
    %v396 = vsel %vm374, %v355, 0.0
    %v397 = vadd.f32 %v395, %v396
    %v398 = vsel %vm374, %v360, 0.0
    %v399 = vadd.f32 %v397, %v398
    %v400 = vsel %vm374, %v363, 0.0
    %v401 = vadd.f32 %v399, %v400
    %v402 = vsel %vm374, %v368, 0.0
    %v403 = vadd.f32 %v401, %v402
    %v404 = vsel %vm374, %v371, 0.0
    %v405 = vadd.f32 %v403, %v404
    %v406 = vrot.slane %v405, 4
    %v407 = vadd.f32 %v405, %v406
    %v408 = vrot.slane %v407, 2
    %v409 = vadd.f32 %v407, %v408
    %v410 = vrot.slane %v409, 1
    %v411 = vadd.f32 %v409, %v410
    %v412 = vmul.f32 %v411, 0.0078125
    %v413 = vmul.f32 %v312, %v312
    %v414 = vmul.f32 %v315, %v315
    %v415 = vmul.f32 %v320, %v320
    %v416 = vmul.f32 %v323, %v323
    %v417 = vmul.f32 %v328, %v328
    %v418 = vmul.f32 %v331, %v331
    %v419 = vmul.f32 %v336, %v336
    %v420 = vmul.f32 %v339, %v339
    %v421 = vmul.f32 %v344, %v344
    %v422 = vmul.f32 %v347, %v347
    %v423 = vmul.f32 %v352, %v352
    %v424 = vmul.f32 %v355, %v355
    %v425 = vmul.f32 %v360, %v360
    %v426 = vmul.f32 %v363, %v363
    %v427 = vmul.f32 %v368, %v368
    %v428 = vmul.f32 %v371, %v371
    %v429 = vsel %vm374, %v413, 0.0
    %v430 = vsel %vm374, %v414, 0.0
    %v431 = vadd.f32 %v429, %v430
    %v432 = vsel %vm374, %v415, 0.0
    %v433 = vadd.f32 %v431, %v432
    %v434 = vsel %vm374, %v416, 0.0
    %v435 = vadd.f32 %v433, %v434
    %v436 = vsel %vm374, %v417, 0.0
    %v437 = vadd.f32 %v435, %v436
    %v438 = vsel %vm374, %v418, 0.0
    %v439 = vadd.f32 %v437, %v438
    %v440 = vsel %vm374, %v419, 0.0
    %v441 = vadd.f32 %v439, %v440
    %v442 = vsel %vm374, %v420, 0.0
    %v443 = vadd.f32 %v441, %v442
    %v444 = vsel %vm374, %v421, 0.0
    %v445 = vadd.f32 %v443, %v444
    %v446 = vsel %vm374, %v422, 0.0
    %v447 = vadd.f32 %v445, %v446
    %v448 = vsel %vm374, %v423, 0.0
    %v449 = vadd.f32 %v447, %v448
    %v450 = vsel %vm374, %v424, 0.0
    %v451 = vadd.f32 %v449, %v450
    %v452 = vsel %vm374, %v425, 0.0
    %v453 = vadd.f32 %v451, %v452
    %v454 = vsel %vm374, %v426, 0.0
    %v455 = vadd.f32 %v453, %v454
    %v456 = vsel %vm374, %v427, 0.0
    %v457 = vadd.f32 %v455, %v456
    %v458 = vsel %vm374, %v428, 0.0
    %v459 = vadd.f32 %v457, %v458
    %v460 = vrot.slane %v459, 4
    %v461 = vadd.f32 %v459, %v460
    %v462 = vrot.slane %v461, 2
    %v463 = vadd.f32 %v461, %v462
    %v464 = vrot.slane %v463, 1
    %v465 = vadd.f32 %v463, %v464
    %v466 = vmul.f32 %v465, 0.0078125
    %v467 = vmul.f32 %v412, %v412
    %v468 = vsub.f32 %v466, %v467
    %v469 = vmax.f32 %v468, 0.0
    %v470 = vsub.f32 %v312, %v412
    %v471 = vsub.f32 %v315, %v412
    %v472 = vsub.f32 %v320, %v412
    %v473 = vsub.f32 %v323, %v412
    %v474 = vsub.f32 %v328, %v412
    %v475 = vsub.f32 %v331, %v412
    %v476 = vsub.f32 %v336, %v412
    %v477 = vsub.f32 %v339, %v412
    %v478 = vsub.f32 %v344, %v412
    %v479 = vsub.f32 %v347, %v412
    %v480 = vsub.f32 %v352, %v412
    %v481 = vsub.f32 %v355, %v412
    %v482 = vsub.f32 %v360, %v412
    %v483 = vsub.f32 %v363, %v412
    %v484 = vsub.f32 %v368, %v412
    %v485 = vsub.f32 %v371, %v412
    %v486 = vadd.f32 %v469, 1e-05
    %v487 = vrsqrt.pop %v486
    %v488 = vmul.f32 %v470, %v487
    %v489 = vmul.f32 %v471, %v487
    %v490 = vmul.f32 %v472, %v487
    %v491 = vmul.f32 %v473, %v487
    %v492 = vmul.f32 %v474, %v487
    %v493 = vmul.f32 %v475, %v487
    %v494 = vmul.f32 %v476, %v487
    %v495 = vmul.f32 %v477, %v487
    %v496 = vmul.f32 %v478, %v487
    %v497 = vmul.f32 %v479, %v487
    %v498 = vmul.f32 %v480, %v487
    %v499 = vmul.f32 %v481, %v487
    %v500 = vmul.f32 %v482, %v487
    %v501 = vmul.f32 %v483, %v487
    %v502 = vmul.f32 %v484, %v487
    %v503 = vmul.f32 %v485, %v487
    %v505 = vlaneseq
    %v506 = vshrl.u32 %v505, 7
    %v507 = vsub.s32 0, %v506
    %v508 = vrot.slane %v232, %v507
    %v510 = vmul.f32 %v488, %v508
    %v511 = vmul.f32 %v489, %v508
    %v512 = vmul.f32 %v490, %v508
    %v513 = vmul.f32 %v491, %v508
    %v514 = vmul.f32 %v492, %v508
    %v515 = vmul.f32 %v493, %v508
    %v516 = vmul.f32 %v494, %v508
    %v517 = vmul.f32 %v495, %v508
    %v518 = vmul.f32 %v496, %v508
    %v519 = vmul.f32 %v497, %v508
    %v520 = vmul.f32 %v498, %v508
    %v521 = vmul.f32 %v499, %v508
    %v522 = vmul.f32 %v500, %v508
    %v523 = vmul.f32 %v501, %v508
    %v524 = vmul.f32 %v502, %v508
    %v525 = vmul.f32 %v503, %v508
    %v527 = vlaneseq
    %v528 = vshrl.u32 %v527, 7
    %v529 = vsub.s32 0, %v528
    %v530 = vrot.slane %v233, %v529
    %v532 = vadd.f32 %v510, %v530
    %v533 = vadd.f32 %v511, %v530
    %v534 = vadd.f32 %v512, %v530
    %v535 = vadd.f32 %v513, %v530
    %v536 = vadd.f32 %v514, %v530
    %v537 = vadd.f32 %v515, %v530
    %v538 = vadd.f32 %v516, %v530
    %v539 = vadd.f32 %v517, %v530
    %v540 = vadd.f32 %v518, %v530
    %v541 = vadd.f32 %v519, %v530
    %v542 = vadd.f32 %v520, %v530
    %v543 = vadd.f32 %v521, %v530
    %v544 = vadd.f32 %v522, %v530
    %v545 = vadd.f32 %v523, %v530
    %v546 = vadd.f32 %v524, %v530
    %v547 = vadd.f32 %v525, %v530
    %v548 = vmax.f32 %v532, 0.0
    %v549 = vmax.f32 %v533, 0.0
    %v550 = vmax.f32 %v534, 0.0
    %v551 = vmax.f32 %v535, 0.0
    %v552 = vmax.f32 %v536, 0.0
    %v553 = vmax.f32 %v537, 0.0
    %v554 = vmax.f32 %v538, 0.0
    %v555 = vmax.f32 %v539, 0.0
    %v556 = vmax.f32 %v540, 0.0
    %v557 = vmax.f32 %v541, 0.0
    %v558 = vmax.f32 %v542, 0.0
    %v559 = vmax.f32 %v543, 0.0
    %v560 = vmax.f32 %v544, 0.0
    %v561 = vmax.f32 %v545, 0.0
    %v562 = vmax.f32 %v546, 0.0
    %v563 = vmax.f32 %v547, 0.0
    %v564 = vld [vmem:[%s13] sm:$0xf]
    %v565 = vld [vmem:[%s13 + $0x4] sm:$0xf]
    %v566 = vld [vmem:[%s13 + $0x8] sm:$0xf]
    %v567 = vld [vmem:[%s13 + $0xc] sm:$0xf]
    %v568 = vld [vmem:[%s15] sm:$0x1]
    %v569 = vld [vmem:[%s17] sm:$0x1]
    %v570 = vld [vmem:[%s19] sm:$0x1]
    %v571 = vpack.c.bf16 %v549, %v548
    %v572 = vpack.c.bf16 %v551, %v550
    %v573 = vpack.c.bf16 %v553, %v552
    %v574 = vpack.c.bf16 %v555, %v554
    %v575 = vpack.c.bf16 %v557, %v556
    %v576 = vpack.c.bf16 %v559, %v558
    %v577 = vpack.c.bf16 %v561, %v560
    %v578 = vpack.c.bf16 %v563, %v562
    %v580 = vlaneseq
    %v581 = vshrl.u32 %v580, 7
    %v582 = vsub.s32 0, %v581
    %v583 = vrot.slane %v568, %v582
    %v589 = vunpack.c.l.b16 %v564
    %v590 = vunpack.c.l.b16 %v565
    %v591 = vunpack.c.l.b16 %v566
    %v592 = vunpack.c.l.b16 %v567
    %v593 = vpack.c.b16 %v590, %v589
    %v594 = vpack.c.b16 %v592, %v591
    %v598 = vsel %vm374, %v571, 0
    %v601 = vsel %vm374, %v572, 0
    %v604 = vsel %vm374, %v573, 0
    %v607 = vsel %vm374, %v574, 0
    %v610 = vsel %vm374, %v575, 0
    %v613 = vsel %vm374, %v576, 0
    %v616 = vsel %vm374, %v577, 0
    %v619 = vsel %vm374, %v578, 0
    %621 = vmatprep.subr.bf16.mxu0 0
    %622 = vmatpush1.bf16.msra.mxu0 0
    %623 = vmatprep.subr.bf16.mxu0 0
    %624 = vmatpush1.bf16.msra.mxu0 0
    %625 = vmatprep.subr.bf16.mxu0 0
    %626 = vmatpush1.bf16.msra.mxu0 0
    %627 = vmatprep.subr.bf16.mxu0 0
    %628 = vmatpush1.bf16.msra.mxu0 0
    %629 = vmatprep.subr.bf16.mxu0 0
    %630 = vmatpush1.bf16.msra.mxu0 0
    %631 = vmatprep.subr.bf16.mxu0 0
    %632 = vmatpush1.bf16.msra.mxu0 0
    %633 = vmatprep.subr.bf16.mxu0 0
    %634 = vmatpush1.bf16.msra.mxu0 %v594
    %635 = vmatprep.subr.bf16.mxu0 0
    %636 = vmatpush1.bf16.msra.mxu0 %v593
    %637 = vmatprep.subr.bf16.mxu0 0
    %638 = vmatpush2.bf16.msra.mxu0 0
    %639 = vmatprep.subr.bf16.mxu0 0
    %640 = vmatpush2.bf16.msra.mxu0 0
    %641 = vmatprep.subr.bf16.mxu0 0
    %642 = vmatpush2.bf16.msra.mxu0 0
    %643 = vmatprep.subr.bf16.mxu0 0
    %644 = vmatpush2.bf16.msra.mxu0 0
    %645 = vmatprep.subr.bf16.mxu0 0
    %646 = vmatpush2.bf16.msra.mxu0 0
    %647 = vmatprep.subr.bf16.mxu0 0
    %648 = vmatpush2.bf16.msra.mxu0 0
    %649 = vmatprep.subr.bf16.mxu0 0
    %650 = vmatpush2.bf16.msra.mxu0 0
    %651 = vmatprep.subr.bf16.mxu0 0
    %652 = vmatpush2.bf16.msra.mxu0 0
    %653 = vmatprep.mubr.bf16.mxu0 0
    %654 = vmatmul.mubr.bf16.gmra.mxu0 %v598
    %v655 = vpop.f32.mrf.mxu0
    %v656 = vadd.f32 %v583, %v655
    %v657 = vpop.f32.mrf.mxu0
    %v658 = vpop.f32.mrf.mxu0
    %v659 = vadd.f32 %v583, %v658
    %v660 = vpop.f32.mrf.mxu0
    %661 = vmatprep.mubr.bf16.mxu0 0
    %662 = vmatmul.mubr.bf16.gmra.mxu0 %v601
    %v663 = vpop.f32.mrf.mxu0
    %v664 = vadd.f32 %v583, %v663
    %v665 = vpop.f32.mrf.mxu0
    %v666 = vpop.f32.mrf.mxu0
    %v667 = vadd.f32 %v583, %v666
    %v668 = vpop.f32.mrf.mxu0
    %669 = vmatprep.mubr.bf16.mxu0 0
    %670 = vmatmul.mubr.bf16.gmra.mxu0 %v604
    %v671 = vpop.f32.mrf.mxu0
    %v672 = vadd.f32 %v583, %v671
    %v673 = vpop.f32.mrf.mxu0
    %v674 = vpop.f32.mrf.mxu0
    %v675 = vadd.f32 %v583, %v674
    %v676 = vpop.f32.mrf.mxu0
    %677 = vmatprep.mubr.bf16.mxu0 0
    %678 = vmatmul.mubr.bf16.gmra.mxu0 %v607
    %v679 = vpop.f32.mrf.mxu0
    %v680 = vadd.f32 %v583, %v679
    %v681 = vpop.f32.mrf.mxu0
    %v682 = vpop.f32.mrf.mxu0
    %v683 = vadd.f32 %v583, %v682
    %v684 = vpop.f32.mrf.mxu0
    %685 = vmatprep.mubr.bf16.mxu0 0
    %686 = vmatmul.mubr.bf16.gmra.mxu0 %v610
    %v687 = vpop.f32.mrf.mxu0
    %v688 = vadd.f32 %v583, %v687
    %v689 = vpop.f32.mrf.mxu0
    %v690 = vpop.f32.mrf.mxu0
    %v691 = vadd.f32 %v583, %v690
    %v692 = vpop.f32.mrf.mxu0
    %693 = vmatprep.mubr.bf16.mxu0 0
    %694 = vmatmul.mubr.bf16.gmra.mxu0 %v613
    %v695 = vpop.f32.mrf.mxu0
    %v696 = vadd.f32 %v583, %v695
    %v697 = vpop.f32.mrf.mxu0
    %v698 = vpop.f32.mrf.mxu0
    %v699 = vadd.f32 %v583, %v698
    %v700 = vpop.f32.mrf.mxu0
    %701 = vmatprep.mubr.bf16.mxu0 0
    %702 = vmatmul.mubr.bf16.gmra.mxu0 %v616
    %v703 = vpop.f32.mrf.mxu0
    %v704 = vadd.f32 %v583, %v703
    %v705 = vpop.f32.mrf.mxu0
    %v706 = vpop.f32.mrf.mxu0
    %v707 = vadd.f32 %v583, %v706
    %v708 = vpop.f32.mrf.mxu0
    %709 = vmatprep.mubr.bf16.mxu0 0
    %710 = vmatmul.mubr.bf16.gmra.mxu0 %v619
    %v711 = vpop.f32.mrf.mxu0
    %v712 = vadd.f32 %v583, %v711
    %v713 = vpop.f32.mrf.mxu0
    %v714 = vpop.f32.mrf.mxu0
    %v715 = vadd.f32 %v583, %v714
    %v716 = vpop.f32.mrf.mxu0
    %717 = vdwg.mxu0
    %v718 = vsel %vm374, %v656, 0.0
    %v719 = vsel %vm374, %v659, 0.0
    %v720 = vadd.f32 %v718, %v719
    %v721 = vsel %vm374, %v664, 0.0
    %v722 = vadd.f32 %v720, %v721
    %v723 = vsel %vm374, %v667, 0.0
    %v724 = vadd.f32 %v722, %v723
    %v725 = vsel %vm374, %v672, 0.0
    %v726 = vadd.f32 %v724, %v725
    %v727 = vsel %vm374, %v675, 0.0
    %v728 = vadd.f32 %v726, %v727
    %v729 = vsel %vm374, %v680, 0.0
    %v730 = vadd.f32 %v728, %v729
    %v731 = vsel %vm374, %v683, 0.0
    %v732 = vadd.f32 %v730, %v731
    %v733 = vsel %vm374, %v688, 0.0
    %v734 = vadd.f32 %v732, %v733
    %v735 = vsel %vm374, %v691, 0.0
    %v736 = vadd.f32 %v734, %v735
    %v737 = vsel %vm374, %v696, 0.0
    %v738 = vadd.f32 %v736, %v737
    %v739 = vsel %vm374, %v699, 0.0
    %v740 = vadd.f32 %v738, %v739
    %v741 = vsel %vm374, %v704, 0.0
    %v742 = vadd.f32 %v740, %v741
    %v743 = vsel %vm374, %v707, 0.0
    %v744 = vadd.f32 %v742, %v743
    %v745 = vsel %vm374, %v712, 0.0
    %v746 = vadd.f32 %v744, %v745
    %v747 = vsel %vm374, %v715, 0.0
    %v748 = vadd.f32 %v746, %v747
    %v749 = vrot.slane %v748, 4
    %v750 = vadd.f32 %v748, %v749
    %v751 = vrot.slane %v750, 2
    %v752 = vadd.f32 %v750, %v751
    %v753 = vrot.slane %v752, 1
    %v754 = vadd.f32 %v752, %v753
    %v755 = vmul.f32 %v754, 0.0078125
    %v756 = vmul.f32 %v656, %v656
    %v757 = vmul.f32 %v659, %v659
    %v758 = vmul.f32 %v664, %v664
    %v759 = vmul.f32 %v667, %v667
    %v760 = vmul.f32 %v672, %v672
    %v761 = vmul.f32 %v675, %v675
    %v762 = vmul.f32 %v680, %v680
    %v763 = vmul.f32 %v683, %v683
    %v764 = vmul.f32 %v688, %v688
    %v765 = vmul.f32 %v691, %v691
    %v766 = vmul.f32 %v696, %v696
    %v767 = vmul.f32 %v699, %v699
    %v768 = vmul.f32 %v704, %v704
    %v769 = vmul.f32 %v707, %v707
    %v770 = vmul.f32 %v712, %v712
    %v771 = vmul.f32 %v715, %v715
    %v772 = vsel %vm374, %v756, 0.0
    %v773 = vsel %vm374, %v757, 0.0
    %v774 = vadd.f32 %v772, %v773
    %v775 = vsel %vm374, %v758, 0.0
    %v776 = vadd.f32 %v774, %v775
    %v777 = vsel %vm374, %v759, 0.0
    %v778 = vadd.f32 %v776, %v777
    %v779 = vsel %vm374, %v760, 0.0
    %v780 = vadd.f32 %v778, %v779
    %v781 = vsel %vm374, %v761, 0.0
    %v782 = vadd.f32 %v780, %v781
    %v783 = vsel %vm374, %v762, 0.0
    %v784 = vadd.f32 %v782, %v783
    %v785 = vsel %vm374, %v763, 0.0
    %v786 = vadd.f32 %v784, %v785
    %v787 = vsel %vm374, %v764, 0.0
    %v788 = vadd.f32 %v786, %v787
    %v789 = vsel %vm374, %v765, 0.0
    %v790 = vadd.f32 %v788, %v789
    %v791 = vsel %vm374, %v766, 0.0
    %v792 = vadd.f32 %v790, %v791
    %v793 = vsel %vm374, %v767, 0.0
    %v794 = vadd.f32 %v792, %v793
    %v795 = vsel %vm374, %v768, 0.0
    %v796 = vadd.f32 %v794, %v795
    %v797 = vsel %vm374, %v769, 0.0
    %v798 = vadd.f32 %v796, %v797
    %v799 = vsel %vm374, %v770, 0.0
    %v800 = vadd.f32 %v798, %v799
    %v801 = vsel %vm374, %v771, 0.0
    %v802 = vadd.f32 %v800, %v801
    %v803 = vrot.slane %v802, 4
    %v804 = vadd.f32 %v802, %v803
    %v805 = vrot.slane %v804, 2
    %v806 = vadd.f32 %v804, %v805
    %v807 = vrot.slane %v806, 1
    %v808 = vadd.f32 %v806, %v807
    %v809 = vmul.f32 %v808, 0.0078125
    %v810 = vmul.f32 %v755, %v755
    %v811 = vsub.f32 %v809, %v810
    %v812 = vmax.f32 %v811, 0.0
    %v813 = vsub.f32 %v656, %v755
    %v814 = vsub.f32 %v659, %v755
    %v815 = vsub.f32 %v664, %v755
    %v816 = vsub.f32 %v667, %v755
    %v817 = vsub.f32 %v672, %v755
    %v818 = vsub.f32 %v675, %v755
    %v819 = vsub.f32 %v680, %v755
    %v820 = vsub.f32 %v683, %v755
    %v821 = vsub.f32 %v688, %v755
    %v822 = vsub.f32 %v691, %v755
    %v823 = vsub.f32 %v696, %v755
    %v824 = vsub.f32 %v699, %v755
    %v825 = vsub.f32 %v704, %v755
    %v826 = vsub.f32 %v707, %v755
    %v827 = vsub.f32 %v712, %v755
    %v828 = vsub.f32 %v715, %v755
    %v829 = vadd.f32 %v812, 1e-05
    %v830 = vrsqrt.pop %v829
    %v831 = vmul.f32 %v813, %v830
    %v832 = vmul.f32 %v814, %v830
    %v833 = vmul.f32 %v815, %v830
    %v834 = vmul.f32 %v816, %v830
    %v835 = vmul.f32 %v817, %v830
    %v836 = vmul.f32 %v818, %v830
    %v837 = vmul.f32 %v819, %v830
    %v838 = vmul.f32 %v820, %v830
    %v839 = vmul.f32 %v821, %v830
    %v840 = vmul.f32 %v822, %v830
    %v841 = vmul.f32 %v823, %v830
    %v842 = vmul.f32 %v824, %v830
    %v843 = vmul.f32 %v825, %v830
    %v844 = vmul.f32 %v826, %v830
    %v845 = vmul.f32 %v827, %v830
    %v846 = vmul.f32 %v828, %v830
    %v848 = vlaneseq
    %v849 = vshrl.u32 %v848, 7
    %v850 = vsub.s32 0, %v849
    %v851 = vrot.slane %v569, %v850
    %v853 = vmul.f32 %v831, %v851
    %v854 = vmul.f32 %v832, %v851
    %v855 = vmul.f32 %v833, %v851
    %v856 = vmul.f32 %v834, %v851
    %v857 = vmul.f32 %v835, %v851
    %v858 = vmul.f32 %v836, %v851
    %v859 = vmul.f32 %v837, %v851
    %v860 = vmul.f32 %v838, %v851
    %v861 = vmul.f32 %v839, %v851
    %v862 = vmul.f32 %v840, %v851
    %v863 = vmul.f32 %v841, %v851
    %v864 = vmul.f32 %v842, %v851
    %v865 = vmul.f32 %v843, %v851
    %v866 = vmul.f32 %v844, %v851
    %v867 = vmul.f32 %v845, %v851
    %v868 = vmul.f32 %v846, %v851
    %v870 = vlaneseq
    %v871 = vshrl.u32 %v870, 7
    %v872 = vsub.s32 0, %v871
    %v873 = vrot.slane %v570, %v872
    %v875 = vadd.f32 %v853, %v873
    %v876 = vadd.f32 %v854, %v873
    %v877 = vadd.f32 %v855, %v873
    %v878 = vadd.f32 %v856, %v873
    %v879 = vadd.f32 %v857, %v873
    %v880 = vadd.f32 %v858, %v873
    %v881 = vadd.f32 %v859, %v873
    %v882 = vadd.f32 %v860, %v873
    %v883 = vadd.f32 %v861, %v873
    %v884 = vadd.f32 %v862, %v873
    %v885 = vadd.f32 %v863, %v873
    %v886 = vadd.f32 %v864, %v873
    %v887 = vadd.f32 %v865, %v873
    %v888 = vadd.f32 %v866, %v873
    %v889 = vadd.f32 %v867, %v873
    %v890 = vadd.f32 %v868, %v873
    %v891 = vmax.f32 %v875, 0.0
    %v892 = vmax.f32 %v876, 0.0
    %v893 = vmax.f32 %v877, 0.0
    %v894 = vmax.f32 %v878, 0.0
    %v895 = vmax.f32 %v879, 0.0
    %v896 = vmax.f32 %v880, 0.0
    %v897 = vmax.f32 %v881, 0.0
    %v898 = vmax.f32 %v882, 0.0
    %v899 = vmax.f32 %v883, 0.0
    %v900 = vmax.f32 %v884, 0.0
    %v901 = vmax.f32 %v885, 0.0
    %v902 = vmax.f32 %v886, 0.0
    %v903 = vmax.f32 %v887, 0.0
    %v904 = vmax.f32 %v888, 0.0
    %v905 = vmax.f32 %v889, 0.0
    %v906 = vmax.f32 %v890, 0.0
    %v907 = vld [vmem:[%s21] sm:$0xf]
    %v908 = vld [vmem:[%s21 + $0x4] sm:$0xf]
    %v909 = vld [vmem:[%s21 + $0x8] sm:$0xf]
    %v910 = vld [vmem:[%s21 + $0xc] sm:$0xf]
    %v911 = vld [vmem:[%s23] sm:$0x1]
    %v912 = vpack.c.bf16 %v892, %v891
    %v913 = vpack.c.bf16 %v894, %v893
    %v914 = vpack.c.bf16 %v896, %v895
    %v915 = vpack.c.bf16 %v898, %v897
    %v916 = vpack.c.bf16 %v900, %v899
    %v917 = vpack.c.bf16 %v902, %v901
    %v918 = vpack.c.bf16 %v904, %v903
    %v919 = vpack.c.bf16 %v906, %v905
    %v921 = vlaneseq
    %v922 = vshrl.u32 %v921, 7
    %v923 = vsub.s32 0, %v922
    %v924 = vrot.slane %v911, %v923
    %v930 = vunpack.c.l.b16 %v907
    %v931 = vunpack.c.l.b16 %v908
    %v932 = vunpack.c.l.b16 %v909
    %v933 = vunpack.c.l.b16 %v910
    %v934 = vpack.c.b16 %v931, %v930
    %v935 = vpack.c.b16 %v933, %v932
    %v939 = vsel %vm374, %v912, 0
    %v942 = vsel %vm374, %v913, 0
    %v945 = vsel %vm374, %v914, 0
    %v948 = vsel %vm374, %v915, 0
    %v951 = vsel %vm374, %v916, 0
    %v954 = vsel %vm374, %v917, 0
    %v957 = vsel %vm374, %v918, 0
    %v960 = vsel %vm374, %v919, 0
    %962 = vmatprep.subr.bf16.mxu0 0
    %963 = vmatpush1.bf16.msra.mxu0 0
    %964 = vmatprep.subr.bf16.mxu0 0
    %965 = vmatpush1.bf16.msra.mxu0 0
    %966 = vmatprep.subr.bf16.mxu0 0
    %967 = vmatpush1.bf16.msra.mxu0 0
    %968 = vmatprep.subr.bf16.mxu0 0
    %969 = vmatpush1.bf16.msra.mxu0 0
    %970 = vmatprep.subr.bf16.mxu0 0
    %971 = vmatpush1.bf16.msra.mxu0 0
    %972 = vmatprep.subr.bf16.mxu0 0
    %973 = vmatpush1.bf16.msra.mxu0 0
    %974 = vmatprep.subr.bf16.mxu0 0
    %975 = vmatpush1.bf16.msra.mxu0 %v935
    %976 = vmatprep.subr.bf16.mxu0 0
    %977 = vmatpush1.bf16.msra.mxu0 %v934
    %978 = vmatprep.subr.bf16.mxu0 0
    %979 = vmatpush2.bf16.msra.mxu0 0
    %980 = vmatprep.subr.bf16.mxu0 0
    %981 = vmatpush2.bf16.msra.mxu0 0
    %982 = vmatprep.subr.bf16.mxu0 0
    %983 = vmatpush2.bf16.msra.mxu0 0
    %984 = vmatprep.subr.bf16.mxu0 0
    %985 = vmatpush2.bf16.msra.mxu0 0
    %986 = vmatprep.subr.bf16.mxu0 0
    %987 = vmatpush2.bf16.msra.mxu0 0
    %988 = vmatprep.subr.bf16.mxu0 0
    %989 = vmatpush2.bf16.msra.mxu0 0
    %990 = vmatprep.subr.bf16.mxu0 0
    %991 = vmatpush2.bf16.msra.mxu0 0
    %992 = vmatprep.subr.bf16.mxu0 0
    %993 = vmatpush2.bf16.msra.mxu0 0
    %994 = vmatprep.mubr.bf16.mxu0 0
    %995 = vmatmul.mubr.bf16.gmra.mxu0 %v939
    %v996 = vpop.f32.mrf.mxu0
    %v997 = vadd.f32 %v924, %v996
    %v998 = vpop.f32.mrf.mxu0
    %v999 = vpop.f32.mrf.mxu0
    %v1000 = vadd.f32 %v924, %v999
    %v1001 = vpop.f32.mrf.mxu0
    %1002 = vmatprep.mubr.bf16.mxu0 0
    %1003 = vmatmul.mubr.bf16.gmra.mxu0 %v942
    %v1004 = vpop.f32.mrf.mxu0
    %v1005 = vadd.f32 %v924, %v1004
    %v1006 = vpop.f32.mrf.mxu0
    %v1007 = vpop.f32.mrf.mxu0
    %v1008 = vadd.f32 %v924, %v1007
    %v1009 = vpop.f32.mrf.mxu0
    %1010 = vmatprep.mubr.bf16.mxu0 0
    %1011 = vmatmul.mubr.bf16.gmra.mxu0 %v945
    %v1012 = vpop.f32.mrf.mxu0
    %v1013 = vadd.f32 %v924, %v1012
    %v1014 = vpop.f32.mrf.mxu0
    %v1015 = vpop.f32.mrf.mxu0
    %v1016 = vadd.f32 %v924, %v1015
    %v1017 = vpop.f32.mrf.mxu0
    %1018 = vmatprep.mubr.bf16.mxu0 0
    %1019 = vmatmul.mubr.bf16.gmra.mxu0 %v948
    %v1020 = vpop.f32.mrf.mxu0
    %v1021 = vadd.f32 %v924, %v1020
    %v1022 = vpop.f32.mrf.mxu0
    %v1023 = vpop.f32.mrf.mxu0
    %v1024 = vadd.f32 %v924, %v1023
    %v1025 = vpop.f32.mrf.mxu0
    %1026 = vmatprep.mubr.bf16.mxu0 0
    %1027 = vmatmul.mubr.bf16.gmra.mxu0 %v951
    %v1028 = vpop.f32.mrf.mxu0
    %v1029 = vadd.f32 %v924, %v1028
    %v1030 = vpop.f32.mrf.mxu0
    %v1031 = vpop.f32.mrf.mxu0
    %v1032 = vadd.f32 %v924, %v1031
    %v1033 = vpop.f32.mrf.mxu0
    %1034 = vmatprep.mubr.bf16.mxu0 0
    %1035 = vmatmul.mubr.bf16.gmra.mxu0 %v954
    %v1036 = vpop.f32.mrf.mxu0
    %v1037 = vadd.f32 %v924, %v1036
    %v1038 = vpop.f32.mrf.mxu0
    %v1039 = vpop.f32.mrf.mxu0
    %v1040 = vadd.f32 %v924, %v1039
    %v1041 = vpop.f32.mrf.mxu0
    %1042 = vmatprep.mubr.bf16.mxu0 0
    %1043 = vmatmul.mubr.bf16.gmra.mxu0 %v957
    %v1044 = vpop.f32.mrf.mxu0
    %v1045 = vadd.f32 %v924, %v1044
    %v1046 = vpop.f32.mrf.mxu0
    %v1047 = vpop.f32.mrf.mxu0
    %v1048 = vadd.f32 %v924, %v1047
    %v1049 = vpop.f32.mrf.mxu0
    %1050 = vmatprep.mubr.bf16.mxu0 0
    %1051 = vmatmul.mubr.bf16.gmra.mxu0 %v960
    %v1052 = vpop.f32.mrf.mxu0
    %v1053 = vadd.f32 %v924, %v1052
    %v1054 = vpop.f32.mrf.mxu0
    %v1055 = vpop.f32.mrf.mxu0
    %v1056 = vadd.f32 %v924, %v1055
    %v1057 = vpop.f32.mrf.mxu0
    %1058 = vdwg.mxu0
    %v1059 = vld [vmem:[%s25] sm:$0xf]
    %v1060 = vld [vmem:[%s25 + $0x4] sm:$0xf]
    %v1061 = vld [vmem:[%s25 + $0x8] sm:$0xf]
    %v1062 = vld [vmem:[%s25 + $0xc] sm:$0xf]
    %v1063 = vld [vmem:[%s27] sm:$0x1]
    %v1064 = vld [vmem:[%s29] sm:$0xf]
    %v1065 = vld [vmem:[%s29 + $0x4] sm:$0xf]
    %v1066 = vld [vmem:[%s29 + $0x8] sm:$0xf]
    %v1067 = vld [vmem:[%s29 + $0xc] sm:$0xf]
    %v1068 = vld [vmem:[%s31] sm:$0x1]
    %v1069 = vld [vmem:[%s33] sm:$0xf]
    %v1070 = vld [vmem:[%s33 + $0x4] sm:$0xf]
    %v1071 = vld [vmem:[%s33 + $0x8] sm:$0xf]
    %v1072 = vld [vmem:[%s33 + $0xc] sm:$0xf]
    %v1073 = vld [vmem:[%s35] sm:$0xf]
    %v1074 = vld [vmem:[%s35 + $0x4] sm:$0xf]
    %v1075 = vld [vmem:[%s35 + $0x8] sm:$0xf]
    %v1076 = vld [vmem:[%s35 + $0xc] sm:$0xf]
    %v1077 = vld [vmem:[%s37] sm:$0x1]
    %v1078 = vld [vmem:[%s39] sm:$0x1]
    %v1079 = vld [vmem:[%s41] sm:$0x1]
    %v1080 = vld [vmem:[%s43] sm:$0xf]
    %v1081 = vld [vmem:[%s43 + $0x4] sm:$0xf]
    %v1082 = vld [vmem:[%s43 + $0x8] sm:$0xf]
    %v1083 = vld [vmem:[%s43 + $0xc] sm:$0xf]
    %v1084 = vld [vmem:[%s43 + $0x10] sm:$0xf]
    %v1085 = vld [vmem:[%s43 + $0x14] sm:$0xf]
    %v1086 = vld [vmem:[%s43 + $0x18] sm:$0xf]
    %v1087 = vld [vmem:[%s43 + $0x1c] sm:$0xf]
    %v1088 = vld [vmem:[%s45] sm:$0x1]
    %v1089 = vpack.c.bf16 %v1000, %v997
    %v1090 = vpack.c.bf16 %v1008, %v1005
    %v1091 = vpack.c.bf16 %v1016, %v1013
    %v1092 = vpack.c.bf16 %v1024, %v1021
    %v1093 = vpack.c.bf16 %v1032, %v1029
    %v1094 = vpack.c.bf16 %v1040, %v1037
    %v1095 = vpack.c.bf16 %v1048, %v1045
    %v1096 = vpack.c.bf16 %v1056, %v1053
    %v1098 = vlaneseq
    %v1099 = vshrl.u32 %v1098, 7
    %v1100 = vsub.s32 0, %v1099
    %v1101 = vrot.slane %v1063, %v1100
    %v1107 = vunpack.c.l.b16 %v1059
    %v1108 = vunpack.c.l.b16 %v1060
    %v1109 = vunpack.c.l.b16 %v1061
    %v1110 = vunpack.c.l.b16 %v1062
    %v1111 = vpack.c.b16 %v1108, %v1107
    %v1112 = vpack.c.b16 %v1110, %v1109
    %v1116 = vsel %vm374, %v1089, 0
    %v1119 = vsel %vm374, %v1090, 0
    %v1122 = vsel %vm374, %v1091, 0
    %v1125 = vsel %vm374, %v1092, 0
    %v1128 = vsel %vm374, %v1093, 0
    %v1131 = vsel %vm374, %v1094, 0
    %v1134 = vsel %vm374, %v1095, 0
    %v1137 = vsel %vm374, %v1096, 0
    %1139 = vmatprep.subr.bf16.mxu0 0
    %1140 = vmatpush1.bf16.msra.mxu0 0
    %1141 = vmatprep.subr.bf16.mxu0 0
    %1142 = vmatpush1.bf16.msra.mxu0 0
    %1143 = vmatprep.subr.bf16.mxu0 0
    %1144 = vmatpush1.bf16.msra.mxu0 0
    %1145 = vmatprep.subr.bf16.mxu0 0
    %1146 = vmatpush1.bf16.msra.mxu0 0
    %1147 = vmatprep.subr.bf16.mxu0 0
    %1148 = vmatpush1.bf16.msra.mxu0 0
    %1149 = vmatprep.subr.bf16.mxu0 0
    %1150 = vmatpush1.bf16.msra.mxu0 0
    %1151 = vmatprep.subr.bf16.mxu0 0
    %1152 = vmatpush1.bf16.msra.mxu0 %v1112
    %1153 = vmatprep.subr.bf16.mxu0 0
    %1154 = vmatpush1.bf16.msra.mxu0 %v1111
    %1155 = vmatprep.subr.bf16.mxu0 0
    %1156 = vmatpush2.bf16.msra.mxu0 0
    %1157 = vmatprep.subr.bf16.mxu0 0
    %1158 = vmatpush2.bf16.msra.mxu0 0
    %1159 = vmatprep.subr.bf16.mxu0 0
    %1160 = vmatpush2.bf16.msra.mxu0 0
    %1161 = vmatprep.subr.bf16.mxu0 0
    %1162 = vmatpush2.bf16.msra.mxu0 0
    %1163 = vmatprep.subr.bf16.mxu0 0
    %1164 = vmatpush2.bf16.msra.mxu0 0
    %1165 = vmatprep.subr.bf16.mxu0 0
    %1166 = vmatpush2.bf16.msra.mxu0 0
    %1167 = vmatprep.subr.bf16.mxu0 0
    %1168 = vmatpush2.bf16.msra.mxu0 0
    %1169 = vmatprep.subr.bf16.mxu0 0
    %1170 = vmatpush2.bf16.msra.mxu0 0
    %1171 = vmatprep.mubr.bf16.mxu0 0
    %1172 = vmatmul.mubr.bf16.gmra.mxu0 %v1116
    %v1173 = vpop.f32.mrf.mxu0
    %v1174 = vadd.f32 %v1101, %v1173
    %v1175 = vpop.f32.mrf.mxu0
    %v1176 = vpop.f32.mrf.mxu0
    %v1177 = vadd.f32 %v1101, %v1176
    %v1178 = vpop.f32.mrf.mxu0
    %1179 = vmatprep.mubr.bf16.mxu0 0
    %1180 = vmatmul.mubr.bf16.gmra.mxu0 %v1119
    %v1181 = vpop.f32.mrf.mxu0
    %v1182 = vadd.f32 %v1101, %v1181
    %v1183 = vpop.f32.mrf.mxu0
    %v1184 = vpop.f32.mrf.mxu0
    %v1185 = vadd.f32 %v1101, %v1184
    %v1186 = vpop.f32.mrf.mxu0
    %1187 = vmatprep.mubr.bf16.mxu0 0
    %1188 = vmatmul.mubr.bf16.gmra.mxu0 %v1122
    %v1189 = vpop.f32.mrf.mxu0
    %v1190 = vadd.f32 %v1101, %v1189
    %v1191 = vpop.f32.mrf.mxu0
    %v1192 = vpop.f32.mrf.mxu0
    %v1193 = vadd.f32 %v1101, %v1192
    %v1194 = vpop.f32.mrf.mxu0
    %1195 = vmatprep.mubr.bf16.mxu0 0
    %1196 = vmatmul.mubr.bf16.gmra.mxu0 %v1125
    %v1197 = vpop.f32.mrf.mxu0
    %v1198 = vadd.f32 %v1101, %v1197
    %v1199 = vpop.f32.mrf.mxu0
    %v1200 = vpop.f32.mrf.mxu0
    %v1201 = vadd.f32 %v1101, %v1200
    %v1202 = vpop.f32.mrf.mxu0
    %1203 = vmatprep.mubr.bf16.mxu0 0
    %1204 = vmatmul.mubr.bf16.gmra.mxu0 %v1128
    %v1205 = vpop.f32.mrf.mxu0
    %v1206 = vadd.f32 %v1101, %v1205
    %v1207 = vpop.f32.mrf.mxu0
    %v1208 = vpop.f32.mrf.mxu0
    %v1209 = vadd.f32 %v1101, %v1208
    %v1210 = vpop.f32.mrf.mxu0
    %1211 = vmatprep.mubr.bf16.mxu0 0
    %1212 = vmatmul.mubr.bf16.gmra.mxu0 %v1131
    %v1213 = vpop.f32.mrf.mxu0
    %v1214 = vadd.f32 %v1101, %v1213
    %v1215 = vpop.f32.mrf.mxu0
    %v1216 = vpop.f32.mrf.mxu0
    %v1217 = vadd.f32 %v1101, %v1216
    %v1218 = vpop.f32.mrf.mxu0
    %1219 = vmatprep.mubr.bf16.mxu0 0
    %1220 = vmatmul.mubr.bf16.gmra.mxu0 %v1134
    %v1221 = vpop.f32.mrf.mxu0
    %v1222 = vadd.f32 %v1101, %v1221
    %v1223 = vpop.f32.mrf.mxu0
    %v1224 = vpop.f32.mrf.mxu0
    %v1225 = vadd.f32 %v1101, %v1224
    %v1226 = vpop.f32.mrf.mxu0
    %1227 = vmatprep.mubr.bf16.mxu0 0
    %1228 = vmatmul.mubr.bf16.gmra.mxu0 %v1137
    %v1229 = vpop.f32.mrf.mxu0
    %v1230 = vadd.f32 %v1101, %v1229
    %v1231 = vpop.f32.mrf.mxu0
    %v1232 = vpop.f32.mrf.mxu0
    %v1233 = vadd.f32 %v1101, %v1232
    %v1234 = vpop.f32.mrf.mxu0
    %1235 = vdwg.mxu0
    %v1236 = vpack.c.bf16 %v1177, %v1174
    %v1237 = vpack.c.bf16 %v1185, %v1182
    %v1238 = vpack.c.bf16 %v1193, %v1190
    %v1239 = vpack.c.bf16 %v1201, %v1198
    %v1240 = vpack.c.bf16 %v1209, %v1206
    %v1241 = vpack.c.bf16 %v1217, %v1214
    %v1242 = vpack.c.bf16 %v1225, %v1222
    %v1243 = vpack.c.bf16 %v1233, %v1230
    %v1245 = vpack.i.b16 %v226, %v226
    %v1247 = vlaneseq
    %v1248 = vshrl.u32 %v1247, 7
    %v1249 = vsub.s32 0, %v1248
    %v1250 = vrot.slane %v1245, %v1249
    %v1252 = vpack.i.b16 %v227, %v227
    %v1254 = vlaneseq
    %v1255 = vshrl.u32 %v1254, 7
    %v1256 = vsub.s32 0, %v1255
    %v1257 = vrot.slane %v1252, %v1256
    %v1259 = vpack.i.b16 %v228, %v228
    %v1261 = vlaneseq
    %v1262 = vshrl.u32 %v1261, 7
    %v1263 = vsub.s32 0, %v1262
    %v1264 = vrot.slane %v1259, %v1263
    %v1266 = vpack.i.b16 %v229, %v229
    %v1268 = vlaneseq
    %v1269 = vshrl.u32 %v1268, 7
    %v1270 = vsub.s32 0, %v1269
    %v1271 = vrot.slane %v1266, %v1270
    %v1272 = vmul.bf16 %v1236, %v1250
    %v1273 = vmul.bf16 %v1237, %v1250
    %v1274 = vmul.bf16 %v1238, %v1250
    %v1275 = vmul.bf16 %v1239, %v1250
    %v1276 = vmul.bf16 %v1240, %v1250
    %v1277 = vmul.bf16 %v1241, %v1250
    %v1278 = vmul.bf16 %v1242, %v1250
    %v1279 = vmul.bf16 %v1243, %v1250
    %v1280 = vmul.bf16 %v1236, %v1257
    %v1281 = vmul.bf16 %v1237, %v1257
    %v1282 = vmul.bf16 %v1238, %v1257
    %v1283 = vmul.bf16 %v1239, %v1257
    %v1284 = vmul.bf16 %v1240, %v1257
    %v1285 = vmul.bf16 %v1241, %v1257
    %v1286 = vmul.bf16 %v1242, %v1257
    %v1287 = vmul.bf16 %v1243, %v1257
    %v1288 = vmul.bf16 %v1236, %v1264
    %v1289 = vmul.bf16 %v1237, %v1264
    %v1290 = vmul.bf16 %v1238, %v1264
    %v1291 = vmul.bf16 %v1239, %v1264
    %v1292 = vmul.bf16 %v1240, %v1264
    %v1293 = vmul.bf16 %v1241, %v1264
    %v1294 = vmul.bf16 %v1242, %v1264
    %v1295 = vmul.bf16 %v1243, %v1264
    %v1296 = vmul.bf16 %v1236, %v1271
    %v1297 = vmul.bf16 %v1237, %v1271
    %v1298 = vmul.bf16 %v1238, %v1271
    %v1299 = vmul.bf16 %v1239, %v1271
    %v1300 = vmul.bf16 %v1240, %v1271
    %v1301 = vmul.bf16 %v1241, %v1271
    %v1302 = vmul.bf16 %v1242, %v1271
    %v1303 = vmul.bf16 %v1243, %v1271
    %1308 = vrot.lane.b32.xlu0 %v1250, 64
    %v1309 = vpop.permute.xlu0 %1308
    %1310 = vrot.lane.b32.xlu0 %v1257, 64
    %v1311 = vpop.permute.xlu0 %1310
    %1312 = vrot.lane.b32.xlu0 %v1264, 64
    %v1313 = vpop.permute.xlu0 %1312
    %1314 = vrot.lane.b32.xlu0 %v1271, 64
    %v1315 = vpop.permute.xlu0 %1314
    %v1320 = vmul.bf16 %v1236, %v1309
    %v1321 = vmul.bf16 %v1237, %v1309
    %v1322 = vmul.bf16 %v1238, %v1309
    %v1323 = vmul.bf16 %v1239, %v1309
    %v1324 = vmul.bf16 %v1240, %v1309
    %v1325 = vmul.bf16 %v1241, %v1309
    %v1326 = vmul.bf16 %v1242, %v1309
    %v1327 = vmul.bf16 %v1243, %v1309
    %v1328 = vmul.bf16 %v1236, %v1311
    %v1329 = vmul.bf16 %v1237, %v1311
    %v1330 = vmul.bf16 %v1238, %v1311
    %v1331 = vmul.bf16 %v1239, %v1311
    %v1332 = vmul.bf16 %v1240, %v1311
    %v1333 = vmul.bf16 %v1241, %v1311
    %v1334 = vmul.bf16 %v1242, %v1311
    %v1335 = vmul.bf16 %v1243, %v1311
    %v1336 = vmul.bf16 %v1236, %v1313
    %v1337 = vmul.bf16 %v1237, %v1313
    %v1338 = vmul.bf16 %v1238, %v1313
    %v1339 = vmul.bf16 %v1239, %v1313
    %v1340 = vmul.bf16 %v1240, %v1313
    %v1341 = vmul.bf16 %v1241, %v1313
    %v1342 = vmul.bf16 %v1242, %v1313
    %v1343 = vmul.bf16 %v1243, %v1313
    %v1344 = vmul.bf16 %v1236, %v1315
    %v1345 = vmul.bf16 %v1237, %v1315
    %v1346 = vmul.bf16 %v1238, %v1315
    %v1347 = vmul.bf16 %v1239, %v1315
    %v1348 = vmul.bf16 %v1240, %v1315
    %v1349 = vmul.bf16 %v1241, %v1315
    %v1350 = vmul.bf16 %v1242, %v1315
    %v1351 = vmul.bf16 %v1243, %v1315
    %1356 = vrot.lane.b32.xlu0 %v1236, 96
    %v1357 = vpop.permute.xlu0 %1356
    %1358 = vrot.lane.b32.xlu0 %v1237, 96
    %v1359 = vpop.permute.xlu0 %1358
    %1360 = vrot.lane.b32.xlu0 %v1238, 96
    %v1361 = vpop.permute.xlu0 %1360
    %1362 = vrot.lane.b32.xlu0 %v1239, 96
    %v1363 = vpop.permute.xlu0 %1362
    %v1365 = vsel %vm374, %v1272, 0
    %v1368 = vsel %vm374, %v1273, 0
    %v1371 = vsel %vm374, %v1274, 0
    %v1374 = vsel %vm374, %v1275, 0
    %v1377 = vsel %vm374, %v1357, 0
    %v1380 = vsel %vm374, %v1359, 0
    %v1383 = vsel %vm374, %v1361, 0
    %v1386 = vsel %vm374, %v1363, 0
    %1388 = vmatprep.subr.bf16.mxu0 0
    %1389 = vmatpush1.bf16.xpose.msra.mxu0 0
    %1390 = vmatprep.subr.bf16.mxu0 0
    %1391 = vmatpush1.bf16.xpose.msra.mxu0 0
    %1392 = vmatprep.subr.bf16.mxu0 0
    %1393 = vmatpush1.bf16.xpose.msra.mxu0 0
    %1394 = vmatprep.subr.bf16.mxu0 0
    %1395 = vmatpush1.bf16.xpose.msra.mxu0 0
    %1396 = vmatprep.subr.bf16.mxu0 0
    %1397 = vmatpush1.bf16.xpose.msra.mxu0 %v1386
    %1398 = vmatprep.subr.bf16.mxu0 0
    %1399 = vmatpush1.bf16.xpose.msra.mxu0 %v1383
    %1400 = vmatprep.subr.bf16.mxu0 0
    %1401 = vmatpush1.bf16.xpose.msra.mxu0 %v1380
    %1402 = vmatprep.subr.bf16.mxu0 0
    %1403 = vmatpush1.bf16.xpose.msra.mxu0 %v1377
    %1404 = vmatprep.subr.bf16.mxu0 0
    %1405 = vmatpush2.bf16.xpose.msra.mxu0 0
    %1406 = vmatprep.subr.bf16.mxu0 0
    %1407 = vmatpush2.bf16.xpose.msra.mxu0 0
    %1408 = vmatprep.subr.bf16.mxu0 0
    %1409 = vmatpush2.bf16.xpose.msra.mxu0 0
    %1410 = vmatprep.subr.bf16.mxu0 0
    %1411 = vmatpush2.bf16.xpose.msra.mxu0 0
    %1412 = vmatprep.subr.bf16.mxu0 0
    %1413 = vmatpush2.bf16.xpose.msra.mxu0 0
    %1414 = vmatprep.subr.bf16.mxu0 0
    %1415 = vmatpush2.bf16.xpose.msra.mxu0 0
    %1416 = vmatprep.subr.bf16.mxu0 0
    %1417 = vmatpush2.bf16.xpose.msra.mxu0 0
    %1418 = vmatprep.subr.bf16.mxu0 0
    %1419 = vmatpush2.bf16.xpose.msra.mxu0 0
    %1420 = vmatprep.mubr.bf16.mxu0 0
    %1421 = vmatmul.mubr.bf16.gmra.mxu0 %v1365
    %v1422 = vpop.f32.mrf.mxu0
    %v1423 = vadd.f32 0.0, %v1422
    %v1424 = vpop.f32.mrf.mxu0
    %v1425 = vpop.f32.mrf.mxu0
    %v1426 = vadd.f32 0.0, %v1425
    %v1427 = vpop.f32.mrf.mxu0
    %1428 = vmatprep.mubr.bf16.mxu0 0
    %1429 = vmatmul.mubr.bf16.gmra.mxu0 %v1368
    %v1430 = vpop.f32.mrf.mxu0
    %v1431 = vadd.f32 0.0, %v1430
    %v1432 = vpop.f32.mrf.mxu0
    %v1433 = vpop.f32.mrf.mxu0
    %v1434 = vadd.f32 0.0, %v1433
    %v1435 = vpop.f32.mrf.mxu0
    %1436 = vmatprep.mubr.bf16.mxu0 0
    %1437 = vmatmul.mubr.bf16.gmra.mxu0 %v1371
    %v1438 = vpop.f32.mrf.mxu0
    %v1439 = vadd.f32 0.0, %v1438
    %v1440 = vpop.f32.mrf.mxu0
    %v1441 = vpop.f32.mrf.mxu0
    %v1442 = vadd.f32 0.0, %v1441
    %v1443 = vpop.f32.mrf.mxu0
    %1444 = vmatprep.mubr.bf16.mxu0 0
    %1445 = vmatmul.mubr.bf16.gmra.mxu0 %v1374
    %v1446 = vpop.f32.mrf.mxu0
    %v1447 = vadd.f32 0.0, %v1446
    %v1448 = vpop.f32.mrf.mxu0
    %v1449 = vpop.f32.mrf.mxu0
    %v1450 = vadd.f32 0.0, %v1449
    %v1451 = vpop.f32.mrf.mxu0
    %1452 = vdwg.mxu0
    %1457 = vrot.lane.b32.xlu0 %v1240, 96
    %v1458 = vpop.permute.xlu0 %1457
    %1459 = vrot.lane.b32.xlu0 %v1241, 96
    %v1460 = vpop.permute.xlu0 %1459
    %1461 = vrot.lane.b32.xlu0 %v1242, 96
    %v1462 = vpop.permute.xlu0 %1461
    %1463 = vrot.lane.b32.xlu0 %v1243, 96
    %v1464 = vpop.permute.xlu0 %1463
    %v1466 = vsel %vm374, %v1276, 0
    %v1469 = vsel %vm374, %v1277, 0
    %v1472 = vsel %vm374, %v1278, 0
    %v1475 = vsel %vm374, %v1279, 0
    %v1478 = vsel %vm374, %v1458, 0
    %v1481 = vsel %vm374, %v1460, 0
    %v1484 = vsel %vm374, %v1462, 0
    %v1487 = vsel %vm374, %v1464, 0
    %1489 = vmatprep.subr.bf16.mxu0 0
    %1490 = vmatpush1.bf16.xpose.msra.mxu0 0
    %1491 = vmatprep.subr.bf16.mxu0 0
    %1492 = vmatpush1.bf16.xpose.msra.mxu0 0
    %1493 = vmatprep.subr.bf16.mxu0 0
    %1494 = vmatpush1.bf16.xpose.msra.mxu0 0
    %1495 = vmatprep.subr.bf16.mxu0 0
    %1496 = vmatpush1.bf16.xpose.msra.mxu0 0
    %1497 = vmatprep.subr.bf16.mxu0 0
    %1498 = vmatpush1.bf16.xpose.msra.mxu0 %v1487
    %1499 = vmatprep.subr.bf16.mxu0 0
    %1500 = vmatpush1.bf16.xpose.msra.mxu0 %v1484
    %1501 = vmatprep.subr.bf16.mxu0 0
    %1502 = vmatpush1.bf16.xpose.msra.mxu0 %v1481
    %1503 = vmatprep.subr.bf16.mxu0 0
    %1504 = vmatpush1.bf16.xpose.msra.mxu0 %v1478
    %1505 = vmatprep.subr.bf16.mxu0 0
    %1506 = vmatpush2.bf16.xpose.msra.mxu0 0
    %1507 = vmatprep.subr.bf16.mxu0 0
    %1508 = vmatpush2.bf16.xpose.msra.mxu0 0
    %1509 = vmatprep.subr.bf16.mxu0 0
    %1510 = vmatpush2.bf16.xpose.msra.mxu0 0
    %1511 = vmatprep.subr.bf16.mxu0 0
    %1512 = vmatpush2.bf16.xpose.msra.mxu0 0
    %1513 = vmatprep.subr.bf16.mxu0 0
    %1514 = vmatpush2.bf16.xpose.msra.mxu0 0
    %1515 = vmatprep.subr.bf16.mxu0 0
    %1516 = vmatpush2.bf16.xpose.msra.mxu0 0
    %1517 = vmatprep.subr.bf16.mxu0 0
    %1518 = vmatpush2.bf16.xpose.msra.mxu0 0
    %1519 = vmatprep.subr.bf16.mxu0 0
    %1520 = vmatpush2.bf16.xpose.msra.mxu0 0
    %1521 = vmatprep.mubr.bf16.mxu0 0
    %1522 = vmatmul.mubr.bf16.gmra.mxu0 %v1466
    %v1523 = vpop.f32.mrf.mxu0
    %v1524 = vadd.f32 0.0, %v1523
    %v1525 = vpop.f32.mrf.mxu0
    %v1526 = vpop.f32.mrf.mxu0
    %v1527 = vadd.f32 0.0, %v1526
    %v1528 = vpop.f32.mrf.mxu0
    %1529 = vmatprep.mubr.bf16.mxu0 0
    %1530 = vmatmul.mubr.bf16.gmra.mxu0 %v1469
    %v1531 = vpop.f32.mrf.mxu0
    %v1532 = vadd.f32 0.0, %v1531
    %v1533 = vpop.f32.mrf.mxu0
    %v1534 = vpop.f32.mrf.mxu0
    %v1535 = vadd.f32 0.0, %v1534
    %v1536 = vpop.f32.mrf.mxu0
    %1537 = vmatprep.mubr.bf16.mxu0 0
    %1538 = vmatmul.mubr.bf16.gmra.mxu0 %v1472
    %v1539 = vpop.f32.mrf.mxu0
    %v1540 = vadd.f32 0.0, %v1539
    %v1541 = vpop.f32.mrf.mxu0
    %v1542 = vpop.f32.mrf.mxu0
    %v1543 = vadd.f32 0.0, %v1542
    %v1544 = vpop.f32.mrf.mxu0
    %1545 = vmatprep.mubr.bf16.mxu0 0
    %1546 = vmatmul.mubr.bf16.gmra.mxu0 %v1475
    %v1547 = vpop.f32.mrf.mxu0
    %v1548 = vadd.f32 0.0, %v1547
    %v1549 = vpop.f32.mrf.mxu0
    %v1550 = vpop.f32.mrf.mxu0
    %v1551 = vadd.f32 0.0, %v1550
    %v1552 = vpop.f32.mrf.mxu0
    %1553 = vdwg.mxu0
    %v1555 = vsel %vm374, %v1280, 0
    %v1558 = vsel %vm374, %v1281, 0
    %v1561 = vsel %vm374, %v1282, 0
    %v1564 = vsel %vm374, %v1283, 0
    %1566 = vmatprep.subr.bf16.mxu0 0
    %1567 = vmatpush1.bf16.xpose.msra.mxu0 0
    %1568 = vmatprep.subr.bf16.mxu0 0
    %1569 = vmatpush1.bf16.xpose.msra.mxu0 0
    %1570 = vmatprep.subr.bf16.mxu0 0
    %1571 = vmatpush1.bf16.xpose.msra.mxu0 0
    %1572 = vmatprep.subr.bf16.mxu0 0
    %1573 = vmatpush1.bf16.xpose.msra.mxu0 0
    %1574 = vmatprep.subr.bf16.mxu0 0
    %1575 = vmatpush1.bf16.xpose.msra.mxu0 %v1386
    %1576 = vmatprep.subr.bf16.mxu0 0
    %1577 = vmatpush1.bf16.xpose.msra.mxu0 %v1383
    %1578 = vmatprep.subr.bf16.mxu0 0
    %1579 = vmatpush1.bf16.xpose.msra.mxu0 %v1380
    %1580 = vmatprep.subr.bf16.mxu0 0
    %1581 = vmatpush1.bf16.xpose.msra.mxu0 %v1377
    %1582 = vmatprep.subr.bf16.mxu0 0
    %1583 = vmatpush2.bf16.xpose.msra.mxu0 0
    %1584 = vmatprep.subr.bf16.mxu0 0
    %1585 = vmatpush2.bf16.xpose.msra.mxu0 0
    %1586 = vmatprep.subr.bf16.mxu0 0
    %1587 = vmatpush2.bf16.xpose.msra.mxu0 0
    %1588 = vmatprep.subr.bf16.mxu0 0
    %1589 = vmatpush2.bf16.xpose.msra.mxu0 0
    %1590 = vmatprep.subr.bf16.mxu0 0
    %1591 = vmatpush2.bf16.xpose.msra.mxu0 0
    %1592 = vmatprep.subr.bf16.mxu0 0
    %1593 = vmatpush2.bf16.xpose.msra.mxu0 0
    %1594 = vmatprep.subr.bf16.mxu0 0
    %1595 = vmatpush2.bf16.xpose.msra.mxu0 0
    %1596 = vmatprep.subr.bf16.mxu0 0
    %1597 = vmatpush2.bf16.xpose.msra.mxu0 0
    %1598 = vmatprep.mubr.bf16.mxu0 0
    %1599 = vmatmul.mubr.bf16.gmra.mxu0 %v1555
    %v1600 = vpop.f32.mrf.mxu0
    %v1601 = vadd.f32 0.0, %v1600
    %v1602 = vpop.f32.mrf.mxu0
    %v1603 = vpop.f32.mrf.mxu0
    %v1604 = vadd.f32 0.0, %v1603
    %v1605 = vpop.f32.mrf.mxu0
    %1606 = vmatprep.mubr.bf16.mxu0 0
    %1607 = vmatmul.mubr.bf16.gmra.mxu0 %v1558
    %v1608 = vpop.f32.mrf.mxu0
    %v1609 = vadd.f32 0.0, %v1608
    %v1610 = vpop.f32.mrf.mxu0
    %v1611 = vpop.f32.mrf.mxu0
    %v1612 = vadd.f32 0.0, %v1611
    %v1613 = vpop.f32.mrf.mxu0
    %1614 = vmatprep.mubr.bf16.mxu0 0
    %1615 = vmatmul.mubr.bf16.gmra.mxu0 %v1561
    %v1616 = vpop.f32.mrf.mxu0
    %v1617 = vadd.f32 0.0, %v1616
    %v1618 = vpop.f32.mrf.mxu0
    %v1619 = vpop.f32.mrf.mxu0
    %v1620 = vadd.f32 0.0, %v1619
    %v1621 = vpop.f32.mrf.mxu0
    %1622 = vmatprep.mubr.bf16.mxu0 0
    %1623 = vmatmul.mubr.bf16.gmra.mxu0 %v1564
    %v1624 = vpop.f32.mrf.mxu0
    %v1625 = vadd.f32 0.0, %v1624
    %v1626 = vpop.f32.mrf.mxu0
    %v1627 = vpop.f32.mrf.mxu0
    %v1628 = vadd.f32 0.0, %v1627
    %v1629 = vpop.f32.mrf.mxu0
    %1630 = vdwg.mxu0
    %v1632 = vsel %vm374, %v1284, 0
    %v1635 = vsel %vm374, %v1285, 0
    %v1638 = vsel %vm374, %v1286, 0
    %v1641 = vsel %vm374, %v1287, 0
    %1643 = vmatprep.subr.bf16.mxu0 0
    %1644 = vmatpush1.bf16.xpose.msra.mxu0 0
    %1645 = vmatprep.subr.bf16.mxu0 0
    %1646 = vmatpush1.bf16.xpose.msra.mxu0 0
    %1647 = vmatprep.subr.bf16.mxu0 0
    %1648 = vmatpush1.bf16.xpose.msra.mxu0 0
    %1649 = vmatprep.subr.bf16.mxu0 0
    %1650 = vmatpush1.bf16.xpose.msra.mxu0 0
    %1651 = vmatprep.subr.bf16.mxu0 0
    %1652 = vmatpush1.bf16.xpose.msra.mxu0 %v1487
    %1653 = vmatprep.subr.bf16.mxu0 0
    %1654 = vmatpush1.bf16.xpose.msra.mxu0 %v1484
    %1655 = vmatprep.subr.bf16.mxu0 0
    %1656 = vmatpush1.bf16.xpose.msra.mxu0 %v1481
    %1657 = vmatprep.subr.bf16.mxu0 0
    %1658 = vmatpush1.bf16.xpose.msra.mxu0 %v1478
    %1659 = vmatprep.subr.bf16.mxu0 0
    %1660 = vmatpush2.bf16.xpose.msra.mxu0 0
    %1661 = vmatprep.subr.bf16.mxu0 0
    %1662 = vmatpush2.bf16.xpose.msra.mxu0 0
    %1663 = vmatprep.subr.bf16.mxu0 0
    %1664 = vmatpush2.bf16.xpose.msra.mxu0 0
    %1665 = vmatprep.subr.bf16.mxu0 0
    %1666 = vmatpush2.bf16.xpose.msra.mxu0 0
    %1667 = vmatprep.subr.bf16.mxu0 0
    %1668 = vmatpush2.bf16.xpose.msra.mxu0 0
    %1669 = vmatprep.subr.bf16.mxu0 0
    %1670 = vmatpush2.bf16.xpose.msra.mxu0 0
    %1671 = vmatprep.subr.bf16.mxu0 0
    %1672 = vmatpush2.bf16.xpose.msra.mxu0 0
    %1673 = vmatprep.subr.bf16.mxu0 0
    %1674 = vmatpush2.bf16.xpose.msra.mxu0 0
    %1675 = vmatprep.mubr.bf16.mxu0 0
    %1676 = vmatmul.mubr.bf16.gmra.mxu0 %v1632
    %v1677 = vpop.f32.mrf.mxu0
    %v1678 = vadd.f32 0.0, %v1677
    %v1679 = vpop.f32.mrf.mxu0
    %v1680 = vpop.f32.mrf.mxu0
    %v1681 = vadd.f32 0.0, %v1680
    %v1682 = vpop.f32.mrf.mxu0
    %1683 = vmatprep.mubr.bf16.mxu0 0
    %1684 = vmatmul.mubr.bf16.gmra.mxu0 %v1635
    %v1685 = vpop.f32.mrf.mxu0
    %v1686 = vadd.f32 0.0, %v1685
    %v1687 = vpop.f32.mrf.mxu0
    %v1688 = vpop.f32.mrf.mxu0
    %v1689 = vadd.f32 0.0, %v1688
    %v1690 = vpop.f32.mrf.mxu0
    %1691 = vmatprep.mubr.bf16.mxu0 0
    %1692 = vmatmul.mubr.bf16.gmra.mxu0 %v1638
    %v1693 = vpop.f32.mrf.mxu0
    %v1694 = vadd.f32 0.0, %v1693
    %v1695 = vpop.f32.mrf.mxu0
    %v1696 = vpop.f32.mrf.mxu0
    %v1697 = vadd.f32 0.0, %v1696
    %v1698 = vpop.f32.mrf.mxu0
    %1699 = vmatprep.mubr.bf16.mxu0 0
    %1700 = vmatmul.mubr.bf16.gmra.mxu0 %v1641
    %v1701 = vpop.f32.mrf.mxu0
    %v1702 = vadd.f32 0.0, %v1701
    %v1703 = vpop.f32.mrf.mxu0
    %v1704 = vpop.f32.mrf.mxu0
    %v1705 = vadd.f32 0.0, %v1704
    %v1706 = vpop.f32.mrf.mxu0
    %1707 = vdwg.mxu0
    %v1709 = vsel %vm374, %v1288, 0
    %v1712 = vsel %vm374, %v1289, 0
    %v1715 = vsel %vm374, %v1290, 0
    %v1718 = vsel %vm374, %v1291, 0
    %1720 = vmatprep.subr.bf16.mxu0 0
    %1721 = vmatpush1.bf16.xpose.msra.mxu0 0
    %1722 = vmatprep.subr.bf16.mxu0 0
    %1723 = vmatpush1.bf16.xpose.msra.mxu0 0
    %1724 = vmatprep.subr.bf16.mxu0 0
    %1725 = vmatpush1.bf16.xpose.msra.mxu0 0
    %1726 = vmatprep.subr.bf16.mxu0 0
    %1727 = vmatpush1.bf16.xpose.msra.mxu0 0
    %1728 = vmatprep.subr.bf16.mxu0 0
    %1729 = vmatpush1.bf16.xpose.msra.mxu0 %v1386
    %1730 = vmatprep.subr.bf16.mxu0 0
    %1731 = vmatpush1.bf16.xpose.msra.mxu0 %v1383
    %1732 = vmatprep.subr.bf16.mxu0 0
    %1733 = vmatpush1.bf16.xpose.msra.mxu0 %v1380
    %1734 = vmatprep.subr.bf16.mxu0 0
    %1735 = vmatpush1.bf16.xpose.msra.mxu0 %v1377
    %1736 = vmatprep.subr.bf16.mxu0 0
    %1737 = vmatpush2.bf16.xpose.msra.mxu0 0
    %1738 = vmatprep.subr.bf16.mxu0 0
    %1739 = vmatpush2.bf16.xpose.msra.mxu0 0
    %1740 = vmatprep.subr.bf16.mxu0 0
    %1741 = vmatpush2.bf16.xpose.msra.mxu0 0
    %1742 = vmatprep.subr.bf16.mxu0 0
    %1743 = vmatpush2.bf16.xpose.msra.mxu0 0
    %1744 = vmatprep.subr.bf16.mxu0 0
    %1745 = vmatpush2.bf16.xpose.msra.mxu0 0
    %1746 = vmatprep.subr.bf16.mxu0 0
    %1747 = vmatpush2.bf16.xpose.msra.mxu0 0
    %1748 = vmatprep.subr.bf16.mxu0 0
    %1749 = vmatpush2.bf16.xpose.msra.mxu0 0
    %1750 = vmatprep.subr.bf16.mxu0 0
    %1751 = vmatpush2.bf16.xpose.msra.mxu0 0
    %1752 = vmatprep.mubr.bf16.mxu0 0
    %1753 = vmatmul.mubr.bf16.gmra.mxu0 %v1709
    %v1754 = vpop.f32.mrf.mxu0
    %v1755 = vadd.f32 0.0, %v1754
    %v1756 = vpop.f32.mrf.mxu0
    %v1757 = vpop.f32.mrf.mxu0
    %v1758 = vadd.f32 0.0, %v1757
    %v1759 = vpop.f32.mrf.mxu0
    %1760 = vmatprep.mubr.bf16.mxu0 0
    %1761 = vmatmul.mubr.bf16.gmra.mxu0 %v1712
    %v1762 = vpop.f32.mrf.mxu0
    %v1763 = vadd.f32 0.0, %v1762
    %v1764 = vpop.f32.mrf.mxu0
    %v1765 = vpop.f32.mrf.mxu0
    %v1766 = vadd.f32 0.0, %v1765
    %v1767 = vpop.f32.mrf.mxu0
    %1768 = vmatprep.mubr.bf16.mxu0 0
    %1769 = vmatmul.mubr.bf16.gmra.mxu0 %v1715
    %v1770 = vpop.f32.mrf.mxu0
    %v1771 = vadd.f32 0.0, %v1770
    %v1772 = vpop.f32.mrf.mxu0
    %v1773 = vpop.f32.mrf.mxu0
    %v1774 = vadd.f32 0.0, %v1773
    %v1775 = vpop.f32.mrf.mxu0
    %1776 = vmatprep.mubr.bf16.mxu0 0
    %1777 = vmatmul.mubr.bf16.gmra.mxu0 %v1718
    %v1778 = vpop.f32.mrf.mxu0
    %v1779 = vadd.f32 0.0, %v1778
    %v1780 = vpop.f32.mrf.mxu0
    %v1781 = vpop.f32.mrf.mxu0
    %v1782 = vadd.f32 0.0, %v1781
    %v1783 = vpop.f32.mrf.mxu0
    %1784 = vdwg.mxu0
    %v1786 = vsel %vm374, %v1292, 0
    %v1789 = vsel %vm374, %v1293, 0
    %v1792 = vsel %vm374, %v1294, 0
    %v1795 = vsel %vm374, %v1295, 0
    %1797 = vmatprep.subr.bf16.mxu0 0
    %1798 = vmatpush1.bf16.xpose.msra.mxu0 0
    %1799 = vmatprep.subr.bf16.mxu0 0
    %1800 = vmatpush1.bf16.xpose.msra.mxu0 0
    %1801 = vmatprep.subr.bf16.mxu0 0
    %1802 = vmatpush1.bf16.xpose.msra.mxu0 0
    %1803 = vmatprep.subr.bf16.mxu0 0
    %1804 = vmatpush1.bf16.xpose.msra.mxu0 0
    %1805 = vmatprep.subr.bf16.mxu0 0
    %1806 = vmatpush1.bf16.xpose.msra.mxu0 %v1487
    %1807 = vmatprep.subr.bf16.mxu0 0
    %1808 = vmatpush1.bf16.xpose.msra.mxu0 %v1484
    %1809 = vmatprep.subr.bf16.mxu0 0
    %1810 = vmatpush1.bf16.xpose.msra.mxu0 %v1481
    %1811 = vmatprep.subr.bf16.mxu0 0
    %1812 = vmatpush1.bf16.xpose.msra.mxu0 %v1478
    %1813 = vmatprep.subr.bf16.mxu0 0
    %1814 = vmatpush2.bf16.xpose.msra.mxu0 0
    %1815 = vmatprep.subr.bf16.mxu0 0
    %1816 = vmatpush2.bf16.xpose.msra.mxu0 0
    %1817 = vmatprep.subr.bf16.mxu0 0
    %1818 = vmatpush2.bf16.xpose.msra.mxu0 0
    %1819 = vmatprep.subr.bf16.mxu0 0
    %1820 = vmatpush2.bf16.xpose.msra.mxu0 0
    %1821 = vmatprep.subr.bf16.mxu0 0
    %1822 = vmatpush2.bf16.xpose.msra.mxu0 0
    %1823 = vmatprep.subr.bf16.mxu0 0
    %1824 = vmatpush2.bf16.xpose.msra.mxu0 0
    %1825 = vmatprep.subr.bf16.mxu0 0
    %1826 = vmatpush2.bf16.xpose.msra.mxu0 0
    %1827 = vmatprep.subr.bf16.mxu0 0
    %1828 = vmatpush2.bf16.xpose.msra.mxu0 0
    %1829 = vmatprep.mubr.bf16.mxu0 0
    %1830 = vmatmul.mubr.bf16.gmra.mxu0 %v1786
    %v1831 = vpop.f32.mrf.mxu0
    %v1832 = vadd.f32 0.0, %v1831
    %v1833 = vpop.f32.mrf.mxu0
    %v1834 = vpop.f32.mrf.mxu0
    %v1835 = vadd.f32 0.0, %v1834
    %v1836 = vpop.f32.mrf.mxu0
    %1837 = vmatprep.mubr.bf16.mxu0 0
    %1838 = vmatmul.mubr.bf16.gmra.mxu0 %v1789
    %v1839 = vpop.f32.mrf.mxu0
    %v1840 = vadd.f32 0.0, %v1839
    %v1841 = vpop.f32.mrf.mxu0
    %v1842 = vpop.f32.mrf.mxu0
    %v1843 = vadd.f32 0.0, %v1842
    %v1844 = vpop.f32.mrf.mxu0
    %1845 = vmatprep.mubr.bf16.mxu0 0
    %1846 = vmatmul.mubr.bf16.gmra.mxu0 %v1792
    %v1847 = vpop.f32.mrf.mxu0
    %v1848 = vadd.f32 0.0, %v1847
    %v1849 = vpop.f32.mrf.mxu0
    %v1850 = vpop.f32.mrf.mxu0
    %v1851 = vadd.f32 0.0, %v1850
    %v1852 = vpop.f32.mrf.mxu0
    %1853 = vmatprep.mubr.bf16.mxu0 0
    %1854 = vmatmul.mubr.bf16.gmra.mxu0 %v1795
    %v1855 = vpop.f32.mrf.mxu0
    %v1856 = vadd.f32 0.0, %v1855
    %v1857 = vpop.f32.mrf.mxu0
    %v1858 = vpop.f32.mrf.mxu0
    %v1859 = vadd.f32 0.0, %v1858
    %v1860 = vpop.f32.mrf.mxu0
    %1861 = vdwg.mxu0
    %v1863 = vsel %vm374, %v1296, 0
    %v1866 = vsel %vm374, %v1297, 0
    %v1869 = vsel %vm374, %v1298, 0
    %v1872 = vsel %vm374, %v1299, 0
    %1874 = vmatprep.subr.bf16.mxu0 0
    %1875 = vmatpush1.bf16.xpose.msra.mxu0 0
    %1876 = vmatprep.subr.bf16.mxu0 0
    %1877 = vmatpush1.bf16.xpose.msra.mxu0 0
    %1878 = vmatprep.subr.bf16.mxu0 0
    %1879 = vmatpush1.bf16.xpose.msra.mxu0 0
    %1880 = vmatprep.subr.bf16.mxu0 0
    %1881 = vmatpush1.bf16.xpose.msra.mxu0 0
    %1882 = vmatprep.subr.bf16.mxu0 0
    %1883 = vmatpush1.bf16.xpose.msra.mxu0 %v1386
    %1884 = vmatprep.subr.bf16.mxu0 0
    %1885 = vmatpush1.bf16.xpose.msra.mxu0 %v1383
    %1886 = vmatprep.subr.bf16.mxu0 0
    %1887 = vmatpush1.bf16.xpose.msra.mxu0 %v1380
    %1888 = vmatprep.subr.bf16.mxu0 0
    %1889 = vmatpush1.bf16.xpose.msra.mxu0 %v1377
    %1890 = vmatprep.subr.bf16.mxu0 0
    %1891 = vmatpush2.bf16.xpose.msra.mxu0 0
    %1892 = vmatprep.subr.bf16.mxu0 0
    %1893 = vmatpush2.bf16.xpose.msra.mxu0 0
    %1894 = vmatprep.subr.bf16.mxu0 0
    %1895 = vmatpush2.bf16.xpose.msra.mxu0 0
    %1896 = vmatprep.subr.bf16.mxu0 0
    %1897 = vmatpush2.bf16.xpose.msra.mxu0 0
    %1898 = vmatprep.subr.bf16.mxu0 0
    %1899 = vmatpush2.bf16.xpose.msra.mxu0 0
    %1900 = vmatprep.subr.bf16.mxu0 0
    %1901 = vmatpush2.bf16.xpose.msra.mxu0 0
    %1902 = vmatprep.subr.bf16.mxu0 0
    %1903 = vmatpush2.bf16.xpose.msra.mxu0 0
    %1904 = vmatprep.subr.bf16.mxu0 0
    %1905 = vmatpush2.bf16.xpose.msra.mxu0 0
    %1906 = vmatprep.mubr.bf16.mxu0 0
    %1907 = vmatmul.mubr.bf16.gmra.mxu0 %v1863
    %v1908 = vpop.f32.mrf.mxu0
    %v1909 = vadd.f32 0.0, %v1908
    %v1910 = vpop.f32.mrf.mxu0
    %v1911 = vpop.f32.mrf.mxu0
    %v1912 = vadd.f32 0.0, %v1911
    %v1913 = vpop.f32.mrf.mxu0
    %1914 = vmatprep.mubr.bf16.mxu0 0
    %1915 = vmatmul.mubr.bf16.gmra.mxu0 %v1866
    %v1916 = vpop.f32.mrf.mxu0
    %v1917 = vadd.f32 0.0, %v1916
    %v1918 = vpop.f32.mrf.mxu0
    %v1919 = vpop.f32.mrf.mxu0
    %v1920 = vadd.f32 0.0, %v1919
    %v1921 = vpop.f32.mrf.mxu0
    %1922 = vmatprep.mubr.bf16.mxu0 0
    %1923 = vmatmul.mubr.bf16.gmra.mxu0 %v1869
    %v1924 = vpop.f32.mrf.mxu0
    %v1925 = vadd.f32 0.0, %v1924
    %v1926 = vpop.f32.mrf.mxu0
    %v1927 = vpop.f32.mrf.mxu0
    %v1928 = vadd.f32 0.0, %v1927
    %v1929 = vpop.f32.mrf.mxu0
    %1930 = vmatprep.mubr.bf16.mxu0 0
    %1931 = vmatmul.mubr.bf16.gmra.mxu0 %v1872
    %v1932 = vpop.f32.mrf.mxu0
    %v1933 = vadd.f32 0.0, %v1932
    %v1934 = vpop.f32.mrf.mxu0
    %v1935 = vpop.f32.mrf.mxu0
    %v1936 = vadd.f32 0.0, %v1935
    %v1937 = vpop.f32.mrf.mxu0
    %1938 = vdwg.mxu0
    %v1940 = vsel %vm374, %v1300, 0
    %v1943 = vsel %vm374, %v1301, 0
    %v1946 = vsel %vm374, %v1302, 0
    %v1949 = vsel %vm374, %v1303, 0
    %1951 = vmatprep.subr.bf16.mxu0 0
    %1952 = vmatpush1.bf16.xpose.msra.mxu0 0
    %1953 = vmatprep.subr.bf16.mxu0 0
    %1954 = vmatpush1.bf16.xpose.msra.mxu0 0
    %1955 = vmatprep.subr.bf16.mxu0 0
    %1956 = vmatpush1.bf16.xpose.msra.mxu0 0
    %1957 = vmatprep.subr.bf16.mxu0 0
    %1958 = vmatpush1.bf16.xpose.msra.mxu0 0
    %1959 = vmatprep.subr.bf16.mxu0 0
    %1960 = vmatpush1.bf16.xpose.msra.mxu0 %v1487
    %1961 = vmatprep.subr.bf16.mxu0 0
    %1962 = vmatpush1.bf16.xpose.msra.mxu0 %v1484
    %1963 = vmatprep.subr.bf16.mxu0 0
    %1964 = vmatpush1.bf16.xpose.msra.mxu0 %v1481
    %1965 = vmatprep.subr.bf16.mxu0 0
    %1966 = vmatpush1.bf16.xpose.msra.mxu0 %v1478
    %1967 = vmatprep.subr.bf16.mxu0 0
    %1968 = vmatpush2.bf16.xpose.msra.mxu0 0
    %1969 = vmatprep.subr.bf16.mxu0 0
    %1970 = vmatpush2.bf16.xpose.msra.mxu0 0
    %1971 = vmatprep.subr.bf16.mxu0 0
    %1972 = vmatpush2.bf16.xpose.msra.mxu0 0
    %1973 = vmatprep.subr.bf16.mxu0 0
    %1974 = vmatpush2.bf16.xpose.msra.mxu0 0
    %1975 = vmatprep.subr.bf16.mxu0 0
    %1976 = vmatpush2.bf16.xpose.msra.mxu0 0
    %1977 = vmatprep.subr.bf16.mxu0 0
    %1978 = vmatpush2.bf16.xpose.msra.mxu0 0
    %1979 = vmatprep.subr.bf16.mxu0 0
    %1980 = vmatpush2.bf16.xpose.msra.mxu0 0
    %1981 = vmatprep.subr.bf16.mxu0 0
    %1982 = vmatpush2.bf16.xpose.msra.mxu0 0
    %1983 = vmatprep.mubr.bf16.mxu0 0
    %1984 = vmatmul.mubr.bf16.gmra.mxu0 %v1940
    %v1985 = vpop.f32.mrf.mxu0
    %v1986 = vadd.f32 0.0, %v1985
    %v1987 = vpop.f32.mrf.mxu0
    %v1988 = vpop.f32.mrf.mxu0
    %v1989 = vadd.f32 0.0, %v1988
    %v1990 = vpop.f32.mrf.mxu0
    %1991 = vmatprep.mubr.bf16.mxu0 0
    %1992 = vmatmul.mubr.bf16.gmra.mxu0 %v1943
    %v1993 = vpop.f32.mrf.mxu0
    %v1994 = vadd.f32 0.0, %v1993
    %v1995 = vpop.f32.mrf.mxu0
    %v1996 = vpop.f32.mrf.mxu0
    %v1997 = vadd.f32 0.0, %v1996
    %v1998 = vpop.f32.mrf.mxu0
    %1999 = vmatprep.mubr.bf16.mxu0 0
    %2000 = vmatmul.mubr.bf16.gmra.mxu0 %v1946
    %v2001 = vpop.f32.mrf.mxu0
    %v2002 = vadd.f32 0.0, %v2001
    %v2003 = vpop.f32.mrf.mxu0
    %v2004 = vpop.f32.mrf.mxu0
    %v2005 = vadd.f32 0.0, %v2004
    %v2006 = vpop.f32.mrf.mxu0
    %2007 = vmatprep.mubr.bf16.mxu0 0
    %2008 = vmatmul.mubr.bf16.gmra.mxu0 %v1949
    %v2009 = vpop.f32.mrf.mxu0
    %v2010 = vadd.f32 0.0, %v2009
    %v2011 = vpop.f32.mrf.mxu0
    %v2012 = vpop.f32.mrf.mxu0
    %v2013 = vadd.f32 0.0, %v2012
    %v2014 = vpop.f32.mrf.mxu0
    %2015 = vdwg.mxu0
    %vm2016 = vcmask 523264
    %v2017 = vsel %vm2016, %v1423, -inf
    %2018 = vmax.xlane.f32.xlu0 %v2017
    %v2019 = vpop.xlane.xlu0 %2018
    %v2020 = vsel %vm2016, %v1426, -inf
    %2021 = vmax.xlane.f32.xlu0 %v2020
    %v2022 = vpop.xlane.xlu0 %2021
    %v2023 = vsel %vm2016, %v1431, -inf
    %2024 = vmax.xlane.f32.xlu0 %v2023
    %v2025 = vpop.xlane.xlu0 %2024
    %v2026 = vsel %vm2016, %v1434, -inf
    %2027 = vmax.xlane.f32.xlu0 %v2026
    %v2028 = vpop.xlane.xlu0 %2027
    %v2029 = vsel %vm2016, %v1439, -inf
    %2030 = vmax.xlane.f32.xlu0 %v2029
    %v2031 = vpop.xlane.xlu0 %2030
    %v2032 = vsel %vm2016, %v1442, -inf
    %2033 = vmax.xlane.f32.xlu0 %v2032
    %v2034 = vpop.xlane.xlu0 %2033
    %v2035 = vsel %vm2016, %v1447, -inf
    %2036 = vmax.xlane.f32.xlu0 %v2035
    %v2037 = vpop.xlane.xlu0 %2036
    %v2038 = vsel %vm2016, %v1450, -inf
    %2039 = vmax.xlane.f32.xlu0 %v2038
    %v2040 = vpop.xlane.xlu0 %2039
    %v2041 = vsel %vm2016, %v1524, -inf
    %2042 = vmax.xlane.f32.xlu0 %v2041
    %v2043 = vpop.xlane.xlu0 %2042
    %v2044 = vsel %vm2016, %v1527, -inf
    %2045 = vmax.xlane.f32.xlu0 %v2044
    %v2046 = vpop.xlane.xlu0 %2045
    %v2047 = vsel %vm2016, %v1532, -inf
    %2048 = vmax.xlane.f32.xlu0 %v2047
    %v2049 = vpop.xlane.xlu0 %2048
    %v2050 = vsel %vm2016, %v1535, -inf
    %2051 = vmax.xlane.f32.xlu0 %v2050
    %v2052 = vpop.xlane.xlu0 %2051
    %v2053 = vsel %vm2016, %v1540, -inf
    %2054 = vmax.xlane.f32.xlu0 %v2053
    %v2055 = vpop.xlane.xlu0 %2054
    %v2056 = vsel %vm2016, %v1543, -inf
    %2057 = vmax.xlane.f32.xlu0 %v2056
    %v2058 = vpop.xlane.xlu0 %2057
    %v2059 = vsel %vm2016, %v1548, -inf
    %2060 = vmax.xlane.f32.xlu0 %v2059
    %v2061 = vpop.xlane.xlu0 %2060
    %v2062 = vsel %vm2016, %v1551, -inf
    %2063 = vmax.xlane.f32.xlu0 %v2062
    %v2064 = vpop.xlane.xlu0 %2063
    %v2065 = vsel %vm2016, %v1601, -inf
    %2066 = vmax.xlane.f32.xlu0 %v2065
    %v2067 = vpop.xlane.xlu0 %2066
    %v2068 = vsel %vm2016, %v1604, -inf
    %2069 = vmax.xlane.f32.xlu0 %v2068
    %v2070 = vpop.xlane.xlu0 %2069
    %v2071 = vsel %vm2016, %v1609, -inf
    %2072 = vmax.xlane.f32.xlu0 %v2071
    %v2073 = vpop.xlane.xlu0 %2072
    %v2074 = vsel %vm2016, %v1612, -inf
    %2075 = vmax.xlane.f32.xlu0 %v2074
    %v2076 = vpop.xlane.xlu0 %2075
    %v2077 = vsel %vm2016, %v1617, -inf
    %2078 = vmax.xlane.f32.xlu0 %v2077
    %v2079 = vpop.xlane.xlu0 %2078
    %v2080 = vsel %vm2016, %v1620, -inf
    %2081 = vmax.xlane.f32.xlu0 %v2080
    %v2082 = vpop.xlane.xlu0 %2081
    %v2083 = vsel %vm2016, %v1625, -inf
    %2084 = vmax.xlane.f32.xlu0 %v2083
    %v2085 = vpop.xlane.xlu0 %2084
    %v2086 = vsel %vm2016, %v1628, -inf
    %2087 = vmax.xlane.f32.xlu0 %v2086
    %v2088 = vpop.xlane.xlu0 %2087
    %v2089 = vsel %vm2016, %v1678, -inf
    %2090 = vmax.xlane.f32.xlu0 %v2089
    %v2091 = vpop.xlane.xlu0 %2090
    %v2092 = vsel %vm2016, %v1681, -inf
    %2093 = vmax.xlane.f32.xlu0 %v2092
    %v2094 = vpop.xlane.xlu0 %2093
    %v2095 = vsel %vm2016, %v1686, -inf
    %2096 = vmax.xlane.f32.xlu0 %v2095
    %v2097 = vpop.xlane.xlu0 %2096
    %v2098 = vsel %vm2016, %v1689, -inf
    %2099 = vmax.xlane.f32.xlu0 %v2098
    %v2100 = vpop.xlane.xlu0 %2099
    %v2101 = vsel %vm2016, %v1694, -inf
    %2102 = vmax.xlane.f32.xlu0 %v2101
    %v2103 = vpop.xlane.xlu0 %2102
    %v2104 = vsel %vm2016, %v1697, -inf
    %2105 = vmax.xlane.f32.xlu0 %v2104
    %v2106 = vpop.xlane.xlu0 %2105
    %v2107 = vsel %vm2016, %v1702, -inf
    %2108 = vmax.xlane.f32.xlu0 %v2107
    %v2109 = vpop.xlane.xlu0 %2108
    %v2110 = vsel %vm2016, %v1705, -inf
    %2111 = vmax.xlane.f32.xlu0 %v2110
    %v2112 = vpop.xlane.xlu0 %2111
    %v2113 = vsel %vm2016, %v1755, -inf
    %2114 = vmax.xlane.f32.xlu0 %v2113
    %v2115 = vpop.xlane.xlu0 %2114
    %v2116 = vsel %vm2016, %v1758, -inf
    %2117 = vmax.xlane.f32.xlu0 %v2116
    %v2118 = vpop.xlane.xlu0 %2117
    %v2119 = vsel %vm2016, %v1763, -inf
    %2120 = vmax.xlane.f32.xlu0 %v2119
    %v2121 = vpop.xlane.xlu0 %2120
    %v2122 = vsel %vm2016, %v1766, -inf
    %2123 = vmax.xlane.f32.xlu0 %v2122
    %v2124 = vpop.xlane.xlu0 %2123
    %v2125 = vsel %vm2016, %v1771, -inf
    %2126 = vmax.xlane.f32.xlu0 %v2125
    %v2127 = vpop.xlane.xlu0 %2126
    %v2128 = vsel %vm2016, %v1774, -inf
    %2129 = vmax.xlane.f32.xlu0 %v2128
    %v2130 = vpop.xlane.xlu0 %2129
    %v2131 = vsel %vm2016, %v1779, -inf
    %2132 = vmax.xlane.f32.xlu0 %v2131
    %v2133 = vpop.xlane.xlu0 %2132
    %v2134 = vsel %vm2016, %v1782, -inf
    %2135 = vmax.xlane.f32.xlu0 %v2134
    %v2136 = vpop.xlane.xlu0 %2135
    %v2137 = vsel %vm2016, %v1832, -inf
    %2138 = vmax.xlane.f32.xlu0 %v2137
    %v2139 = vpop.xlane.xlu0 %2138
    %v2140 = vsel %vm2016, %v1835, -inf
    %2141 = vmax.xlane.f32.xlu0 %v2140
    %v2142 = vpop.xlane.xlu0 %2141
    %v2143 = vsel %vm2016, %v1840, -inf
    %2144 = vmax.xlane.f32.xlu0 %v2143
    %v2145 = vpop.xlane.xlu0 %2144
    %v2146 = vsel %vm2016, %v1843, -inf
    %2147 = vmax.xlane.f32.xlu0 %v2146
    %v2148 = vpop.xlane.xlu0 %2147
    %v2149 = vsel %vm2016, %v1848, -inf
    %2150 = vmax.xlane.f32.xlu0 %v2149
    %v2151 = vpop.xlane.xlu0 %2150
    %v2152 = vsel %vm2016, %v1851, -inf
    %2153 = vmax.xlane.f32.xlu0 %v2152
    %v2154 = vpop.xlane.xlu0 %2153
    %v2155 = vsel %vm2016, %v1856, -inf
    %2156 = vmax.xlane.f32.xlu0 %v2155
    %v2157 = vpop.xlane.xlu0 %2156
    %v2158 = vsel %vm2016, %v1859, -inf
    %2159 = vmax.xlane.f32.xlu0 %v2158
    %v2160 = vpop.xlane.xlu0 %2159
    %v2161 = vsel %vm2016, %v1909, -inf
    %2162 = vmax.xlane.f32.xlu0 %v2161
    %v2163 = vpop.xlane.xlu0 %2162
    %v2164 = vsel %vm2016, %v1912, -inf
    %2165 = vmax.xlane.f32.xlu0 %v2164
    %v2166 = vpop.xlane.xlu0 %2165
    %v2167 = vsel %vm2016, %v1917, -inf
    %2168 = vmax.xlane.f32.xlu0 %v2167
    %v2169 = vpop.xlane.xlu0 %2168
    %v2170 = vsel %vm2016, %v1920, -inf
    %2171 = vmax.xlane.f32.xlu0 %v2170
    %v2172 = vpop.xlane.xlu0 %2171
    %v2173 = vsel %vm2016, %v1925, -inf
    %2174 = vmax.xlane.f32.xlu0 %v2173
    %v2175 = vpop.xlane.xlu0 %2174
    %v2176 = vsel %vm2016, %v1928, -inf
    %2177 = vmax.xlane.f32.xlu0 %v2176
    %v2178 = vpop.xlane.xlu0 %2177
    %v2179 = vsel %vm2016, %v1933, -inf
    %2180 = vmax.xlane.f32.xlu0 %v2179
    %v2181 = vpop.xlane.xlu0 %2180
    %v2182 = vsel %vm2016, %v1936, -inf
    %2183 = vmax.xlane.f32.xlu0 %v2182
    %v2184 = vpop.xlane.xlu0 %2183
    %v2185 = vsel %vm2016, %v1986, -inf
    %2186 = vmax.xlane.f32.xlu0 %v2185
    %v2187 = vpop.xlane.xlu0 %2186
    %v2188 = vsel %vm2016, %v1989, -inf
    %2189 = vmax.xlane.f32.xlu0 %v2188
    %v2190 = vpop.xlane.xlu0 %2189
    %v2191 = vsel %vm2016, %v1994, -inf
    %2192 = vmax.xlane.f32.xlu0 %v2191
    %v2193 = vpop.xlane.xlu0 %2192
    %v2194 = vsel %vm2016, %v1997, -inf
    %2195 = vmax.xlane.f32.xlu0 %v2194
    %v2196 = vpop.xlane.xlu0 %2195
    %v2197 = vsel %vm2016, %v2002, -inf
    %2198 = vmax.xlane.f32.xlu0 %v2197
    %v2199 = vpop.xlane.xlu0 %2198
    %v2200 = vsel %vm2016, %v2005, -inf
    %2201 = vmax.xlane.f32.xlu0 %v2200
    %v2202 = vpop.xlane.xlu0 %2201
    %v2203 = vsel %vm2016, %v2010, -inf
    %2204 = vmax.xlane.f32.xlu0 %v2203
    %v2205 = vpop.xlane.xlu0 %2204
    %v2206 = vsel %vm2016, %v2013, -inf
    %2207 = vmax.xlane.f32.xlu0 %v2206
    %v2208 = vpop.xlane.xlu0 %2207
    %v2209 = vsub.f32 %v1423, %v2019
    %v2210 = vsub.f32 %v1426, %v2022
    %v2211 = vsub.f32 %v1431, %v2025
    %v2212 = vsub.f32 %v1434, %v2028
    %v2213 = vsub.f32 %v1439, %v2031
    %v2214 = vsub.f32 %v1442, %v2034
    %v2215 = vsub.f32 %v1447, %v2037
    %v2216 = vsub.f32 %v1450, %v2040
    %v2217 = vsub.f32 %v1524, %v2043
    %v2218 = vsub.f32 %v1527, %v2046
    %v2219 = vsub.f32 %v1532, %v2049
    %v2220 = vsub.f32 %v1535, %v2052
    %v2221 = vsub.f32 %v1540, %v2055
    %v2222 = vsub.f32 %v1543, %v2058
    %v2223 = vsub.f32 %v1548, %v2061
    %v2224 = vsub.f32 %v1551, %v2064
    %v2225 = vsub.f32 %v1601, %v2067
    %v2226 = vsub.f32 %v1604, %v2070
    %v2227 = vsub.f32 %v1609, %v2073
    %v2228 = vsub.f32 %v1612, %v2076
    %v2229 = vsub.f32 %v1617, %v2079
    %v2230 = vsub.f32 %v1620, %v2082
    %v2231 = vsub.f32 %v1625, %v2085
    %v2232 = vsub.f32 %v1628, %v2088
    %v2233 = vsub.f32 %v1678, %v2091
    %v2234 = vsub.f32 %v1681, %v2094
    %v2235 = vsub.f32 %v1686, %v2097
    %v2236 = vsub.f32 %v1689, %v2100
    %v2237 = vsub.f32 %v1694, %v2103
    %v2238 = vsub.f32 %v1697, %v2106
    %v2239 = vsub.f32 %v1702, %v2109
    %v2240 = vsub.f32 %v1705, %v2112
    %v2241 = vsub.f32 %v1755, %v2115
    %v2242 = vsub.f32 %v1758, %v2118
    %v2243 = vsub.f32 %v1763, %v2121
    %v2244 = vsub.f32 %v1766, %v2124
    %v2245 = vsub.f32 %v1771, %v2127
    %v2246 = vsub.f32 %v1774, %v2130
    %v2247 = vsub.f32 %v1779, %v2133
    %v2248 = vsub.f32 %v1782, %v2136
    %v2249 = vsub.f32 %v1832, %v2139
    %v2250 = vsub.f32 %v1835, %v2142
    %v2251 = vsub.f32 %v1840, %v2145
    %v2252 = vsub.f32 %v1843, %v2148
    %v2253 = vsub.f32 %v1848, %v2151
    %v2254 = vsub.f32 %v1851, %v2154
    %v2255 = vsub.f32 %v1856, %v2157
    %v2256 = vsub.f32 %v1859, %v2160
    %v2257 = vsub.f32 %v1909, %v2163
    %v2258 = vsub.f32 %v1912, %v2166
    %v2259 = vsub.f32 %v1917, %v2169
    %v2260 = vsub.f32 %v1920, %v2172
    %v2261 = vsub.f32 %v1925, %v2175
    %v2262 = vsub.f32 %v1928, %v2178
    %v2263 = vsub.f32 %v1933, %v2181
    %v2264 = vsub.f32 %v1936, %v2184
    %v2265 = vsub.f32 %v1986, %v2187
    %v2266 = vsub.f32 %v1989, %v2190
    %v2267 = vsub.f32 %v1994, %v2193
    %v2268 = vsub.f32 %v1997, %v2196
    %v2269 = vsub.f32 %v2002, %v2199
    %v2270 = vsub.f32 %v2005, %v2202
    %v2271 = vsub.f32 %v2010, %v2205
    %v2272 = vsub.f32 %v2013, %v2208
    %v2273 = vmul.f32 %v2209, 1.442695
    %v2274 = vpow.pop %v2273
    %v2275 = vmul.f32 %v2210, 1.442695
    %v2276 = vpow.pop %v2275
    %v2277 = vmul.f32 %v2211, 1.442695
    %v2278 = vpow.pop %v2277
    %v2279 = vmul.f32 %v2212, 1.442695
    %v2280 = vpow.pop %v2279
    %v2281 = vmul.f32 %v2213, 1.442695
    %v2282 = vpow.pop %v2281
    %v2283 = vmul.f32 %v2214, 1.442695
    %v2284 = vpow.pop %v2283
    %v2285 = vmul.f32 %v2215, 1.442695
    %v2286 = vpow.pop %v2285
    %v2287 = vmul.f32 %v2216, 1.442695
    %v2288 = vpow.pop %v2287
    %v2289 = vmul.f32 %v2217, 1.442695
    %v2290 = vpow.pop %v2289
    %v2291 = vmul.f32 %v2218, 1.442695
    %v2292 = vpow.pop %v2291
    %v2293 = vmul.f32 %v2219, 1.442695
    %v2294 = vpow.pop %v2293
    %v2295 = vmul.f32 %v2220, 1.442695
    %v2296 = vpow.pop %v2295
    %v2297 = vmul.f32 %v2221, 1.442695
    %v2298 = vpow.pop %v2297
    %v2299 = vmul.f32 %v2222, 1.442695
    %v2300 = vpow.pop %v2299
    %v2301 = vmul.f32 %v2223, 1.442695
    %v2302 = vpow.pop %v2301
    %v2303 = vmul.f32 %v2224, 1.442695
    %v2304 = vpow.pop %v2303
    %v2305 = vmul.f32 %v2225, 1.442695
    %v2306 = vpow.pop %v2305
    %v2307 = vmul.f32 %v2226, 1.442695
    %v2308 = vpow.pop %v2307
    %v2309 = vmul.f32 %v2227, 1.442695
    %v2310 = vpow.pop %v2309
    %v2311 = vmul.f32 %v2228, 1.442695
    %v2312 = vpow.pop %v2311
    %v2313 = vmul.f32 %v2229, 1.442695
    %v2314 = vpow.pop %v2313
    %v2315 = vmul.f32 %v2230, 1.442695
    %v2316 = vpow.pop %v2315
    %v2317 = vmul.f32 %v2231, 1.442695
    %v2318 = vpow.pop %v2317
    %v2319 = vmul.f32 %v2232, 1.442695
    %v2320 = vpow.pop %v2319
    %v2321 = vmul.f32 %v2233, 1.442695
    %v2322 = vpow.pop %v2321
    %v2323 = vmul.f32 %v2234, 1.442695
    %v2324 = vpow.pop %v2323
    %v2325 = vmul.f32 %v2235, 1.442695
    %v2326 = vpow.pop %v2325
    %v2327 = vmul.f32 %v2236, 1.442695
    %v2328 = vpow.pop %v2327
    %v2329 = vmul.f32 %v2237, 1.442695
    %v2330 = vpow.pop %v2329
    %v2331 = vmul.f32 %v2238, 1.442695
    %v2332 = vpow.pop %v2331
    %v2333 = vmul.f32 %v2239, 1.442695
    %v2334 = vpow.pop %v2333
    %v2335 = vmul.f32 %v2240, 1.442695
    %v2336 = vpow.pop %v2335
    %v2337 = vmul.f32 %v2241, 1.442695
    %v2338 = vpow.pop %v2337
    %v2339 = vmul.f32 %v2242, 1.442695
    %v2340 = vpow.pop %v2339
    %v2341 = vmul.f32 %v2243, 1.442695
    %v2342 = vpow.pop %v2341
    %v2343 = vmul.f32 %v2244, 1.442695
    %v2344 = vpow.pop %v2343
    %v2345 = vmul.f32 %v2245, 1.442695
    %v2346 = vpow.pop %v2345
    %v2347 = vmul.f32 %v2246, 1.442695
    %v2348 = vpow.pop %v2347
    %v2349 = vmul.f32 %v2247, 1.442695
    %v2350 = vpow.pop %v2349
    %v2351 = vmul.f32 %v2248, 1.442695
    %v2352 = vpow.pop %v2351
    %v2353 = vmul.f32 %v2249, 1.442695
    %v2354 = vpow.pop %v2353
    %v2355 = vmul.f32 %v2250, 1.442695
    %v2356 = vpow.pop %v2355
    %v2357 = vmul.f32 %v2251, 1.442695
    %v2358 = vpow.pop %v2357
    %v2359 = vmul.f32 %v2252, 1.442695
    %v2360 = vpow.pop %v2359
    %v2361 = vmul.f32 %v2253, 1.442695
    %v2362 = vpow.pop %v2361
    %v2363 = vmul.f32 %v2254, 1.442695
    %v2364 = vpow.pop %v2363
    %v2365 = vmul.f32 %v2255, 1.442695
    %v2366 = vpow.pop %v2365
    %v2367 = vmul.f32 %v2256, 1.442695
    %v2368 = vpow.pop %v2367
    %v2369 = vmul.f32 %v2257, 1.442695
    %v2370 = vpow.pop %v2369
    %v2371 = vmul.f32 %v2258, 1.442695
    %v2372 = vpow.pop %v2371
    %v2373 = vmul.f32 %v2259, 1.442695
    %v2374 = vpow.pop %v2373
    %v2375 = vmul.f32 %v2260, 1.442695
    %v2376 = vpow.pop %v2375
    %v2377 = vmul.f32 %v2261, 1.442695
    %v2378 = vpow.pop %v2377
    %v2379 = vmul.f32 %v2262, 1.442695
    %v2380 = vpow.pop %v2379
    %v2381 = vmul.f32 %v2263, 1.442695
    %v2382 = vpow.pop %v2381
    %v2383 = vmul.f32 %v2264, 1.442695
    %v2384 = vpow.pop %v2383
    %v2385 = vmul.f32 %v2265, 1.442695
    %v2386 = vpow.pop %v2385
    %v2387 = vmul.f32 %v2266, 1.442695
    %v2388 = vpow.pop %v2387
    %v2389 = vmul.f32 %v2267, 1.442695
    %v2390 = vpow.pop %v2389
    %v2391 = vmul.f32 %v2268, 1.442695
    %v2392 = vpow.pop %v2391
    %v2393 = vmul.f32 %v2269, 1.442695
    %v2394 = vpow.pop %v2393
    %v2395 = vmul.f32 %v2270, 1.442695
    %v2396 = vpow.pop %v2395
    %v2397 = vmul.f32 %v2271, 1.442695
    %v2398 = vpow.pop %v2397
    %v2399 = vmul.f32 %v2272, 1.442695
    %v2400 = vpow.pop %v2399
    %v2401 = vsel %vm2016, %v2274, 0.0
    %2402 = vadd.xlane.f32.xlu0 %v2401
    %v2403 = vpop.xlane.xlu0 %2402
    %v2404 = vsel %vm2016, %v2276, 0.0
    %2405 = vadd.xlane.f32.xlu0 %v2404
    %v2406 = vpop.xlane.xlu0 %2405
    %v2407 = vsel %vm2016, %v2278, 0.0
    %2408 = vadd.xlane.f32.xlu0 %v2407
    %v2409 = vpop.xlane.xlu0 %2408
    %v2410 = vsel %vm2016, %v2280, 0.0
    %2411 = vadd.xlane.f32.xlu0 %v2410
    %v2412 = vpop.xlane.xlu0 %2411
    %v2413 = vsel %vm2016, %v2282, 0.0
    %2414 = vadd.xlane.f32.xlu0 %v2413
    %v2415 = vpop.xlane.xlu0 %2414
    %v2416 = vsel %vm2016, %v2284, 0.0
    %2417 = vadd.xlane.f32.xlu0 %v2416
    %v2418 = vpop.xlane.xlu0 %2417
    %v2419 = vsel %vm2016, %v2286, 0.0
    %2420 = vadd.xlane.f32.xlu0 %v2419
    %v2421 = vpop.xlane.xlu0 %2420
    %v2422 = vsel %vm2016, %v2288, 0.0
    %2423 = vadd.xlane.f32.xlu0 %v2422
    %v2424 = vpop.xlane.xlu0 %2423
    %v2425 = vsel %vm2016, %v2290, 0.0
    %2426 = vadd.xlane.f32.xlu0 %v2425
    %v2427 = vpop.xlane.xlu0 %2426
    %v2428 = vsel %vm2016, %v2292, 0.0
    %2429 = vadd.xlane.f32.xlu0 %v2428
    %v2430 = vpop.xlane.xlu0 %2429
    %v2431 = vsel %vm2016, %v2294, 0.0
    %2432 = vadd.xlane.f32.xlu0 %v2431
    %v2433 = vpop.xlane.xlu0 %2432
    %v2434 = vsel %vm2016, %v2296, 0.0
    %2435 = vadd.xlane.f32.xlu0 %v2434
    %v2436 = vpop.xlane.xlu0 %2435
    %v2437 = vsel %vm2016, %v2298, 0.0
    %2438 = vadd.xlane.f32.xlu0 %v2437
    %v2439 = vpop.xlane.xlu0 %2438
    %v2440 = vsel %vm2016, %v2300, 0.0
    %2441 = vadd.xlane.f32.xlu0 %v2440
    %v2442 = vpop.xlane.xlu0 %2441
    %v2443 = vsel %vm2016, %v2302, 0.0
    %2444 = vadd.xlane.f32.xlu0 %v2443
    %v2445 = vpop.xlane.xlu0 %2444
    %v2446 = vsel %vm2016, %v2304, 0.0
    %2447 = vadd.xlane.f32.xlu0 %v2446
    %v2448 = vpop.xlane.xlu0 %2447
    %v2449 = vsel %vm2016, %v2306, 0.0
    %2450 = vadd.xlane.f32.xlu0 %v2449
    %v2451 = vpop.xlane.xlu0 %2450
    %v2452 = vsel %vm2016, %v2308, 0.0
    %2453 = vadd.xlane.f32.xlu0 %v2452
    %v2454 = vpop.xlane.xlu0 %2453
    %v2455 = vsel %vm2016, %v2310, 0.0
    %2456 = vadd.xlane.f32.xlu0 %v2455
    %v2457 = vpop.xlane.xlu0 %2456
    %v2458 = vsel %vm2016, %v2312, 0.0
    %2459 = vadd.xlane.f32.xlu0 %v2458
    %v2460 = vpop.xlane.xlu0 %2459
    %v2461 = vsel %vm2016, %v2314, 0.0
    %2462 = vadd.xlane.f32.xlu0 %v2461
    %v2463 = vpop.xlane.xlu0 %2462
    %v2464 = vsel %vm2016, %v2316, 0.0
    %2465 = vadd.xlane.f32.xlu0 %v2464
    %v2466 = vpop.xlane.xlu0 %2465
    %v2467 = vsel %vm2016, %v2318, 0.0
    %2468 = vadd.xlane.f32.xlu0 %v2467
    %v2469 = vpop.xlane.xlu0 %2468
    %v2470 = vsel %vm2016, %v2320, 0.0
    %2471 = vadd.xlane.f32.xlu0 %v2470
    %v2472 = vpop.xlane.xlu0 %2471
    %v2473 = vsel %vm2016, %v2322, 0.0
    %2474 = vadd.xlane.f32.xlu0 %v2473
    %v2475 = vpop.xlane.xlu0 %2474
    %v2476 = vsel %vm2016, %v2324, 0.0
    %2477 = vadd.xlane.f32.xlu0 %v2476
    %v2478 = vpop.xlane.xlu0 %2477
    %v2479 = vsel %vm2016, %v2326, 0.0
    %2480 = vadd.xlane.f32.xlu0 %v2479
    %v2481 = vpop.xlane.xlu0 %2480
    %v2482 = vsel %vm2016, %v2328, 0.0
    %2483 = vadd.xlane.f32.xlu0 %v2482
    %v2484 = vpop.xlane.xlu0 %2483
    %v2485 = vsel %vm2016, %v2330, 0.0
    %2486 = vadd.xlane.f32.xlu0 %v2485
    %v2487 = vpop.xlane.xlu0 %2486
    %v2488 = vsel %vm2016, %v2332, 0.0
    %2489 = vadd.xlane.f32.xlu0 %v2488
    %v2490 = vpop.xlane.xlu0 %2489
    %v2491 = vsel %vm2016, %v2334, 0.0
    %2492 = vadd.xlane.f32.xlu0 %v2491
    %v2493 = vpop.xlane.xlu0 %2492
    %v2494 = vsel %vm2016, %v2336, 0.0
    %2495 = vadd.xlane.f32.xlu0 %v2494
    %v2496 = vpop.xlane.xlu0 %2495
    %v2497 = vsel %vm2016, %v2338, 0.0
    %2498 = vadd.xlane.f32.xlu0 %v2497
    %v2499 = vpop.xlane.xlu0 %2498
    %v2500 = vsel %vm2016, %v2340, 0.0
    %2501 = vadd.xlane.f32.xlu0 %v2500
    %v2502 = vpop.xlane.xlu0 %2501
    %v2503 = vsel %vm2016, %v2342, 0.0
    %2504 = vadd.xlane.f32.xlu0 %v2503
    %v2505 = vpop.xlane.xlu0 %2504
    %v2506 = vsel %vm2016, %v2344, 0.0
    %2507 = vadd.xlane.f32.xlu0 %v2506
    %v2508 = vpop.xlane.xlu0 %2507
    %v2509 = vsel %vm2016, %v2346, 0.0
    %2510 = vadd.xlane.f32.xlu0 %v2509
    %v2511 = vpop.xlane.xlu0 %2510
    %v2512 = vsel %vm2016, %v2348, 0.0
    %2513 = vadd.xlane.f32.xlu0 %v2512
    %v2514 = vpop.xlane.xlu0 %2513
    %v2515 = vsel %vm2016, %v2350, 0.0
    %2516 = vadd.xlane.f32.xlu0 %v2515
    %v2517 = vpop.xlane.xlu0 %2516
    %v2518 = vsel %vm2016, %v2352, 0.0
    %2519 = vadd.xlane.f32.xlu0 %v2518
    %v2520 = vpop.xlane.xlu0 %2519
    %v2521 = vsel %vm2016, %v2354, 0.0
    %2522 = vadd.xlane.f32.xlu0 %v2521
    %v2523 = vpop.xlane.xlu0 %2522
    %v2524 = vsel %vm2016, %v2356, 0.0
    %2525 = vadd.xlane.f32.xlu0 %v2524
    %v2526 = vpop.xlane.xlu0 %2525
    %v2527 = vsel %vm2016, %v2358, 0.0
    %2528 = vadd.xlane.f32.xlu0 %v2527
    %v2529 = vpop.xlane.xlu0 %2528
    %v2530 = vsel %vm2016, %v2360, 0.0
    %2531 = vadd.xlane.f32.xlu0 %v2530
    %v2532 = vpop.xlane.xlu0 %2531
    %v2533 = vsel %vm2016, %v2362, 0.0
    %2534 = vadd.xlane.f32.xlu0 %v2533
    %v2535 = vpop.xlane.xlu0 %2534
    %v2536 = vsel %vm2016, %v2364, 0.0
    %2537 = vadd.xlane.f32.xlu0 %v2536
    %v2538 = vpop.xlane.xlu0 %2537
    %v2539 = vsel %vm2016, %v2366, 0.0
    %2540 = vadd.xlane.f32.xlu0 %v2539
    %v2541 = vpop.xlane.xlu0 %2540
    %v2542 = vsel %vm2016, %v2368, 0.0
    %2543 = vadd.xlane.f32.xlu0 %v2542
    %v2544 = vpop.xlane.xlu0 %2543
    %v2545 = vsel %vm2016, %v2370, 0.0
    %2546 = vadd.xlane.f32.xlu0 %v2545
    %v2547 = vpop.xlane.xlu0 %2546
    %v2548 = vsel %vm2016, %v2372, 0.0
    %2549 = vadd.xlane.f32.xlu0 %v2548
    %v2550 = vpop.xlane.xlu0 %2549
    %v2551 = vsel %vm2016, %v2374, 0.0
    %2552 = vadd.xlane.f32.xlu0 %v2551
    %v2553 = vpop.xlane.xlu0 %2552
    %v2554 = vsel %vm2016, %v2376, 0.0
    %2555 = vadd.xlane.f32.xlu0 %v2554
    %v2556 = vpop.xlane.xlu0 %2555
    %v2557 = vsel %vm2016, %v2378, 0.0
    %2558 = vadd.xlane.f32.xlu0 %v2557
    %v2559 = vpop.xlane.xlu0 %2558
    %v2560 = vsel %vm2016, %v2380, 0.0
    %2561 = vadd.xlane.f32.xlu0 %v2560
    %v2562 = vpop.xlane.xlu0 %2561
    %v2563 = vsel %vm2016, %v2382, 0.0
    %2564 = vadd.xlane.f32.xlu0 %v2563
    %v2565 = vpop.xlane.xlu0 %2564
    %v2566 = vsel %vm2016, %v2384, 0.0
    %2567 = vadd.xlane.f32.xlu0 %v2566
    %v2568 = vpop.xlane.xlu0 %2567
    %v2569 = vsel %vm2016, %v2386, 0.0
    %2570 = vadd.xlane.f32.xlu0 %v2569
    %v2571 = vpop.xlane.xlu0 %2570
    %v2572 = vsel %vm2016, %v2388, 0.0
    %2573 = vadd.xlane.f32.xlu0 %v2572
    %v2574 = vpop.xlane.xlu0 %2573
    %v2575 = vsel %vm2016, %v2390, 0.0
    %2576 = vadd.xlane.f32.xlu0 %v2575
    %v2577 = vpop.xlane.xlu0 %2576
    %v2578 = vsel %vm2016, %v2392, 0.0
    %2579 = vadd.xlane.f32.xlu0 %v2578
    %v2580 = vpop.xlane.xlu0 %2579
    %v2581 = vsel %vm2016, %v2394, 0.0
    %2582 = vadd.xlane.f32.xlu0 %v2581
    %v2583 = vpop.xlane.xlu0 %2582
    %v2584 = vsel %vm2016, %v2396, 0.0
    %2585 = vadd.xlane.f32.xlu0 %v2584
    %v2586 = vpop.xlane.xlu0 %2585
    %v2587 = vsel %vm2016, %v2398, 0.0
    %2588 = vadd.xlane.f32.xlu0 %v2587
    %v2589 = vpop.xlane.xlu0 %2588
    %v2590 = vsel %vm2016, %v2400, 0.0
    %2591 = vadd.xlane.f32.xlu0 %v2590
    %v2592 = vpop.xlane.xlu0 %2591
    %v2593 = vrcp.pop %v2403
    %v2594 = vrcp.pop %v2406
    %v2595 = vrcp.pop %v2409
    %v2596 = vrcp.pop %v2412
    %v2597 = vrcp.pop %v2415
    %v2598 = vrcp.pop %v2418
    %v2599 = vrcp.pop %v2421
    %v2600 = vrcp.pop %v2424
    %v2601 = vrcp.pop %v2427
    %v2602 = vrcp.pop %v2430
    %v2603 = vrcp.pop %v2433
    %v2604 = vrcp.pop %v2436
    %v2605 = vrcp.pop %v2439
    %v2606 = vrcp.pop %v2442
    %v2607 = vrcp.pop %v2445
    %v2608 = vrcp.pop %v2448
    %v2609 = vrcp.pop %v2451
    %v2610 = vrcp.pop %v2454
    %v2611 = vrcp.pop %v2457
    %v2612 = vrcp.pop %v2460
    %v2613 = vrcp.pop %v2463
    %v2614 = vrcp.pop %v2466
    %v2615 = vrcp.pop %v2469
    %v2616 = vrcp.pop %v2472
    %v2617 = vrcp.pop %v2475
    %v2618 = vrcp.pop %v2478
    %v2619 = vrcp.pop %v2481
    %v2620 = vrcp.pop %v2484
    %v2621 = vrcp.pop %v2487
    %v2622 = vrcp.pop %v2490
    %v2623 = vrcp.pop %v2493
    %v2624 = vrcp.pop %v2496
    %v2625 = vrcp.pop %v2499
    %v2626 = vrcp.pop %v2502
    %v2627 = vrcp.pop %v2505
    %v2628 = vrcp.pop %v2508
    %v2629 = vrcp.pop %v2511
    %v2630 = vrcp.pop %v2514
    %v2631 = vrcp.pop %v2517
    %v2632 = vrcp.pop %v2520
    %v2633 = vrcp.pop %v2523
    %v2634 = vrcp.pop %v2526
    %v2635 = vrcp.pop %v2529
    %v2636 = vrcp.pop %v2532
    %v2637 = vrcp.pop %v2535
    %v2638 = vrcp.pop %v2538
    %v2639 = vrcp.pop %v2541
    %v2640 = vrcp.pop %v2544
    %v2641 = vrcp.pop %v2547
    %v2642 = vrcp.pop %v2550
    %v2643 = vrcp.pop %v2553
    %v2644 = vrcp.pop %v2556
    %v2645 = vrcp.pop %v2559
    %v2646 = vrcp.pop %v2562
    %v2647 = vrcp.pop %v2565
    %v2648 = vrcp.pop %v2568
    %v2649 = vrcp.pop %v2571
    %v2650 = vrcp.pop %v2574
    %v2651 = vrcp.pop %v2577
    %v2652 = vrcp.pop %v2580
    %v2653 = vrcp.pop %v2583
    %v2654 = vrcp.pop %v2586
    %v2655 = vrcp.pop %v2589
    %v2656 = vrcp.pop %v2592
    %v2657 = vmul.f32 %v2274, %v2593
    %v2658 = vmul.f32 %v2276, %v2594
    %v2659 = vmul.f32 %v2278, %v2595
    %v2660 = vmul.f32 %v2280, %v2596
    %v2661 = vmul.f32 %v2282, %v2597
    %v2662 = vmul.f32 %v2284, %v2598
    %v2663 = vmul.f32 %v2286, %v2599
    %v2664 = vmul.f32 %v2288, %v2600
    %v2665 = vmul.f32 %v2290, %v2601
    %v2666 = vmul.f32 %v2292, %v2602
    %v2667 = vmul.f32 %v2294, %v2603
    %v2668 = vmul.f32 %v2296, %v2604
    %v2669 = vmul.f32 %v2298, %v2605
    %v2670 = vmul.f32 %v2300, %v2606
    %v2671 = vmul.f32 %v2302, %v2607
    %v2672 = vmul.f32 %v2304, %v2608
    %v2673 = vmul.f32 %v2306, %v2609
    %v2674 = vmul.f32 %v2308, %v2610
    %v2675 = vmul.f32 %v2310, %v2611
    %v2676 = vmul.f32 %v2312, %v2612
    %v2677 = vmul.f32 %v2314, %v2613
    %v2678 = vmul.f32 %v2316, %v2614
    %v2679 = vmul.f32 %v2318, %v2615
    %v2680 = vmul.f32 %v2320, %v2616
    %v2681 = vmul.f32 %v2322, %v2617
    %v2682 = vmul.f32 %v2324, %v2618
    %v2683 = vmul.f32 %v2326, %v2619
    %v2684 = vmul.f32 %v2328, %v2620
    %v2685 = vmul.f32 %v2330, %v2621
    %v2686 = vmul.f32 %v2332, %v2622
    %v2687 = vmul.f32 %v2334, %v2623
    %v2688 = vmul.f32 %v2336, %v2624
    %v2689 = vmul.f32 %v2338, %v2625
    %v2690 = vmul.f32 %v2340, %v2626
    %v2691 = vmul.f32 %v2342, %v2627
    %v2692 = vmul.f32 %v2344, %v2628
    %v2693 = vmul.f32 %v2346, %v2629
    %v2694 = vmul.f32 %v2348, %v2630
    %v2695 = vmul.f32 %v2350, %v2631
    %v2696 = vmul.f32 %v2352, %v2632
    %v2697 = vmul.f32 %v2354, %v2633
    %v2698 = vmul.f32 %v2356, %v2634
    %v2699 = vmul.f32 %v2358, %v2635
    %v2700 = vmul.f32 %v2360, %v2636
    %v2701 = vmul.f32 %v2362, %v2637
    %v2702 = vmul.f32 %v2364, %v2638
    %v2703 = vmul.f32 %v2366, %v2639
    %v2704 = vmul.f32 %v2368, %v2640
    %v2705 = vmul.f32 %v2370, %v2641
    %v2706 = vmul.f32 %v2372, %v2642
    %v2707 = vmul.f32 %v2374, %v2643
    %v2708 = vmul.f32 %v2376, %v2644
    %v2709 = vmul.f32 %v2378, %v2645
    %v2710 = vmul.f32 %v2380, %v2646
    %v2711 = vmul.f32 %v2382, %v2647
    %v2712 = vmul.f32 %v2384, %v2648
    %v2713 = vmul.f32 %v2386, %v2649
    %v2714 = vmul.f32 %v2388, %v2650
    %v2715 = vmul.f32 %v2390, %v2651
    %v2716 = vmul.f32 %v2392, %v2652
    %v2717 = vmul.f32 %v2394, %v2653
    %v2718 = vmul.f32 %v2396, %v2654
    %v2719 = vmul.f32 %v2398, %v2655
    %v2720 = vmul.f32 %v2400, %v2656
    %v2721 = vpack.c.bf16 %v2658, %v2657
    %v2722 = vpack.c.bf16 %v2660, %v2659
    %v2723 = vpack.c.bf16 %v2662, %v2661
    %v2724 = vpack.c.bf16 %v2664, %v2663
    %v2725 = vpack.c.bf16 %v2666, %v2665
    %v2726 = vpack.c.bf16 %v2668, %v2667
    %v2727 = vpack.c.bf16 %v2670, %v2669
    %v2728 = vpack.c.bf16 %v2672, %v2671
    %v2729 = vpack.c.bf16 %v2674, %v2673
    %v2730 = vpack.c.bf16 %v2676, %v2675
    %v2731 = vpack.c.bf16 %v2678, %v2677
    %v2732 = vpack.c.bf16 %v2680, %v2679
    %v2733 = vpack.c.bf16 %v2682, %v2681
    %v2734 = vpack.c.bf16 %v2684, %v2683
    %v2735 = vpack.c.bf16 %v2686, %v2685
    %v2736 = vpack.c.bf16 %v2688, %v2687
    %v2737 = vpack.c.bf16 %v2690, %v2689
    %v2738 = vpack.c.bf16 %v2692, %v2691
    %v2739 = vpack.c.bf16 %v2694, %v2693
    %v2740 = vpack.c.bf16 %v2696, %v2695
    %v2741 = vpack.c.bf16 %v2698, %v2697
    %v2742 = vpack.c.bf16 %v2700, %v2699
    %v2743 = vpack.c.bf16 %v2702, %v2701
    %v2744 = vpack.c.bf16 %v2704, %v2703
    %v2745 = vpack.c.bf16 %v2706, %v2705
    %v2746 = vpack.c.bf16 %v2708, %v2707
    %v2747 = vpack.c.bf16 %v2710, %v2709
    %v2748 = vpack.c.bf16 %v2712, %v2711
    %v2749 = vpack.c.bf16 %v2714, %v2713
    %v2750 = vpack.c.bf16 %v2716, %v2715
    %v2751 = vpack.c.bf16 %v2718, %v2717
    %v2752 = vpack.c.bf16 %v2720, %v2719
    %2757 = vrot.lane.b32.xlu0 %v1320, 64
    %v2758 = vpop.permute.xlu0 %2757
    %2759 = vrot.lane.b32.xlu0 %v1321, 64
    %v2760 = vpop.permute.xlu0 %2759
    %2761 = vrot.lane.b32.xlu0 %v1322, 64
    %v2762 = vpop.permute.xlu0 %2761
    %2763 = vrot.lane.b32.xlu0 %v1323, 64
    %v2764 = vpop.permute.xlu0 %2763
    %v2770 = vsel %vm2016, %v2721, 0
    %v2773 = vsel %vm2016, %v2722, 0
    %v2776 = vsel %vm2016, %v2723, 0
    %v2779 = vsel %vm2016, %v2724, 0
    %2781 = vmatprep.subr.bf16.mxu0 0
    %2782 = vmatpush1.bf16.msra.mxu0 0
    %2783 = vmatprep.subr.bf16.mxu0 0
    %2784 = vmatpush1.bf16.msra.mxu0 0
    %2785 = vmatprep.subr.bf16.mxu0 0
    %2786 = vmatpush1.bf16.msra.mxu0 0
    %2787 = vmatprep.subr.bf16.mxu0 0
    %2788 = vmatpush1.bf16.msra.mxu0 0
    %2789 = vmatprep.subr.bf16.mxu0 0
    %2790 = vmatpush1.bf16.msra.mxu0 %v2764
    %2791 = vmatprep.subr.bf16.mxu0 0
    %2792 = vmatpush1.bf16.msra.mxu0 %v2762
    %2793 = vmatprep.subr.bf16.mxu0 0
    %2794 = vmatpush1.bf16.msra.mxu0 %v2760
    %2795 = vmatprep.subr.bf16.mxu0 0
    %2796 = vmatpush1.bf16.msra.mxu0 %v2758
    %2797 = vmatprep.subr.bf16.mxu0 0
    %2798 = vmatpush2.bf16.msra.mxu0 0
    %2799 = vmatprep.subr.bf16.mxu0 0
    %2800 = vmatpush2.bf16.msra.mxu0 0
    %2801 = vmatprep.subr.bf16.mxu0 0
    %2802 = vmatpush2.bf16.msra.mxu0 0
    %2803 = vmatprep.subr.bf16.mxu0 0
    %2804 = vmatpush2.bf16.msra.mxu0 0
    %2805 = vmatprep.subr.bf16.mxu0 0
    %2806 = vmatpush2.bf16.msra.mxu0 0
    %2807 = vmatprep.subr.bf16.mxu0 0
    %2808 = vmatpush2.bf16.msra.mxu0 0
    %2809 = vmatprep.subr.bf16.mxu0 0
    %2810 = vmatpush2.bf16.msra.mxu0 0
    %2811 = vmatprep.subr.bf16.mxu0 0
    %2812 = vmatpush2.bf16.msra.mxu0 0
    %2813 = vmatprep.mubr.bf16.mxu0 0
    %2814 = vmatmul.mubr.bf16.gmra.mxu0 %v2770
    %v2815 = vpop.f32.mrf.mxu0
    %v2816 = vadd.f32 0.0, %v2815
    %v2817 = vpop.f32.mrf.mxu0
    %v2818 = vpop.f32.mrf.mxu0
    %v2819 = vadd.f32 0.0, %v2818
    %v2820 = vpop.f32.mrf.mxu0
    %2821 = vmatprep.mubr.bf16.mxu0 0
    %2822 = vmatmul.mubr.bf16.gmra.mxu0 %v2773
    %v2823 = vpop.f32.mrf.mxu0
    %v2824 = vadd.f32 0.0, %v2823
    %v2825 = vpop.f32.mrf.mxu0
    %v2826 = vpop.f32.mrf.mxu0
    %v2827 = vadd.f32 0.0, %v2826
    %v2828 = vpop.f32.mrf.mxu0
    %2829 = vmatprep.mubr.bf16.mxu0 0
    %2830 = vmatmul.mubr.bf16.gmra.mxu0 %v2776
    %v2831 = vpop.f32.mrf.mxu0
    %v2832 = vadd.f32 0.0, %v2831
    %v2833 = vpop.f32.mrf.mxu0
    %v2834 = vpop.f32.mrf.mxu0
    %v2835 = vadd.f32 0.0, %v2834
    %v2836 = vpop.f32.mrf.mxu0
    %2837 = vmatprep.mubr.bf16.mxu0 0
    %2838 = vmatmul.mubr.bf16.gmra.mxu0 %v2779
    %v2839 = vpop.f32.mrf.mxu0
    %v2840 = vadd.f32 0.0, %v2839
    %v2841 = vpop.f32.mrf.mxu0
    %v2842 = vpop.f32.mrf.mxu0
    %v2843 = vadd.f32 0.0, %v2842
    %v2844 = vpop.f32.mrf.mxu0
    %2845 = vdwg.mxu0
    %2850 = vrot.lane.b32.xlu0 %v1324, 64
    %v2851 = vpop.permute.xlu0 %2850
    %2852 = vrot.lane.b32.xlu0 %v1325, 64
    %v2853 = vpop.permute.xlu0 %2852
    %2854 = vrot.lane.b32.xlu0 %v1326, 64
    %v2855 = vpop.permute.xlu0 %2854
    %2856 = vrot.lane.b32.xlu0 %v1327, 64
    %v2857 = vpop.permute.xlu0 %2856
    %v2863 = vsel %vm2016, %v2725, 0
    %v2866 = vsel %vm2016, %v2726, 0
    %v2869 = vsel %vm2016, %v2727, 0
    %v2872 = vsel %vm2016, %v2728, 0
    %2874 = vmatprep.subr.bf16.mxu0 0
    %2875 = vmatpush1.bf16.msra.mxu0 0
    %2876 = vmatprep.subr.bf16.mxu0 0
    %2877 = vmatpush1.bf16.msra.mxu0 0
    %2878 = vmatprep.subr.bf16.mxu0 0
    %2879 = vmatpush1.bf16.msra.mxu0 0
    %2880 = vmatprep.subr.bf16.mxu0 0
    %2881 = vmatpush1.bf16.msra.mxu0 0
    %2882 = vmatprep.subr.bf16.mxu0 0
    %2883 = vmatpush1.bf16.msra.mxu0 %v2857
    %2884 = vmatprep.subr.bf16.mxu0 0
    %2885 = vmatpush1.bf16.msra.mxu0 %v2855
    %2886 = vmatprep.subr.bf16.mxu0 0
    %2887 = vmatpush1.bf16.msra.mxu0 %v2853
    %2888 = vmatprep.subr.bf16.mxu0 0
    %2889 = vmatpush1.bf16.msra.mxu0 %v2851
    %2890 = vmatprep.subr.bf16.mxu0 0
    %2891 = vmatpush2.bf16.msra.mxu0 0
    %2892 = vmatprep.subr.bf16.mxu0 0
    %2893 = vmatpush2.bf16.msra.mxu0 0
    %2894 = vmatprep.subr.bf16.mxu0 0
    %2895 = vmatpush2.bf16.msra.mxu0 0
    %2896 = vmatprep.subr.bf16.mxu0 0
    %2897 = vmatpush2.bf16.msra.mxu0 0
    %2898 = vmatprep.subr.bf16.mxu0 0
    %2899 = vmatpush2.bf16.msra.mxu0 0
    %2900 = vmatprep.subr.bf16.mxu0 0
    %2901 = vmatpush2.bf16.msra.mxu0 0
    %2902 = vmatprep.subr.bf16.mxu0 0
    %2903 = vmatpush2.bf16.msra.mxu0 0
    %2904 = vmatprep.subr.bf16.mxu0 0
    %2905 = vmatpush2.bf16.msra.mxu0 0
    %2906 = vmatprep.mubr.bf16.mxu0 0
    %2907 = vmatmul.mubr.bf16.gmra.mxu0 %v2863
    %v2908 = vpop.f32.mrf.mxu0
    %v2909 = vadd.f32 0.0, %v2908
    %v2910 = vpop.f32.mrf.mxu0
    %v2911 = vpop.f32.mrf.mxu0
    %v2912 = vadd.f32 0.0, %v2911
    %v2913 = vpop.f32.mrf.mxu0
    %2914 = vmatprep.mubr.bf16.mxu0 0
    %2915 = vmatmul.mubr.bf16.gmra.mxu0 %v2866
    %v2916 = vpop.f32.mrf.mxu0
    %v2917 = vadd.f32 0.0, %v2916
    %v2918 = vpop.f32.mrf.mxu0
    %v2919 = vpop.f32.mrf.mxu0
    %v2920 = vadd.f32 0.0, %v2919
    %v2921 = vpop.f32.mrf.mxu0
    %2922 = vmatprep.mubr.bf16.mxu0 0
    %2923 = vmatmul.mubr.bf16.gmra.mxu0 %v2869
    %v2924 = vpop.f32.mrf.mxu0
    %v2925 = vadd.f32 0.0, %v2924
    %v2926 = vpop.f32.mrf.mxu0
    %v2927 = vpop.f32.mrf.mxu0
    %v2928 = vadd.f32 0.0, %v2927
    %v2929 = vpop.f32.mrf.mxu0
    %2930 = vmatprep.mubr.bf16.mxu0 0
    %2931 = vmatmul.mubr.bf16.gmra.mxu0 %v2872
    %v2932 = vpop.f32.mrf.mxu0
    %v2933 = vadd.f32 0.0, %v2932
    %v2934 = vpop.f32.mrf.mxu0
    %v2935 = vpop.f32.mrf.mxu0
    %v2936 = vadd.f32 0.0, %v2935
    %v2937 = vpop.f32.mrf.mxu0
    %2938 = vdwg.mxu0
    %2943 = vrot.lane.b32.xlu0 %v1328, 64
    %v2944 = vpop.permute.xlu0 %2943
    %2945 = vrot.lane.b32.xlu0 %v1329, 64
    %v2946 = vpop.permute.xlu0 %2945
    %2947 = vrot.lane.b32.xlu0 %v1330, 64
    %v2948 = vpop.permute.xlu0 %2947
    %2949 = vrot.lane.b32.xlu0 %v1331, 64
    %v2950 = vpop.permute.xlu0 %2949
    %v2956 = vsel %vm2016, %v2729, 0
    %v2959 = vsel %vm2016, %v2730, 0
    %v2962 = vsel %vm2016, %v2731, 0
    %v2965 = vsel %vm2016, %v2732, 0
    %2967 = vmatprep.subr.bf16.mxu0 0
    %2968 = vmatpush1.bf16.msra.mxu0 0
    %2969 = vmatprep.subr.bf16.mxu0 0
    %2970 = vmatpush1.bf16.msra.mxu0 0
    %2971 = vmatprep.subr.bf16.mxu0 0
    %2972 = vmatpush1.bf16.msra.mxu0 0
    %2973 = vmatprep.subr.bf16.mxu0 0
    %2974 = vmatpush1.bf16.msra.mxu0 0
    %2975 = vmatprep.subr.bf16.mxu0 0
    %2976 = vmatpush1.bf16.msra.mxu0 %v2950
    %2977 = vmatprep.subr.bf16.mxu0 0
    %2978 = vmatpush1.bf16.msra.mxu0 %v2948
    %2979 = vmatprep.subr.bf16.mxu0 0
    %2980 = vmatpush1.bf16.msra.mxu0 %v2946
    %2981 = vmatprep.subr.bf16.mxu0 0
    %2982 = vmatpush1.bf16.msra.mxu0 %v2944
    %2983 = vmatprep.subr.bf16.mxu0 0
    %2984 = vmatpush2.bf16.msra.mxu0 0
    %2985 = vmatprep.subr.bf16.mxu0 0
    %2986 = vmatpush2.bf16.msra.mxu0 0
    %2987 = vmatprep.subr.bf16.mxu0 0
    %2988 = vmatpush2.bf16.msra.mxu0 0
    %2989 = vmatprep.subr.bf16.mxu0 0
    %2990 = vmatpush2.bf16.msra.mxu0 0
    %2991 = vmatprep.subr.bf16.mxu0 0
    %2992 = vmatpush2.bf16.msra.mxu0 0
    %2993 = vmatprep.subr.bf16.mxu0 0
    %2994 = vmatpush2.bf16.msra.mxu0 0
    %2995 = vmatprep.subr.bf16.mxu0 0
    %2996 = vmatpush2.bf16.msra.mxu0 0
    %2997 = vmatprep.subr.bf16.mxu0 0
    %2998 = vmatpush2.bf16.msra.mxu0 0
    %2999 = vmatprep.mubr.bf16.mxu0 0
    %3000 = vmatmul.mubr.bf16.gmra.mxu0 %v2956
    %v3001 = vpop.f32.mrf.mxu0
    %v3002 = vadd.f32 0.0, %v3001
    %v3003 = vpop.f32.mrf.mxu0
    %v3004 = vpop.f32.mrf.mxu0
    %v3005 = vadd.f32 0.0, %v3004
    %v3006 = vpop.f32.mrf.mxu0
    %3007 = vmatprep.mubr.bf16.mxu0 0
    %3008 = vmatmul.mubr.bf16.gmra.mxu0 %v2959
    %v3009 = vpop.f32.mrf.mxu0
    %v3010 = vadd.f32 0.0, %v3009
    %v3011 = vpop.f32.mrf.mxu0
    %v3012 = vpop.f32.mrf.mxu0
    %v3013 = vadd.f32 0.0, %v3012
    %v3014 = vpop.f32.mrf.mxu0
    %3015 = vmatprep.mubr.bf16.mxu0 0
    %3016 = vmatmul.mubr.bf16.gmra.mxu0 %v2962
    %v3017 = vpop.f32.mrf.mxu0
    %v3018 = vadd.f32 0.0, %v3017
    %v3019 = vpop.f32.mrf.mxu0
    %v3020 = vpop.f32.mrf.mxu0
    %v3021 = vadd.f32 0.0, %v3020
    %v3022 = vpop.f32.mrf.mxu0
    %3023 = vmatprep.mubr.bf16.mxu0 0
    %3024 = vmatmul.mubr.bf16.gmra.mxu0 %v2965
    %v3025 = vpop.f32.mrf.mxu0
    %v3026 = vadd.f32 0.0, %v3025
    %v3027 = vpop.f32.mrf.mxu0
    %v3028 = vpop.f32.mrf.mxu0
    %v3029 = vadd.f32 0.0, %v3028
    %v3030 = vpop.f32.mrf.mxu0
    %3031 = vdwg.mxu0
    %3036 = vrot.lane.b32.xlu0 %v1332, 64
    %v3037 = vpop.permute.xlu0 %3036
    %3038 = vrot.lane.b32.xlu0 %v1333, 64
    %v3039 = vpop.permute.xlu0 %3038
    %3040 = vrot.lane.b32.xlu0 %v1334, 64
    %v3041 = vpop.permute.xlu0 %3040
    %3042 = vrot.lane.b32.xlu0 %v1335, 64
    %v3043 = vpop.permute.xlu0 %3042
    %v3049 = vsel %vm2016, %v2733, 0
    %v3052 = vsel %vm2016, %v2734, 0
    %v3055 = vsel %vm2016, %v2735, 0
    %v3058 = vsel %vm2016, %v2736, 0
    %3060 = vmatprep.subr.bf16.mxu0 0
    %3061 = vmatpush1.bf16.msra.mxu0 0
    %3062 = vmatprep.subr.bf16.mxu0 0
    %3063 = vmatpush1.bf16.msra.mxu0 0
    %3064 = vmatprep.subr.bf16.mxu0 0
    %3065 = vmatpush1.bf16.msra.mxu0 0
    %3066 = vmatprep.subr.bf16.mxu0 0
    %3067 = vmatpush1.bf16.msra.mxu0 0
    %3068 = vmatprep.subr.bf16.mxu0 0
    %3069 = vmatpush1.bf16.msra.mxu0 %v3043
    %3070 = vmatprep.subr.bf16.mxu0 0
    %3071 = vmatpush1.bf16.msra.mxu0 %v3041
    %3072 = vmatprep.subr.bf16.mxu0 0
    %3073 = vmatpush1.bf16.msra.mxu0 %v3039
    %3074 = vmatprep.subr.bf16.mxu0 0
    %3075 = vmatpush1.bf16.msra.mxu0 %v3037
    %3076 = vmatprep.subr.bf16.mxu0 0
    %3077 = vmatpush2.bf16.msra.mxu0 0
    %3078 = vmatprep.subr.bf16.mxu0 0
    %3079 = vmatpush2.bf16.msra.mxu0 0
    %3080 = vmatprep.subr.bf16.mxu0 0
    %3081 = vmatpush2.bf16.msra.mxu0 0
    %3082 = vmatprep.subr.bf16.mxu0 0
    %3083 = vmatpush2.bf16.msra.mxu0 0
    %3084 = vmatprep.subr.bf16.mxu0 0
    %3085 = vmatpush2.bf16.msra.mxu0 0
    %3086 = vmatprep.subr.bf16.mxu0 0
    %3087 = vmatpush2.bf16.msra.mxu0 0
    %3088 = vmatprep.subr.bf16.mxu0 0
    %3089 = vmatpush2.bf16.msra.mxu0 0
    %3090 = vmatprep.subr.bf16.mxu0 0
    %3091 = vmatpush2.bf16.msra.mxu0 0
    %3092 = vmatprep.mubr.bf16.mxu0 0
    %3093 = vmatmul.mubr.bf16.gmra.mxu0 %v3049
    %v3094 = vpop.f32.mrf.mxu0
    %v3095 = vadd.f32 0.0, %v3094
    %v3096 = vpop.f32.mrf.mxu0
    %v3097 = vpop.f32.mrf.mxu0
    %v3098 = vadd.f32 0.0, %v3097
    %v3099 = vpop.f32.mrf.mxu0
    %3100 = vmatprep.mubr.bf16.mxu0 0
    %3101 = vmatmul.mubr.bf16.gmra.mxu0 %v3052
    %v3102 = vpop.f32.mrf.mxu0
    %v3103 = vadd.f32 0.0, %v3102
    %v3104 = vpop.f32.mrf.mxu0
    %v3105 = vpop.f32.mrf.mxu0
    %v3106 = vadd.f32 0.0, %v3105
    %v3107 = vpop.f32.mrf.mxu0
    %3108 = vmatprep.mubr.bf16.mxu0 0
    %3109 = vmatmul.mubr.bf16.gmra.mxu0 %v3055
    %v3110 = vpop.f32.mrf.mxu0
    %v3111 = vadd.f32 0.0, %v3110
    %v3112 = vpop.f32.mrf.mxu0
    %v3113 = vpop.f32.mrf.mxu0
    %v3114 = vadd.f32 0.0, %v3113
    %v3115 = vpop.f32.mrf.mxu0
    %3116 = vmatprep.mubr.bf16.mxu0 0
    %3117 = vmatmul.mubr.bf16.gmra.mxu0 %v3058
    %v3118 = vpop.f32.mrf.mxu0
    %v3119 = vadd.f32 0.0, %v3118
    %v3120 = vpop.f32.mrf.mxu0
    %v3121 = vpop.f32.mrf.mxu0
    %v3122 = vadd.f32 0.0, %v3121
    %v3123 = vpop.f32.mrf.mxu0
    %3124 = vdwg.mxu0
    %3129 = vrot.lane.b32.xlu0 %v1336, 64
    %v3130 = vpop.permute.xlu0 %3129
    %3131 = vrot.lane.b32.xlu0 %v1337, 64
    %v3132 = vpop.permute.xlu0 %3131
    %3133 = vrot.lane.b32.xlu0 %v1338, 64
    %v3134 = vpop.permute.xlu0 %3133
    %3135 = vrot.lane.b32.xlu0 %v1339, 64
    %v3136 = vpop.permute.xlu0 %3135
    %v3142 = vsel %vm2016, %v2737, 0
    %v3145 = vsel %vm2016, %v2738, 0
    %v3148 = vsel %vm2016, %v2739, 0
    %v3151 = vsel %vm2016, %v2740, 0
    %3153 = vmatprep.subr.bf16.mxu0 0
    %3154 = vmatpush1.bf16.msra.mxu0 0
    %3155 = vmatprep.subr.bf16.mxu0 0
    %3156 = vmatpush1.bf16.msra.mxu0 0
    %3157 = vmatprep.subr.bf16.mxu0 0
    %3158 = vmatpush1.bf16.msra.mxu0 0
    %3159 = vmatprep.subr.bf16.mxu0 0
    %3160 = vmatpush1.bf16.msra.mxu0 0
    %3161 = vmatprep.subr.bf16.mxu0 0
    %3162 = vmatpush1.bf16.msra.mxu0 %v3136
    %3163 = vmatprep.subr.bf16.mxu0 0
    %3164 = vmatpush1.bf16.msra.mxu0 %v3134
    %3165 = vmatprep.subr.bf16.mxu0 0
    %3166 = vmatpush1.bf16.msra.mxu0 %v3132
    %3167 = vmatprep.subr.bf16.mxu0 0
    %3168 = vmatpush1.bf16.msra.mxu0 %v3130
    %3169 = vmatprep.subr.bf16.mxu0 0
    %3170 = vmatpush2.bf16.msra.mxu0 0
    %3171 = vmatprep.subr.bf16.mxu0 0
    %3172 = vmatpush2.bf16.msra.mxu0 0
    %3173 = vmatprep.subr.bf16.mxu0 0
    %3174 = vmatpush2.bf16.msra.mxu0 0
    %3175 = vmatprep.subr.bf16.mxu0 0
    %3176 = vmatpush2.bf16.msra.mxu0 0
    %3177 = vmatprep.subr.bf16.mxu0 0
    %3178 = vmatpush2.bf16.msra.mxu0 0
    %3179 = vmatprep.subr.bf16.mxu0 0
    %3180 = vmatpush2.bf16.msra.mxu0 0
    %3181 = vmatprep.subr.bf16.mxu0 0
    %3182 = vmatpush2.bf16.msra.mxu0 0
    %3183 = vmatprep.subr.bf16.mxu0 0
    %3184 = vmatpush2.bf16.msra.mxu0 0
    %3185 = vmatprep.mubr.bf16.mxu0 0
    %3186 = vmatmul.mubr.bf16.gmra.mxu0 %v3142
    %v3187 = vpop.f32.mrf.mxu0
    %v3188 = vadd.f32 0.0, %v3187
    %v3189 = vpop.f32.mrf.mxu0
    %v3190 = vpop.f32.mrf.mxu0
    %v3191 = vadd.f32 0.0, %v3190
    %v3192 = vpop.f32.mrf.mxu0
    %3193 = vmatprep.mubr.bf16.mxu0 0
    %3194 = vmatmul.mubr.bf16.gmra.mxu0 %v3145
    %v3195 = vpop.f32.mrf.mxu0
    %v3196 = vadd.f32 0.0, %v3195
    %v3197 = vpop.f32.mrf.mxu0
    %v3198 = vpop.f32.mrf.mxu0
    %v3199 = vadd.f32 0.0, %v3198
    %v3200 = vpop.f32.mrf.mxu0
    %3201 = vmatprep.mubr.bf16.mxu0 0
    %3202 = vmatmul.mubr.bf16.gmra.mxu0 %v3148
    %v3203 = vpop.f32.mrf.mxu0
    %v3204 = vadd.f32 0.0, %v3203
    %v3205 = vpop.f32.mrf.mxu0
    %v3206 = vpop.f32.mrf.mxu0
    %v3207 = vadd.f32 0.0, %v3206
    %v3208 = vpop.f32.mrf.mxu0
    %3209 = vmatprep.mubr.bf16.mxu0 0
    %3210 = vmatmul.mubr.bf16.gmra.mxu0 %v3151
    %v3211 = vpop.f32.mrf.mxu0
    %v3212 = vadd.f32 0.0, %v3211
    %v3213 = vpop.f32.mrf.mxu0
    %v3214 = vpop.f32.mrf.mxu0
    %v3215 = vadd.f32 0.0, %v3214
    %v3216 = vpop.f32.mrf.mxu0
    %3217 = vdwg.mxu0
    %3222 = vrot.lane.b32.xlu0 %v1340, 64
    %v3223 = vpop.permute.xlu0 %3222
    %3224 = vrot.lane.b32.xlu0 %v1341, 64
    %v3225 = vpop.permute.xlu0 %3224
    %3226 = vrot.lane.b32.xlu0 %v1342, 64
    %v3227 = vpop.permute.xlu0 %3226
    %3228 = vrot.lane.b32.xlu0 %v1343, 64
    %v3229 = vpop.permute.xlu0 %3228
    %v3235 = vsel %vm2016, %v2741, 0
    %v3238 = vsel %vm2016, %v2742, 0
    %v3241 = vsel %vm2016, %v2743, 0
    %v3244 = vsel %vm2016, %v2744, 0
    %3246 = vmatprep.subr.bf16.mxu0 0
    %3247 = vmatpush1.bf16.msra.mxu0 0
    %3248 = vmatprep.subr.bf16.mxu0 0
    %3249 = vmatpush1.bf16.msra.mxu0 0
    %3250 = vmatprep.subr.bf16.mxu0 0
    %3251 = vmatpush1.bf16.msra.mxu0 0
    %3252 = vmatprep.subr.bf16.mxu0 0
    %3253 = vmatpush1.bf16.msra.mxu0 0
    %3254 = vmatprep.subr.bf16.mxu0 0
    %3255 = vmatpush1.bf16.msra.mxu0 %v3229
    %3256 = vmatprep.subr.bf16.mxu0 0
    %3257 = vmatpush1.bf16.msra.mxu0 %v3227
    %3258 = vmatprep.subr.bf16.mxu0 0
    %3259 = vmatpush1.bf16.msra.mxu0 %v3225
    %3260 = vmatprep.subr.bf16.mxu0 0
    %3261 = vmatpush1.bf16.msra.mxu0 %v3223
    %3262 = vmatprep.subr.bf16.mxu0 0
    %3263 = vmatpush2.bf16.msra.mxu0 0
    %3264 = vmatprep.subr.bf16.mxu0 0
    %3265 = vmatpush2.bf16.msra.mxu0 0
    %3266 = vmatprep.subr.bf16.mxu0 0
    %3267 = vmatpush2.bf16.msra.mxu0 0
    %3268 = vmatprep.subr.bf16.mxu0 0
    %3269 = vmatpush2.bf16.msra.mxu0 0
    %3270 = vmatprep.subr.bf16.mxu0 0
    %3271 = vmatpush2.bf16.msra.mxu0 0
    %3272 = vmatprep.subr.bf16.mxu0 0
    %3273 = vmatpush2.bf16.msra.mxu0 0
    %3274 = vmatprep.subr.bf16.mxu0 0
    %3275 = vmatpush2.bf16.msra.mxu0 0
    %3276 = vmatprep.subr.bf16.mxu0 0
    %3277 = vmatpush2.bf16.msra.mxu0 0
    %3278 = vmatprep.mubr.bf16.mxu0 0
    %3279 = vmatmul.mubr.bf16.gmra.mxu0 %v3235
    %v3280 = vpop.f32.mrf.mxu0
    %v3281 = vadd.f32 0.0, %v3280
    %v3282 = vpop.f32.mrf.mxu0
    %v3283 = vpop.f32.mrf.mxu0
    %v3284 = vadd.f32 0.0, %v3283
    %v3285 = vpop.f32.mrf.mxu0
    %3286 = vmatprep.mubr.bf16.mxu0 0
    %3287 = vmatmul.mubr.bf16.gmra.mxu0 %v3238
    %v3288 = vpop.f32.mrf.mxu0
    %v3289 = vadd.f32 0.0, %v3288
    %v3290 = vpop.f32.mrf.mxu0
    %v3291 = vpop.f32.mrf.mxu0
    %v3292 = vadd.f32 0.0, %v3291
    %v3293 = vpop.f32.mrf.mxu0
    %3294 = vmatprep.mubr.bf16.mxu0 0
    %3295 = vmatmul.mubr.bf16.gmra.mxu0 %v3241
    %v3296 = vpop.f32.mrf.mxu0
    %v3297 = vadd.f32 0.0, %v3296
    %v3298 = vpop.f32.mrf.mxu0
    %v3299 = vpop.f32.mrf.mxu0
    %v3300 = vadd.f32 0.0, %v3299
    %v3301 = vpop.f32.mrf.mxu0
    %3302 = vmatprep.mubr.bf16.mxu0 0
    %3303 = vmatmul.mubr.bf16.gmra.mxu0 %v3244
    %v3304 = vpop.f32.mrf.mxu0
    %v3305 = vadd.f32 0.0, %v3304
    %v3306 = vpop.f32.mrf.mxu0
    %v3307 = vpop.f32.mrf.mxu0
    %v3308 = vadd.f32 0.0, %v3307
    %v3309 = vpop.f32.mrf.mxu0
    %3310 = vdwg.mxu0
    %3315 = vrot.lane.b32.xlu0 %v1344, 64
    %v3316 = vpop.permute.xlu0 %3315
    %3317 = vrot.lane.b32.xlu0 %v1345, 64
    %v3318 = vpop.permute.xlu0 %3317
    %3319 = vrot.lane.b32.xlu0 %v1346, 64
    %v3320 = vpop.permute.xlu0 %3319
    %3321 = vrot.lane.b32.xlu0 %v1347, 64
    %v3322 = vpop.permute.xlu0 %3321
    %v3328 = vsel %vm2016, %v2745, 0
    %v3331 = vsel %vm2016, %v2746, 0
    %v3334 = vsel %vm2016, %v2747, 0
    %v3337 = vsel %vm2016, %v2748, 0
    %3339 = vmatprep.subr.bf16.mxu0 0
    %3340 = vmatpush1.bf16.msra.mxu0 0
    %3341 = vmatprep.subr.bf16.mxu0 0
    %3342 = vmatpush1.bf16.msra.mxu0 0
    %3343 = vmatprep.subr.bf16.mxu0 0
    %3344 = vmatpush1.bf16.msra.mxu0 0
    %3345 = vmatprep.subr.bf16.mxu0 0
    %3346 = vmatpush1.bf16.msra.mxu0 0
    %3347 = vmatprep.subr.bf16.mxu0 0
    %3348 = vmatpush1.bf16.msra.mxu0 %v3322
    %3349 = vmatprep.subr.bf16.mxu0 0
    %3350 = vmatpush1.bf16.msra.mxu0 %v3320
    %3351 = vmatprep.subr.bf16.mxu0 0
    %3352 = vmatpush1.bf16.msra.mxu0 %v3318
    %3353 = vmatprep.subr.bf16.mxu0 0
    %3354 = vmatpush1.bf16.msra.mxu0 %v3316
    %3355 = vmatprep.subr.bf16.mxu0 0
    %3356 = vmatpush2.bf16.msra.mxu0 0
    %3357 = vmatprep.subr.bf16.mxu0 0
    %3358 = vmatpush2.bf16.msra.mxu0 0
    %3359 = vmatprep.subr.bf16.mxu0 0
    %3360 = vmatpush2.bf16.msra.mxu0 0
    %3361 = vmatprep.subr.bf16.mxu0 0
    %3362 = vmatpush2.bf16.msra.mxu0 0
    %3363 = vmatprep.subr.bf16.mxu0 0
    %3364 = vmatpush2.bf16.msra.mxu0 0
    %3365 = vmatprep.subr.bf16.mxu0 0
    %3366 = vmatpush2.bf16.msra.mxu0 0
    %3367 = vmatprep.subr.bf16.mxu0 0
    %3368 = vmatpush2.bf16.msra.mxu0 0
    %3369 = vmatprep.subr.bf16.mxu0 0
    %3370 = vmatpush2.bf16.msra.mxu0 0
    %3371 = vmatprep.mubr.bf16.mxu0 0
    %3372 = vmatmul.mubr.bf16.gmra.mxu0 %v3328
    %v3373 = vpop.f32.mrf.mxu0
    %v3374 = vadd.f32 0.0, %v3373
    %v3375 = vpop.f32.mrf.mxu0
    %v3376 = vpop.f32.mrf.mxu0
    %v3377 = vadd.f32 0.0, %v3376
    %v3378 = vpop.f32.mrf.mxu0
    %3379 = vmatprep.mubr.bf16.mxu0 0
    %3380 = vmatmul.mubr.bf16.gmra.mxu0 %v3331
    %v3381 = vpop.f32.mrf.mxu0
    %v3382 = vadd.f32 0.0, %v3381
    %v3383 = vpop.f32.mrf.mxu0
    %v3384 = vpop.f32.mrf.mxu0
    %v3385 = vadd.f32 0.0, %v3384
    %v3386 = vpop.f32.mrf.mxu0
    %3387 = vmatprep.mubr.bf16.mxu0 0
    %3388 = vmatmul.mubr.bf16.gmra.mxu0 %v3334
    %v3389 = vpop.f32.mrf.mxu0
    %v3390 = vadd.f32 0.0, %v3389
    %v3391 = vpop.f32.mrf.mxu0
    %v3392 = vpop.f32.mrf.mxu0
    %v3393 = vadd.f32 0.0, %v3392
    %v3394 = vpop.f32.mrf.mxu0
    %3395 = vmatprep.mubr.bf16.mxu0 0
    %3396 = vmatmul.mubr.bf16.gmra.mxu0 %v3337
    %v3397 = vpop.f32.mrf.mxu0
    %v3398 = vadd.f32 0.0, %v3397
    %v3399 = vpop.f32.mrf.mxu0
    %v3400 = vpop.f32.mrf.mxu0
    %v3401 = vadd.f32 0.0, %v3400
    %v3402 = vpop.f32.mrf.mxu0
    %3403 = vdwg.mxu0
    %3408 = vrot.lane.b32.xlu0 %v1348, 64
    %v3409 = vpop.permute.xlu0 %3408
    %3410 = vrot.lane.b32.xlu0 %v1349, 64
    %v3411 = vpop.permute.xlu0 %3410
    %3412 = vrot.lane.b32.xlu0 %v1350, 64
    %v3413 = vpop.permute.xlu0 %3412
    %3414 = vrot.lane.b32.xlu0 %v1351, 64
    %v3415 = vpop.permute.xlu0 %3414
    %v3421 = vsel %vm2016, %v2749, 0
    %v3424 = vsel %vm2016, %v2750, 0
    %v3427 = vsel %vm2016, %v2751, 0
    %v3430 = vsel %vm2016, %v2752, 0
    %3432 = vmatprep.subr.bf16.mxu0 0
    %3433 = vmatpush1.bf16.msra.mxu0 0
    %3434 = vmatprep.subr.bf16.mxu0 0
    %3435 = vmatpush1.bf16.msra.mxu0 0
    %3436 = vmatprep.subr.bf16.mxu0 0
    %3437 = vmatpush1.bf16.msra.mxu0 0
    %3438 = vmatprep.subr.bf16.mxu0 0
    %3439 = vmatpush1.bf16.msra.mxu0 0
    %3440 = vmatprep.subr.bf16.mxu0 0
    %3441 = vmatpush1.bf16.msra.mxu0 %v3415
    %3442 = vmatprep.subr.bf16.mxu0 0
    %3443 = vmatpush1.bf16.msra.mxu0 %v3413
    %3444 = vmatprep.subr.bf16.mxu0 0
    %3445 = vmatpush1.bf16.msra.mxu0 %v3411
    %3446 = vmatprep.subr.bf16.mxu0 0
    %3447 = vmatpush1.bf16.msra.mxu0 %v3409
    %3448 = vmatprep.subr.bf16.mxu0 0
    %3449 = vmatpush2.bf16.msra.mxu0 0
    %3450 = vmatprep.subr.bf16.mxu0 0
    %3451 = vmatpush2.bf16.msra.mxu0 0
    %3452 = vmatprep.subr.bf16.mxu0 0
    %3453 = vmatpush2.bf16.msra.mxu0 0
    %3454 = vmatprep.subr.bf16.mxu0 0
    %3455 = vmatpush2.bf16.msra.mxu0 0
    %3456 = vmatprep.subr.bf16.mxu0 0
    %3457 = vmatpush2.bf16.msra.mxu0 0
    %3458 = vmatprep.subr.bf16.mxu0 0
    %3459 = vmatpush2.bf16.msra.mxu0 0
    %3460 = vmatprep.subr.bf16.mxu0 0
    %3461 = vmatpush2.bf16.msra.mxu0 0
    %3462 = vmatprep.subr.bf16.mxu0 0
    %3463 = vmatpush2.bf16.msra.mxu0 0
    %3464 = vmatprep.mubr.bf16.mxu0 0
    %3465 = vmatmul.mubr.bf16.gmra.mxu0 %v3421
    %v3466 = vpop.f32.mrf.mxu0
    %v3467 = vadd.f32 0.0, %v3466
    %v3468 = vpop.f32.mrf.mxu0
    %v3469 = vpop.f32.mrf.mxu0
    %v3470 = vadd.f32 0.0, %v3469
    %v3471 = vpop.f32.mrf.mxu0
    %3472 = vmatprep.mubr.bf16.mxu0 0
    %3473 = vmatmul.mubr.bf16.gmra.mxu0 %v3424
    %v3474 = vpop.f32.mrf.mxu0
    %v3475 = vadd.f32 0.0, %v3474
    %v3476 = vpop.f32.mrf.mxu0
    %v3477 = vpop.f32.mrf.mxu0
    %v3478 = vadd.f32 0.0, %v3477
    %v3479 = vpop.f32.mrf.mxu0
    %3480 = vmatprep.mubr.bf16.mxu0 0
    %3481 = vmatmul.mubr.bf16.gmra.mxu0 %v3427
    %v3482 = vpop.f32.mrf.mxu0
    %v3483 = vadd.f32 0.0, %v3482
    %v3484 = vpop.f32.mrf.mxu0
    %v3485 = vpop.f32.mrf.mxu0
    %v3486 = vadd.f32 0.0, %v3485
    %v3487 = vpop.f32.mrf.mxu0
    %3488 = vmatprep.mubr.bf16.mxu0 0
    %3489 = vmatmul.mubr.bf16.gmra.mxu0 %v3430
    %v3490 = vpop.f32.mrf.mxu0
    %v3491 = vadd.f32 0.0, %v3490
    %v3492 = vpop.f32.mrf.mxu0
    %v3493 = vpop.f32.mrf.mxu0
    %v3494 = vadd.f32 0.0, %v3493
    %v3495 = vpop.f32.mrf.mxu0
    %3496 = vdwg.mxu0
    %v3497 = vsel %vm374, %v2816, 0.0
    %v3498 = vsel %vm374, %v3002, 0.0
    %v3499 = vadd.f32 %v3497, %v3498
    %v3500 = vsel %vm374, %v3188, 0.0
    %v3501 = vadd.f32 %v3499, %v3500
    %v3502 = vsel %vm374, %v3374, 0.0
    %v3503 = vadd.f32 %v3501, %v3502
    %v3504 = vsel %vm374, %v2819, 0.0
    %v3505 = vsel %vm374, %v3005, 0.0
    %v3506 = vadd.f32 %v3504, %v3505
    %v3507 = vsel %vm374, %v3191, 0.0
    %v3508 = vadd.f32 %v3506, %v3507
    %v3509 = vsel %vm374, %v3377, 0.0
    %v3510 = vadd.f32 %v3508, %v3509
    %v3511 = vsel %vm374, %v2824, 0.0
    %v3512 = vsel %vm374, %v3010, 0.0
    %v3513 = vadd.f32 %v3511, %v3512
    %v3514 = vsel %vm374, %v3196, 0.0
    %v3515 = vadd.f32 %v3513, %v3514
    %v3516 = vsel %vm374, %v3382, 0.0
    %v3517 = vadd.f32 %v3515, %v3516
    %v3518 = vsel %vm374, %v2827, 0.0
    %v3519 = vsel %vm374, %v3013, 0.0
    %v3520 = vadd.f32 %v3518, %v3519
    %v3521 = vsel %vm374, %v3199, 0.0
    %v3522 = vadd.f32 %v3520, %v3521
    %v3523 = vsel %vm374, %v3385, 0.0
    %v3524 = vadd.f32 %v3522, %v3523
    %v3525 = vsel %vm374, %v2832, 0.0
    %v3526 = vsel %vm374, %v3018, 0.0
    %v3527 = vadd.f32 %v3525, %v3526
    %v3528 = vsel %vm374, %v3204, 0.0
    %v3529 = vadd.f32 %v3527, %v3528
    %v3530 = vsel %vm374, %v3390, 0.0
    %v3531 = vadd.f32 %v3529, %v3530
    %v3532 = vsel %vm374, %v2835, 0.0
    %v3533 = vsel %vm374, %v3021, 0.0
    %v3534 = vadd.f32 %v3532, %v3533
    %v3535 = vsel %vm374, %v3207, 0.0
    %v3536 = vadd.f32 %v3534, %v3535
    %v3537 = vsel %vm374, %v3393, 0.0
    %v3538 = vadd.f32 %v3536, %v3537
    %v3539 = vsel %vm374, %v2840, 0.0
    %v3540 = vsel %vm374, %v3026, 0.0
    %v3541 = vadd.f32 %v3539, %v3540
    %v3542 = vsel %vm374, %v3212, 0.0
    %v3543 = vadd.f32 %v3541, %v3542
    %v3544 = vsel %vm374, %v3398, 0.0
    %v3545 = vadd.f32 %v3543, %v3544
    %v3546 = vsel %vm374, %v2843, 0.0
    %v3547 = vsel %vm374, %v3029, 0.0
    %v3548 = vadd.f32 %v3546, %v3547
    %v3549 = vsel %vm374, %v3215, 0.0
    %v3550 = vadd.f32 %v3548, %v3549
    %v3551 = vsel %vm374, %v3401, 0.0
    %v3552 = vadd.f32 %v3550, %v3551
    %v3553 = vsel %vm374, %v2909, 0.0
    %v3554 = vsel %vm374, %v3095, 0.0
    %v3555 = vadd.f32 %v3553, %v3554
    %v3556 = vsel %vm374, %v3281, 0.0
    %v3557 = vadd.f32 %v3555, %v3556
    %v3558 = vsel %vm374, %v3467, 0.0
    %v3559 = vadd.f32 %v3557, %v3558
    %v3560 = vsel %vm374, %v2912, 0.0
    %v3561 = vsel %vm374, %v3098, 0.0
    %v3562 = vadd.f32 %v3560, %v3561
    %v3563 = vsel %vm374, %v3284, 0.0
    %v3564 = vadd.f32 %v3562, %v3563
    %v3565 = vsel %vm374, %v3470, 0.0
    %v3566 = vadd.f32 %v3564, %v3565
    %v3567 = vsel %vm374, %v2917, 0.0
    %v3568 = vsel %vm374, %v3103, 0.0
    %v3569 = vadd.f32 %v3567, %v3568
    %v3570 = vsel %vm374, %v3289, 0.0
    %v3571 = vadd.f32 %v3569, %v3570
    %v3572 = vsel %vm374, %v3475, 0.0
    %v3573 = vadd.f32 %v3571, %v3572
    %v3574 = vsel %vm374, %v2920, 0.0
    %v3575 = vsel %vm374, %v3106, 0.0
    %v3576 = vadd.f32 %v3574, %v3575
    %v3577 = vsel %vm374, %v3292, 0.0
    %v3578 = vadd.f32 %v3576, %v3577
    %v3579 = vsel %vm374, %v3478, 0.0
    %v3580 = vadd.f32 %v3578, %v3579
    %v3581 = vsel %vm374, %v2925, 0.0
    %v3582 = vsel %vm374, %v3111, 0.0
    %v3583 = vadd.f32 %v3581, %v3582
    %v3584 = vsel %vm374, %v3297, 0.0
    %v3585 = vadd.f32 %v3583, %v3584
    %v3586 = vsel %vm374, %v3483, 0.0
    %v3587 = vadd.f32 %v3585, %v3586
    %v3588 = vsel %vm374, %v2928, 0.0
    %v3589 = vsel %vm374, %v3114, 0.0
    %v3590 = vadd.f32 %v3588, %v3589
    %v3591 = vsel %vm374, %v3300, 0.0
    %v3592 = vadd.f32 %v3590, %v3591
    %v3593 = vsel %vm374, %v3486, 0.0
    %v3594 = vadd.f32 %v3592, %v3593
    %v3595 = vsel %vm374, %v2933, 0.0
    %v3596 = vsel %vm374, %v3119, 0.0
    %v3597 = vadd.f32 %v3595, %v3596
    %v3598 = vsel %vm374, %v3305, 0.0
    %v3599 = vadd.f32 %v3597, %v3598
    %v3600 = vsel %vm374, %v3491, 0.0
    %v3601 = vadd.f32 %v3599, %v3600
    %v3602 = vsel %vm374, %v2936, 0.0
    %v3603 = vsel %vm374, %v3122, 0.0
    %v3604 = vadd.f32 %v3602, %v3603
    %v3605 = vsel %vm374, %v3308, 0.0
    %v3606 = vadd.f32 %v3604, %v3605
    %v3607 = vsel %vm374, %v3494, 0.0
    %v3608 = vadd.f32 %v3606, %v3607
    %v3609 = vpack.c.bf16 %v3510, %v3503
    %v3610 = vpack.c.bf16 %v3524, %v3517
    %v3611 = vpack.c.bf16 %v3538, %v3531
    %v3612 = vpack.c.bf16 %v3552, %v3545
    %v3613 = vpack.c.bf16 %v3566, %v3559
    %v3614 = vpack.c.bf16 %v3580, %v3573
    %v3615 = vpack.c.bf16 %v3594, %v3587
    %v3616 = vpack.c.bf16 %v3608, %v3601
    %v3618 = vlaneseq
    %v3619 = vshrl.u32 %v3618, 7
    %v3620 = vsub.s32 0, %v3619
    %v3621 = vrot.slane %v1068, %v3620
    %v3627 = vunpack.c.l.b16 %v1064
    %v3628 = vunpack.c.l.b16 %v1065
    %v3629 = vunpack.c.l.b16 %v1066
    %v3630 = vunpack.c.l.b16 %v1067
    %v3631 = vpack.c.b16 %v3628, %v3627
    %v3632 = vpack.c.b16 %v3630, %v3629
    %v3636 = vsel %vm374, %v3609, 0
    %v3639 = vsel %vm374, %v3610, 0
    %v3642 = vsel %vm374, %v3611, 0
    %v3645 = vsel %vm374, %v3612, 0
    %v3648 = vsel %vm374, %v3613, 0
    %v3651 = vsel %vm374, %v3614, 0
    %v3654 = vsel %vm374, %v3615, 0
    %v3657 = vsel %vm374, %v3616, 0
    %3659 = vmatprep.subr.bf16.mxu0 0
    %3660 = vmatpush1.bf16.msra.mxu0 0
    %3661 = vmatprep.subr.bf16.mxu0 0
    %3662 = vmatpush1.bf16.msra.mxu0 0
    %3663 = vmatprep.subr.bf16.mxu0 0
    %3664 = vmatpush1.bf16.msra.mxu0 0
    %3665 = vmatprep.subr.bf16.mxu0 0
    %3666 = vmatpush1.bf16.msra.mxu0 0
    %3667 = vmatprep.subr.bf16.mxu0 0
    %3668 = vmatpush1.bf16.msra.mxu0 0
    %3669 = vmatprep.subr.bf16.mxu0 0
    %3670 = vmatpush1.bf16.msra.mxu0 0
    %3671 = vmatprep.subr.bf16.mxu0 0
    %3672 = vmatpush1.bf16.msra.mxu0 %v3632
    %3673 = vmatprep.subr.bf16.mxu0 0
    %3674 = vmatpush1.bf16.msra.mxu0 %v3631
    %3675 = vmatprep.subr.bf16.mxu0 0
    %3676 = vmatpush2.bf16.msra.mxu0 0
    %3677 = vmatprep.subr.bf16.mxu0 0
    %3678 = vmatpush2.bf16.msra.mxu0 0
    %3679 = vmatprep.subr.bf16.mxu0 0
    %3680 = vmatpush2.bf16.msra.mxu0 0
    %3681 = vmatprep.subr.bf16.mxu0 0
    %3682 = vmatpush2.bf16.msra.mxu0 0
    %3683 = vmatprep.subr.bf16.mxu0 0
    %3684 = vmatpush2.bf16.msra.mxu0 0
    %3685 = vmatprep.subr.bf16.mxu0 0
    %3686 = vmatpush2.bf16.msra.mxu0 0
    %3687 = vmatprep.subr.bf16.mxu0 0
    %3688 = vmatpush2.bf16.msra.mxu0 0
    %3689 = vmatprep.subr.bf16.mxu0 0
    %3690 = vmatpush2.bf16.msra.mxu0 0
    %3691 = vmatprep.mubr.bf16.mxu0 0
    %3692 = vmatmul.mubr.bf16.gmra.mxu0 %v3636
    %v3693 = vpop.f32.mrf.mxu0
    %v3694 = vadd.f32 %v3621, %v3693
    %v3695 = vpop.f32.mrf.mxu0
    %v3696 = vpop.f32.mrf.mxu0
    %v3697 = vadd.f32 %v3621, %v3696
    %v3698 = vpop.f32.mrf.mxu0
    %3699 = vmatprep.mubr.bf16.mxu0 0
    %3700 = vmatmul.mubr.bf16.gmra.mxu0 %v3639
    %v3701 = vpop.f32.mrf.mxu0
    %v3702 = vadd.f32 %v3621, %v3701
    %v3703 = vpop.f32.mrf.mxu0
    %v3704 = vpop.f32.mrf.mxu0
    %v3705 = vadd.f32 %v3621, %v3704
    %v3706 = vpop.f32.mrf.mxu0
    %3707 = vmatprep.mubr.bf16.mxu0 0
    %3708 = vmatmul.mubr.bf16.gmra.mxu0 %v3642
    %v3709 = vpop.f32.mrf.mxu0
    %v3710 = vadd.f32 %v3621, %v3709
    %v3711 = vpop.f32.mrf.mxu0
    %v3712 = vpop.f32.mrf.mxu0
    %v3713 = vadd.f32 %v3621, %v3712
    %v3714 = vpop.f32.mrf.mxu0
    %3715 = vmatprep.mubr.bf16.mxu0 0
    %3716 = vmatmul.mubr.bf16.gmra.mxu0 %v3645
    %v3717 = vpop.f32.mrf.mxu0
    %v3718 = vadd.f32 %v3621, %v3717
    %v3719 = vpop.f32.mrf.mxu0
    %v3720 = vpop.f32.mrf.mxu0
    %v3721 = vadd.f32 %v3621, %v3720
    %v3722 = vpop.f32.mrf.mxu0
    %3723 = vmatprep.mubr.bf16.mxu0 0
    %3724 = vmatmul.mubr.bf16.gmra.mxu0 %v3648
    %v3725 = vpop.f32.mrf.mxu0
    %v3726 = vadd.f32 %v3621, %v3725
    %v3727 = vpop.f32.mrf.mxu0
    %v3728 = vpop.f32.mrf.mxu0
    %v3729 = vadd.f32 %v3621, %v3728
    %v3730 = vpop.f32.mrf.mxu0
    %3731 = vmatprep.mubr.bf16.mxu0 0
    %3732 = vmatmul.mubr.bf16.gmra.mxu0 %v3651
    %v3733 = vpop.f32.mrf.mxu0
    %v3734 = vadd.f32 %v3621, %v3733
    %v3735 = vpop.f32.mrf.mxu0
    %v3736 = vpop.f32.mrf.mxu0
    %v3737 = vadd.f32 %v3621, %v3736
    %v3738 = vpop.f32.mrf.mxu0
    %3739 = vmatprep.mubr.bf16.mxu0 0
    %3740 = vmatmul.mubr.bf16.gmra.mxu0 %v3654
    %v3741 = vpop.f32.mrf.mxu0
    %v3742 = vadd.f32 %v3621, %v3741
    %v3743 = vpop.f32.mrf.mxu0
    %v3744 = vpop.f32.mrf.mxu0
    %v3745 = vadd.f32 %v3621, %v3744
    %v3746 = vpop.f32.mrf.mxu0
    %3747 = vmatprep.mubr.bf16.mxu0 0
    %3748 = vmatmul.mubr.bf16.gmra.mxu0 %v3657
    %v3749 = vpop.f32.mrf.mxu0
    %v3750 = vadd.f32 %v3621, %v3749
    %v3751 = vpop.f32.mrf.mxu0
    %v3752 = vpop.f32.mrf.mxu0
    %v3753 = vadd.f32 %v3621, %v3752
    %v3754 = vpop.f32.mrf.mxu0
    %3755 = vdwg.mxu0
    %v3756 = vpack.c.bf16 %v3697, %v3694
    %v3757 = vpack.c.bf16 %v3705, %v3702
    %v3758 = vpack.c.bf16 %v3713, %v3710
    %v3759 = vpack.c.bf16 %v3721, %v3718
    %v3760 = vpack.c.bf16 %v3729, %v3726
    %v3761 = vpack.c.bf16 %v3737, %v3734
    %v3762 = vpack.c.bf16 %v3745, %v3742
    %v3763 = vpack.c.bf16 %v3753, %v3750
    %v3768 = vunpack.c.l.b16 %v1073
    %v3769 = vunpack.c.l.b16 %v1074
    %v3770 = vunpack.c.l.b16 %v1075
    %v3771 = vunpack.c.l.b16 %v1076
    %v3772 = vpack.c.b16 %v3769, %v3768
    %v3773 = vpack.c.b16 %v3771, %v3770
    %v3777 = vsel %vm374, %v3756, 0
    %v3780 = vsel %vm374, %v3757, 0
    %v3783 = vsel %vm374, %v3758, 0
    %v3786 = vsel %vm374, %v3759, 0
    %v3789 = vsel %vm374, %v3760, 0
    %v3792 = vsel %vm374, %v3761, 0
    %v3795 = vsel %vm374, %v3762, 0
    %v3798 = vsel %vm374, %v3763, 0
    %3800 = vmatprep.subr.bf16.mxu0 0
    %3801 = vmatpush1.bf16.msra.mxu0 0
    %3802 = vmatprep.subr.bf16.mxu0 0
    %3803 = vmatpush1.bf16.msra.mxu0 0
    %3804 = vmatprep.subr.bf16.mxu0 0
    %3805 = vmatpush1.bf16.msra.mxu0 0
    %3806 = vmatprep.subr.bf16.mxu0 0
    %3807 = vmatpush1.bf16.msra.mxu0 0
    %3808 = vmatprep.subr.bf16.mxu0 0
    %3809 = vmatpush1.bf16.msra.mxu0 0
    %3810 = vmatprep.subr.bf16.mxu0 0
    %3811 = vmatpush1.bf16.msra.mxu0 0
    %3812 = vmatprep.subr.bf16.mxu0 0
    %3813 = vmatpush1.bf16.msra.mxu0 %v3773
    %3814 = vmatprep.subr.bf16.mxu0 0
    %3815 = vmatpush1.bf16.msra.mxu0 %v3772
    %3816 = vmatprep.subr.bf16.mxu0 0
    %3817 = vmatpush2.bf16.msra.mxu0 0
    %3818 = vmatprep.subr.bf16.mxu0 0
    %3819 = vmatpush2.bf16.msra.mxu0 0
    %3820 = vmatprep.subr.bf16.mxu0 0
    %3821 = vmatpush2.bf16.msra.mxu0 0
    %3822 = vmatprep.subr.bf16.mxu0 0
    %3823 = vmatpush2.bf16.msra.mxu0 0
    %3824 = vmatprep.subr.bf16.mxu0 0
    %3825 = vmatpush2.bf16.msra.mxu0 0
    %3826 = vmatprep.subr.bf16.mxu0 0
    %3827 = vmatpush2.bf16.msra.mxu0 0
    %3828 = vmatprep.subr.bf16.mxu0 0
    %3829 = vmatpush2.bf16.msra.mxu0 0
    %3830 = vmatprep.subr.bf16.mxu0 0
    %3831 = vmatpush2.bf16.msra.mxu0 0
    %3832 = vmatprep.mubr.bf16.mxu0 0
    %3833 = vmatmul.mubr.bf16.gmra.mxu0 %v3777
    %v3834 = vpop.f32.mrf.mxu0
    %v3835 = vadd.f32 0.0, %v3834
    %v3836 = vpop.f32.mrf.mxu0
    %v3837 = vpop.f32.mrf.mxu0
    %v3838 = vadd.f32 0.0, %v3837
    %v3839 = vpop.f32.mrf.mxu0
    %3840 = vmatprep.mubr.bf16.mxu0 0
    %3841 = vmatmul.mubr.bf16.gmra.mxu0 %v3780
    %v3842 = vpop.f32.mrf.mxu0
    %v3843 = vadd.f32 0.0, %v3842
    %v3844 = vpop.f32.mrf.mxu0
    %v3845 = vpop.f32.mrf.mxu0
    %v3846 = vadd.f32 0.0, %v3845
    %v3847 = vpop.f32.mrf.mxu0
    %3848 = vmatprep.mubr.bf16.mxu0 0
    %3849 = vmatmul.mubr.bf16.gmra.mxu0 %v3783
    %v3850 = vpop.f32.mrf.mxu0
    %v3851 = vadd.f32 0.0, %v3850
    %v3852 = vpop.f32.mrf.mxu0
    %v3853 = vpop.f32.mrf.mxu0
    %v3854 = vadd.f32 0.0, %v3853
    %v3855 = vpop.f32.mrf.mxu0
    %3856 = vmatprep.mubr.bf16.mxu0 0
    %3857 = vmatmul.mubr.bf16.gmra.mxu0 %v3786
    %v3858 = vpop.f32.mrf.mxu0
    %v3859 = vadd.f32 0.0, %v3858
    %v3860 = vpop.f32.mrf.mxu0
    %v3861 = vpop.f32.mrf.mxu0
    %v3862 = vadd.f32 0.0, %v3861
    %v3863 = vpop.f32.mrf.mxu0
    %3864 = vmatprep.mubr.bf16.mxu0 0
    %3865 = vmatmul.mubr.bf16.gmra.mxu0 %v3789
    %v3866 = vpop.f32.mrf.mxu0
    %v3867 = vadd.f32 0.0, %v3866
    %v3868 = vpop.f32.mrf.mxu0
    %v3869 = vpop.f32.mrf.mxu0
    %v3870 = vadd.f32 0.0, %v3869
    %v3871 = vpop.f32.mrf.mxu0
    %3872 = vmatprep.mubr.bf16.mxu0 0
    %3873 = vmatmul.mubr.bf16.gmra.mxu0 %v3792
    %v3874 = vpop.f32.mrf.mxu0
    %v3875 = vadd.f32 0.0, %v3874
    %v3876 = vpop.f32.mrf.mxu0
    %v3877 = vpop.f32.mrf.mxu0
    %v3878 = vadd.f32 0.0, %v3877
    %v3879 = vpop.f32.mrf.mxu0
    %3880 = vmatprep.mubr.bf16.mxu0 0
    %3881 = vmatmul.mubr.bf16.gmra.mxu0 %v3795
    %v3882 = vpop.f32.mrf.mxu0
    %v3883 = vadd.f32 0.0, %v3882
    %v3884 = vpop.f32.mrf.mxu0
    %v3885 = vpop.f32.mrf.mxu0
    %v3886 = vadd.f32 0.0, %v3885
    %v3887 = vpop.f32.mrf.mxu0
    %3888 = vmatprep.mubr.bf16.mxu0 0
    %3889 = vmatmul.mubr.bf16.gmra.mxu0 %v3798
    %v3890 = vpop.f32.mrf.mxu0
    %v3891 = vadd.f32 0.0, %v3890
    %v3892 = vpop.f32.mrf.mxu0
    %v3893 = vpop.f32.mrf.mxu0
    %v3894 = vadd.f32 0.0, %v3893
    %v3895 = vpop.f32.mrf.mxu0
    %3896 = vdwg.mxu0
    %v3901 = vunpack.c.l.b16 %v1069
    %v3902 = vunpack.c.l.b16 %v1070
    %v3903 = vunpack.c.l.b16 %v1071
    %v3904 = vunpack.c.l.b16 %v1072
    %v3905 = vpack.c.b16 %v3902, %v3901
    %v3906 = vpack.c.b16 %v3904, %v3903
    %3909 = vmatprep.subr.bf16.mxu0 0
    %3910 = vmatpush1.bf16.msra.mxu0 0
    %3911 = vmatprep.subr.bf16.mxu0 0
    %3912 = vmatpush1.bf16.msra.mxu0 0
    %3913 = vmatprep.subr.bf16.mxu0 0
    %3914 = vmatpush1.bf16.msra.mxu0 0
    %3915 = vmatprep.subr.bf16.mxu0 0
    %3916 = vmatpush1.bf16.msra.mxu0 0
    %3917 = vmatprep.subr.bf16.mxu0 0
    %3918 = vmatpush1.bf16.msra.mxu0 0
    %3919 = vmatprep.subr.bf16.mxu0 0
    %3920 = vmatpush1.bf16.msra.mxu0 0
    %3921 = vmatprep.subr.bf16.mxu0 0
    %3922 = vmatpush1.bf16.msra.mxu0 %v3906
    %3923 = vmatprep.subr.bf16.mxu0 0
    %3924 = vmatpush1.bf16.msra.mxu0 %v3905
    %3925 = vmatprep.subr.bf16.mxu0 0
    %3926 = vmatpush2.bf16.msra.mxu0 0
    %3927 = vmatprep.subr.bf16.mxu0 0
    %3928 = vmatpush2.bf16.msra.mxu0 0
    %3929 = vmatprep.subr.bf16.mxu0 0
    %3930 = vmatpush2.bf16.msra.mxu0 0
    %3931 = vmatprep.subr.bf16.mxu0 0
    %3932 = vmatpush2.bf16.msra.mxu0 0
    %3933 = vmatprep.subr.bf16.mxu0 0
    %3934 = vmatpush2.bf16.msra.mxu0 0
    %3935 = vmatprep.subr.bf16.mxu0 0
    %3936 = vmatpush2.bf16.msra.mxu0 0
    %3937 = vmatprep.subr.bf16.mxu0 0
    %3938 = vmatpush2.bf16.msra.mxu0 0
    %3939 = vmatprep.subr.bf16.mxu0 0
    %3940 = vmatpush2.bf16.msra.mxu0 0
    %3941 = vmatprep.mubr.bf16.mxu0 0
    %3942 = vmatmul.mubr.bf16.gmra.mxu0 %v1116
    %v3943 = vpop.f32.mrf.mxu0
    %v3944 = vadd.f32 %v3835, %v3943
    %v3945 = vpop.f32.mrf.mxu0
    %v3946 = vpop.f32.mrf.mxu0
    %v3947 = vadd.f32 %v3838, %v3946
    %v3948 = vpop.f32.mrf.mxu0
    %3949 = vmatprep.mubr.bf16.mxu0 0
    %3950 = vmatmul.mubr.bf16.gmra.mxu0 %v1119
    %v3951 = vpop.f32.mrf.mxu0
    %v3952 = vadd.f32 %v3843, %v3951
    %v3953 = vpop.f32.mrf.mxu0
    %v3954 = vpop.f32.mrf.mxu0
    %v3955 = vadd.f32 %v3846, %v3954
    %v3956 = vpop.f32.mrf.mxu0
    %3957 = vmatprep.mubr.bf16.mxu0 0
    %3958 = vmatmul.mubr.bf16.gmra.mxu0 %v1122
    %v3959 = vpop.f32.mrf.mxu0
    %v3960 = vadd.f32 %v3851, %v3959
    %v3961 = vpop.f32.mrf.mxu0
    %v3962 = vpop.f32.mrf.mxu0
    %v3963 = vadd.f32 %v3854, %v3962
    %v3964 = vpop.f32.mrf.mxu0
    %3965 = vmatprep.mubr.bf16.mxu0 0
    %3966 = vmatmul.mubr.bf16.gmra.mxu0 %v1125
    %v3967 = vpop.f32.mrf.mxu0
    %v3968 = vadd.f32 %v3859, %v3967
    %v3969 = vpop.f32.mrf.mxu0
    %v3970 = vpop.f32.mrf.mxu0
    %v3971 = vadd.f32 %v3862, %v3970
    %v3972 = vpop.f32.mrf.mxu0
    %3973 = vmatprep.mubr.bf16.mxu0 0
    %3974 = vmatmul.mubr.bf16.gmra.mxu0 %v1128
    %v3975 = vpop.f32.mrf.mxu0
    %v3976 = vadd.f32 %v3867, %v3975
    %v3977 = vpop.f32.mrf.mxu0
    %v3978 = vpop.f32.mrf.mxu0
    %v3979 = vadd.f32 %v3870, %v3978
    %v3980 = vpop.f32.mrf.mxu0
    %3981 = vmatprep.mubr.bf16.mxu0 0
    %3982 = vmatmul.mubr.bf16.gmra.mxu0 %v1131
    %v3983 = vpop.f32.mrf.mxu0
    %v3984 = vadd.f32 %v3875, %v3983
    %v3985 = vpop.f32.mrf.mxu0
    %v3986 = vpop.f32.mrf.mxu0
    %v3987 = vadd.f32 %v3878, %v3986
    %v3988 = vpop.f32.mrf.mxu0
    %3989 = vmatprep.mubr.bf16.mxu0 0
    %3990 = vmatmul.mubr.bf16.gmra.mxu0 %v1134
    %v3991 = vpop.f32.mrf.mxu0
    %v3992 = vadd.f32 %v3883, %v3991
    %v3993 = vpop.f32.mrf.mxu0
    %v3994 = vpop.f32.mrf.mxu0
    %v3995 = vadd.f32 %v3886, %v3994
    %v3996 = vpop.f32.mrf.mxu0
    %3997 = vmatprep.mubr.bf16.mxu0 0
    %3998 = vmatmul.mubr.bf16.gmra.mxu0 %v1137
    %v3999 = vpop.f32.mrf.mxu0
    %v4000 = vadd.f32 %v3891, %v3999
    %v4001 = vpop.f32.mrf.mxu0
    %v4002 = vpop.f32.mrf.mxu0
    %v4003 = vadd.f32 %v3894, %v4002
    %v4004 = vpop.f32.mrf.mxu0
    %4005 = vdwg.mxu0
    %v4007 = vlaneseq
    %v4008 = vshrl.u32 %v4007, 7
    %v4009 = vsub.s32 0, %v4008
    %v4010 = vrot.slane %v1077, %v4009
    %v4012 = vadd.f32 %v3944, %v4010
    %v4013 = vadd.f32 %v3947, %v4010
    %v4014 = vadd.f32 %v3952, %v4010
    %v4015 = vadd.f32 %v3955, %v4010
    %v4016 = vadd.f32 %v3960, %v4010
    %v4017 = vadd.f32 %v3963, %v4010
    %v4018 = vadd.f32 %v3968, %v4010
    %v4019 = vadd.f32 %v3971, %v4010
    %v4020 = vadd.f32 %v3976, %v4010
    %v4021 = vadd.f32 %v3979, %v4010
    %v4022 = vadd.f32 %v3984, %v4010
    %v4023 = vadd.f32 %v3987, %v4010
    %v4024 = vadd.f32 %v3992, %v4010
    %v4025 = vadd.f32 %v3995, %v4010
    %v4026 = vadd.f32 %v4000, %v4010
    %v4027 = vadd.f32 %v4003, %v4010
    %v4028 = vsel %vm2016, %v4012, 0.0
    %v4029 = vsel %vm2016, %v4013, 0.0
    %v4030 = vadd.f32 %v4028, %v4029
    %v4031 = vsel %vm2016, %v4014, 0.0
    %v4032 = vadd.f32 %v4030, %v4031
    %v4033 = vsel %vm2016, %v4015, 0.0
    %v4034 = vadd.f32 %v4032, %v4033
    %v4035 = vsel %vm2016, %v4016, 0.0
    %v4036 = vadd.f32 %v4034, %v4035
    %v4037 = vsel %vm2016, %v4017, 0.0
    %v4038 = vadd.f32 %v4036, %v4037
    %v4039 = vsel %vm2016, %v4018, 0.0
    %v4040 = vadd.f32 %v4038, %v4039
    %v4041 = vsel %vm2016, %v4019, 0.0
    %v4042 = vadd.f32 %v4040, %v4041
    %v4043 = vsel %vm2016, %v4020, 0.0
    %v4044 = vadd.f32 %v4042, %v4043
    %v4045 = vsel %vm2016, %v4021, 0.0
    %v4046 = vadd.f32 %v4044, %v4045
    %v4047 = vsel %vm2016, %v4022, 0.0
    %v4048 = vadd.f32 %v4046, %v4047
    %v4049 = vsel %vm2016, %v4023, 0.0
    %v4050 = vadd.f32 %v4048, %v4049
    %v4051 = vsel %vm2016, %v4024, 0.0
    %v4052 = vadd.f32 %v4050, %v4051
    %v4053 = vsel %vm2016, %v4025, 0.0
    %v4054 = vadd.f32 %v4052, %v4053
    %v4055 = vsel %vm2016, %v4026, 0.0
    %v4056 = vadd.f32 %v4054, %v4055
    %v4057 = vsel %vm2016, %v4027, 0.0
    %v4058 = vadd.f32 %v4056, %v4057
    %v4059 = vrot.slane %v4058, 4
    %v4060 = vadd.f32 %v4058, %v4059
    %v4061 = vrot.slane %v4060, 2
    %v4062 = vadd.f32 %v4060, %v4061
    %v4063 = vrot.slane %v4062, 1
    %v4064 = vadd.f32 %v4062, %v4063
    %v4065 = vmul.f32 %v4064, 0.0078125
    %v4066 = vmul.f32 %v4012, %v4012
    %v4067 = vmul.f32 %v4013, %v4013
    %v4068 = vmul.f32 %v4014, %v4014
    %v4069 = vmul.f32 %v4015, %v4015
    %v4070 = vmul.f32 %v4016, %v4016
    %v4071 = vmul.f32 %v4017, %v4017
    %v4072 = vmul.f32 %v4018, %v4018
    %v4073 = vmul.f32 %v4019, %v4019
    %v4074 = vmul.f32 %v4020, %v4020
    %v4075 = vmul.f32 %v4021, %v4021
    %v4076 = vmul.f32 %v4022, %v4022
    %v4077 = vmul.f32 %v4023, %v4023
    %v4078 = vmul.f32 %v4024, %v4024
    %v4079 = vmul.f32 %v4025, %v4025
    %v4080 = vmul.f32 %v4026, %v4026
    %v4081 = vmul.f32 %v4027, %v4027
    %v4082 = vsel %vm2016, %v4066, 0.0
    %v4083 = vsel %vm2016, %v4067, 0.0
    %v4084 = vadd.f32 %v4082, %v4083
    %v4085 = vsel %vm2016, %v4068, 0.0
    %v4086 = vadd.f32 %v4084, %v4085
    %v4087 = vsel %vm2016, %v4069, 0.0
    %v4088 = vadd.f32 %v4086, %v4087
    %v4089 = vsel %vm2016, %v4070, 0.0
    %v4090 = vadd.f32 %v4088, %v4089
    %v4091 = vsel %vm2016, %v4071, 0.0
    %v4092 = vadd.f32 %v4090, %v4091
    %v4093 = vsel %vm2016, %v4072, 0.0
    %v4094 = vadd.f32 %v4092, %v4093
    %v4095 = vsel %vm2016, %v4073, 0.0
    %v4096 = vadd.f32 %v4094, %v4095
    %v4097 = vsel %vm2016, %v4074, 0.0
    %v4098 = vadd.f32 %v4096, %v4097
    %v4099 = vsel %vm2016, %v4075, 0.0
    %v4100 = vadd.f32 %v4098, %v4099
    %v4101 = vsel %vm2016, %v4076, 0.0
    %v4102 = vadd.f32 %v4100, %v4101
    %v4103 = vsel %vm2016, %v4077, 0.0
    %v4104 = vadd.f32 %v4102, %v4103
    %v4105 = vsel %vm2016, %v4078, 0.0
    %v4106 = vadd.f32 %v4104, %v4105
    %v4107 = vsel %vm2016, %v4079, 0.0
    %v4108 = vadd.f32 %v4106, %v4107
    %v4109 = vsel %vm2016, %v4080, 0.0
    %v4110 = vadd.f32 %v4108, %v4109
    %v4111 = vsel %vm2016, %v4081, 0.0
    %v4112 = vadd.f32 %v4110, %v4111
    %v4113 = vrot.slane %v4112, 4
    %v4114 = vadd.f32 %v4112, %v4113
    %v4115 = vrot.slane %v4114, 2
    %v4116 = vadd.f32 %v4114, %v4115
    %v4117 = vrot.slane %v4116, 1
    %v4118 = vadd.f32 %v4116, %v4117
    %v4119 = vmul.f32 %v4118, 0.0078125
    %v4120 = vmul.f32 %v4065, %v4065
    %v4121 = vsub.f32 %v4119, %v4120
    %v4122 = vmax.f32 %v4121, 0.0
    %v4123 = vsub.f32 %v4012, %v4065
    %v4124 = vsub.f32 %v4013, %v4065
    %v4125 = vsub.f32 %v4014, %v4065
    %v4126 = vsub.f32 %v4015, %v4065
    %v4127 = vsub.f32 %v4016, %v4065
    %v4128 = vsub.f32 %v4017, %v4065
    %v4129 = vsub.f32 %v4018, %v4065
    %v4130 = vsub.f32 %v4019, %v4065
    %v4131 = vsub.f32 %v4020, %v4065
    %v4132 = vsub.f32 %v4021, %v4065
    %v4133 = vsub.f32 %v4022, %v4065
    %v4134 = vsub.f32 %v4023, %v4065
    %v4135 = vsub.f32 %v4024, %v4065
    %v4136 = vsub.f32 %v4025, %v4065
    %v4137 = vsub.f32 %v4026, %v4065
    %v4138 = vsub.f32 %v4027, %v4065
    %v4139 = vadd.f32 %v4122, 1e-05
    %v4140 = vrsqrt.pop %v4139
    %v4141 = vmul.f32 %v4123, %v4140
    %v4142 = vmul.f32 %v4124, %v4140
    %v4143 = vmul.f32 %v4125, %v4140
    %v4144 = vmul.f32 %v4126, %v4140
    %v4145 = vmul.f32 %v4127, %v4140
    %v4146 = vmul.f32 %v4128, %v4140
    %v4147 = vmul.f32 %v4129, %v4140
    %v4148 = vmul.f32 %v4130, %v4140
    %v4149 = vmul.f32 %v4131, %v4140
    %v4150 = vmul.f32 %v4132, %v4140
    %v4151 = vmul.f32 %v4133, %v4140
    %v4152 = vmul.f32 %v4134, %v4140
    %v4153 = vmul.f32 %v4135, %v4140
    %v4154 = vmul.f32 %v4136, %v4140
    %v4155 = vmul.f32 %v4137, %v4140
    %v4156 = vmul.f32 %v4138, %v4140
    %v4158 = vlaneseq
    %v4159 = vshrl.u32 %v4158, 7
    %v4160 = vsub.s32 0, %v4159
    %v4161 = vrot.slane %v1078, %v4160
    %v4163 = vmul.f32 %v4141, %v4161
    %v4164 = vmul.f32 %v4142, %v4161
    %v4165 = vmul.f32 %v4143, %v4161
    %v4166 = vmul.f32 %v4144, %v4161
    %v4167 = vmul.f32 %v4145, %v4161
    %v4168 = vmul.f32 %v4146, %v4161
    %v4169 = vmul.f32 %v4147, %v4161
    %v4170 = vmul.f32 %v4148, %v4161
    %v4171 = vmul.f32 %v4149, %v4161
    %v4172 = vmul.f32 %v4150, %v4161
    %v4173 = vmul.f32 %v4151, %v4161
    %v4174 = vmul.f32 %v4152, %v4161
    %v4175 = vmul.f32 %v4153, %v4161
    %v4176 = vmul.f32 %v4154, %v4161
    %v4177 = vmul.f32 %v4155, %v4161
    %v4178 = vmul.f32 %v4156, %v4161
    %v4180 = vlaneseq
    %v4181 = vshrl.u32 %v4180, 7
    %v4182 = vsub.s32 0, %v4181
    %v4183 = vrot.slane %v1079, %v4182
    %v4185 = vadd.f32 %v4163, %v4183
    %v4186 = vadd.f32 %v4164, %v4183
    %v4187 = vadd.f32 %v4165, %v4183
    %v4188 = vadd.f32 %v4166, %v4183
    %v4189 = vadd.f32 %v4167, %v4183
    %v4190 = vadd.f32 %v4168, %v4183
    %v4191 = vadd.f32 %v4169, %v4183
    %v4192 = vadd.f32 %v4170, %v4183
    %v4193 = vadd.f32 %v4171, %v4183
    %v4194 = vadd.f32 %v4172, %v4183
    %v4195 = vadd.f32 %v4173, %v4183
    %v4196 = vadd.f32 %v4174, %v4183
    %v4197 = vadd.f32 %v4175, %v4183
    %v4198 = vadd.f32 %v4176, %v4183
    %v4199 = vadd.f32 %v4177, %v4183
    %v4200 = vadd.f32 %v4178, %v4183
    %v4201 = vmax.f32 %v4185, 0.0
    %v4202 = vmax.f32 %v4186, 0.0
    %v4203 = vmax.f32 %v4187, 0.0
    %v4204 = vmax.f32 %v4188, 0.0
    %v4205 = vmax.f32 %v4189, 0.0
    %v4206 = vmax.f32 %v4190, 0.0
    %v4207 = vmax.f32 %v4191, 0.0
    %v4208 = vmax.f32 %v4192, 0.0
    %v4209 = vmax.f32 %v4193, 0.0
    %v4210 = vmax.f32 %v4194, 0.0
    %v4211 = vmax.f32 %v4195, 0.0
    %v4212 = vmax.f32 %v4196, 0.0
    %v4213 = vmax.f32 %v4197, 0.0
    %v4214 = vmax.f32 %v4198, 0.0
    %v4215 = vmax.f32 %v4199, 0.0
    %v4216 = vmax.f32 %v4200, 0.0
    %v4217 = vpack.c.bf16 %v4202, %v4201
    %v4218 = vpack.c.bf16 %v4204, %v4203
    %v4219 = vpack.c.bf16 %v4206, %v4205
    %v4220 = vpack.c.bf16 %v4208, %v4207
    %v4221 = vpack.c.bf16 %v4210, %v4209
    %v4222 = vpack.c.bf16 %v4212, %v4211
    %v4223 = vpack.c.bf16 %v4214, %v4213
    %v4224 = vpack.c.bf16 %v4216, %v4215
    %v4226 = vlaneseq
    %v4227 = vshrl.u32 %v4226, 7
    %v4228 = vsub.s32 0, %v4227
    %v4229 = vrot.slane %v1088, %v4228
    %v4239 = vunpack.c.l.b16 %v1080
    %v4240 = vunpack.c.l.b16 %v1081
    %v4241 = vunpack.c.l.b16 %v1082
    %v4242 = vunpack.c.l.b16 %v1083
    %v4243 = vunpack.c.l.b16 %v1084
    %v4244 = vunpack.c.l.b16 %v1085
    %v4245 = vunpack.c.l.b16 %v1086
    %v4246 = vunpack.c.l.b16 %v1087
    %v4247 = vpack.c.b16 %v4240, %v4239
    %v4248 = vpack.c.b16 %v4242, %v4241
    %v4249 = vpack.c.b16 %v4244, %v4243
    %v4250 = vpack.c.b16 %v4246, %v4245
    %v4256 = vsel %vm2016, %v4217, 0
    %v4259 = vsel %vm2016, %v4218, 0
    %v4262 = vsel %vm2016, %v4219, 0
    %v4265 = vsel %vm2016, %v4220, 0
    %v4268 = vsel %vm2016, %v4221, 0
    %v4271 = vsel %vm2016, %v4222, 0
    %v4274 = vsel %vm2016, %v4223, 0
    %v4277 = vsel %vm2016, %v4224, 0
    %4279 = vmatprep.subr.bf16.mxu0 0
    %4280 = vmatpush1.bf16.msra.mxu0 0
    %4281 = vmatprep.subr.bf16.mxu0 0
    %4282 = vmatpush1.bf16.msra.mxu0 0
    %4283 = vmatprep.subr.bf16.mxu0 0
    %4284 = vmatpush1.bf16.msra.mxu0 0
    %4285 = vmatprep.subr.bf16.mxu0 0
    %4286 = vmatpush1.bf16.msra.mxu0 0
    %4287 = vmatprep.subr.bf16.mxu0 0
    %4288 = vmatpush1.bf16.msra.mxu0 %v4250
    %4289 = vmatprep.subr.bf16.mxu0 0
    %4290 = vmatpush1.bf16.msra.mxu0 %v4249
    %4291 = vmatprep.subr.bf16.mxu0 0
    %4292 = vmatpush1.bf16.msra.mxu0 %v4248
    %4293 = vmatprep.subr.bf16.mxu0 0
    %4294 = vmatpush1.bf16.msra.mxu0 %v4247
    %4295 = vmatprep.subr.bf16.mxu0 0
    %4296 = vmatpush2.bf16.msra.mxu0 0
    %4297 = vmatprep.subr.bf16.mxu0 0
    %4298 = vmatpush2.bf16.msra.mxu0 0
    %4299 = vmatprep.subr.bf16.mxu0 0
    %4300 = vmatpush2.bf16.msra.mxu0 0
    %4301 = vmatprep.subr.bf16.mxu0 0
    %4302 = vmatpush2.bf16.msra.mxu0 0
    %4303 = vmatprep.subr.bf16.mxu0 0
    %4304 = vmatpush2.bf16.msra.mxu0 0
    %4305 = vmatprep.subr.bf16.mxu0 0
    %4306 = vmatpush2.bf16.msra.mxu0 0
    %4307 = vmatprep.subr.bf16.mxu0 0
    %4308 = vmatpush2.bf16.msra.mxu0 0
    %4309 = vmatprep.subr.bf16.mxu0 0
    %4310 = vmatpush2.bf16.msra.mxu0 0
    %4311 = vmatprep.mubr.bf16.mxu0 0
    %4312 = vmatmul.mubr.bf16.gmra.mxu0 %v4256
    %v4313 = vpop.f32.mrf.mxu0
    %v4314 = vadd.f32 %v4229, %v4313
    %v4315 = vpop.f32.mrf.mxu0
    %v4316 = vpop.f32.mrf.mxu0
    %v4317 = vadd.f32 %v4229, %v4316
    %v4318 = vpop.f32.mrf.mxu0
    %4319 = vmatprep.mubr.bf16.mxu0 0
    %4320 = vmatmul.mubr.bf16.gmra.mxu0 %v4259
    %v4321 = vpop.f32.mrf.mxu0
    %v4322 = vadd.f32 %v4229, %v4321
    %v4323 = vpop.f32.mrf.mxu0
    %v4324 = vpop.f32.mrf.mxu0
    %v4325 = vadd.f32 %v4229, %v4324
    %v4326 = vpop.f32.mrf.mxu0
    %4327 = vmatprep.mubr.bf16.mxu0 0
    %4328 = vmatmul.mubr.bf16.gmra.mxu0 %v4262
    %v4329 = vpop.f32.mrf.mxu0
    %v4330 = vadd.f32 %v4229, %v4329
    %v4331 = vpop.f32.mrf.mxu0
    %v4332 = vpop.f32.mrf.mxu0
    %v4333 = vadd.f32 %v4229, %v4332
    %v4334 = vpop.f32.mrf.mxu0
    %4335 = vmatprep.mubr.bf16.mxu0 0
    %4336 = vmatmul.mubr.bf16.gmra.mxu0 %v4265
    %v4337 = vpop.f32.mrf.mxu0
    %v4338 = vadd.f32 %v4229, %v4337
    %v4339 = vpop.f32.mrf.mxu0
    %v4340 = vpop.f32.mrf.mxu0
    %v4341 = vadd.f32 %v4229, %v4340
    %v4342 = vpop.f32.mrf.mxu0
    %4343 = vmatprep.mubr.bf16.mxu0 0
    %4344 = vmatmul.mubr.bf16.gmra.mxu0 %v4268
    %v4345 = vpop.f32.mrf.mxu0
    %v4346 = vadd.f32 %v4229, %v4345
    %v4347 = vpop.f32.mrf.mxu0
    %v4348 = vpop.f32.mrf.mxu0
    %v4349 = vadd.f32 %v4229, %v4348
    %v4350 = vpop.f32.mrf.mxu0
    %4351 = vmatprep.mubr.bf16.mxu0 0
    %4352 = vmatmul.mubr.bf16.gmra.mxu0 %v4271
    %v4353 = vpop.f32.mrf.mxu0
    %v4354 = vadd.f32 %v4229, %v4353
    %v4355 = vpop.f32.mrf.mxu0
    %v4356 = vpop.f32.mrf.mxu0
    %v4357 = vadd.f32 %v4229, %v4356
    %v4358 = vpop.f32.mrf.mxu0
    %4359 = vmatprep.mubr.bf16.mxu0 0
    %4360 = vmatmul.mubr.bf16.gmra.mxu0 %v4274
    %v4361 = vpop.f32.mrf.mxu0
    %v4362 = vadd.f32 %v4229, %v4361
    %v4363 = vpop.f32.mrf.mxu0
    %v4364 = vpop.f32.mrf.mxu0
    %v4365 = vadd.f32 %v4229, %v4364
    %v4366 = vpop.f32.mrf.mxu0
    %4367 = vmatprep.mubr.bf16.mxu0 0
    %4368 = vmatmul.mubr.bf16.gmra.mxu0 %v4277
    %v4369 = vpop.f32.mrf.mxu0
    %v4370 = vadd.f32 %v4229, %v4369
    %v4371 = vpop.f32.mrf.mxu0
    %v4372 = vpop.f32.mrf.mxu0
    %v4373 = vadd.f32 %v4229, %v4372
    %v4374 = vpop.f32.mrf.mxu0
    %4375 = vdwg.mxu0
    %v4376 = vadd.f32 %v997, %v4314
    %v4377 = vadd.f32 %v1000, %v4317
    %v4378 = vadd.f32 %v1005, %v4322
    %v4379 = vadd.f32 %v1008, %v4325
    %v4380 = vadd.f32 %v1013, %v4330
    %v4381 = vadd.f32 %v1016, %v4333
    %v4382 = vadd.f32 %v1021, %v4338
    %v4383 = vadd.f32 %v1024, %v4341
    %v4384 = vadd.f32 %v1029, %v4346
    %v4385 = vadd.f32 %v1032, %v4349
    %v4386 = vadd.f32 %v1037, %v4354
    %v4387 = vadd.f32 %v1040, %v4357
    %v4388 = vadd.f32 %v1045, %v4362
    %v4389 = vadd.f32 %v1048, %v4365
    %v4390 = vadd.f32 %v1053, %v4370
    %v4391 = vadd.f32 %v1056, %v4373
    %v4392 = vld [vmem:[%s47] sm:$0xf]
    %v4393 = vld [vmem:[%s47 + $0x4] sm:$0xf]
    %v4394 = vld [vmem:[%s47 + $0x8] sm:$0xf]
    %v4395 = vld [vmem:[%s47 + $0xc] sm:$0xf]
    %v4396 = vld [vmem:[%s49] sm:$0x1]
    %v4397 = vld [vmem:[%s51] sm:$0xf]
    %v4398 = vld [vmem:[%s51 + $0x4] sm:$0xf]
    %v4399 = vld [vmem:[%s51 + $0x8] sm:$0xf]
    %v4400 = vld [vmem:[%s51 + $0xc] sm:$0xf]
    %v4401 = vld [vmem:[%s53] sm:$0x1]
    %v4402 = vld [vmem:[%s55] sm:$0xf]
    %v4403 = vld [vmem:[%s55 + $0x4] sm:$0xf]
    %v4404 = vld [vmem:[%s55 + $0x8] sm:$0xf]
    %v4405 = vld [vmem:[%s55 + $0xc] sm:$0xf]
    %v4406 = vld [vmem:[%s57] sm:$0xf]
    %v4407 = vld [vmem:[%s57 + $0x4] sm:$0xf]
    %v4408 = vld [vmem:[%s57 + $0x8] sm:$0xf]
    %v4409 = vld [vmem:[%s57 + $0xc] sm:$0xf]
    %v4410 = vld [vmem:[%s59] sm:$0x1]
    %v4411 = vld [vmem:[%s61] sm:$0x1]
    %v4412 = vld [vmem:[%s63] sm:$0x1]
    %v4413 = vld [vmem:[%s65] sm:$0xf]
    %v4414 = vld [vmem:[%s65 + $0x4] sm:$0xf]
    %v4415 = vld [vmem:[%s65 + $0x8] sm:$0xf]
    %v4416 = vld [vmem:[%s65 + $0xc] sm:$0xf]
    %v4417 = vld [vmem:[%s65 + $0x10] sm:$0xf]
    %v4418 = vld [vmem:[%s65 + $0x14] sm:$0xf]
    %v4419 = vld [vmem:[%s65 + $0x18] sm:$0xf]
    %v4420 = vld [vmem:[%s65 + $0x1c] sm:$0xf]
    %v4421 = vld [vmem:[%s67] sm:$0x1]
    %v4422 = vpack.c.bf16 %v4377, %v4376
    %v4423 = vpack.c.bf16 %v4379, %v4378
    %v4424 = vpack.c.bf16 %v4381, %v4380
    %v4425 = vpack.c.bf16 %v4383, %v4382
    %v4426 = vpack.c.bf16 %v4385, %v4384
    %v4427 = vpack.c.bf16 %v4387, %v4386
    %v4428 = vpack.c.bf16 %v4389, %v4388
    %v4429 = vpack.c.bf16 %v4391, %v4390
    %v4431 = vlaneseq
    %v4432 = vshrl.u32 %v4431, 7
    %v4433 = vsub.s32 0, %v4432
    %v4434 = vrot.slane %v4396, %v4433
    %v4440 = vunpack.c.l.b16 %v4392
    %v4441 = vunpack.c.l.b16 %v4393
    %v4442 = vunpack.c.l.b16 %v4394
    %v4443 = vunpack.c.l.b16 %v4395
    %v4444 = vpack.c.b16 %v4441, %v4440
    %v4445 = vpack.c.b16 %v4443, %v4442
    %v4449 = vsel %vm374, %v4422, 0
    %v4452 = vsel %vm374, %v4423, 0
    %v4455 = vsel %vm374, %v4424, 0
    %v4458 = vsel %vm374, %v4425, 0
    %v4461 = vsel %vm374, %v4426, 0
    %v4464 = vsel %vm374, %v4427, 0
    %v4467 = vsel %vm374, %v4428, 0
    %v4470 = vsel %vm374, %v4429, 0
    %4472 = vmatprep.subr.bf16.mxu0 0
    %4473 = vmatpush1.bf16.msra.mxu0 0
    %4474 = vmatprep.subr.bf16.mxu0 0
    %4475 = vmatpush1.bf16.msra.mxu0 0
    %4476 = vmatprep.subr.bf16.mxu0 0
    %4477 = vmatpush1.bf16.msra.mxu0 0
    %4478 = vmatprep.subr.bf16.mxu0 0
    %4479 = vmatpush1.bf16.msra.mxu0 0
    %4480 = vmatprep.subr.bf16.mxu0 0
    %4481 = vmatpush1.bf16.msra.mxu0 0
    %4482 = vmatprep.subr.bf16.mxu0 0
    %4483 = vmatpush1.bf16.msra.mxu0 0
    %4484 = vmatprep.subr.bf16.mxu0 0
    %4485 = vmatpush1.bf16.msra.mxu0 %v4445
    %4486 = vmatprep.subr.bf16.mxu0 0
    %4487 = vmatpush1.bf16.msra.mxu0 %v4444
    %4488 = vmatprep.subr.bf16.mxu0 0
    %4489 = vmatpush2.bf16.msra.mxu0 0
    %4490 = vmatprep.subr.bf16.mxu0 0
    %4491 = vmatpush2.bf16.msra.mxu0 0
    %4492 = vmatprep.subr.bf16.mxu0 0
    %4493 = vmatpush2.bf16.msra.mxu0 0
    %4494 = vmatprep.subr.bf16.mxu0 0
    %4495 = vmatpush2.bf16.msra.mxu0 0
    %4496 = vmatprep.subr.bf16.mxu0 0
    %4497 = vmatpush2.bf16.msra.mxu0 0
    %4498 = vmatprep.subr.bf16.mxu0 0
    %4499 = vmatpush2.bf16.msra.mxu0 0
    %4500 = vmatprep.subr.bf16.mxu0 0
    %4501 = vmatpush2.bf16.msra.mxu0 0
    %4502 = vmatprep.subr.bf16.mxu0 0
    %4503 = vmatpush2.bf16.msra.mxu0 0
    %4504 = vmatprep.mubr.bf16.mxu0 0
    %4505 = vmatmul.mubr.bf16.gmra.mxu0 %v4449
    %v4506 = vpop.f32.mrf.mxu0
    %v4507 = vadd.f32 %v4434, %v4506
    %v4508 = vpop.f32.mrf.mxu0
    %v4509 = vpop.f32.mrf.mxu0
    %v4510 = vadd.f32 %v4434, %v4509
    %v4511 = vpop.f32.mrf.mxu0
    %4512 = vmatprep.mubr.bf16.mxu0 0
    %4513 = vmatmul.mubr.bf16.gmra.mxu0 %v4452
    %v4514 = vpop.f32.mrf.mxu0
    %v4515 = vadd.f32 %v4434, %v4514
    %v4516 = vpop.f32.mrf.mxu0
    %v4517 = vpop.f32.mrf.mxu0
    %v4518 = vadd.f32 %v4434, %v4517
    %v4519 = vpop.f32.mrf.mxu0
    %4520 = vmatprep.mubr.bf16.mxu0 0
    %4521 = vmatmul.mubr.bf16.gmra.mxu0 %v4455
    %v4522 = vpop.f32.mrf.mxu0
    %v4523 = vadd.f32 %v4434, %v4522
    %v4524 = vpop.f32.mrf.mxu0
    %v4525 = vpop.f32.mrf.mxu0
    %v4526 = vadd.f32 %v4434, %v4525
    %v4527 = vpop.f32.mrf.mxu0
    %4528 = vmatprep.mubr.bf16.mxu0 0
    %4529 = vmatmul.mubr.bf16.gmra.mxu0 %v4458
    %v4530 = vpop.f32.mrf.mxu0
    %v4531 = vadd.f32 %v4434, %v4530
    %v4532 = vpop.f32.mrf.mxu0
    %v4533 = vpop.f32.mrf.mxu0
    %v4534 = vadd.f32 %v4434, %v4533
    %v4535 = vpop.f32.mrf.mxu0
    %4536 = vmatprep.mubr.bf16.mxu0 0
    %4537 = vmatmul.mubr.bf16.gmra.mxu0 %v4461
    %v4538 = vpop.f32.mrf.mxu0
    %v4539 = vadd.f32 %v4434, %v4538
    %v4540 = vpop.f32.mrf.mxu0
    %v4541 = vpop.f32.mrf.mxu0
    %v4542 = vadd.f32 %v4434, %v4541
    %v4543 = vpop.f32.mrf.mxu0
    %4544 = vmatprep.mubr.bf16.mxu0 0
    %4545 = vmatmul.mubr.bf16.gmra.mxu0 %v4464
    %v4546 = vpop.f32.mrf.mxu0
    %v4547 = vadd.f32 %v4434, %v4546
    %v4548 = vpop.f32.mrf.mxu0
    %v4549 = vpop.f32.mrf.mxu0
    %v4550 = vadd.f32 %v4434, %v4549
    %v4551 = vpop.f32.mrf.mxu0
    %4552 = vmatprep.mubr.bf16.mxu0 0
    %4553 = vmatmul.mubr.bf16.gmra.mxu0 %v4467
    %v4554 = vpop.f32.mrf.mxu0
    %v4555 = vadd.f32 %v4434, %v4554
    %v4556 = vpop.f32.mrf.mxu0
    %v4557 = vpop.f32.mrf.mxu0
    %v4558 = vadd.f32 %v4434, %v4557
    %v4559 = vpop.f32.mrf.mxu0
    %4560 = vmatprep.mubr.bf16.mxu0 0
    %4561 = vmatmul.mubr.bf16.gmra.mxu0 %v4470
    %v4562 = vpop.f32.mrf.mxu0
    %v4563 = vadd.f32 %v4434, %v4562
    %v4564 = vpop.f32.mrf.mxu0
    %v4565 = vpop.f32.mrf.mxu0
    %v4566 = vadd.f32 %v4434, %v4565
    %v4567 = vpop.f32.mrf.mxu0
    %4568 = vdwg.mxu0
    %v4569 = vpack.c.bf16 %v4510, %v4507
    %v4570 = vpack.c.bf16 %v4518, %v4515
    %v4571 = vpack.c.bf16 %v4526, %v4523
    %v4572 = vpack.c.bf16 %v4534, %v4531
    %v4573 = vpack.c.bf16 %v4542, %v4539
    %v4574 = vpack.c.bf16 %v4550, %v4547
    %v4575 = vpack.c.bf16 %v4558, %v4555
    %v4576 = vpack.c.bf16 %v4566, %v4563
    %v4577 = vmul.bf16 %v4569, %v1250
    %v4578 = vmul.bf16 %v4570, %v1250
    %v4579 = vmul.bf16 %v4571, %v1250
    %v4580 = vmul.bf16 %v4572, %v1250
    %v4581 = vmul.bf16 %v4573, %v1250
    %v4582 = vmul.bf16 %v4574, %v1250
    %v4583 = vmul.bf16 %v4575, %v1250
    %v4584 = vmul.bf16 %v4576, %v1250
    %v4585 = vmul.bf16 %v4569, %v1257
    %v4586 = vmul.bf16 %v4570, %v1257
    %v4587 = vmul.bf16 %v4571, %v1257
    %v4588 = vmul.bf16 %v4572, %v1257
    %v4589 = vmul.bf16 %v4573, %v1257
    %v4590 = vmul.bf16 %v4574, %v1257
    %v4591 = vmul.bf16 %v4575, %v1257
    %v4592 = vmul.bf16 %v4576, %v1257
    %v4593 = vmul.bf16 %v4569, %v1264
    %v4594 = vmul.bf16 %v4570, %v1264
    %v4595 = vmul.bf16 %v4571, %v1264
    %v4596 = vmul.bf16 %v4572, %v1264
    %v4597 = vmul.bf16 %v4573, %v1264
    %v4598 = vmul.bf16 %v4574, %v1264
    %v4599 = vmul.bf16 %v4575, %v1264
    %v4600 = vmul.bf16 %v4576, %v1264
    %v4601 = vmul.bf16 %v4569, %v1271
    %v4602 = vmul.bf16 %v4570, %v1271
    %v4603 = vmul.bf16 %v4571, %v1271
    %v4604 = vmul.bf16 %v4572, %v1271
    %v4605 = vmul.bf16 %v4573, %v1271
    %v4606 = vmul.bf16 %v4574, %v1271
    %v4607 = vmul.bf16 %v4575, %v1271
    %v4608 = vmul.bf16 %v4576, %v1271
    %v4609 = vmul.bf16 %v4569, %v1309
    %v4610 = vmul.bf16 %v4570, %v1309
    %v4611 = vmul.bf16 %v4571, %v1309
    %v4612 = vmul.bf16 %v4572, %v1309
    %v4613 = vmul.bf16 %v4573, %v1309
    %v4614 = vmul.bf16 %v4574, %v1309
    %v4615 = vmul.bf16 %v4575, %v1309
    %v4616 = vmul.bf16 %v4576, %v1309
    %v4617 = vmul.bf16 %v4569, %v1311
    %v4618 = vmul.bf16 %v4570, %v1311
    %v4619 = vmul.bf16 %v4571, %v1311
    %v4620 = vmul.bf16 %v4572, %v1311
    %v4621 = vmul.bf16 %v4573, %v1311
    %v4622 = vmul.bf16 %v4574, %v1311
    %v4623 = vmul.bf16 %v4575, %v1311
    %v4624 = vmul.bf16 %v4576, %v1311
    %v4625 = vmul.bf16 %v4569, %v1313
    %v4626 = vmul.bf16 %v4570, %v1313
    %v4627 = vmul.bf16 %v4571, %v1313
    %v4628 = vmul.bf16 %v4572, %v1313
    %v4629 = vmul.bf16 %v4573, %v1313
    %v4630 = vmul.bf16 %v4574, %v1313
    %v4631 = vmul.bf16 %v4575, %v1313
    %v4632 = vmul.bf16 %v4576, %v1313
    %v4633 = vmul.bf16 %v4569, %v1315
    %v4634 = vmul.bf16 %v4570, %v1315
    %v4635 = vmul.bf16 %v4571, %v1315
    %v4636 = vmul.bf16 %v4572, %v1315
    %v4637 = vmul.bf16 %v4573, %v1315
    %v4638 = vmul.bf16 %v4574, %v1315
    %v4639 = vmul.bf16 %v4575, %v1315
    %v4640 = vmul.bf16 %v4576, %v1315
    %4645 = vrot.lane.b32.xlu0 %v4569, 96
    %v4646 = vpop.permute.xlu0 %4645
    %4647 = vrot.lane.b32.xlu0 %v4570, 96
    %v4648 = vpop.permute.xlu0 %4647
    %4649 = vrot.lane.b32.xlu0 %v4571, 96
    %v4650 = vpop.permute.xlu0 %4649
    %4651 = vrot.lane.b32.xlu0 %v4572, 96
    %v4652 = vpop.permute.xlu0 %4651
    %v4654 = vsel %vm374, %v4577, 0
    %v4657 = vsel %vm374, %v4578, 0
    %v4660 = vsel %vm374, %v4579, 0
    %v4663 = vsel %vm374, %v4580, 0
    %v4666 = vsel %vm374, %v4646, 0
    %v4669 = vsel %vm374, %v4648, 0
    %v4672 = vsel %vm374, %v4650, 0
    %v4675 = vsel %vm374, %v4652, 0
    %4677 = vmatprep.subr.bf16.mxu0 0
    %4678 = vmatpush1.bf16.xpose.msra.mxu0 0
    %4679 = vmatprep.subr.bf16.mxu0 0
    %4680 = vmatpush1.bf16.xpose.msra.mxu0 0
    %4681 = vmatprep.subr.bf16.mxu0 0
    %4682 = vmatpush1.bf16.xpose.msra.mxu0 0
    %4683 = vmatprep.subr.bf16.mxu0 0
    %4684 = vmatpush1.bf16.xpose.msra.mxu0 0
    %4685 = vmatprep.subr.bf16.mxu0 0
    %4686 = vmatpush1.bf16.xpose.msra.mxu0 %v4675
    %4687 = vmatprep.subr.bf16.mxu0 0
    %4688 = vmatpush1.bf16.xpose.msra.mxu0 %v4672
    %4689 = vmatprep.subr.bf16.mxu0 0
    %4690 = vmatpush1.bf16.xpose.msra.mxu0 %v4669
    %4691 = vmatprep.subr.bf16.mxu0 0
    %4692 = vmatpush1.bf16.xpose.msra.mxu0 %v4666
    %4693 = vmatprep.subr.bf16.mxu0 0
    %4694 = vmatpush2.bf16.xpose.msra.mxu0 0
    %4695 = vmatprep.subr.bf16.mxu0 0
    %4696 = vmatpush2.bf16.xpose.msra.mxu0 0
    %4697 = vmatprep.subr.bf16.mxu0 0
    %4698 = vmatpush2.bf16.xpose.msra.mxu0 0
    %4699 = vmatprep.subr.bf16.mxu0 0
    %4700 = vmatpush2.bf16.xpose.msra.mxu0 0
    %4701 = vmatprep.subr.bf16.mxu0 0
    %4702 = vmatpush2.bf16.xpose.msra.mxu0 0
    %4703 = vmatprep.subr.bf16.mxu0 0
    %4704 = vmatpush2.bf16.xpose.msra.mxu0 0
    %4705 = vmatprep.subr.bf16.mxu0 0
    %4706 = vmatpush2.bf16.xpose.msra.mxu0 0
    %4707 = vmatprep.subr.bf16.mxu0 0
    %4708 = vmatpush2.bf16.xpose.msra.mxu0 0
    %4709 = vmatprep.mubr.bf16.mxu0 0
    %4710 = vmatmul.mubr.bf16.gmra.mxu0 %v4654
    %v4711 = vpop.f32.mrf.mxu0
    %v4712 = vadd.f32 0.0, %v4711
    %v4713 = vpop.f32.mrf.mxu0
    %v4714 = vpop.f32.mrf.mxu0
    %v4715 = vadd.f32 0.0, %v4714
    %v4716 = vpop.f32.mrf.mxu0
    %4717 = vmatprep.mubr.bf16.mxu0 0
    %4718 = vmatmul.mubr.bf16.gmra.mxu0 %v4657
    %v4719 = vpop.f32.mrf.mxu0
    %v4720 = vadd.f32 0.0, %v4719
    %v4721 = vpop.f32.mrf.mxu0
    %v4722 = vpop.f32.mrf.mxu0
    %v4723 = vadd.f32 0.0, %v4722
    %v4724 = vpop.f32.mrf.mxu0
    %4725 = vmatprep.mubr.bf16.mxu0 0
    %4726 = vmatmul.mubr.bf16.gmra.mxu0 %v4660
    %v4727 = vpop.f32.mrf.mxu0
    %v4728 = vadd.f32 0.0, %v4727
    %v4729 = vpop.f32.mrf.mxu0
    %v4730 = vpop.f32.mrf.mxu0
    %v4731 = vadd.f32 0.0, %v4730
    %v4732 = vpop.f32.mrf.mxu0
    %4733 = vmatprep.mubr.bf16.mxu0 0
    %4734 = vmatmul.mubr.bf16.gmra.mxu0 %v4663
    %v4735 = vpop.f32.mrf.mxu0
    %v4736 = vadd.f32 0.0, %v4735
    %v4737 = vpop.f32.mrf.mxu0
    %v4738 = vpop.f32.mrf.mxu0
    %v4739 = vadd.f32 0.0, %v4738
    %v4740 = vpop.f32.mrf.mxu0
    %4741 = vdwg.mxu0
    %4746 = vrot.lane.b32.xlu0 %v4573, 96
    %v4747 = vpop.permute.xlu0 %4746
    %4748 = vrot.lane.b32.xlu0 %v4574, 96
    %v4749 = vpop.permute.xlu0 %4748
    %4750 = vrot.lane.b32.xlu0 %v4575, 96
    %v4751 = vpop.permute.xlu0 %4750
    %4752 = vrot.lane.b32.xlu0 %v4576, 96
    %v4753 = vpop.permute.xlu0 %4752
    %v4755 = vsel %vm374, %v4581, 0
    %v4758 = vsel %vm374, %v4582, 0
    %v4761 = vsel %vm374, %v4583, 0
    %v4764 = vsel %vm374, %v4584, 0
    %v4767 = vsel %vm374, %v4747, 0
    %v4770 = vsel %vm374, %v4749, 0
    %v4773 = vsel %vm374, %v4751, 0
    %v4776 = vsel %vm374, %v4753, 0
    %4778 = vmatprep.subr.bf16.mxu0 0
    %4779 = vmatpush1.bf16.xpose.msra.mxu0 0
    %4780 = vmatprep.subr.bf16.mxu0 0
    %4781 = vmatpush1.bf16.xpose.msra.mxu0 0
    %4782 = vmatprep.subr.bf16.mxu0 0
    %4783 = vmatpush1.bf16.xpose.msra.mxu0 0
    %4784 = vmatprep.subr.bf16.mxu0 0
    %4785 = vmatpush1.bf16.xpose.msra.mxu0 0
    %4786 = vmatprep.subr.bf16.mxu0 0
    %4787 = vmatpush1.bf16.xpose.msra.mxu0 %v4776
    %4788 = vmatprep.subr.bf16.mxu0 0
    %4789 = vmatpush1.bf16.xpose.msra.mxu0 %v4773
    %4790 = vmatprep.subr.bf16.mxu0 0
    %4791 = vmatpush1.bf16.xpose.msra.mxu0 %v4770
    %4792 = vmatprep.subr.bf16.mxu0 0
    %4793 = vmatpush1.bf16.xpose.msra.mxu0 %v4767
    %4794 = vmatprep.subr.bf16.mxu0 0
    %4795 = vmatpush2.bf16.xpose.msra.mxu0 0
    %4796 = vmatprep.subr.bf16.mxu0 0
    %4797 = vmatpush2.bf16.xpose.msra.mxu0 0
    %4798 = vmatprep.subr.bf16.mxu0 0
    %4799 = vmatpush2.bf16.xpose.msra.mxu0 0
    %4800 = vmatprep.subr.bf16.mxu0 0
    %4801 = vmatpush2.bf16.xpose.msra.mxu0 0
    %4802 = vmatprep.subr.bf16.mxu0 0
    %4803 = vmatpush2.bf16.xpose.msra.mxu0 0
    %4804 = vmatprep.subr.bf16.mxu0 0
    %4805 = vmatpush2.bf16.xpose.msra.mxu0 0
    %4806 = vmatprep.subr.bf16.mxu0 0
    %4807 = vmatpush2.bf16.xpose.msra.mxu0 0
    %4808 = vmatprep.subr.bf16.mxu0 0
    %4809 = vmatpush2.bf16.xpose.msra.mxu0 0
    %4810 = vmatprep.mubr.bf16.mxu0 0
    %4811 = vmatmul.mubr.bf16.gmra.mxu0 %v4755
    %v4812 = vpop.f32.mrf.mxu0
    %v4813 = vadd.f32 0.0, %v4812
    %v4814 = vpop.f32.mrf.mxu0
    %v4815 = vpop.f32.mrf.mxu0
    %v4816 = vadd.f32 0.0, %v4815
    %v4817 = vpop.f32.mrf.mxu0
    %4818 = vmatprep.mubr.bf16.mxu0 0
    %4819 = vmatmul.mubr.bf16.gmra.mxu0 %v4758
    %v4820 = vpop.f32.mrf.mxu0
    %v4821 = vadd.f32 0.0, %v4820
    %v4822 = vpop.f32.mrf.mxu0
    %v4823 = vpop.f32.mrf.mxu0
    %v4824 = vadd.f32 0.0, %v4823
    %v4825 = vpop.f32.mrf.mxu0
    %4826 = vmatprep.mubr.bf16.mxu0 0
    %4827 = vmatmul.mubr.bf16.gmra.mxu0 %v4761
    %v4828 = vpop.f32.mrf.mxu0
    %v4829 = vadd.f32 0.0, %v4828
    %v4830 = vpop.f32.mrf.mxu0
    %v4831 = vpop.f32.mrf.mxu0
    %v4832 = vadd.f32 0.0, %v4831
    %v4833 = vpop.f32.mrf.mxu0
    %4834 = vmatprep.mubr.bf16.mxu0 0
    %4835 = vmatmul.mubr.bf16.gmra.mxu0 %v4764
    %v4836 = vpop.f32.mrf.mxu0
    %v4837 = vadd.f32 0.0, %v4836
    %v4838 = vpop.f32.mrf.mxu0
    %v4839 = vpop.f32.mrf.mxu0
    %v4840 = vadd.f32 0.0, %v4839
    %v4841 = vpop.f32.mrf.mxu0
    %4842 = vdwg.mxu0
    %v4844 = vsel %vm374, %v4585, 0
    %v4847 = vsel %vm374, %v4586, 0
    %v4850 = vsel %vm374, %v4587, 0
    %v4853 = vsel %vm374, %v4588, 0
    %4855 = vmatprep.subr.bf16.mxu0 0
    %4856 = vmatpush1.bf16.xpose.msra.mxu0 0
    %4857 = vmatprep.subr.bf16.mxu0 0
    %4858 = vmatpush1.bf16.xpose.msra.mxu0 0
    %4859 = vmatprep.subr.bf16.mxu0 0
    %4860 = vmatpush1.bf16.xpose.msra.mxu0 0
    %4861 = vmatprep.subr.bf16.mxu0 0
    %4862 = vmatpush1.bf16.xpose.msra.mxu0 0
    %4863 = vmatprep.subr.bf16.mxu0 0
    %4864 = vmatpush1.bf16.xpose.msra.mxu0 %v4675
    %4865 = vmatprep.subr.bf16.mxu0 0
    %4866 = vmatpush1.bf16.xpose.msra.mxu0 %v4672
    %4867 = vmatprep.subr.bf16.mxu0 0
    %4868 = vmatpush1.bf16.xpose.msra.mxu0 %v4669
    %4869 = vmatprep.subr.bf16.mxu0 0
    %4870 = vmatpush1.bf16.xpose.msra.mxu0 %v4666
    %4871 = vmatprep.subr.bf16.mxu0 0
    %4872 = vmatpush2.bf16.xpose.msra.mxu0 0
    %4873 = vmatprep.subr.bf16.mxu0 0
    %4874 = vmatpush2.bf16.xpose.msra.mxu0 0
    %4875 = vmatprep.subr.bf16.mxu0 0
    %4876 = vmatpush2.bf16.xpose.msra.mxu0 0
    %4877 = vmatprep.subr.bf16.mxu0 0
    %4878 = vmatpush2.bf16.xpose.msra.mxu0 0
    %4879 = vmatprep.subr.bf16.mxu0 0
    %4880 = vmatpush2.bf16.xpose.msra.mxu0 0
    %4881 = vmatprep.subr.bf16.mxu0 0
    %4882 = vmatpush2.bf16.xpose.msra.mxu0 0
    %4883 = vmatprep.subr.bf16.mxu0 0
    %4884 = vmatpush2.bf16.xpose.msra.mxu0 0
    %4885 = vmatprep.subr.bf16.mxu0 0
    %4886 = vmatpush2.bf16.xpose.msra.mxu0 0
    %4887 = vmatprep.mubr.bf16.mxu0 0
    %4888 = vmatmul.mubr.bf16.gmra.mxu0 %v4844
    %v4889 = vpop.f32.mrf.mxu0
    %v4890 = vadd.f32 0.0, %v4889
    %v4891 = vpop.f32.mrf.mxu0
    %v4892 = vpop.f32.mrf.mxu0
    %v4893 = vadd.f32 0.0, %v4892
    %v4894 = vpop.f32.mrf.mxu0
    %4895 = vmatprep.mubr.bf16.mxu0 0
    %4896 = vmatmul.mubr.bf16.gmra.mxu0 %v4847
    %v4897 = vpop.f32.mrf.mxu0
    %v4898 = vadd.f32 0.0, %v4897
    %v4899 = vpop.f32.mrf.mxu0
    %v4900 = vpop.f32.mrf.mxu0
    %v4901 = vadd.f32 0.0, %v4900
    %v4902 = vpop.f32.mrf.mxu0
    %4903 = vmatprep.mubr.bf16.mxu0 0
    %4904 = vmatmul.mubr.bf16.gmra.mxu0 %v4850
    %v4905 = vpop.f32.mrf.mxu0
    %v4906 = vadd.f32 0.0, %v4905
    %v4907 = vpop.f32.mrf.mxu0
    %v4908 = vpop.f32.mrf.mxu0
    %v4909 = vadd.f32 0.0, %v4908
    %v4910 = vpop.f32.mrf.mxu0
    %4911 = vmatprep.mubr.bf16.mxu0 0
    %4912 = vmatmul.mubr.bf16.gmra.mxu0 %v4853
    %v4913 = vpop.f32.mrf.mxu0
    %v4914 = vadd.f32 0.0, %v4913
    %v4915 = vpop.f32.mrf.mxu0
    %v4916 = vpop.f32.mrf.mxu0
    %v4917 = vadd.f32 0.0, %v4916
    %v4918 = vpop.f32.mrf.mxu0
    %4919 = vdwg.mxu0
    %v4921 = vsel %vm374, %v4589, 0
    %v4924 = vsel %vm374, %v4590, 0
    %v4927 = vsel %vm374, %v4591, 0
    %v4930 = vsel %vm374, %v4592, 0
    %4932 = vmatprep.subr.bf16.mxu0 0
    %4933 = vmatpush1.bf16.xpose.msra.mxu0 0
    %4934 = vmatprep.subr.bf16.mxu0 0
    %4935 = vmatpush1.bf16.xpose.msra.mxu0 0
    %4936 = vmatprep.subr.bf16.mxu0 0
    %4937 = vmatpush1.bf16.xpose.msra.mxu0 0
    %4938 = vmatprep.subr.bf16.mxu0 0
    %4939 = vmatpush1.bf16.xpose.msra.mxu0 0
    %4940 = vmatprep.subr.bf16.mxu0 0
    %4941 = vmatpush1.bf16.xpose.msra.mxu0 %v4776
    %4942 = vmatprep.subr.bf16.mxu0 0
    %4943 = vmatpush1.bf16.xpose.msra.mxu0 %v4773
    %4944 = vmatprep.subr.bf16.mxu0 0
    %4945 = vmatpush1.bf16.xpose.msra.mxu0 %v4770
    %4946 = vmatprep.subr.bf16.mxu0 0
    %4947 = vmatpush1.bf16.xpose.msra.mxu0 %v4767
    %4948 = vmatprep.subr.bf16.mxu0 0
    %4949 = vmatpush2.bf16.xpose.msra.mxu0 0
    %4950 = vmatprep.subr.bf16.mxu0 0
    %4951 = vmatpush2.bf16.xpose.msra.mxu0 0
    %4952 = vmatprep.subr.bf16.mxu0 0
    %4953 = vmatpush2.bf16.xpose.msra.mxu0 0
    %4954 = vmatprep.subr.bf16.mxu0 0
    %4955 = vmatpush2.bf16.xpose.msra.mxu0 0
    %4956 = vmatprep.subr.bf16.mxu0 0
    %4957 = vmatpush2.bf16.xpose.msra.mxu0 0
    %4958 = vmatprep.subr.bf16.mxu0 0
    %4959 = vmatpush2.bf16.xpose.msra.mxu0 0
    %4960 = vmatprep.subr.bf16.mxu0 0
    %4961 = vmatpush2.bf16.xpose.msra.mxu0 0
    %4962 = vmatprep.subr.bf16.mxu0 0
    %4963 = vmatpush2.bf16.xpose.msra.mxu0 0
    %4964 = vmatprep.mubr.bf16.mxu0 0
    %4965 = vmatmul.mubr.bf16.gmra.mxu0 %v4921
    %v4966 = vpop.f32.mrf.mxu0
    %v4967 = vadd.f32 0.0, %v4966
    %v4968 = vpop.f32.mrf.mxu0
    %v4969 = vpop.f32.mrf.mxu0
    %v4970 = vadd.f32 0.0, %v4969
    %v4971 = vpop.f32.mrf.mxu0
    %4972 = vmatprep.mubr.bf16.mxu0 0
    %4973 = vmatmul.mubr.bf16.gmra.mxu0 %v4924
    %v4974 = vpop.f32.mrf.mxu0
    %v4975 = vadd.f32 0.0, %v4974
    %v4976 = vpop.f32.mrf.mxu0
    %v4977 = vpop.f32.mrf.mxu0
    %v4978 = vadd.f32 0.0, %v4977
    %v4979 = vpop.f32.mrf.mxu0
    %4980 = vmatprep.mubr.bf16.mxu0 0
    %4981 = vmatmul.mubr.bf16.gmra.mxu0 %v4927
    %v4982 = vpop.f32.mrf.mxu0
    %v4983 = vadd.f32 0.0, %v4982
    %v4984 = vpop.f32.mrf.mxu0
    %v4985 = vpop.f32.mrf.mxu0
    %v4986 = vadd.f32 0.0, %v4985
    %v4987 = vpop.f32.mrf.mxu0
    %4988 = vmatprep.mubr.bf16.mxu0 0
    %4989 = vmatmul.mubr.bf16.gmra.mxu0 %v4930
    %v4990 = vpop.f32.mrf.mxu0
    %v4991 = vadd.f32 0.0, %v4990
    %v4992 = vpop.f32.mrf.mxu0
    %v4993 = vpop.f32.mrf.mxu0
    %v4994 = vadd.f32 0.0, %v4993
    %v4995 = vpop.f32.mrf.mxu0
    %4996 = vdwg.mxu0
    %v4998 = vsel %vm374, %v4593, 0
    %v5001 = vsel %vm374, %v4594, 0
    %v5004 = vsel %vm374, %v4595, 0
    %v5007 = vsel %vm374, %v4596, 0
    %5009 = vmatprep.subr.bf16.mxu0 0
    %5010 = vmatpush1.bf16.xpose.msra.mxu0 0
    %5011 = vmatprep.subr.bf16.mxu0 0
    %5012 = vmatpush1.bf16.xpose.msra.mxu0 0
    %5013 = vmatprep.subr.bf16.mxu0 0
    %5014 = vmatpush1.bf16.xpose.msra.mxu0 0
    %5015 = vmatprep.subr.bf16.mxu0 0
    %5016 = vmatpush1.bf16.xpose.msra.mxu0 0
    %5017 = vmatprep.subr.bf16.mxu0 0
    %5018 = vmatpush1.bf16.xpose.msra.mxu0 %v4675
    %5019 = vmatprep.subr.bf16.mxu0 0
    %5020 = vmatpush1.bf16.xpose.msra.mxu0 %v4672
    %5021 = vmatprep.subr.bf16.mxu0 0
    %5022 = vmatpush1.bf16.xpose.msra.mxu0 %v4669
    %5023 = vmatprep.subr.bf16.mxu0 0
    %5024 = vmatpush1.bf16.xpose.msra.mxu0 %v4666
    %5025 = vmatprep.subr.bf16.mxu0 0
    %5026 = vmatpush2.bf16.xpose.msra.mxu0 0
    %5027 = vmatprep.subr.bf16.mxu0 0
    %5028 = vmatpush2.bf16.xpose.msra.mxu0 0
    %5029 = vmatprep.subr.bf16.mxu0 0
    %5030 = vmatpush2.bf16.xpose.msra.mxu0 0
    %5031 = vmatprep.subr.bf16.mxu0 0
    %5032 = vmatpush2.bf16.xpose.msra.mxu0 0
    %5033 = vmatprep.subr.bf16.mxu0 0
    %5034 = vmatpush2.bf16.xpose.msra.mxu0 0
    %5035 = vmatprep.subr.bf16.mxu0 0
    %5036 = vmatpush2.bf16.xpose.msra.mxu0 0
    %5037 = vmatprep.subr.bf16.mxu0 0
    %5038 = vmatpush2.bf16.xpose.msra.mxu0 0
    %5039 = vmatprep.subr.bf16.mxu0 0
    %5040 = vmatpush2.bf16.xpose.msra.mxu0 0
    %5041 = vmatprep.mubr.bf16.mxu0 0
    %5042 = vmatmul.mubr.bf16.gmra.mxu0 %v4998
    %v5043 = vpop.f32.mrf.mxu0
    %v5044 = vadd.f32 0.0, %v5043
    %v5045 = vpop.f32.mrf.mxu0
    %v5046 = vpop.f32.mrf.mxu0
    %v5047 = vadd.f32 0.0, %v5046
    %v5048 = vpop.f32.mrf.mxu0
    %5049 = vmatprep.mubr.bf16.mxu0 0
    %5050 = vmatmul.mubr.bf16.gmra.mxu0 %v5001
    %v5051 = vpop.f32.mrf.mxu0
    %v5052 = vadd.f32 0.0, %v5051
    %v5053 = vpop.f32.mrf.mxu0
    %v5054 = vpop.f32.mrf.mxu0
    %v5055 = vadd.f32 0.0, %v5054
    %v5056 = vpop.f32.mrf.mxu0
    %5057 = vmatprep.mubr.bf16.mxu0 0
    %5058 = vmatmul.mubr.bf16.gmra.mxu0 %v5004
    %v5059 = vpop.f32.mrf.mxu0
    %v5060 = vadd.f32 0.0, %v5059
    %v5061 = vpop.f32.mrf.mxu0
    %v5062 = vpop.f32.mrf.mxu0
    %v5063 = vadd.f32 0.0, %v5062
    %v5064 = vpop.f32.mrf.mxu0
    %5065 = vmatprep.mubr.bf16.mxu0 0
    %5066 = vmatmul.mubr.bf16.gmra.mxu0 %v5007
    %v5067 = vpop.f32.mrf.mxu0
    %v5068 = vadd.f32 0.0, %v5067
    %v5069 = vpop.f32.mrf.mxu0
    %v5070 = vpop.f32.mrf.mxu0
    %v5071 = vadd.f32 0.0, %v5070
    %v5072 = vpop.f32.mrf.mxu0
    %5073 = vdwg.mxu0
    %v5075 = vsel %vm374, %v4597, 0
    %v5078 = vsel %vm374, %v4598, 0
    %v5081 = vsel %vm374, %v4599, 0
    %v5084 = vsel %vm374, %v4600, 0
    %5086 = vmatprep.subr.bf16.mxu0 0
    %5087 = vmatpush1.bf16.xpose.msra.mxu0 0
    %5088 = vmatprep.subr.bf16.mxu0 0
    %5089 = vmatpush1.bf16.xpose.msra.mxu0 0
    %5090 = vmatprep.subr.bf16.mxu0 0
    %5091 = vmatpush1.bf16.xpose.msra.mxu0 0
    %5092 = vmatprep.subr.bf16.mxu0 0
    %5093 = vmatpush1.bf16.xpose.msra.mxu0 0
    %5094 = vmatprep.subr.bf16.mxu0 0
    %5095 = vmatpush1.bf16.xpose.msra.mxu0 %v4776
    %5096 = vmatprep.subr.bf16.mxu0 0
    %5097 = vmatpush1.bf16.xpose.msra.mxu0 %v4773
    %5098 = vmatprep.subr.bf16.mxu0 0
    %5099 = vmatpush1.bf16.xpose.msra.mxu0 %v4770
    %5100 = vmatprep.subr.bf16.mxu0 0
    %5101 = vmatpush1.bf16.xpose.msra.mxu0 %v4767
    %5102 = vmatprep.subr.bf16.mxu0 0
    %5103 = vmatpush2.bf16.xpose.msra.mxu0 0
    %5104 = vmatprep.subr.bf16.mxu0 0
    %5105 = vmatpush2.bf16.xpose.msra.mxu0 0
    %5106 = vmatprep.subr.bf16.mxu0 0
    %5107 = vmatpush2.bf16.xpose.msra.mxu0 0
    %5108 = vmatprep.subr.bf16.mxu0 0
    %5109 = vmatpush2.bf16.xpose.msra.mxu0 0
    %5110 = vmatprep.subr.bf16.mxu0 0
    %5111 = vmatpush2.bf16.xpose.msra.mxu0 0
    %5112 = vmatprep.subr.bf16.mxu0 0
    %5113 = vmatpush2.bf16.xpose.msra.mxu0 0
    %5114 = vmatprep.subr.bf16.mxu0 0
    %5115 = vmatpush2.bf16.xpose.msra.mxu0 0
    %5116 = vmatprep.subr.bf16.mxu0 0
    %5117 = vmatpush2.bf16.xpose.msra.mxu0 0
    %5118 = vmatprep.mubr.bf16.mxu0 0
    %5119 = vmatmul.mubr.bf16.gmra.mxu0 %v5075
    %v5120 = vpop.f32.mrf.mxu0
    %v5121 = vadd.f32 0.0, %v5120
    %v5122 = vpop.f32.mrf.mxu0
    %v5123 = vpop.f32.mrf.mxu0
    %v5124 = vadd.f32 0.0, %v5123
    %v5125 = vpop.f32.mrf.mxu0
    %5126 = vmatprep.mubr.bf16.mxu0 0
    %5127 = vmatmul.mubr.bf16.gmra.mxu0 %v5078
    %v5128 = vpop.f32.mrf.mxu0
    %v5129 = vadd.f32 0.0, %v5128
    %v5130 = vpop.f32.mrf.mxu0
    %v5131 = vpop.f32.mrf.mxu0
    %v5132 = vadd.f32 0.0, %v5131
    %v5133 = vpop.f32.mrf.mxu0
    %5134 = vmatprep.mubr.bf16.mxu0 0
    %5135 = vmatmul.mubr.bf16.gmra.mxu0 %v5081
    %v5136 = vpop.f32.mrf.mxu0
    %v5137 = vadd.f32 0.0, %v5136
    %v5138 = vpop.f32.mrf.mxu0
    %v5139 = vpop.f32.mrf.mxu0
    %v5140 = vadd.f32 0.0, %v5139
    %v5141 = vpop.f32.mrf.mxu0
    %5142 = vmatprep.mubr.bf16.mxu0 0
    %5143 = vmatmul.mubr.bf16.gmra.mxu0 %v5084
    %v5144 = vpop.f32.mrf.mxu0
    %v5145 = vadd.f32 0.0, %v5144
    %v5146 = vpop.f32.mrf.mxu0
    %v5147 = vpop.f32.mrf.mxu0
    %v5148 = vadd.f32 0.0, %v5147
    %v5149 = vpop.f32.mrf.mxu0
    %5150 = vdwg.mxu0
    %v5152 = vsel %vm374, %v4601, 0
    %v5155 = vsel %vm374, %v4602, 0
    %v5158 = vsel %vm374, %v4603, 0
    %v5161 = vsel %vm374, %v4604, 0
    %5163 = vmatprep.subr.bf16.mxu0 0
    %5164 = vmatpush1.bf16.xpose.msra.mxu0 0
    %5165 = vmatprep.subr.bf16.mxu0 0
    %5166 = vmatpush1.bf16.xpose.msra.mxu0 0
    %5167 = vmatprep.subr.bf16.mxu0 0
    %5168 = vmatpush1.bf16.xpose.msra.mxu0 0
    %5169 = vmatprep.subr.bf16.mxu0 0
    %5170 = vmatpush1.bf16.xpose.msra.mxu0 0
    %5171 = vmatprep.subr.bf16.mxu0 0
    %5172 = vmatpush1.bf16.xpose.msra.mxu0 %v4675
    %5173 = vmatprep.subr.bf16.mxu0 0
    %5174 = vmatpush1.bf16.xpose.msra.mxu0 %v4672
    %5175 = vmatprep.subr.bf16.mxu0 0
    %5176 = vmatpush1.bf16.xpose.msra.mxu0 %v4669
    %5177 = vmatprep.subr.bf16.mxu0 0
    %5178 = vmatpush1.bf16.xpose.msra.mxu0 %v4666
    %5179 = vmatprep.subr.bf16.mxu0 0
    %5180 = vmatpush2.bf16.xpose.msra.mxu0 0
    %5181 = vmatprep.subr.bf16.mxu0 0
    %5182 = vmatpush2.bf16.xpose.msra.mxu0 0
    %5183 = vmatprep.subr.bf16.mxu0 0
    %5184 = vmatpush2.bf16.xpose.msra.mxu0 0
    %5185 = vmatprep.subr.bf16.mxu0 0
    %5186 = vmatpush2.bf16.xpose.msra.mxu0 0
    %5187 = vmatprep.subr.bf16.mxu0 0
    %5188 = vmatpush2.bf16.xpose.msra.mxu0 0
    %5189 = vmatprep.subr.bf16.mxu0 0
    %5190 = vmatpush2.bf16.xpose.msra.mxu0 0
    %5191 = vmatprep.subr.bf16.mxu0 0
    %5192 = vmatpush2.bf16.xpose.msra.mxu0 0
    %5193 = vmatprep.subr.bf16.mxu0 0
    %5194 = vmatpush2.bf16.xpose.msra.mxu0 0
    %5195 = vmatprep.mubr.bf16.mxu0 0
    %5196 = vmatmul.mubr.bf16.gmra.mxu0 %v5152
    %v5197 = vpop.f32.mrf.mxu0
    %v5198 = vadd.f32 0.0, %v5197
    %v5199 = vpop.f32.mrf.mxu0
    %v5200 = vpop.f32.mrf.mxu0
    %v5201 = vadd.f32 0.0, %v5200
    %v5202 = vpop.f32.mrf.mxu0
    %5203 = vmatprep.mubr.bf16.mxu0 0
    %5204 = vmatmul.mubr.bf16.gmra.mxu0 %v5155
    %v5205 = vpop.f32.mrf.mxu0
    %v5206 = vadd.f32 0.0, %v5205
    %v5207 = vpop.f32.mrf.mxu0
    %v5208 = vpop.f32.mrf.mxu0
    %v5209 = vadd.f32 0.0, %v5208
    %v5210 = vpop.f32.mrf.mxu0
    %5211 = vmatprep.mubr.bf16.mxu0 0
    %5212 = vmatmul.mubr.bf16.gmra.mxu0 %v5158
    %v5213 = vpop.f32.mrf.mxu0
    %v5214 = vadd.f32 0.0, %v5213
    %v5215 = vpop.f32.mrf.mxu0
    %v5216 = vpop.f32.mrf.mxu0
    %v5217 = vadd.f32 0.0, %v5216
    %v5218 = vpop.f32.mrf.mxu0
    %5219 = vmatprep.mubr.bf16.mxu0 0
    %5220 = vmatmul.mubr.bf16.gmra.mxu0 %v5161
    %v5221 = vpop.f32.mrf.mxu0
    %v5222 = vadd.f32 0.0, %v5221
    %v5223 = vpop.f32.mrf.mxu0
    %v5224 = vpop.f32.mrf.mxu0
    %v5225 = vadd.f32 0.0, %v5224
    %v5226 = vpop.f32.mrf.mxu0
    %5227 = vdwg.mxu0
    %v5229 = vsel %vm374, %v4605, 0
    %v5232 = vsel %vm374, %v4606, 0
    %v5235 = vsel %vm374, %v4607, 0
    %v5238 = vsel %vm374, %v4608, 0
    %5240 = vmatprep.subr.bf16.mxu0 0
    %5241 = vmatpush1.bf16.xpose.msra.mxu0 0
    %5242 = vmatprep.subr.bf16.mxu0 0
    %5243 = vmatpush1.bf16.xpose.msra.mxu0 0
    %5244 = vmatprep.subr.bf16.mxu0 0
    %5245 = vmatpush1.bf16.xpose.msra.mxu0 0
    %5246 = vmatprep.subr.bf16.mxu0 0
    %5247 = vmatpush1.bf16.xpose.msra.mxu0 0
    %5248 = vmatprep.subr.bf16.mxu0 0
    %5249 = vmatpush1.bf16.xpose.msra.mxu0 %v4776
    %5250 = vmatprep.subr.bf16.mxu0 0
    %5251 = vmatpush1.bf16.xpose.msra.mxu0 %v4773
    %5252 = vmatprep.subr.bf16.mxu0 0
    %5253 = vmatpush1.bf16.xpose.msra.mxu0 %v4770
    %5254 = vmatprep.subr.bf16.mxu0 0
    %5255 = vmatpush1.bf16.xpose.msra.mxu0 %v4767
    %5256 = vmatprep.subr.bf16.mxu0 0
    %5257 = vmatpush2.bf16.xpose.msra.mxu0 0
    %5258 = vmatprep.subr.bf16.mxu0 0
    %5259 = vmatpush2.bf16.xpose.msra.mxu0 0
    %5260 = vmatprep.subr.bf16.mxu0 0
    %5261 = vmatpush2.bf16.xpose.msra.mxu0 0
    %5262 = vmatprep.subr.bf16.mxu0 0
    %5263 = vmatpush2.bf16.xpose.msra.mxu0 0
    %5264 = vmatprep.subr.bf16.mxu0 0
    %5265 = vmatpush2.bf16.xpose.msra.mxu0 0
    %5266 = vmatprep.subr.bf16.mxu0 0
    %5267 = vmatpush2.bf16.xpose.msra.mxu0 0
    %5268 = vmatprep.subr.bf16.mxu0 0
    %5269 = vmatpush2.bf16.xpose.msra.mxu0 0
    %5270 = vmatprep.subr.bf16.mxu0 0
    %5271 = vmatpush2.bf16.xpose.msra.mxu0 0
    %5272 = vmatprep.mubr.bf16.mxu0 0
    %5273 = vmatmul.mubr.bf16.gmra.mxu0 %v5229
    %v5274 = vpop.f32.mrf.mxu0
    %v5275 = vadd.f32 0.0, %v5274
    %v5276 = vpop.f32.mrf.mxu0
    %v5277 = vpop.f32.mrf.mxu0
    %v5278 = vadd.f32 0.0, %v5277
    %v5279 = vpop.f32.mrf.mxu0
    %5280 = vmatprep.mubr.bf16.mxu0 0
    %5281 = vmatmul.mubr.bf16.gmra.mxu0 %v5232
    %v5282 = vpop.f32.mrf.mxu0
    %v5283 = vadd.f32 0.0, %v5282
    %v5284 = vpop.f32.mrf.mxu0
    %v5285 = vpop.f32.mrf.mxu0
    %v5286 = vadd.f32 0.0, %v5285
    %v5287 = vpop.f32.mrf.mxu0
    %5288 = vmatprep.mubr.bf16.mxu0 0
    %5289 = vmatmul.mubr.bf16.gmra.mxu0 %v5235
    %v5290 = vpop.f32.mrf.mxu0
    %v5291 = vadd.f32 0.0, %v5290
    %v5292 = vpop.f32.mrf.mxu0
    %v5293 = vpop.f32.mrf.mxu0
    %v5294 = vadd.f32 0.0, %v5293
    %v5295 = vpop.f32.mrf.mxu0
    %5296 = vmatprep.mubr.bf16.mxu0 0
    %5297 = vmatmul.mubr.bf16.gmra.mxu0 %v5238
    %v5298 = vpop.f32.mrf.mxu0
    %v5299 = vadd.f32 0.0, %v5298
    %v5300 = vpop.f32.mrf.mxu0
    %v5301 = vpop.f32.mrf.mxu0
    %v5302 = vadd.f32 0.0, %v5301
    %v5303 = vpop.f32.mrf.mxu0
    %5304 = vdwg.mxu0
    %v5305 = vsel %vm2016, %v4712, -inf
    %5306 = vmax.xlane.f32.xlu0 %v5305
    %v5307 = vpop.xlane.xlu0 %5306
    %v5308 = vsel %vm2016, %v4715, -inf
    %5309 = vmax.xlane.f32.xlu0 %v5308
    %v5310 = vpop.xlane.xlu0 %5309
    %v5311 = vsel %vm2016, %v4720, -inf
    %5312 = vmax.xlane.f32.xlu0 %v5311
    %v5313 = vpop.xlane.xlu0 %5312
    %v5314 = vsel %vm2016, %v4723, -inf
    %5315 = vmax.xlane.f32.xlu0 %v5314
    %v5316 = vpop.xlane.xlu0 %5315
    %v5317 = vsel %vm2016, %v4728, -inf
    %5318 = vmax.xlane.f32.xlu0 %v5317
    %v5319 = vpop.xlane.xlu0 %5318
    %v5320 = vsel %vm2016, %v4731, -inf
    %5321 = vmax.xlane.f32.xlu0 %v5320
    %v5322 = vpop.xlane.xlu0 %5321
    %v5323 = vsel %vm2016, %v4736, -inf
    %5324 = vmax.xlane.f32.xlu0 %v5323
    %v5325 = vpop.xlane.xlu0 %5324
    %v5326 = vsel %vm2016, %v4739, -inf
    %5327 = vmax.xlane.f32.xlu0 %v5326
    %v5328 = vpop.xlane.xlu0 %5327
    %v5329 = vsel %vm2016, %v4813, -inf
    %5330 = vmax.xlane.f32.xlu0 %v5329
    %v5331 = vpop.xlane.xlu0 %5330
    %v5332 = vsel %vm2016, %v4816, -inf
    %5333 = vmax.xlane.f32.xlu0 %v5332
    %v5334 = vpop.xlane.xlu0 %5333
    %v5335 = vsel %vm2016, %v4821, -inf
    %5336 = vmax.xlane.f32.xlu0 %v5335
    %v5337 = vpop.xlane.xlu0 %5336
    %v5338 = vsel %vm2016, %v4824, -inf
    %5339 = vmax.xlane.f32.xlu0 %v5338
    %v5340 = vpop.xlane.xlu0 %5339
    %v5341 = vsel %vm2016, %v4829, -inf
    %5342 = vmax.xlane.f32.xlu0 %v5341
    %v5343 = vpop.xlane.xlu0 %5342
    %v5344 = vsel %vm2016, %v4832, -inf
    %5345 = vmax.xlane.f32.xlu0 %v5344
    %v5346 = vpop.xlane.xlu0 %5345
    %v5347 = vsel %vm2016, %v4837, -inf
    %5348 = vmax.xlane.f32.xlu0 %v5347
    %v5349 = vpop.xlane.xlu0 %5348
    %v5350 = vsel %vm2016, %v4840, -inf
    %5351 = vmax.xlane.f32.xlu0 %v5350
    %v5352 = vpop.xlane.xlu0 %5351
    %v5353 = vsel %vm2016, %v4890, -inf
    %5354 = vmax.xlane.f32.xlu0 %v5353
    %v5355 = vpop.xlane.xlu0 %5354
    %v5356 = vsel %vm2016, %v4893, -inf
    %5357 = vmax.xlane.f32.xlu0 %v5356
    %v5358 = vpop.xlane.xlu0 %5357
    %v5359 = vsel %vm2016, %v4898, -inf
    %5360 = vmax.xlane.f32.xlu0 %v5359
    %v5361 = vpop.xlane.xlu0 %5360
    %v5362 = vsel %vm2016, %v4901, -inf
    %5363 = vmax.xlane.f32.xlu0 %v5362
    %v5364 = vpop.xlane.xlu0 %5363
    %v5365 = vsel %vm2016, %v4906, -inf
    %5366 = vmax.xlane.f32.xlu0 %v5365
    %v5367 = vpop.xlane.xlu0 %5366
    %v5368 = vsel %vm2016, %v4909, -inf
    %5369 = vmax.xlane.f32.xlu0 %v5368
    %v5370 = vpop.xlane.xlu0 %5369
    %v5371 = vsel %vm2016, %v4914, -inf
    %5372 = vmax.xlane.f32.xlu0 %v5371
    %v5373 = vpop.xlane.xlu0 %5372
    %v5374 = vsel %vm2016, %v4917, -inf
    %5375 = vmax.xlane.f32.xlu0 %v5374
    %v5376 = vpop.xlane.xlu0 %5375
    %v5377 = vsel %vm2016, %v4967, -inf
    %5378 = vmax.xlane.f32.xlu0 %v5377
    %v5379 = vpop.xlane.xlu0 %5378
    %v5380 = vsel %vm2016, %v4970, -inf
    %5381 = vmax.xlane.f32.xlu0 %v5380
    %v5382 = vpop.xlane.xlu0 %5381
    %v5383 = vsel %vm2016, %v4975, -inf
    %5384 = vmax.xlane.f32.xlu0 %v5383
    %v5385 = vpop.xlane.xlu0 %5384
    %v5386 = vsel %vm2016, %v4978, -inf
    %5387 = vmax.xlane.f32.xlu0 %v5386
    %v5388 = vpop.xlane.xlu0 %5387
    %v5389 = vsel %vm2016, %v4983, -inf
    %5390 = vmax.xlane.f32.xlu0 %v5389
    %v5391 = vpop.xlane.xlu0 %5390
    %v5392 = vsel %vm2016, %v4986, -inf
    %5393 = vmax.xlane.f32.xlu0 %v5392
    %v5394 = vpop.xlane.xlu0 %5393
    %v5395 = vsel %vm2016, %v4991, -inf
    %5396 = vmax.xlane.f32.xlu0 %v5395
    %v5397 = vpop.xlane.xlu0 %5396
    %v5398 = vsel %vm2016, %v4994, -inf
    %5399 = vmax.xlane.f32.xlu0 %v5398
    %v5400 = vpop.xlane.xlu0 %5399
    %v5401 = vsel %vm2016, %v5044, -inf
    %5402 = vmax.xlane.f32.xlu0 %v5401
    %v5403 = vpop.xlane.xlu0 %5402
    %v5404 = vsel %vm2016, %v5047, -inf
    %5405 = vmax.xlane.f32.xlu0 %v5404
    %v5406 = vpop.xlane.xlu0 %5405
    %v5407 = vsel %vm2016, %v5052, -inf
    %5408 = vmax.xlane.f32.xlu0 %v5407
    %v5409 = vpop.xlane.xlu0 %5408
    %v5410 = vsel %vm2016, %v5055, -inf
    %5411 = vmax.xlane.f32.xlu0 %v5410
    %v5412 = vpop.xlane.xlu0 %5411
    %v5413 = vsel %vm2016, %v5060, -inf
    %5414 = vmax.xlane.f32.xlu0 %v5413
    %v5415 = vpop.xlane.xlu0 %5414
    %v5416 = vsel %vm2016, %v5063, -inf
    %5417 = vmax.xlane.f32.xlu0 %v5416
    %v5418 = vpop.xlane.xlu0 %5417
    %v5419 = vsel %vm2016, %v5068, -inf
    %5420 = vmax.xlane.f32.xlu0 %v5419
    %v5421 = vpop.xlane.xlu0 %5420
    %v5422 = vsel %vm2016, %v5071, -inf
    %5423 = vmax.xlane.f32.xlu0 %v5422
    %v5424 = vpop.xlane.xlu0 %5423
    %v5425 = vsel %vm2016, %v5121, -inf
    %5426 = vmax.xlane.f32.xlu0 %v5425
    %v5427 = vpop.xlane.xlu0 %5426
    %v5428 = vsel %vm2016, %v5124, -inf
    %5429 = vmax.xlane.f32.xlu0 %v5428
    %v5430 = vpop.xlane.xlu0 %5429
    %v5431 = vsel %vm2016, %v5129, -inf
    %5432 = vmax.xlane.f32.xlu0 %v5431
    %v5433 = vpop.xlane.xlu0 %5432
    %v5434 = vsel %vm2016, %v5132, -inf
    %5435 = vmax.xlane.f32.xlu0 %v5434
    %v5436 = vpop.xlane.xlu0 %5435
    %v5437 = vsel %vm2016, %v5137, -inf
    %5438 = vmax.xlane.f32.xlu0 %v5437
    %v5439 = vpop.xlane.xlu0 %5438
    %v5440 = vsel %vm2016, %v5140, -inf
    %5441 = vmax.xlane.f32.xlu0 %v5440
    %v5442 = vpop.xlane.xlu0 %5441
    %v5443 = vsel %vm2016, %v5145, -inf
    %5444 = vmax.xlane.f32.xlu0 %v5443
    %v5445 = vpop.xlane.xlu0 %5444
    %v5446 = vsel %vm2016, %v5148, -inf
    %5447 = vmax.xlane.f32.xlu0 %v5446
    %v5448 = vpop.xlane.xlu0 %5447
    %v5449 = vsel %vm2016, %v5198, -inf
    %5450 = vmax.xlane.f32.xlu0 %v5449
    %v5451 = vpop.xlane.xlu0 %5450
    %v5452 = vsel %vm2016, %v5201, -inf
    %5453 = vmax.xlane.f32.xlu0 %v5452
    %v5454 = vpop.xlane.xlu0 %5453
    %v5455 = vsel %vm2016, %v5206, -inf
    %5456 = vmax.xlane.f32.xlu0 %v5455
    %v5457 = vpop.xlane.xlu0 %5456
    %v5458 = vsel %vm2016, %v5209, -inf
    %5459 = vmax.xlane.f32.xlu0 %v5458
    %v5460 = vpop.xlane.xlu0 %5459
    %v5461 = vsel %vm2016, %v5214, -inf
    %5462 = vmax.xlane.f32.xlu0 %v5461
    %v5463 = vpop.xlane.xlu0 %5462
    %v5464 = vsel %vm2016, %v5217, -inf
    %5465 = vmax.xlane.f32.xlu0 %v5464
    %v5466 = vpop.xlane.xlu0 %5465
    %v5467 = vsel %vm2016, %v5222, -inf
    %5468 = vmax.xlane.f32.xlu0 %v5467
    %v5469 = vpop.xlane.xlu0 %5468
    %v5470 = vsel %vm2016, %v5225, -inf
    %5471 = vmax.xlane.f32.xlu0 %v5470
    %v5472 = vpop.xlane.xlu0 %5471
    %v5473 = vsel %vm2016, %v5275, -inf
    %5474 = vmax.xlane.f32.xlu0 %v5473
    %v5475 = vpop.xlane.xlu0 %5474
    %v5476 = vsel %vm2016, %v5278, -inf
    %5477 = vmax.xlane.f32.xlu0 %v5476
    %v5478 = vpop.xlane.xlu0 %5477
    %v5479 = vsel %vm2016, %v5283, -inf
    %5480 = vmax.xlane.f32.xlu0 %v5479
    %v5481 = vpop.xlane.xlu0 %5480
    %v5482 = vsel %vm2016, %v5286, -inf
    %5483 = vmax.xlane.f32.xlu0 %v5482
    %v5484 = vpop.xlane.xlu0 %5483
    %v5485 = vsel %vm2016, %v5291, -inf
    %5486 = vmax.xlane.f32.xlu0 %v5485
    %v5487 = vpop.xlane.xlu0 %5486
    %v5488 = vsel %vm2016, %v5294, -inf
    %5489 = vmax.xlane.f32.xlu0 %v5488
    %v5490 = vpop.xlane.xlu0 %5489
    %v5491 = vsel %vm2016, %v5299, -inf
    %5492 = vmax.xlane.f32.xlu0 %v5491
    %v5493 = vpop.xlane.xlu0 %5492
    %v5494 = vsel %vm2016, %v5302, -inf
    %5495 = vmax.xlane.f32.xlu0 %v5494
    %v5496 = vpop.xlane.xlu0 %5495
    %v5497 = vsub.f32 %v4712, %v5307
    %v5498 = vsub.f32 %v4715, %v5310
    %v5499 = vsub.f32 %v4720, %v5313
    %v5500 = vsub.f32 %v4723, %v5316
    %v5501 = vsub.f32 %v4728, %v5319
    %v5502 = vsub.f32 %v4731, %v5322
    %v5503 = vsub.f32 %v4736, %v5325
    %v5504 = vsub.f32 %v4739, %v5328
    %v5505 = vsub.f32 %v4813, %v5331
    %v5506 = vsub.f32 %v4816, %v5334
    %v5507 = vsub.f32 %v4821, %v5337
    %v5508 = vsub.f32 %v4824, %v5340
    %v5509 = vsub.f32 %v4829, %v5343
    %v5510 = vsub.f32 %v4832, %v5346
    %v5511 = vsub.f32 %v4837, %v5349
    %v5512 = vsub.f32 %v4840, %v5352
    %v5513 = vsub.f32 %v4890, %v5355
    %v5514 = vsub.f32 %v4893, %v5358
    %v5515 = vsub.f32 %v4898, %v5361
    %v5516 = vsub.f32 %v4901, %v5364
    %v5517 = vsub.f32 %v4906, %v5367
    %v5518 = vsub.f32 %v4909, %v5370
    %v5519 = vsub.f32 %v4914, %v5373
    %v5520 = vsub.f32 %v4917, %v5376
    %v5521 = vsub.f32 %v4967, %v5379
    %v5522 = vsub.f32 %v4970, %v5382
    %v5523 = vsub.f32 %v4975, %v5385
    %v5524 = vsub.f32 %v4978, %v5388
    %v5525 = vsub.f32 %v4983, %v5391
    %v5526 = vsub.f32 %v4986, %v5394
    %v5527 = vsub.f32 %v4991, %v5397
    %v5528 = vsub.f32 %v4994, %v5400
    %v5529 = vsub.f32 %v5044, %v5403
    %v5530 = vsub.f32 %v5047, %v5406
    %v5531 = vsub.f32 %v5052, %v5409
    %v5532 = vsub.f32 %v5055, %v5412
    %v5533 = vsub.f32 %v5060, %v5415
    %v5534 = vsub.f32 %v5063, %v5418
    %v5535 = vsub.f32 %v5068, %v5421
    %v5536 = vsub.f32 %v5071, %v5424
    %v5537 = vsub.f32 %v5121, %v5427
    %v5538 = vsub.f32 %v5124, %v5430
    %v5539 = vsub.f32 %v5129, %v5433
    %v5540 = vsub.f32 %v5132, %v5436
    %v5541 = vsub.f32 %v5137, %v5439
    %v5542 = vsub.f32 %v5140, %v5442
    %v5543 = vsub.f32 %v5145, %v5445
    %v5544 = vsub.f32 %v5148, %v5448
    %v5545 = vsub.f32 %v5198, %v5451
    %v5546 = vsub.f32 %v5201, %v5454
    %v5547 = vsub.f32 %v5206, %v5457
    %v5548 = vsub.f32 %v5209, %v5460
    %v5549 = vsub.f32 %v5214, %v5463
    %v5550 = vsub.f32 %v5217, %v5466
    %v5551 = vsub.f32 %v5222, %v5469
    %v5552 = vsub.f32 %v5225, %v5472
    %v5553 = vsub.f32 %v5275, %v5475
    %v5554 = vsub.f32 %v5278, %v5478
    %v5555 = vsub.f32 %v5283, %v5481
    %v5556 = vsub.f32 %v5286, %v5484
    %v5557 = vsub.f32 %v5291, %v5487
    %v5558 = vsub.f32 %v5294, %v5490
    %v5559 = vsub.f32 %v5299, %v5493
    %v5560 = vsub.f32 %v5302, %v5496
    %v5561 = vmul.f32 %v5497, 1.442695
    %v5562 = vpow.pop %v5561
    %v5563 = vmul.f32 %v5498, 1.442695
    %v5564 = vpow.pop %v5563
    %v5565 = vmul.f32 %v5499, 1.442695
    %v5566 = vpow.pop %v5565
    %v5567 = vmul.f32 %v5500, 1.442695
    %v5568 = vpow.pop %v5567
    %v5569 = vmul.f32 %v5501, 1.442695
    %v5570 = vpow.pop %v5569
    %v5571 = vmul.f32 %v5502, 1.442695
    %v5572 = vpow.pop %v5571
    %v5573 = vmul.f32 %v5503, 1.442695
    %v5574 = vpow.pop %v5573
    %v5575 = vmul.f32 %v5504, 1.442695
    %v5576 = vpow.pop %v5575
    %v5577 = vmul.f32 %v5505, 1.442695
    %v5578 = vpow.pop %v5577
    %v5579 = vmul.f32 %v5506, 1.442695
    %v5580 = vpow.pop %v5579
    %v5581 = vmul.f32 %v5507, 1.442695
    %v5582 = vpow.pop %v5581
    %v5583 = vmul.f32 %v5508, 1.442695
    %v5584 = vpow.pop %v5583
    %v5585 = vmul.f32 %v5509, 1.442695
    %v5586 = vpow.pop %v5585
    %v5587 = vmul.f32 %v5510, 1.442695
    %v5588 = vpow.pop %v5587
    %v5589 = vmul.f32 %v5511, 1.442695
    %v5590 = vpow.pop %v5589
    %v5591 = vmul.f32 %v5512, 1.442695
    %v5592 = vpow.pop %v5591
    %v5593 = vmul.f32 %v5513, 1.442695
    %v5594 = vpow.pop %v5593
    %v5595 = vmul.f32 %v5514, 1.442695
    %v5596 = vpow.pop %v5595
    %v5597 = vmul.f32 %v5515, 1.442695
    %v5598 = vpow.pop %v5597
    %v5599 = vmul.f32 %v5516, 1.442695
    %v5600 = vpow.pop %v5599
    %v5601 = vmul.f32 %v5517, 1.442695
    %v5602 = vpow.pop %v5601
    %v5603 = vmul.f32 %v5518, 1.442695
    %v5604 = vpow.pop %v5603
    %v5605 = vmul.f32 %v5519, 1.442695
    %v5606 = vpow.pop %v5605
    %v5607 = vmul.f32 %v5520, 1.442695
    %v5608 = vpow.pop %v5607
    %v5609 = vmul.f32 %v5521, 1.442695
    %v5610 = vpow.pop %v5609
    %v5611 = vmul.f32 %v5522, 1.442695
    %v5612 = vpow.pop %v5611
    %v5613 = vmul.f32 %v5523, 1.442695
    %v5614 = vpow.pop %v5613
    %v5615 = vmul.f32 %v5524, 1.442695
    %v5616 = vpow.pop %v5615
    %v5617 = vmul.f32 %v5525, 1.442695
    %v5618 = vpow.pop %v5617
    %v5619 = vmul.f32 %v5526, 1.442695
    %v5620 = vpow.pop %v5619
    %v5621 = vmul.f32 %v5527, 1.442695
    %v5622 = vpow.pop %v5621
    %v5623 = vmul.f32 %v5528, 1.442695
    %v5624 = vpow.pop %v5623
    %v5625 = vmul.f32 %v5529, 1.442695
    %v5626 = vpow.pop %v5625
    %v5627 = vmul.f32 %v5530, 1.442695
    %v5628 = vpow.pop %v5627
    %v5629 = vmul.f32 %v5531, 1.442695
    %v5630 = vpow.pop %v5629
    %v5631 = vmul.f32 %v5532, 1.442695
    %v5632 = vpow.pop %v5631
    %v5633 = vmul.f32 %v5533, 1.442695
    %v5634 = vpow.pop %v5633
    %v5635 = vmul.f32 %v5534, 1.442695
    %v5636 = vpow.pop %v5635
    %v5637 = vmul.f32 %v5535, 1.442695
    %v5638 = vpow.pop %v5637
    %v5639 = vmul.f32 %v5536, 1.442695
    %v5640 = vpow.pop %v5639
    %v5641 = vmul.f32 %v5537, 1.442695
    %v5642 = vpow.pop %v5641
    %v5643 = vmul.f32 %v5538, 1.442695
    %v5644 = vpow.pop %v5643
    %v5645 = vmul.f32 %v5539, 1.442695
    %v5646 = vpow.pop %v5645
    %v5647 = vmul.f32 %v5540, 1.442695
    %v5648 = vpow.pop %v5647
    %v5649 = vmul.f32 %v5541, 1.442695
    %v5650 = vpow.pop %v5649
    %v5651 = vmul.f32 %v5542, 1.442695
    %v5652 = vpow.pop %v5651
    %v5653 = vmul.f32 %v5543, 1.442695
    %v5654 = vpow.pop %v5653
    %v5655 = vmul.f32 %v5544, 1.442695
    %v5656 = vpow.pop %v5655
    %v5657 = vmul.f32 %v5545, 1.442695
    %v5658 = vpow.pop %v5657
    %v5659 = vmul.f32 %v5546, 1.442695
    %v5660 = vpow.pop %v5659
    %v5661 = vmul.f32 %v5547, 1.442695
    %v5662 = vpow.pop %v5661
    %v5663 = vmul.f32 %v5548, 1.442695
    %v5664 = vpow.pop %v5663
    %v5665 = vmul.f32 %v5549, 1.442695
    %v5666 = vpow.pop %v5665
    %v5667 = vmul.f32 %v5550, 1.442695
    %v5668 = vpow.pop %v5667
    %v5669 = vmul.f32 %v5551, 1.442695
    %v5670 = vpow.pop %v5669
    %v5671 = vmul.f32 %v5552, 1.442695
    %v5672 = vpow.pop %v5671
    %v5673 = vmul.f32 %v5553, 1.442695
    %v5674 = vpow.pop %v5673
    %v5675 = vmul.f32 %v5554, 1.442695
    %v5676 = vpow.pop %v5675
    %v5677 = vmul.f32 %v5555, 1.442695
    %v5678 = vpow.pop %v5677
    %v5679 = vmul.f32 %v5556, 1.442695
    %v5680 = vpow.pop %v5679
    %v5681 = vmul.f32 %v5557, 1.442695
    %v5682 = vpow.pop %v5681
    %v5683 = vmul.f32 %v5558, 1.442695
    %v5684 = vpow.pop %v5683
    %v5685 = vmul.f32 %v5559, 1.442695
    %v5686 = vpow.pop %v5685
    %v5687 = vmul.f32 %v5560, 1.442695
    %v5688 = vpow.pop %v5687
    %v5689 = vsel %vm2016, %v5562, 0.0
    %5690 = vadd.xlane.f32.xlu0 %v5689
    %v5691 = vpop.xlane.xlu0 %5690
    %v5692 = vsel %vm2016, %v5564, 0.0
    %5693 = vadd.xlane.f32.xlu0 %v5692
    %v5694 = vpop.xlane.xlu0 %5693
    %v5695 = vsel %vm2016, %v5566, 0.0
    %5696 = vadd.xlane.f32.xlu0 %v5695
    %v5697 = vpop.xlane.xlu0 %5696
    %v5698 = vsel %vm2016, %v5568, 0.0
    %5699 = vadd.xlane.f32.xlu0 %v5698
    %v5700 = vpop.xlane.xlu0 %5699
    %v5701 = vsel %vm2016, %v5570, 0.0
    %5702 = vadd.xlane.f32.xlu0 %v5701
    %v5703 = vpop.xlane.xlu0 %5702
    %v5704 = vsel %vm2016, %v5572, 0.0
    %5705 = vadd.xlane.f32.xlu0 %v5704
    %v5706 = vpop.xlane.xlu0 %5705
    %v5707 = vsel %vm2016, %v5574, 0.0
    %5708 = vadd.xlane.f32.xlu0 %v5707
    %v5709 = vpop.xlane.xlu0 %5708
    %v5710 = vsel %vm2016, %v5576, 0.0
    %5711 = vadd.xlane.f32.xlu0 %v5710
    %v5712 = vpop.xlane.xlu0 %5711
    %v5713 = vsel %vm2016, %v5578, 0.0
    %5714 = vadd.xlane.f32.xlu0 %v5713
    %v5715 = vpop.xlane.xlu0 %5714
    %v5716 = vsel %vm2016, %v5580, 0.0
    %5717 = vadd.xlane.f32.xlu0 %v5716
    %v5718 = vpop.xlane.xlu0 %5717
    %v5719 = vsel %vm2016, %v5582, 0.0
    %5720 = vadd.xlane.f32.xlu0 %v5719
    %v5721 = vpop.xlane.xlu0 %5720
    %v5722 = vsel %vm2016, %v5584, 0.0
    %5723 = vadd.xlane.f32.xlu0 %v5722
    %v5724 = vpop.xlane.xlu0 %5723
    %v5725 = vsel %vm2016, %v5586, 0.0
    %5726 = vadd.xlane.f32.xlu0 %v5725
    %v5727 = vpop.xlane.xlu0 %5726
    %v5728 = vsel %vm2016, %v5588, 0.0
    %5729 = vadd.xlane.f32.xlu0 %v5728
    %v5730 = vpop.xlane.xlu0 %5729
    %v5731 = vsel %vm2016, %v5590, 0.0
    %5732 = vadd.xlane.f32.xlu0 %v5731
    %v5733 = vpop.xlane.xlu0 %5732
    %v5734 = vsel %vm2016, %v5592, 0.0
    %5735 = vadd.xlane.f32.xlu0 %v5734
    %v5736 = vpop.xlane.xlu0 %5735
    %v5737 = vsel %vm2016, %v5594, 0.0
    %5738 = vadd.xlane.f32.xlu0 %v5737
    %v5739 = vpop.xlane.xlu0 %5738
    %v5740 = vsel %vm2016, %v5596, 0.0
    %5741 = vadd.xlane.f32.xlu0 %v5740
    %v5742 = vpop.xlane.xlu0 %5741
    %v5743 = vsel %vm2016, %v5598, 0.0
    %5744 = vadd.xlane.f32.xlu0 %v5743
    %v5745 = vpop.xlane.xlu0 %5744
    %v5746 = vsel %vm2016, %v5600, 0.0
    %5747 = vadd.xlane.f32.xlu0 %v5746
    %v5748 = vpop.xlane.xlu0 %5747
    %v5749 = vsel %vm2016, %v5602, 0.0
    %5750 = vadd.xlane.f32.xlu0 %v5749
    %v5751 = vpop.xlane.xlu0 %5750
    %v5752 = vsel %vm2016, %v5604, 0.0
    %5753 = vadd.xlane.f32.xlu0 %v5752
    %v5754 = vpop.xlane.xlu0 %5753
    %v5755 = vsel %vm2016, %v5606, 0.0
    %5756 = vadd.xlane.f32.xlu0 %v5755
    %v5757 = vpop.xlane.xlu0 %5756
    %v5758 = vsel %vm2016, %v5608, 0.0
    %5759 = vadd.xlane.f32.xlu0 %v5758
    %v5760 = vpop.xlane.xlu0 %5759
    %v5761 = vsel %vm2016, %v5610, 0.0
    %5762 = vadd.xlane.f32.xlu0 %v5761
    %v5763 = vpop.xlane.xlu0 %5762
    %v5764 = vsel %vm2016, %v5612, 0.0
    %5765 = vadd.xlane.f32.xlu0 %v5764
    %v5766 = vpop.xlane.xlu0 %5765
    %v5767 = vsel %vm2016, %v5614, 0.0
    %5768 = vadd.xlane.f32.xlu0 %v5767
    %v5769 = vpop.xlane.xlu0 %5768
    %v5770 = vsel %vm2016, %v5616, 0.0
    %5771 = vadd.xlane.f32.xlu0 %v5770
    %v5772 = vpop.xlane.xlu0 %5771
    %v5773 = vsel %vm2016, %v5618, 0.0
    %5774 = vadd.xlane.f32.xlu0 %v5773
    %v5775 = vpop.xlane.xlu0 %5774
    %v5776 = vsel %vm2016, %v5620, 0.0
    %5777 = vadd.xlane.f32.xlu0 %v5776
    %v5778 = vpop.xlane.xlu0 %5777
    %v5779 = vsel %vm2016, %v5622, 0.0
    %5780 = vadd.xlane.f32.xlu0 %v5779
    %v5781 = vpop.xlane.xlu0 %5780
    %v5782 = vsel %vm2016, %v5624, 0.0
    %5783 = vadd.xlane.f32.xlu0 %v5782
    %v5784 = vpop.xlane.xlu0 %5783
    %v5785 = vsel %vm2016, %v5626, 0.0
    %5786 = vadd.xlane.f32.xlu0 %v5785
    %v5787 = vpop.xlane.xlu0 %5786
    %v5788 = vsel %vm2016, %v5628, 0.0
    %5789 = vadd.xlane.f32.xlu0 %v5788
    %v5790 = vpop.xlane.xlu0 %5789
    %v5791 = vsel %vm2016, %v5630, 0.0
    %5792 = vadd.xlane.f32.xlu0 %v5791
    %v5793 = vpop.xlane.xlu0 %5792
    %v5794 = vsel %vm2016, %v5632, 0.0
    %5795 = vadd.xlane.f32.xlu0 %v5794
    %v5796 = vpop.xlane.xlu0 %5795
    %v5797 = vsel %vm2016, %v5634, 0.0
    %5798 = vadd.xlane.f32.xlu0 %v5797
    %v5799 = vpop.xlane.xlu0 %5798
    %v5800 = vsel %vm2016, %v5636, 0.0
    %5801 = vadd.xlane.f32.xlu0 %v5800
    %v5802 = vpop.xlane.xlu0 %5801
    %v5803 = vsel %vm2016, %v5638, 0.0
    %5804 = vadd.xlane.f32.xlu0 %v5803
    %v5805 = vpop.xlane.xlu0 %5804
    %v5806 = vsel %vm2016, %v5640, 0.0
    %5807 = vadd.xlane.f32.xlu0 %v5806
    %v5808 = vpop.xlane.xlu0 %5807
    %v5809 = vsel %vm2016, %v5642, 0.0
    %5810 = vadd.xlane.f32.xlu0 %v5809
    %v5811 = vpop.xlane.xlu0 %5810
    %v5812 = vsel %vm2016, %v5644, 0.0
    %5813 = vadd.xlane.f32.xlu0 %v5812
    %v5814 = vpop.xlane.xlu0 %5813
    %v5815 = vsel %vm2016, %v5646, 0.0
    %5816 = vadd.xlane.f32.xlu0 %v5815
    %v5817 = vpop.xlane.xlu0 %5816
    %v5818 = vsel %vm2016, %v5648, 0.0
    %5819 = vadd.xlane.f32.xlu0 %v5818
    %v5820 = vpop.xlane.xlu0 %5819
    %v5821 = vsel %vm2016, %v5650, 0.0
    %5822 = vadd.xlane.f32.xlu0 %v5821
    %v5823 = vpop.xlane.xlu0 %5822
    %v5824 = vsel %vm2016, %v5652, 0.0
    %5825 = vadd.xlane.f32.xlu0 %v5824
    %v5826 = vpop.xlane.xlu0 %5825
    %v5827 = vsel %vm2016, %v5654, 0.0
    %5828 = vadd.xlane.f32.xlu0 %v5827
    %v5829 = vpop.xlane.xlu0 %5828
    %v5830 = vsel %vm2016, %v5656, 0.0
    %5831 = vadd.xlane.f32.xlu0 %v5830
    %v5832 = vpop.xlane.xlu0 %5831
    %v5833 = vsel %vm2016, %v5658, 0.0
    %5834 = vadd.xlane.f32.xlu0 %v5833
    %v5835 = vpop.xlane.xlu0 %5834
    %v5836 = vsel %vm2016, %v5660, 0.0
    %5837 = vadd.xlane.f32.xlu0 %v5836
    %v5838 = vpop.xlane.xlu0 %5837
    %v5839 = vsel %vm2016, %v5662, 0.0
    %5840 = vadd.xlane.f32.xlu0 %v5839
    %v5841 = vpop.xlane.xlu0 %5840
    %v5842 = vsel %vm2016, %v5664, 0.0
    %5843 = vadd.xlane.f32.xlu0 %v5842
    %v5844 = vpop.xlane.xlu0 %5843
    %v5845 = vsel %vm2016, %v5666, 0.0
    %5846 = vadd.xlane.f32.xlu0 %v5845
    %v5847 = vpop.xlane.xlu0 %5846
    %v5848 = vsel %vm2016, %v5668, 0.0
    %5849 = vadd.xlane.f32.xlu0 %v5848
    %v5850 = vpop.xlane.xlu0 %5849
    %v5851 = vsel %vm2016, %v5670, 0.0
    %5852 = vadd.xlane.f32.xlu0 %v5851
    %v5853 = vpop.xlane.xlu0 %5852
    %v5854 = vsel %vm2016, %v5672, 0.0
    %5855 = vadd.xlane.f32.xlu0 %v5854
    %v5856 = vpop.xlane.xlu0 %5855
    %v5857 = vsel %vm2016, %v5674, 0.0
    %5858 = vadd.xlane.f32.xlu0 %v5857
    %v5859 = vpop.xlane.xlu0 %5858
    %v5860 = vsel %vm2016, %v5676, 0.0
    %5861 = vadd.xlane.f32.xlu0 %v5860
    %v5862 = vpop.xlane.xlu0 %5861
    %v5863 = vsel %vm2016, %v5678, 0.0
    %5864 = vadd.xlane.f32.xlu0 %v5863
    %v5865 = vpop.xlane.xlu0 %5864
    %v5866 = vsel %vm2016, %v5680, 0.0
    %5867 = vadd.xlane.f32.xlu0 %v5866
    %v5868 = vpop.xlane.xlu0 %5867
    %v5869 = vsel %vm2016, %v5682, 0.0
    %5870 = vadd.xlane.f32.xlu0 %v5869
    %v5871 = vpop.xlane.xlu0 %5870
    %v5872 = vsel %vm2016, %v5684, 0.0
    %5873 = vadd.xlane.f32.xlu0 %v5872
    %v5874 = vpop.xlane.xlu0 %5873
    %v5875 = vsel %vm2016, %v5686, 0.0
    %5876 = vadd.xlane.f32.xlu0 %v5875
    %v5877 = vpop.xlane.xlu0 %5876
    %v5878 = vsel %vm2016, %v5688, 0.0
    %5879 = vadd.xlane.f32.xlu0 %v5878
    %v5880 = vpop.xlane.xlu0 %5879
    %v5881 = vrcp.pop %v5691
    %v5882 = vrcp.pop %v5694
    %v5883 = vrcp.pop %v5697
    %v5884 = vrcp.pop %v5700
    %v5885 = vrcp.pop %v5703
    %v5886 = vrcp.pop %v5706
    %v5887 = vrcp.pop %v5709
    %v5888 = vrcp.pop %v5712
    %v5889 = vrcp.pop %v5715
    %v5890 = vrcp.pop %v5718
    %v5891 = vrcp.pop %v5721
    %v5892 = vrcp.pop %v5724
    %v5893 = vrcp.pop %v5727
    %v5894 = vrcp.pop %v5730
    %v5895 = vrcp.pop %v5733
    %v5896 = vrcp.pop %v5736
    %v5897 = vrcp.pop %v5739
    %v5898 = vrcp.pop %v5742
    %v5899 = vrcp.pop %v5745
    %v5900 = vrcp.pop %v5748
    %v5901 = vrcp.pop %v5751
    %v5902 = vrcp.pop %v5754
    %v5903 = vrcp.pop %v5757
    %v5904 = vrcp.pop %v5760
    %v5905 = vrcp.pop %v5763
    %v5906 = vrcp.pop %v5766
    %v5907 = vrcp.pop %v5769
    %v5908 = vrcp.pop %v5772
    %v5909 = vrcp.pop %v5775
    %v5910 = vrcp.pop %v5778
    %v5911 = vrcp.pop %v5781
    %v5912 = vrcp.pop %v5784
    %v5913 = vrcp.pop %v5787
    %v5914 = vrcp.pop %v5790
    %v5915 = vrcp.pop %v5793
    %v5916 = vrcp.pop %v5796
    %v5917 = vrcp.pop %v5799
    %v5918 = vrcp.pop %v5802
    %v5919 = vrcp.pop %v5805
    %v5920 = vrcp.pop %v5808
    %v5921 = vrcp.pop %v5811
    %v5922 = vrcp.pop %v5814
    %v5923 = vrcp.pop %v5817
    %v5924 = vrcp.pop %v5820
    %v5925 = vrcp.pop %v5823
    %v5926 = vrcp.pop %v5826
    %v5927 = vrcp.pop %v5829
    %v5928 = vrcp.pop %v5832
    %v5929 = vrcp.pop %v5835
    %v5930 = vrcp.pop %v5838
    %v5931 = vrcp.pop %v5841
    %v5932 = vrcp.pop %v5844
    %v5933 = vrcp.pop %v5847
    %v5934 = vrcp.pop %v5850
    %v5935 = vrcp.pop %v5853
    %v5936 = vrcp.pop %v5856
    %v5937 = vrcp.pop %v5859
    %v5938 = vrcp.pop %v5862
    %v5939 = vrcp.pop %v5865
    %v5940 = vrcp.pop %v5868
    %v5941 = vrcp.pop %v5871
    %v5942 = vrcp.pop %v5874
    %v5943 = vrcp.pop %v5877
    %v5944 = vrcp.pop %v5880
    %v5945 = vmul.f32 %v5562, %v5881
    %v5946 = vmul.f32 %v5564, %v5882
    %v5947 = vmul.f32 %v5566, %v5883
    %v5948 = vmul.f32 %v5568, %v5884
    %v5949 = vmul.f32 %v5570, %v5885
    %v5950 = vmul.f32 %v5572, %v5886
    %v5951 = vmul.f32 %v5574, %v5887
    %v5952 = vmul.f32 %v5576, %v5888
    %v5953 = vmul.f32 %v5578, %v5889
    %v5954 = vmul.f32 %v5580, %v5890
    %v5955 = vmul.f32 %v5582, %v5891
    %v5956 = vmul.f32 %v5584, %v5892
    %v5957 = vmul.f32 %v5586, %v5893
    %v5958 = vmul.f32 %v5588, %v5894
    %v5959 = vmul.f32 %v5590, %v5895
    %v5960 = vmul.f32 %v5592, %v5896
    %v5961 = vmul.f32 %v5594, %v5897
    %v5962 = vmul.f32 %v5596, %v5898
    %v5963 = vmul.f32 %v5598, %v5899
    %v5964 = vmul.f32 %v5600, %v5900
    %v5965 = vmul.f32 %v5602, %v5901
    %v5966 = vmul.f32 %v5604, %v5902
    %v5967 = vmul.f32 %v5606, %v5903
    %v5968 = vmul.f32 %v5608, %v5904
    %v5969 = vmul.f32 %v5610, %v5905
    %v5970 = vmul.f32 %v5612, %v5906
    %v5971 = vmul.f32 %v5614, %v5907
    %v5972 = vmul.f32 %v5616, %v5908
    %v5973 = vmul.f32 %v5618, %v5909
    %v5974 = vmul.f32 %v5620, %v5910
    %v5975 = vmul.f32 %v5622, %v5911
    %v5976 = vmul.f32 %v5624, %v5912
    %v5977 = vmul.f32 %v5626, %v5913
    %v5978 = vmul.f32 %v5628, %v5914
    %v5979 = vmul.f32 %v5630, %v5915
    %v5980 = vmul.f32 %v5632, %v5916
    %v5981 = vmul.f32 %v5634, %v5917
    %v5982 = vmul.f32 %v5636, %v5918
    %v5983 = vmul.f32 %v5638, %v5919
    %v5984 = vmul.f32 %v5640, %v5920
    %v5985 = vmul.f32 %v5642, %v5921
    %v5986 = vmul.f32 %v5644, %v5922
    %v5987 = vmul.f32 %v5646, %v5923
    %v5988 = vmul.f32 %v5648, %v5924
    %v5989 = vmul.f32 %v5650, %v5925
    %v5990 = vmul.f32 %v5652, %v5926
    %v5991 = vmul.f32 %v5654, %v5927
    %v5992 = vmul.f32 %v5656, %v5928
    %v5993 = vmul.f32 %v5658, %v5929
    %v5994 = vmul.f32 %v5660, %v5930
    %v5995 = vmul.f32 %v5662, %v5931
    %v5996 = vmul.f32 %v5664, %v5932
    %v5997 = vmul.f32 %v5666, %v5933
    %v5998 = vmul.f32 %v5668, %v5934
    %v5999 = vmul.f32 %v5670, %v5935
    %v6000 = vmul.f32 %v5672, %v5936
    %v6001 = vmul.f32 %v5674, %v5937
    %v6002 = vmul.f32 %v5676, %v5938
    %v6003 = vmul.f32 %v5678, %v5939
    %v6004 = vmul.f32 %v5680, %v5940
    %v6005 = vmul.f32 %v5682, %v5941
    %v6006 = vmul.f32 %v5684, %v5942
    %v6007 = vmul.f32 %v5686, %v5943
    %v6008 = vmul.f32 %v5688, %v5944
    %v6009 = vpack.c.bf16 %v5946, %v5945
    %v6010 = vpack.c.bf16 %v5948, %v5947
    %v6011 = vpack.c.bf16 %v5950, %v5949
    %v6012 = vpack.c.bf16 %v5952, %v5951
    %v6013 = vpack.c.bf16 %v5954, %v5953
    %v6014 = vpack.c.bf16 %v5956, %v5955
    %v6015 = vpack.c.bf16 %v5958, %v5957
    %v6016 = vpack.c.bf16 %v5960, %v5959
    %v6017 = vpack.c.bf16 %v5962, %v5961
    %v6018 = vpack.c.bf16 %v5964, %v5963
    %v6019 = vpack.c.bf16 %v5966, %v5965
    %v6020 = vpack.c.bf16 %v5968, %v5967
    %v6021 = vpack.c.bf16 %v5970, %v5969
    %v6022 = vpack.c.bf16 %v5972, %v5971
    %v6023 = vpack.c.bf16 %v5974, %v5973
    %v6024 = vpack.c.bf16 %v5976, %v5975
    %v6025 = vpack.c.bf16 %v5978, %v5977
    %v6026 = vpack.c.bf16 %v5980, %v5979
    %v6027 = vpack.c.bf16 %v5982, %v5981
    %v6028 = vpack.c.bf16 %v5984, %v5983
    %v6029 = vpack.c.bf16 %v5986, %v5985
    %v6030 = vpack.c.bf16 %v5988, %v5987
    %v6031 = vpack.c.bf16 %v5990, %v5989
    %v6032 = vpack.c.bf16 %v5992, %v5991
    %v6033 = vpack.c.bf16 %v5994, %v5993
    %v6034 = vpack.c.bf16 %v5996, %v5995
    %v6035 = vpack.c.bf16 %v5998, %v5997
    %v6036 = vpack.c.bf16 %v6000, %v5999
    %v6037 = vpack.c.bf16 %v6002, %v6001
    %v6038 = vpack.c.bf16 %v6004, %v6003
    %v6039 = vpack.c.bf16 %v6006, %v6005
    %v6040 = vpack.c.bf16 %v6008, %v6007
    %6045 = vrot.lane.b32.xlu0 %v4609, 64
    %v6046 = vpop.permute.xlu0 %6045
    %6047 = vrot.lane.b32.xlu0 %v4610, 64
    %v6048 = vpop.permute.xlu0 %6047
    %6049 = vrot.lane.b32.xlu0 %v4611, 64
    %v6050 = vpop.permute.xlu0 %6049
    %6051 = vrot.lane.b32.xlu0 %v4612, 64
    %v6052 = vpop.permute.xlu0 %6051
    %v6058 = vsel %vm2016, %v6009, 0
    %v6061 = vsel %vm2016, %v6010, 0
    %v6064 = vsel %vm2016, %v6011, 0
    %v6067 = vsel %vm2016, %v6012, 0
    %6069 = vmatprep.subr.bf16.mxu0 0
    %6070 = vmatpush1.bf16.msra.mxu0 0
    %6071 = vmatprep.subr.bf16.mxu0 0
    %6072 = vmatpush1.bf16.msra.mxu0 0
    %6073 = vmatprep.subr.bf16.mxu0 0
    %6074 = vmatpush1.bf16.msra.mxu0 0
    %6075 = vmatprep.subr.bf16.mxu0 0
    %6076 = vmatpush1.bf16.msra.mxu0 0
    %6077 = vmatprep.subr.bf16.mxu0 0
    %6078 = vmatpush1.bf16.msra.mxu0 %v6052
    %6079 = vmatprep.subr.bf16.mxu0 0
    %6080 = vmatpush1.bf16.msra.mxu0 %v6050
    %6081 = vmatprep.subr.bf16.mxu0 0
    %6082 = vmatpush1.bf16.msra.mxu0 %v6048
    %6083 = vmatprep.subr.bf16.mxu0 0
    %6084 = vmatpush1.bf16.msra.mxu0 %v6046
    %6085 = vmatprep.subr.bf16.mxu0 0
    %6086 = vmatpush2.bf16.msra.mxu0 0
    %6087 = vmatprep.subr.bf16.mxu0 0
    %6088 = vmatpush2.bf16.msra.mxu0 0
    %6089 = vmatprep.subr.bf16.mxu0 0
    %6090 = vmatpush2.bf16.msra.mxu0 0
    %6091 = vmatprep.subr.bf16.mxu0 0
    %6092 = vmatpush2.bf16.msra.mxu0 0
    %6093 = vmatprep.subr.bf16.mxu0 0
    %6094 = vmatpush2.bf16.msra.mxu0 0
    %6095 = vmatprep.subr.bf16.mxu0 0
    %6096 = vmatpush2.bf16.msra.mxu0 0
    %6097 = vmatprep.subr.bf16.mxu0 0
    %6098 = vmatpush2.bf16.msra.mxu0 0
    %6099 = vmatprep.subr.bf16.mxu0 0
    %6100 = vmatpush2.bf16.msra.mxu0 0
    %6101 = vmatprep.mubr.bf16.mxu0 0
    %6102 = vmatmul.mubr.bf16.gmra.mxu0 %v6058
    %v6103 = vpop.f32.mrf.mxu0
    %v6104 = vadd.f32 0.0, %v6103
    %v6105 = vpop.f32.mrf.mxu0
    %v6106 = vpop.f32.mrf.mxu0
    %v6107 = vadd.f32 0.0, %v6106
    %v6108 = vpop.f32.mrf.mxu0
    %6109 = vmatprep.mubr.bf16.mxu0 0
    %6110 = vmatmul.mubr.bf16.gmra.mxu0 %v6061
    %v6111 = vpop.f32.mrf.mxu0
    %v6112 = vadd.f32 0.0, %v6111
    %v6113 = vpop.f32.mrf.mxu0
    %v6114 = vpop.f32.mrf.mxu0
    %v6115 = vadd.f32 0.0, %v6114
    %v6116 = vpop.f32.mrf.mxu0
    %6117 = vmatprep.mubr.bf16.mxu0 0
    %6118 = vmatmul.mubr.bf16.gmra.mxu0 %v6064
    %v6119 = vpop.f32.mrf.mxu0
    %v6120 = vadd.f32 0.0, %v6119
    %v6121 = vpop.f32.mrf.mxu0
    %v6122 = vpop.f32.mrf.mxu0
    %v6123 = vadd.f32 0.0, %v6122
    %v6124 = vpop.f32.mrf.mxu0
    %6125 = vmatprep.mubr.bf16.mxu0 0
    %6126 = vmatmul.mubr.bf16.gmra.mxu0 %v6067
    %v6127 = vpop.f32.mrf.mxu0
    %v6128 = vadd.f32 0.0, %v6127
    %v6129 = vpop.f32.mrf.mxu0
    %v6130 = vpop.f32.mrf.mxu0
    %v6131 = vadd.f32 0.0, %v6130
    %v6132 = vpop.f32.mrf.mxu0
    %6133 = vdwg.mxu0
    %6138 = vrot.lane.b32.xlu0 %v4613, 64
    %v6139 = vpop.permute.xlu0 %6138
    %6140 = vrot.lane.b32.xlu0 %v4614, 64
    %v6141 = vpop.permute.xlu0 %6140
    %6142 = vrot.lane.b32.xlu0 %v4615, 64
    %v6143 = vpop.permute.xlu0 %6142
    %6144 = vrot.lane.b32.xlu0 %v4616, 64
    %v6145 = vpop.permute.xlu0 %6144
    %v6151 = vsel %vm2016, %v6013, 0
    %v6154 = vsel %vm2016, %v6014, 0
    %v6157 = vsel %vm2016, %v6015, 0
    %v6160 = vsel %vm2016, %v6016, 0
    %6162 = vmatprep.subr.bf16.mxu0 0
    %6163 = vmatpush1.bf16.msra.mxu0 0
    %6164 = vmatprep.subr.bf16.mxu0 0
    %6165 = vmatpush1.bf16.msra.mxu0 0
    %6166 = vmatprep.subr.bf16.mxu0 0
    %6167 = vmatpush1.bf16.msra.mxu0 0
    %6168 = vmatprep.subr.bf16.mxu0 0
    %6169 = vmatpush1.bf16.msra.mxu0 0
    %6170 = vmatprep.subr.bf16.mxu0 0
    %6171 = vmatpush1.bf16.msra.mxu0 %v6145
    %6172 = vmatprep.subr.bf16.mxu0 0
    %6173 = vmatpush1.bf16.msra.mxu0 %v6143
    %6174 = vmatprep.subr.bf16.mxu0 0
    %6175 = vmatpush1.bf16.msra.mxu0 %v6141
    %6176 = vmatprep.subr.bf16.mxu0 0
    %6177 = vmatpush1.bf16.msra.mxu0 %v6139
    %6178 = vmatprep.subr.bf16.mxu0 0
    %6179 = vmatpush2.bf16.msra.mxu0 0
    %6180 = vmatprep.subr.bf16.mxu0 0
    %6181 = vmatpush2.bf16.msra.mxu0 0
    %6182 = vmatprep.subr.bf16.mxu0 0
    %6183 = vmatpush2.bf16.msra.mxu0 0
    %6184 = vmatprep.subr.bf16.mxu0 0
    %6185 = vmatpush2.bf16.msra.mxu0 0
    %6186 = vmatprep.subr.bf16.mxu0 0
    %6187 = vmatpush2.bf16.msra.mxu0 0
    %6188 = vmatprep.subr.bf16.mxu0 0
    %6189 = vmatpush2.bf16.msra.mxu0 0
    %6190 = vmatprep.subr.bf16.mxu0 0
    %6191 = vmatpush2.bf16.msra.mxu0 0
    %6192 = vmatprep.subr.bf16.mxu0 0
    %6193 = vmatpush2.bf16.msra.mxu0 0
    %6194 = vmatprep.mubr.bf16.mxu0 0
    %6195 = vmatmul.mubr.bf16.gmra.mxu0 %v6151
    %v6196 = vpop.f32.mrf.mxu0
    %v6197 = vadd.f32 0.0, %v6196
    %v6198 = vpop.f32.mrf.mxu0
    %v6199 = vpop.f32.mrf.mxu0
    %v6200 = vadd.f32 0.0, %v6199
    %v6201 = vpop.f32.mrf.mxu0
    %6202 = vmatprep.mubr.bf16.mxu0 0
    %6203 = vmatmul.mubr.bf16.gmra.mxu0 %v6154
    %v6204 = vpop.f32.mrf.mxu0
    %v6205 = vadd.f32 0.0, %v6204
    %v6206 = vpop.f32.mrf.mxu0
    %v6207 = vpop.f32.mrf.mxu0
    %v6208 = vadd.f32 0.0, %v6207
    %v6209 = vpop.f32.mrf.mxu0
    %6210 = vmatprep.mubr.bf16.mxu0 0
    %6211 = vmatmul.mubr.bf16.gmra.mxu0 %v6157
    %v6212 = vpop.f32.mrf.mxu0
    %v6213 = vadd.f32 0.0, %v6212
    %v6214 = vpop.f32.mrf.mxu0
    %v6215 = vpop.f32.mrf.mxu0
    %v6216 = vadd.f32 0.0, %v6215
    %v6217 = vpop.f32.mrf.mxu0
    %6218 = vmatprep.mubr.bf16.mxu0 0
    %6219 = vmatmul.mubr.bf16.gmra.mxu0 %v6160
    %v6220 = vpop.f32.mrf.mxu0
    %v6221 = vadd.f32 0.0, %v6220
    %v6222 = vpop.f32.mrf.mxu0
    %v6223 = vpop.f32.mrf.mxu0
    %v6224 = vadd.f32 0.0, %v6223
    %v6225 = vpop.f32.mrf.mxu0
    %6226 = vdwg.mxu0
    %6231 = vrot.lane.b32.xlu0 %v4617, 64
    %v6232 = vpop.permute.xlu0 %6231
    %6233 = vrot.lane.b32.xlu0 %v4618, 64
    %v6234 = vpop.permute.xlu0 %6233
    %6235 = vrot.lane.b32.xlu0 %v4619, 64
    %v6236 = vpop.permute.xlu0 %6235
    %6237 = vrot.lane.b32.xlu0 %v4620, 64
    %v6238 = vpop.permute.xlu0 %6237
    %v6244 = vsel %vm2016, %v6017, 0
    %v6247 = vsel %vm2016, %v6018, 0
    %v6250 = vsel %vm2016, %v6019, 0
    %v6253 = vsel %vm2016, %v6020, 0
    %6255 = vmatprep.subr.bf16.mxu0 0
    %6256 = vmatpush1.bf16.msra.mxu0 0
    %6257 = vmatprep.subr.bf16.mxu0 0
    %6258 = vmatpush1.bf16.msra.mxu0 0
    %6259 = vmatprep.subr.bf16.mxu0 0
    %6260 = vmatpush1.bf16.msra.mxu0 0
    %6261 = vmatprep.subr.bf16.mxu0 0
    %6262 = vmatpush1.bf16.msra.mxu0 0
    %6263 = vmatprep.subr.bf16.mxu0 0
    %6264 = vmatpush1.bf16.msra.mxu0 %v6238
    %6265 = vmatprep.subr.bf16.mxu0 0
    %6266 = vmatpush1.bf16.msra.mxu0 %v6236
    %6267 = vmatprep.subr.bf16.mxu0 0
    %6268 = vmatpush1.bf16.msra.mxu0 %v6234
    %6269 = vmatprep.subr.bf16.mxu0 0
    %6270 = vmatpush1.bf16.msra.mxu0 %v6232
    %6271 = vmatprep.subr.bf16.mxu0 0
    %6272 = vmatpush2.bf16.msra.mxu0 0
    %6273 = vmatprep.subr.bf16.mxu0 0
    %6274 = vmatpush2.bf16.msra.mxu0 0
    %6275 = vmatprep.subr.bf16.mxu0 0
    %6276 = vmatpush2.bf16.msra.mxu0 0
    %6277 = vmatprep.subr.bf16.mxu0 0
    %6278 = vmatpush2.bf16.msra.mxu0 0
    %6279 = vmatprep.subr.bf16.mxu0 0
    %6280 = vmatpush2.bf16.msra.mxu0 0
    %6281 = vmatprep.subr.bf16.mxu0 0
    %6282 = vmatpush2.bf16.msra.mxu0 0
    %6283 = vmatprep.subr.bf16.mxu0 0
    %6284 = vmatpush2.bf16.msra.mxu0 0
    %6285 = vmatprep.subr.bf16.mxu0 0
    %6286 = vmatpush2.bf16.msra.mxu0 0
    %6287 = vmatprep.mubr.bf16.mxu0 0
    %6288 = vmatmul.mubr.bf16.gmra.mxu0 %v6244
    %v6289 = vpop.f32.mrf.mxu0
    %v6290 = vadd.f32 0.0, %v6289
    %v6291 = vpop.f32.mrf.mxu0
    %v6292 = vpop.f32.mrf.mxu0
    %v6293 = vadd.f32 0.0, %v6292
    %v6294 = vpop.f32.mrf.mxu0
    %6295 = vmatprep.mubr.bf16.mxu0 0
    %6296 = vmatmul.mubr.bf16.gmra.mxu0 %v6247
    %v6297 = vpop.f32.mrf.mxu0
    %v6298 = vadd.f32 0.0, %v6297
    %v6299 = vpop.f32.mrf.mxu0
    %v6300 = vpop.f32.mrf.mxu0
    %v6301 = vadd.f32 0.0, %v6300
    %v6302 = vpop.f32.mrf.mxu0
    %6303 = vmatprep.mubr.bf16.mxu0 0
    %6304 = vmatmul.mubr.bf16.gmra.mxu0 %v6250
    %v6305 = vpop.f32.mrf.mxu0
    %v6306 = vadd.f32 0.0, %v6305
    %v6307 = vpop.f32.mrf.mxu0
    %v6308 = vpop.f32.mrf.mxu0
    %v6309 = vadd.f32 0.0, %v6308
    %v6310 = vpop.f32.mrf.mxu0
    %6311 = vmatprep.mubr.bf16.mxu0 0
    %6312 = vmatmul.mubr.bf16.gmra.mxu0 %v6253
    %v6313 = vpop.f32.mrf.mxu0
    %v6314 = vadd.f32 0.0, %v6313
    %v6315 = vpop.f32.mrf.mxu0
    %v6316 = vpop.f32.mrf.mxu0
    %v6317 = vadd.f32 0.0, %v6316
    %v6318 = vpop.f32.mrf.mxu0
    %6319 = vdwg.mxu0
    %6324 = vrot.lane.b32.xlu0 %v4621, 64
    %v6325 = vpop.permute.xlu0 %6324
    %6326 = vrot.lane.b32.xlu0 %v4622, 64
    %v6327 = vpop.permute.xlu0 %6326
    %6328 = vrot.lane.b32.xlu0 %v4623, 64
    %v6329 = vpop.permute.xlu0 %6328
    %6330 = vrot.lane.b32.xlu0 %v4624, 64
    %v6331 = vpop.permute.xlu0 %6330
    %v6337 = vsel %vm2016, %v6021, 0
    %v6340 = vsel %vm2016, %v6022, 0
    %v6343 = vsel %vm2016, %v6023, 0
    %v6346 = vsel %vm2016, %v6024, 0
    %6348 = vmatprep.subr.bf16.mxu0 0
    %6349 = vmatpush1.bf16.msra.mxu0 0
    %6350 = vmatprep.subr.bf16.mxu0 0
    %6351 = vmatpush1.bf16.msra.mxu0 0
    %6352 = vmatprep.subr.bf16.mxu0 0
    %6353 = vmatpush1.bf16.msra.mxu0 0
    %6354 = vmatprep.subr.bf16.mxu0 0
    %6355 = vmatpush1.bf16.msra.mxu0 0
    %6356 = vmatprep.subr.bf16.mxu0 0
    %6357 = vmatpush1.bf16.msra.mxu0 %v6331
    %6358 = vmatprep.subr.bf16.mxu0 0
    %6359 = vmatpush1.bf16.msra.mxu0 %v6329
    %6360 = vmatprep.subr.bf16.mxu0 0
    %6361 = vmatpush1.bf16.msra.mxu0 %v6327
    %6362 = vmatprep.subr.bf16.mxu0 0
    %6363 = vmatpush1.bf16.msra.mxu0 %v6325
    %6364 = vmatprep.subr.bf16.mxu0 0
    %6365 = vmatpush2.bf16.msra.mxu0 0
    %6366 = vmatprep.subr.bf16.mxu0 0
    %6367 = vmatpush2.bf16.msra.mxu0 0
    %6368 = vmatprep.subr.bf16.mxu0 0
    %6369 = vmatpush2.bf16.msra.mxu0 0
    %6370 = vmatprep.subr.bf16.mxu0 0
    %6371 = vmatpush2.bf16.msra.mxu0 0
    %6372 = vmatprep.subr.bf16.mxu0 0
    %6373 = vmatpush2.bf16.msra.mxu0 0
    %6374 = vmatprep.subr.bf16.mxu0 0
    %6375 = vmatpush2.bf16.msra.mxu0 0
    %6376 = vmatprep.subr.bf16.mxu0 0
    %6377 = vmatpush2.bf16.msra.mxu0 0
    %6378 = vmatprep.subr.bf16.mxu0 0
    %6379 = vmatpush2.bf16.msra.mxu0 0
    %6380 = vmatprep.mubr.bf16.mxu0 0
    %6381 = vmatmul.mubr.bf16.gmra.mxu0 %v6337
    %v6382 = vpop.f32.mrf.mxu0
    %v6383 = vadd.f32 0.0, %v6382
    %v6384 = vpop.f32.mrf.mxu0
    %v6385 = vpop.f32.mrf.mxu0
    %v6386 = vadd.f32 0.0, %v6385
    %v6387 = vpop.f32.mrf.mxu0
    %6388 = vmatprep.mubr.bf16.mxu0 0
    %6389 = vmatmul.mubr.bf16.gmra.mxu0 %v6340
    %v6390 = vpop.f32.mrf.mxu0
    %v6391 = vadd.f32 0.0, %v6390
    %v6392 = vpop.f32.mrf.mxu0
    %v6393 = vpop.f32.mrf.mxu0
    %v6394 = vadd.f32 0.0, %v6393
    %v6395 = vpop.f32.mrf.mxu0
    %6396 = vmatprep.mubr.bf16.mxu0 0
    %6397 = vmatmul.mubr.bf16.gmra.mxu0 %v6343
    %v6398 = vpop.f32.mrf.mxu0
    %v6399 = vadd.f32 0.0, %v6398
    %v6400 = vpop.f32.mrf.mxu0
    %v6401 = vpop.f32.mrf.mxu0
    %v6402 = vadd.f32 0.0, %v6401
    %v6403 = vpop.f32.mrf.mxu0
    %6404 = vmatprep.mubr.bf16.mxu0 0
    %6405 = vmatmul.mubr.bf16.gmra.mxu0 %v6346
    %v6406 = vpop.f32.mrf.mxu0
    %v6407 = vadd.f32 0.0, %v6406
    %v6408 = vpop.f32.mrf.mxu0
    %v6409 = vpop.f32.mrf.mxu0
    %v6410 = vadd.f32 0.0, %v6409
    %v6411 = vpop.f32.mrf.mxu0
    %6412 = vdwg.mxu0
    %6417 = vrot.lane.b32.xlu0 %v4625, 64
    %v6418 = vpop.permute.xlu0 %6417
    %6419 = vrot.lane.b32.xlu0 %v4626, 64
    %v6420 = vpop.permute.xlu0 %6419
    %6421 = vrot.lane.b32.xlu0 %v4627, 64
    %v6422 = vpop.permute.xlu0 %6421
    %6423 = vrot.lane.b32.xlu0 %v4628, 64
    %v6424 = vpop.permute.xlu0 %6423
    %v6430 = vsel %vm2016, %v6025, 0
    %v6433 = vsel %vm2016, %v6026, 0
    %v6436 = vsel %vm2016, %v6027, 0
    %v6439 = vsel %vm2016, %v6028, 0
    %6441 = vmatprep.subr.bf16.mxu0 0
    %6442 = vmatpush1.bf16.msra.mxu0 0
    %6443 = vmatprep.subr.bf16.mxu0 0
    %6444 = vmatpush1.bf16.msra.mxu0 0
    %6445 = vmatprep.subr.bf16.mxu0 0
    %6446 = vmatpush1.bf16.msra.mxu0 0
    %6447 = vmatprep.subr.bf16.mxu0 0
    %6448 = vmatpush1.bf16.msra.mxu0 0
    %6449 = vmatprep.subr.bf16.mxu0 0
    %6450 = vmatpush1.bf16.msra.mxu0 %v6424
    %6451 = vmatprep.subr.bf16.mxu0 0
    %6452 = vmatpush1.bf16.msra.mxu0 %v6422
    %6453 = vmatprep.subr.bf16.mxu0 0
    %6454 = vmatpush1.bf16.msra.mxu0 %v6420
    %6455 = vmatprep.subr.bf16.mxu0 0
    %6456 = vmatpush1.bf16.msra.mxu0 %v6418
    %6457 = vmatprep.subr.bf16.mxu0 0
    %6458 = vmatpush2.bf16.msra.mxu0 0
    %6459 = vmatprep.subr.bf16.mxu0 0
    %6460 = vmatpush2.bf16.msra.mxu0 0
    %6461 = vmatprep.subr.bf16.mxu0 0
    %6462 = vmatpush2.bf16.msra.mxu0 0
    %6463 = vmatprep.subr.bf16.mxu0 0
    %6464 = vmatpush2.bf16.msra.mxu0 0
    %6465 = vmatprep.subr.bf16.mxu0 0
    %6466 = vmatpush2.bf16.msra.mxu0 0
    %6467 = vmatprep.subr.bf16.mxu0 0
    %6468 = vmatpush2.bf16.msra.mxu0 0
    %6469 = vmatprep.subr.bf16.mxu0 0
    %6470 = vmatpush2.bf16.msra.mxu0 0
    %6471 = vmatprep.subr.bf16.mxu0 0
    %6472 = vmatpush2.bf16.msra.mxu0 0
    %6473 = vmatprep.mubr.bf16.mxu0 0
    %6474 = vmatmul.mubr.bf16.gmra.mxu0 %v6430
    %v6475 = vpop.f32.mrf.mxu0
    %v6476 = vadd.f32 0.0, %v6475
    %v6477 = vpop.f32.mrf.mxu0
    %v6478 = vpop.f32.mrf.mxu0
    %v6479 = vadd.f32 0.0, %v6478
    %v6480 = vpop.f32.mrf.mxu0
    %6481 = vmatprep.mubr.bf16.mxu0 0
    %6482 = vmatmul.mubr.bf16.gmra.mxu0 %v6433
    %v6483 = vpop.f32.mrf.mxu0
    %v6484 = vadd.f32 0.0, %v6483
    %v6485 = vpop.f32.mrf.mxu0
    %v6486 = vpop.f32.mrf.mxu0
    %v6487 = vadd.f32 0.0, %v6486
    %v6488 = vpop.f32.mrf.mxu0
    %6489 = vmatprep.mubr.bf16.mxu0 0
    %6490 = vmatmul.mubr.bf16.gmra.mxu0 %v6436
    %v6491 = vpop.f32.mrf.mxu0
    %v6492 = vadd.f32 0.0, %v6491
    %v6493 = vpop.f32.mrf.mxu0
    %v6494 = vpop.f32.mrf.mxu0
    %v6495 = vadd.f32 0.0, %v6494
    %v6496 = vpop.f32.mrf.mxu0
    %6497 = vmatprep.mubr.bf16.mxu0 0
    %6498 = vmatmul.mubr.bf16.gmra.mxu0 %v6439
    %v6499 = vpop.f32.mrf.mxu0
    %v6500 = vadd.f32 0.0, %v6499
    %v6501 = vpop.f32.mrf.mxu0
    %v6502 = vpop.f32.mrf.mxu0
    %v6503 = vadd.f32 0.0, %v6502
    %v6504 = vpop.f32.mrf.mxu0
    %6505 = vdwg.mxu0
    %6510 = vrot.lane.b32.xlu0 %v4629, 64
    %v6511 = vpop.permute.xlu0 %6510
    %6512 = vrot.lane.b32.xlu0 %v4630, 64
    %v6513 = vpop.permute.xlu0 %6512
    %6514 = vrot.lane.b32.xlu0 %v4631, 64
    %v6515 = vpop.permute.xlu0 %6514
    %6516 = vrot.lane.b32.xlu0 %v4632, 64
    %v6517 = vpop.permute.xlu0 %6516
    %v6523 = vsel %vm2016, %v6029, 0
    %v6526 = vsel %vm2016, %v6030, 0
    %v6529 = vsel %vm2016, %v6031, 0
    %v6532 = vsel %vm2016, %v6032, 0
    %6534 = vmatprep.subr.bf16.mxu0 0
    %6535 = vmatpush1.bf16.msra.mxu0 0
    %6536 = vmatprep.subr.bf16.mxu0 0
    %6537 = vmatpush1.bf16.msra.mxu0 0
    %6538 = vmatprep.subr.bf16.mxu0 0
    %6539 = vmatpush1.bf16.msra.mxu0 0
    %6540 = vmatprep.subr.bf16.mxu0 0
    %6541 = vmatpush1.bf16.msra.mxu0 0
    %6542 = vmatprep.subr.bf16.mxu0 0
    %6543 = vmatpush1.bf16.msra.mxu0 %v6517
    %6544 = vmatprep.subr.bf16.mxu0 0
    %6545 = vmatpush1.bf16.msra.mxu0 %v6515
    %6546 = vmatprep.subr.bf16.mxu0 0
    %6547 = vmatpush1.bf16.msra.mxu0 %v6513
    %6548 = vmatprep.subr.bf16.mxu0 0
    %6549 = vmatpush1.bf16.msra.mxu0 %v6511
    %6550 = vmatprep.subr.bf16.mxu0 0
    %6551 = vmatpush2.bf16.msra.mxu0 0
    %6552 = vmatprep.subr.bf16.mxu0 0
    %6553 = vmatpush2.bf16.msra.mxu0 0
    %6554 = vmatprep.subr.bf16.mxu0 0
    %6555 = vmatpush2.bf16.msra.mxu0 0
    %6556 = vmatprep.subr.bf16.mxu0 0
    %6557 = vmatpush2.bf16.msra.mxu0 0
    %6558 = vmatprep.subr.bf16.mxu0 0
    %6559 = vmatpush2.bf16.msra.mxu0 0
    %6560 = vmatprep.subr.bf16.mxu0 0
    %6561 = vmatpush2.bf16.msra.mxu0 0
    %6562 = vmatprep.subr.bf16.mxu0 0
    %6563 = vmatpush2.bf16.msra.mxu0 0
    %6564 = vmatprep.subr.bf16.mxu0 0
    %6565 = vmatpush2.bf16.msra.mxu0 0
    %6566 = vmatprep.mubr.bf16.mxu0 0
    %6567 = vmatmul.mubr.bf16.gmra.mxu0 %v6523
    %v6568 = vpop.f32.mrf.mxu0
    %v6569 = vadd.f32 0.0, %v6568
    %v6570 = vpop.f32.mrf.mxu0
    %v6571 = vpop.f32.mrf.mxu0
    %v6572 = vadd.f32 0.0, %v6571
    %v6573 = vpop.f32.mrf.mxu0
    %6574 = vmatprep.mubr.bf16.mxu0 0
    %6575 = vmatmul.mubr.bf16.gmra.mxu0 %v6526
    %v6576 = vpop.f32.mrf.mxu0
    %v6577 = vadd.f32 0.0, %v6576
    %v6578 = vpop.f32.mrf.mxu0
    %v6579 = vpop.f32.mrf.mxu0
    %v6580 = vadd.f32 0.0, %v6579
    %v6581 = vpop.f32.mrf.mxu0
    %6582 = vmatprep.mubr.bf16.mxu0 0
    %6583 = vmatmul.mubr.bf16.gmra.mxu0 %v6529
    %v6584 = vpop.f32.mrf.mxu0
    %v6585 = vadd.f32 0.0, %v6584
    %v6586 = vpop.f32.mrf.mxu0
    %v6587 = vpop.f32.mrf.mxu0
    %v6588 = vadd.f32 0.0, %v6587
    %v6589 = vpop.f32.mrf.mxu0
    %6590 = vmatprep.mubr.bf16.mxu0 0
    %6591 = vmatmul.mubr.bf16.gmra.mxu0 %v6532
    %v6592 = vpop.f32.mrf.mxu0
    %v6593 = vadd.f32 0.0, %v6592
    %v6594 = vpop.f32.mrf.mxu0
    %v6595 = vpop.f32.mrf.mxu0
    %v6596 = vadd.f32 0.0, %v6595
    %v6597 = vpop.f32.mrf.mxu0
    %6598 = vdwg.mxu0
    %6603 = vrot.lane.b32.xlu0 %v4633, 64
    %v6604 = vpop.permute.xlu0 %6603
    %6605 = vrot.lane.b32.xlu0 %v4634, 64
    %v6606 = vpop.permute.xlu0 %6605
    %6607 = vrot.lane.b32.xlu0 %v4635, 64
    %v6608 = vpop.permute.xlu0 %6607
    %6609 = vrot.lane.b32.xlu0 %v4636, 64
    %v6610 = vpop.permute.xlu0 %6609
    %v6616 = vsel %vm2016, %v6033, 0
    %v6619 = vsel %vm2016, %v6034, 0
    %v6622 = vsel %vm2016, %v6035, 0
    %v6625 = vsel %vm2016, %v6036, 0
    %6627 = vmatprep.subr.bf16.mxu0 0
    %6628 = vmatpush1.bf16.msra.mxu0 0
    %6629 = vmatprep.subr.bf16.mxu0 0
    %6630 = vmatpush1.bf16.msra.mxu0 0
    %6631 = vmatprep.subr.bf16.mxu0 0
    %6632 = vmatpush1.bf16.msra.mxu0 0
    %6633 = vmatprep.subr.bf16.mxu0 0
    %6634 = vmatpush1.bf16.msra.mxu0 0
    %6635 = vmatprep.subr.bf16.mxu0 0
    %6636 = vmatpush1.bf16.msra.mxu0 %v6610
    %6637 = vmatprep.subr.bf16.mxu0 0
    %6638 = vmatpush1.bf16.msra.mxu0 %v6608
    %6639 = vmatprep.subr.bf16.mxu0 0
    %6640 = vmatpush1.bf16.msra.mxu0 %v6606
    %6641 = vmatprep.subr.bf16.mxu0 0
    %6642 = vmatpush1.bf16.msra.mxu0 %v6604
    %6643 = vmatprep.subr.bf16.mxu0 0
    %6644 = vmatpush2.bf16.msra.mxu0 0
    %6645 = vmatprep.subr.bf16.mxu0 0
    %6646 = vmatpush2.bf16.msra.mxu0 0
    %6647 = vmatprep.subr.bf16.mxu0 0
    %6648 = vmatpush2.bf16.msra.mxu0 0
    %6649 = vmatprep.subr.bf16.mxu0 0
    %6650 = vmatpush2.bf16.msra.mxu0 0
    %6651 = vmatprep.subr.bf16.mxu0 0
    %6652 = vmatpush2.bf16.msra.mxu0 0
    %6653 = vmatprep.subr.bf16.mxu0 0
    %6654 = vmatpush2.bf16.msra.mxu0 0
    %6655 = vmatprep.subr.bf16.mxu0 0
    %6656 = vmatpush2.bf16.msra.mxu0 0
    %6657 = vmatprep.subr.bf16.mxu0 0
    %6658 = vmatpush2.bf16.msra.mxu0 0
    %6659 = vmatprep.mubr.bf16.mxu0 0
    %6660 = vmatmul.mubr.bf16.gmra.mxu0 %v6616
    %v6661 = vpop.f32.mrf.mxu0
    %v6662 = vadd.f32 0.0, %v6661
    %v6663 = vpop.f32.mrf.mxu0
    %v6664 = vpop.f32.mrf.mxu0
    %v6665 = vadd.f32 0.0, %v6664
    %v6666 = vpop.f32.mrf.mxu0
    %6667 = vmatprep.mubr.bf16.mxu0 0
    %6668 = vmatmul.mubr.bf16.gmra.mxu0 %v6619
    %v6669 = vpop.f32.mrf.mxu0
    %v6670 = vadd.f32 0.0, %v6669
    %v6671 = vpop.f32.mrf.mxu0
    %v6672 = vpop.f32.mrf.mxu0
    %v6673 = vadd.f32 0.0, %v6672
    %v6674 = vpop.f32.mrf.mxu0
    %6675 = vmatprep.mubr.bf16.mxu0 0
    %6676 = vmatmul.mubr.bf16.gmra.mxu0 %v6622
    %v6677 = vpop.f32.mrf.mxu0
    %v6678 = vadd.f32 0.0, %v6677
    %v6679 = vpop.f32.mrf.mxu0
    %v6680 = vpop.f32.mrf.mxu0
    %v6681 = vadd.f32 0.0, %v6680
    %v6682 = vpop.f32.mrf.mxu0
    %6683 = vmatprep.mubr.bf16.mxu0 0
    %6684 = vmatmul.mubr.bf16.gmra.mxu0 %v6625
    %v6685 = vpop.f32.mrf.mxu0
    %v6686 = vadd.f32 0.0, %v6685
    %v6687 = vpop.f32.mrf.mxu0
    %v6688 = vpop.f32.mrf.mxu0
    %v6689 = vadd.f32 0.0, %v6688
    %v6690 = vpop.f32.mrf.mxu0
    %6691 = vdwg.mxu0
    %6696 = vrot.lane.b32.xlu0 %v4637, 64
    %v6697 = vpop.permute.xlu0 %6696
    %6698 = vrot.lane.b32.xlu0 %v4638, 64
    %v6699 = vpop.permute.xlu0 %6698
    %6700 = vrot.lane.b32.xlu0 %v4639, 64
    %v6701 = vpop.permute.xlu0 %6700
    %6702 = vrot.lane.b32.xlu0 %v4640, 64
    %v6703 = vpop.permute.xlu0 %6702
    %v6709 = vsel %vm2016, %v6037, 0
    %v6712 = vsel %vm2016, %v6038, 0
    %v6715 = vsel %vm2016, %v6039, 0
    %v6718 = vsel %vm2016, %v6040, 0
    %6720 = vmatprep.subr.bf16.mxu0 0
    %6721 = vmatpush1.bf16.msra.mxu0 0
    %6722 = vmatprep.subr.bf16.mxu0 0
    %6723 = vmatpush1.bf16.msra.mxu0 0
    %6724 = vmatprep.subr.bf16.mxu0 0
    %6725 = vmatpush1.bf16.msra.mxu0 0
    %6726 = vmatprep.subr.bf16.mxu0 0
    %6727 = vmatpush1.bf16.msra.mxu0 0
    %6728 = vmatprep.subr.bf16.mxu0 0
    %6729 = vmatpush1.bf16.msra.mxu0 %v6703
    %6730 = vmatprep.subr.bf16.mxu0 0
    %6731 = vmatpush1.bf16.msra.mxu0 %v6701
    %6732 = vmatprep.subr.bf16.mxu0 0
    %6733 = vmatpush1.bf16.msra.mxu0 %v6699
    %6734 = vmatprep.subr.bf16.mxu0 0
    %6735 = vmatpush1.bf16.msra.mxu0 %v6697
    %6736 = vmatprep.subr.bf16.mxu0 0
    %6737 = vmatpush2.bf16.msra.mxu0 0
    %6738 = vmatprep.subr.bf16.mxu0 0
    %6739 = vmatpush2.bf16.msra.mxu0 0
    %6740 = vmatprep.subr.bf16.mxu0 0
    %6741 = vmatpush2.bf16.msra.mxu0 0
    %6742 = vmatprep.subr.bf16.mxu0 0
    %6743 = vmatpush2.bf16.msra.mxu0 0
    %6744 = vmatprep.subr.bf16.mxu0 0
    %6745 = vmatpush2.bf16.msra.mxu0 0
    %6746 = vmatprep.subr.bf16.mxu0 0
    %6747 = vmatpush2.bf16.msra.mxu0 0
    %6748 = vmatprep.subr.bf16.mxu0 0
    %6749 = vmatpush2.bf16.msra.mxu0 0
    %6750 = vmatprep.subr.bf16.mxu0 0
    %6751 = vmatpush2.bf16.msra.mxu0 0
    %6752 = vmatprep.mubr.bf16.mxu0 0
    %6753 = vmatmul.mubr.bf16.gmra.mxu0 %v6709
    %v6754 = vpop.f32.mrf.mxu0
    %v6755 = vadd.f32 0.0, %v6754
    %v6756 = vpop.f32.mrf.mxu0
    %v6757 = vpop.f32.mrf.mxu0
    %v6758 = vadd.f32 0.0, %v6757
    %v6759 = vpop.f32.mrf.mxu0
    %6760 = vmatprep.mubr.bf16.mxu0 0
    %6761 = vmatmul.mubr.bf16.gmra.mxu0 %v6712
    %v6762 = vpop.f32.mrf.mxu0
    %v6763 = vadd.f32 0.0, %v6762
    %v6764 = vpop.f32.mrf.mxu0
    %v6765 = vpop.f32.mrf.mxu0
    %v6766 = vadd.f32 0.0, %v6765
    %v6767 = vpop.f32.mrf.mxu0
    %6768 = vmatprep.mubr.bf16.mxu0 0
    %6769 = vmatmul.mubr.bf16.gmra.mxu0 %v6715
    %v6770 = vpop.f32.mrf.mxu0
    %v6771 = vadd.f32 0.0, %v6770
    %v6772 = vpop.f32.mrf.mxu0
    %v6773 = vpop.f32.mrf.mxu0
    %v6774 = vadd.f32 0.0, %v6773
    %v6775 = vpop.f32.mrf.mxu0
    %6776 = vmatprep.mubr.bf16.mxu0 0
    %6777 = vmatmul.mubr.bf16.gmra.mxu0 %v6718
    %v6778 = vpop.f32.mrf.mxu0
    %v6779 = vadd.f32 0.0, %v6778
    %v6780 = vpop.f32.mrf.mxu0
    %v6781 = vpop.f32.mrf.mxu0
    %v6782 = vadd.f32 0.0, %v6781
    %v6783 = vpop.f32.mrf.mxu0
    %6784 = vdwg.mxu0
    %v6785 = vsel %vm374, %v6104, 0.0
    %v6786 = vsel %vm374, %v6290, 0.0
    %v6787 = vadd.f32 %v6785, %v6786
    %v6788 = vsel %vm374, %v6476, 0.0
    %v6789 = vadd.f32 %v6787, %v6788
    %v6790 = vsel %vm374, %v6662, 0.0
    %v6791 = vadd.f32 %v6789, %v6790
    %v6792 = vsel %vm374, %v6107, 0.0
    %v6793 = vsel %vm374, %v6293, 0.0
    %v6794 = vadd.f32 %v6792, %v6793
    %v6795 = vsel %vm374, %v6479, 0.0
    %v6796 = vadd.f32 %v6794, %v6795
    %v6797 = vsel %vm374, %v6665, 0.0
    %v6798 = vadd.f32 %v6796, %v6797
    %v6799 = vsel %vm374, %v6112, 0.0
    %v6800 = vsel %vm374, %v6298, 0.0
    %v6801 = vadd.f32 %v6799, %v6800
    %v6802 = vsel %vm374, %v6484, 0.0
    %v6803 = vadd.f32 %v6801, %v6802
    %v6804 = vsel %vm374, %v6670, 0.0
    %v6805 = vadd.f32 %v6803, %v6804
    %v6806 = vsel %vm374, %v6115, 0.0
    %v6807 = vsel %vm374, %v6301, 0.0
    %v6808 = vadd.f32 %v6806, %v6807
    %v6809 = vsel %vm374, %v6487, 0.0
    %v6810 = vadd.f32 %v6808, %v6809
    %v6811 = vsel %vm374, %v6673, 0.0
    %v6812 = vadd.f32 %v6810, %v6811
    %v6813 = vsel %vm374, %v6120, 0.0
    %v6814 = vsel %vm374, %v6306, 0.0
    %v6815 = vadd.f32 %v6813, %v6814
    %v6816 = vsel %vm374, %v6492, 0.0
    %v6817 = vadd.f32 %v6815, %v6816
    %v6818 = vsel %vm374, %v6678, 0.0
    %v6819 = vadd.f32 %v6817, %v6818
    %v6820 = vsel %vm374, %v6123, 0.0
    %v6821 = vsel %vm374, %v6309, 0.0
    %v6822 = vadd.f32 %v6820, %v6821
    %v6823 = vsel %vm374, %v6495, 0.0
    %v6824 = vadd.f32 %v6822, %v6823
    %v6825 = vsel %vm374, %v6681, 0.0
    %v6826 = vadd.f32 %v6824, %v6825
    %v6827 = vsel %vm374, %v6128, 0.0
    %v6828 = vsel %vm374, %v6314, 0.0
    %v6829 = vadd.f32 %v6827, %v6828
    %v6830 = vsel %vm374, %v6500, 0.0
    %v6831 = vadd.f32 %v6829, %v6830
    %v6832 = vsel %vm374, %v6686, 0.0
    %v6833 = vadd.f32 %v6831, %v6832
    %v6834 = vsel %vm374, %v6131, 0.0
    %v6835 = vsel %vm374, %v6317, 0.0
    %v6836 = vadd.f32 %v6834, %v6835
    %v6837 = vsel %vm374, %v6503, 0.0
    %v6838 = vadd.f32 %v6836, %v6837
    %v6839 = vsel %vm374, %v6689, 0.0
    %v6840 = vadd.f32 %v6838, %v6839
    %v6841 = vsel %vm374, %v6197, 0.0
    %v6842 = vsel %vm374, %v6383, 0.0
    %v6843 = vadd.f32 %v6841, %v6842
    %v6844 = vsel %vm374, %v6569, 0.0
    %v6845 = vadd.f32 %v6843, %v6844
    %v6846 = vsel %vm374, %v6755, 0.0
    %v6847 = vadd.f32 %v6845, %v6846
    %v6848 = vsel %vm374, %v6200, 0.0
    %v6849 = vsel %vm374, %v6386, 0.0
    %v6850 = vadd.f32 %v6848, %v6849
    %v6851 = vsel %vm374, %v6572, 0.0
    %v6852 = vadd.f32 %v6850, %v6851
    %v6853 = vsel %vm374, %v6758, 0.0
    %v6854 = vadd.f32 %v6852, %v6853
    %v6855 = vsel %vm374, %v6205, 0.0
    %v6856 = vsel %vm374, %v6391, 0.0
    %v6857 = vadd.f32 %v6855, %v6856
    %v6858 = vsel %vm374, %v6577, 0.0
    %v6859 = vadd.f32 %v6857, %v6858
    %v6860 = vsel %vm374, %v6763, 0.0
    %v6861 = vadd.f32 %v6859, %v6860
    %v6862 = vsel %vm374, %v6208, 0.0
    %v6863 = vsel %vm374, %v6394, 0.0
    %v6864 = vadd.f32 %v6862, %v6863
    %v6865 = vsel %vm374, %v6580, 0.0
    %v6866 = vadd.f32 %v6864, %v6865
    %v6867 = vsel %vm374, %v6766, 0.0
    %v6868 = vadd.f32 %v6866, %v6867
    %v6869 = vsel %vm374, %v6213, 0.0
    %v6870 = vsel %vm374, %v6399, 0.0
    %v6871 = vadd.f32 %v6869, %v6870
    %v6872 = vsel %vm374, %v6585, 0.0
    %v6873 = vadd.f32 %v6871, %v6872
    %v6874 = vsel %vm374, %v6771, 0.0
    %v6875 = vadd.f32 %v6873, %v6874
    %v6876 = vsel %vm374, %v6216, 0.0
    %v6877 = vsel %vm374, %v6402, 0.0
    %v6878 = vadd.f32 %v6876, %v6877
    %v6879 = vsel %vm374, %v6588, 0.0
    %v6880 = vadd.f32 %v6878, %v6879
    %v6881 = vsel %vm374, %v6774, 0.0
    %v6882 = vadd.f32 %v6880, %v6881
    %v6883 = vsel %vm374, %v6221, 0.0
    %v6884 = vsel %vm374, %v6407, 0.0
    %v6885 = vadd.f32 %v6883, %v6884
    %v6886 = vsel %vm374, %v6593, 0.0
    %v6887 = vadd.f32 %v6885, %v6886
    %v6888 = vsel %vm374, %v6779, 0.0
    %v6889 = vadd.f32 %v6887, %v6888
    %v6890 = vsel %vm374, %v6224, 0.0
    %v6891 = vsel %vm374, %v6410, 0.0
    %v6892 = vadd.f32 %v6890, %v6891
    %v6893 = vsel %vm374, %v6596, 0.0
    %v6894 = vadd.f32 %v6892, %v6893
    %v6895 = vsel %vm374, %v6782, 0.0
    %v6896 = vadd.f32 %v6894, %v6895
    %v6897 = vpack.c.bf16 %v6798, %v6791
    %v6898 = vpack.c.bf16 %v6812, %v6805
    %v6899 = vpack.c.bf16 %v6826, %v6819
    %v6900 = vpack.c.bf16 %v6840, %v6833
    %v6901 = vpack.c.bf16 %v6854, %v6847
    %v6902 = vpack.c.bf16 %v6868, %v6861
    %v6903 = vpack.c.bf16 %v6882, %v6875
    %v6904 = vpack.c.bf16 %v6896, %v6889
    %v6906 = vlaneseq
    %v6907 = vshrl.u32 %v6906, 7
    %v6908 = vsub.s32 0, %v6907
    %v6909 = vrot.slane %v4401, %v6908
    %v6915 = vunpack.c.l.b16 %v4397
    %v6916 = vunpack.c.l.b16 %v4398
    %v6917 = vunpack.c.l.b16 %v4399
    %v6918 = vunpack.c.l.b16 %v4400
    %v6919 = vpack.c.b16 %v6916, %v6915
    %v6920 = vpack.c.b16 %v6918, %v6917
    %v6924 = vsel %vm374, %v6897, 0
    %v6927 = vsel %vm374, %v6898, 0
    %v6930 = vsel %vm374, %v6899, 0
    %v6933 = vsel %vm374, %v6900, 0
    %v6936 = vsel %vm374, %v6901, 0
    %v6939 = vsel %vm374, %v6902, 0
    %v6942 = vsel %vm374, %v6903, 0
    %v6945 = vsel %vm374, %v6904, 0
    %6947 = vmatprep.subr.bf16.mxu0 0
    %6948 = vmatpush1.bf16.msra.mxu0 0
    %6949 = vmatprep.subr.bf16.mxu0 0
    %6950 = vmatpush1.bf16.msra.mxu0 0
    %6951 = vmatprep.subr.bf16.mxu0 0
    %6952 = vmatpush1.bf16.msra.mxu0 0
    %6953 = vmatprep.subr.bf16.mxu0 0
    %6954 = vmatpush1.bf16.msra.mxu0 0
    %6955 = vmatprep.subr.bf16.mxu0 0
    %6956 = vmatpush1.bf16.msra.mxu0 0
    %6957 = vmatprep.subr.bf16.mxu0 0
    %6958 = vmatpush1.bf16.msra.mxu0 0
    %6959 = vmatprep.subr.bf16.mxu0 0
    %6960 = vmatpush1.bf16.msra.mxu0 %v6920
    %6961 = vmatprep.subr.bf16.mxu0 0
    %6962 = vmatpush1.bf16.msra.mxu0 %v6919
    %6963 = vmatprep.subr.bf16.mxu0 0
    %6964 = vmatpush2.bf16.msra.mxu0 0
    %6965 = vmatprep.subr.bf16.mxu0 0
    %6966 = vmatpush2.bf16.msra.mxu0 0
    %6967 = vmatprep.subr.bf16.mxu0 0
    %6968 = vmatpush2.bf16.msra.mxu0 0
    %6969 = vmatprep.subr.bf16.mxu0 0
    %6970 = vmatpush2.bf16.msra.mxu0 0
    %6971 = vmatprep.subr.bf16.mxu0 0
    %6972 = vmatpush2.bf16.msra.mxu0 0
    %6973 = vmatprep.subr.bf16.mxu0 0
    %6974 = vmatpush2.bf16.msra.mxu0 0
    %6975 = vmatprep.subr.bf16.mxu0 0
    %6976 = vmatpush2.bf16.msra.mxu0 0
    %6977 = vmatprep.subr.bf16.mxu0 0
    %6978 = vmatpush2.bf16.msra.mxu0 0
    %6979 = vmatprep.mubr.bf16.mxu0 0
    %6980 = vmatmul.mubr.bf16.gmra.mxu0 %v6924
    %v6981 = vpop.f32.mrf.mxu0
    %v6982 = vadd.f32 %v6909, %v6981
    %v6983 = vpop.f32.mrf.mxu0
    %v6984 = vpop.f32.mrf.mxu0
    %v6985 = vadd.f32 %v6909, %v6984
    %v6986 = vpop.f32.mrf.mxu0
    %6987 = vmatprep.mubr.bf16.mxu0 0
    %6988 = vmatmul.mubr.bf16.gmra.mxu0 %v6927
    %v6989 = vpop.f32.mrf.mxu0
    %v6990 = vadd.f32 %v6909, %v6989
    %v6991 = vpop.f32.mrf.mxu0
    %v6992 = vpop.f32.mrf.mxu0
    %v6993 = vadd.f32 %v6909, %v6992
    %v6994 = vpop.f32.mrf.mxu0
    %6995 = vmatprep.mubr.bf16.mxu0 0
    %6996 = vmatmul.mubr.bf16.gmra.mxu0 %v6930
    %v6997 = vpop.f32.mrf.mxu0
    %v6998 = vadd.f32 %v6909, %v6997
    %v6999 = vpop.f32.mrf.mxu0
    %v7000 = vpop.f32.mrf.mxu0
    %v7001 = vadd.f32 %v6909, %v7000
    %v7002 = vpop.f32.mrf.mxu0
    %7003 = vmatprep.mubr.bf16.mxu0 0
    %7004 = vmatmul.mubr.bf16.gmra.mxu0 %v6933
    %v7005 = vpop.f32.mrf.mxu0
    %v7006 = vadd.f32 %v6909, %v7005
    %v7007 = vpop.f32.mrf.mxu0
    %v7008 = vpop.f32.mrf.mxu0
    %v7009 = vadd.f32 %v6909, %v7008
    %v7010 = vpop.f32.mrf.mxu0
    %7011 = vmatprep.mubr.bf16.mxu0 0
    %7012 = vmatmul.mubr.bf16.gmra.mxu0 %v6936
    %v7013 = vpop.f32.mrf.mxu0
    %v7014 = vadd.f32 %v6909, %v7013
    %v7015 = vpop.f32.mrf.mxu0
    %v7016 = vpop.f32.mrf.mxu0
    %v7017 = vadd.f32 %v6909, %v7016
    %v7018 = vpop.f32.mrf.mxu0
    %7019 = vmatprep.mubr.bf16.mxu0 0
    %7020 = vmatmul.mubr.bf16.gmra.mxu0 %v6939
    %v7021 = vpop.f32.mrf.mxu0
    %v7022 = vadd.f32 %v6909, %v7021
    %v7023 = vpop.f32.mrf.mxu0
    %v7024 = vpop.f32.mrf.mxu0
    %v7025 = vadd.f32 %v6909, %v7024
    %v7026 = vpop.f32.mrf.mxu0
    %7027 = vmatprep.mubr.bf16.mxu0 0
    %7028 = vmatmul.mubr.bf16.gmra.mxu0 %v6942
    %v7029 = vpop.f32.mrf.mxu0
    %v7030 = vadd.f32 %v6909, %v7029
    %v7031 = vpop.f32.mrf.mxu0
    %v7032 = vpop.f32.mrf.mxu0
    %v7033 = vadd.f32 %v6909, %v7032
    %v7034 = vpop.f32.mrf.mxu0
    %7035 = vmatprep.mubr.bf16.mxu0 0
    %7036 = vmatmul.mubr.bf16.gmra.mxu0 %v6945
    %v7037 = vpop.f32.mrf.mxu0
    %v7038 = vadd.f32 %v6909, %v7037
    %v7039 = vpop.f32.mrf.mxu0
    %v7040 = vpop.f32.mrf.mxu0
    %v7041 = vadd.f32 %v6909, %v7040
    %v7042 = vpop.f32.mrf.mxu0
    %7043 = vdwg.mxu0
    %v7044 = vpack.c.bf16 %v6985, %v6982
    %v7045 = vpack.c.bf16 %v6993, %v6990
    %v7046 = vpack.c.bf16 %v7001, %v6998
    %v7047 = vpack.c.bf16 %v7009, %v7006
    %v7048 = vpack.c.bf16 %v7017, %v7014
    %v7049 = vpack.c.bf16 %v7025, %v7022
    %v7050 = vpack.c.bf16 %v7033, %v7030
    %v7051 = vpack.c.bf16 %v7041, %v7038
    %v7056 = vunpack.c.l.b16 %v4406
    %v7057 = vunpack.c.l.b16 %v4407
    %v7058 = vunpack.c.l.b16 %v4408
    %v7059 = vunpack.c.l.b16 %v4409
    %v7060 = vpack.c.b16 %v7057, %v7056
    %v7061 = vpack.c.b16 %v7059, %v7058
    %v7065 = vsel %vm374, %v7044, 0
    %v7068 = vsel %vm374, %v7045, 0
    %v7071 = vsel %vm374, %v7046, 0
    %v7074 = vsel %vm374, %v7047, 0
    %v7077 = vsel %vm374, %v7048, 0
    %v7080 = vsel %vm374, %v7049, 0
    %v7083 = vsel %vm374, %v7050, 0
    %v7086 = vsel %vm374, %v7051, 0
    %7088 = vmatprep.subr.bf16.mxu0 0
    %7089 = vmatpush1.bf16.msra.mxu0 0
    %7090 = vmatprep.subr.bf16.mxu0 0
    %7091 = vmatpush1.bf16.msra.mxu0 0
    %7092 = vmatprep.subr.bf16.mxu0 0
    %7093 = vmatpush1.bf16.msra.mxu0 0
    %7094 = vmatprep.subr.bf16.mxu0 0
    %7095 = vmatpush1.bf16.msra.mxu0 0
    %7096 = vmatprep.subr.bf16.mxu0 0
    %7097 = vmatpush1.bf16.msra.mxu0 0
    %7098 = vmatprep.subr.bf16.mxu0 0
    %7099 = vmatpush1.bf16.msra.mxu0 0
    %7100 = vmatprep.subr.bf16.mxu0 0
    %7101 = vmatpush1.bf16.msra.mxu0 %v7061
    %7102 = vmatprep.subr.bf16.mxu0 0
    %7103 = vmatpush1.bf16.msra.mxu0 %v7060
    %7104 = vmatprep.subr.bf16.mxu0 0
    %7105 = vmatpush2.bf16.msra.mxu0 0
    %7106 = vmatprep.subr.bf16.mxu0 0
    %7107 = vmatpush2.bf16.msra.mxu0 0
    %7108 = vmatprep.subr.bf16.mxu0 0
    %7109 = vmatpush2.bf16.msra.mxu0 0
    %7110 = vmatprep.subr.bf16.mxu0 0
    %7111 = vmatpush2.bf16.msra.mxu0 0
    %7112 = vmatprep.subr.bf16.mxu0 0
    %7113 = vmatpush2.bf16.msra.mxu0 0
    %7114 = vmatprep.subr.bf16.mxu0 0
    %7115 = vmatpush2.bf16.msra.mxu0 0
    %7116 = vmatprep.subr.bf16.mxu0 0
    %7117 = vmatpush2.bf16.msra.mxu0 0
    %7118 = vmatprep.subr.bf16.mxu0 0
    %7119 = vmatpush2.bf16.msra.mxu0 0
    %7120 = vmatprep.mubr.bf16.mxu0 0
    %7121 = vmatmul.mubr.bf16.gmra.mxu0 %v7065
    %v7122 = vpop.f32.mrf.mxu0
    %v7123 = vadd.f32 0.0, %v7122
    %v7124 = vpop.f32.mrf.mxu0
    %v7125 = vpop.f32.mrf.mxu0
    %v7126 = vadd.f32 0.0, %v7125
    %v7127 = vpop.f32.mrf.mxu0
    %7128 = vmatprep.mubr.bf16.mxu0 0
    %7129 = vmatmul.mubr.bf16.gmra.mxu0 %v7068
    %v7130 = vpop.f32.mrf.mxu0
    %v7131 = vadd.f32 0.0, %v7130
    %v7132 = vpop.f32.mrf.mxu0
    %v7133 = vpop.f32.mrf.mxu0
    %v7134 = vadd.f32 0.0, %v7133
    %v7135 = vpop.f32.mrf.mxu0
    %7136 = vmatprep.mubr.bf16.mxu0 0
    %7137 = vmatmul.mubr.bf16.gmra.mxu0 %v7071
    %v7138 = vpop.f32.mrf.mxu0
    %v7139 = vadd.f32 0.0, %v7138
    %v7140 = vpop.f32.mrf.mxu0
    %v7141 = vpop.f32.mrf.mxu0
    %v7142 = vadd.f32 0.0, %v7141
    %v7143 = vpop.f32.mrf.mxu0
    %7144 = vmatprep.mubr.bf16.mxu0 0
    %7145 = vmatmul.mubr.bf16.gmra.mxu0 %v7074
    %v7146 = vpop.f32.mrf.mxu0
    %v7147 = vadd.f32 0.0, %v7146
    %v7148 = vpop.f32.mrf.mxu0
    %v7149 = vpop.f32.mrf.mxu0
    %v7150 = vadd.f32 0.0, %v7149
    %v7151 = vpop.f32.mrf.mxu0
    %7152 = vmatprep.mubr.bf16.mxu0 0
    %7153 = vmatmul.mubr.bf16.gmra.mxu0 %v7077
    %v7154 = vpop.f32.mrf.mxu0
    %v7155 = vadd.f32 0.0, %v7154
    %v7156 = vpop.f32.mrf.mxu0
    %v7157 = vpop.f32.mrf.mxu0
    %v7158 = vadd.f32 0.0, %v7157
    %v7159 = vpop.f32.mrf.mxu0
    %7160 = vmatprep.mubr.bf16.mxu0 0
    %7161 = vmatmul.mubr.bf16.gmra.mxu0 %v7080
    %v7162 = vpop.f32.mrf.mxu0
    %v7163 = vadd.f32 0.0, %v7162
    %v7164 = vpop.f32.mrf.mxu0
    %v7165 = vpop.f32.mrf.mxu0
    %v7166 = vadd.f32 0.0, %v7165
    %v7167 = vpop.f32.mrf.mxu0
    %7168 = vmatprep.mubr.bf16.mxu0 0
    %7169 = vmatmul.mubr.bf16.gmra.mxu0 %v7083
    %v7170 = vpop.f32.mrf.mxu0
    %v7171 = vadd.f32 0.0, %v7170
    %v7172 = vpop.f32.mrf.mxu0
    %v7173 = vpop.f32.mrf.mxu0
    %v7174 = vadd.f32 0.0, %v7173
    %v7175 = vpop.f32.mrf.mxu0
    %7176 = vmatprep.mubr.bf16.mxu0 0
    %7177 = vmatmul.mubr.bf16.gmra.mxu0 %v7086
    %v7178 = vpop.f32.mrf.mxu0
    %v7179 = vadd.f32 0.0, %v7178
    %v7180 = vpop.f32.mrf.mxu0
    %v7181 = vpop.f32.mrf.mxu0
    %v7182 = vadd.f32 0.0, %v7181
    %v7183 = vpop.f32.mrf.mxu0
    %7184 = vdwg.mxu0
    %v7189 = vunpack.c.l.b16 %v4402
    %v7190 = vunpack.c.l.b16 %v4403
    %v7191 = vunpack.c.l.b16 %v4404
    %v7192 = vunpack.c.l.b16 %v4405
    %v7193 = vpack.c.b16 %v7190, %v7189
    %v7194 = vpack.c.b16 %v7192, %v7191
    %7197 = vmatprep.subr.bf16.mxu0 0
    %7198 = vmatpush1.bf16.msra.mxu0 0
    %7199 = vmatprep.subr.bf16.mxu0 0
    %7200 = vmatpush1.bf16.msra.mxu0 0
    %7201 = vmatprep.subr.bf16.mxu0 0
    %7202 = vmatpush1.bf16.msra.mxu0 0
    %7203 = vmatprep.subr.bf16.mxu0 0
    %7204 = vmatpush1.bf16.msra.mxu0 0
    %7205 = vmatprep.subr.bf16.mxu0 0
    %7206 = vmatpush1.bf16.msra.mxu0 0
    %7207 = vmatprep.subr.bf16.mxu0 0
    %7208 = vmatpush1.bf16.msra.mxu0 0
    %7209 = vmatprep.subr.bf16.mxu0 0
    %7210 = vmatpush1.bf16.msra.mxu0 %v7194
    %7211 = vmatprep.subr.bf16.mxu0 0
    %7212 = vmatpush1.bf16.msra.mxu0 %v7193
    %7213 = vmatprep.subr.bf16.mxu0 0
    %7214 = vmatpush2.bf16.msra.mxu0 0
    %7215 = vmatprep.subr.bf16.mxu0 0
    %7216 = vmatpush2.bf16.msra.mxu0 0
    %7217 = vmatprep.subr.bf16.mxu0 0
    %7218 = vmatpush2.bf16.msra.mxu0 0
    %7219 = vmatprep.subr.bf16.mxu0 0
    %7220 = vmatpush2.bf16.msra.mxu0 0
    %7221 = vmatprep.subr.bf16.mxu0 0
    %7222 = vmatpush2.bf16.msra.mxu0 0
    %7223 = vmatprep.subr.bf16.mxu0 0
    %7224 = vmatpush2.bf16.msra.mxu0 0
    %7225 = vmatprep.subr.bf16.mxu0 0
    %7226 = vmatpush2.bf16.msra.mxu0 0
    %7227 = vmatprep.subr.bf16.mxu0 0
    %7228 = vmatpush2.bf16.msra.mxu0 0
    %7229 = vmatprep.mubr.bf16.mxu0 0
    %7230 = vmatmul.mubr.bf16.gmra.mxu0 %v4449
    %v7231 = vpop.f32.mrf.mxu0
    %v7232 = vadd.f32 %v7123, %v7231
    %v7233 = vpop.f32.mrf.mxu0
    %v7234 = vpop.f32.mrf.mxu0
    %v7235 = vadd.f32 %v7126, %v7234
    %v7236 = vpop.f32.mrf.mxu0
    %7237 = vmatprep.mubr.bf16.mxu0 0
    %7238 = vmatmul.mubr.bf16.gmra.mxu0 %v4452
    %v7239 = vpop.f32.mrf.mxu0
    %v7240 = vadd.f32 %v7131, %v7239
    %v7241 = vpop.f32.mrf.mxu0
    %v7242 = vpop.f32.mrf.mxu0
    %v7243 = vadd.f32 %v7134, %v7242
    %v7244 = vpop.f32.mrf.mxu0
    %7245 = vmatprep.mubr.bf16.mxu0 0
    %7246 = vmatmul.mubr.bf16.gmra.mxu0 %v4455
    %v7247 = vpop.f32.mrf.mxu0
    %v7248 = vadd.f32 %v7139, %v7247
    %v7249 = vpop.f32.mrf.mxu0
    %v7250 = vpop.f32.mrf.mxu0
    %v7251 = vadd.f32 %v7142, %v7250
    %v7252 = vpop.f32.mrf.mxu0
    %7253 = vmatprep.mubr.bf16.mxu0 0
    %7254 = vmatmul.mubr.bf16.gmra.mxu0 %v4458
    %v7255 = vpop.f32.mrf.mxu0
    %v7256 = vadd.f32 %v7147, %v7255
    %v7257 = vpop.f32.mrf.mxu0
    %v7258 = vpop.f32.mrf.mxu0
    %v7259 = vadd.f32 %v7150, %v7258
    %v7260 = vpop.f32.mrf.mxu0
    %7261 = vmatprep.mubr.bf16.mxu0 0
    %7262 = vmatmul.mubr.bf16.gmra.mxu0 %v4461
    %v7263 = vpop.f32.mrf.mxu0
    %v7264 = vadd.f32 %v7155, %v7263
    %v7265 = vpop.f32.mrf.mxu0
    %v7266 = vpop.f32.mrf.mxu0
    %v7267 = vadd.f32 %v7158, %v7266
    %v7268 = vpop.f32.mrf.mxu0
    %7269 = vmatprep.mubr.bf16.mxu0 0
    %7270 = vmatmul.mubr.bf16.gmra.mxu0 %v4464
    %v7271 = vpop.f32.mrf.mxu0
    %v7272 = vadd.f32 %v7163, %v7271
    %v7273 = vpop.f32.mrf.mxu0
    %v7274 = vpop.f32.mrf.mxu0
    %v7275 = vadd.f32 %v7166, %v7274
    %v7276 = vpop.f32.mrf.mxu0
    %7277 = vmatprep.mubr.bf16.mxu0 0
    %7278 = vmatmul.mubr.bf16.gmra.mxu0 %v4467
    %v7279 = vpop.f32.mrf.mxu0
    %v7280 = vadd.f32 %v7171, %v7279
    %v7281 = vpop.f32.mrf.mxu0
    %v7282 = vpop.f32.mrf.mxu0
    %v7283 = vadd.f32 %v7174, %v7282
    %v7284 = vpop.f32.mrf.mxu0
    %7285 = vmatprep.mubr.bf16.mxu0 0
    %7286 = vmatmul.mubr.bf16.gmra.mxu0 %v4470
    %v7287 = vpop.f32.mrf.mxu0
    %v7288 = vadd.f32 %v7179, %v7287
    %v7289 = vpop.f32.mrf.mxu0
    %v7290 = vpop.f32.mrf.mxu0
    %v7291 = vadd.f32 %v7182, %v7290
    %v7292 = vpop.f32.mrf.mxu0
    %7293 = vdwg.mxu0
    %v7295 = vlaneseq
    %v7296 = vshrl.u32 %v7295, 7
    %v7297 = vsub.s32 0, %v7296
    %v7298 = vrot.slane %v4410, %v7297
    %v7300 = vadd.f32 %v7232, %v7298
    %v7301 = vadd.f32 %v7235, %v7298
    %v7302 = vadd.f32 %v7240, %v7298
    %v7303 = vadd.f32 %v7243, %v7298
    %v7304 = vadd.f32 %v7248, %v7298
    %v7305 = vadd.f32 %v7251, %v7298
    %v7306 = vadd.f32 %v7256, %v7298
    %v7307 = vadd.f32 %v7259, %v7298
    %v7308 = vadd.f32 %v7264, %v7298
    %v7309 = vadd.f32 %v7267, %v7298
    %v7310 = vadd.f32 %v7272, %v7298
    %v7311 = vadd.f32 %v7275, %v7298
    %v7312 = vadd.f32 %v7280, %v7298
    %v7313 = vadd.f32 %v7283, %v7298
    %v7314 = vadd.f32 %v7288, %v7298
    %v7315 = vadd.f32 %v7291, %v7298
    %v7316 = vsel %vm2016, %v7300, 0.0
    %v7317 = vsel %vm2016, %v7301, 0.0
    %v7318 = vadd.f32 %v7316, %v7317
    %v7319 = vsel %vm2016, %v7302, 0.0
    %v7320 = vadd.f32 %v7318, %v7319
    %v7321 = vsel %vm2016, %v7303, 0.0
    %v7322 = vadd.f32 %v7320, %v7321
    %v7323 = vsel %vm2016, %v7304, 0.0
    %v7324 = vadd.f32 %v7322, %v7323
    %v7325 = vsel %vm2016, %v7305, 0.0
    %v7326 = vadd.f32 %v7324, %v7325
    %v7327 = vsel %vm2016, %v7306, 0.0
    %v7328 = vadd.f32 %v7326, %v7327
    %v7329 = vsel %vm2016, %v7307, 0.0
    %v7330 = vadd.f32 %v7328, %v7329
    %v7331 = vsel %vm2016, %v7308, 0.0
    %v7332 = vadd.f32 %v7330, %v7331
    %v7333 = vsel %vm2016, %v7309, 0.0
    %v7334 = vadd.f32 %v7332, %v7333
    %v7335 = vsel %vm2016, %v7310, 0.0
    %v7336 = vadd.f32 %v7334, %v7335
    %v7337 = vsel %vm2016, %v7311, 0.0
    %v7338 = vadd.f32 %v7336, %v7337
    %v7339 = vsel %vm2016, %v7312, 0.0
    %v7340 = vadd.f32 %v7338, %v7339
    %v7341 = vsel %vm2016, %v7313, 0.0
    %v7342 = vadd.f32 %v7340, %v7341
    %v7343 = vsel %vm2016, %v7314, 0.0
    %v7344 = vadd.f32 %v7342, %v7343
    %v7345 = vsel %vm2016, %v7315, 0.0
    %v7346 = vadd.f32 %v7344, %v7345
    %v7347 = vrot.slane %v7346, 4
    %v7348 = vadd.f32 %v7346, %v7347
    %v7349 = vrot.slane %v7348, 2
    %v7350 = vadd.f32 %v7348, %v7349
    %v7351 = vrot.slane %v7350, 1
    %v7352 = vadd.f32 %v7350, %v7351
    %v7353 = vmul.f32 %v7352, 0.0078125
    %v7354 = vmul.f32 %v7300, %v7300
    %v7355 = vmul.f32 %v7301, %v7301
    %v7356 = vmul.f32 %v7302, %v7302
    %v7357 = vmul.f32 %v7303, %v7303
    %v7358 = vmul.f32 %v7304, %v7304
    %v7359 = vmul.f32 %v7305, %v7305
    %v7360 = vmul.f32 %v7306, %v7306
    %v7361 = vmul.f32 %v7307, %v7307
    %v7362 = vmul.f32 %v7308, %v7308
    %v7363 = vmul.f32 %v7309, %v7309
    %v7364 = vmul.f32 %v7310, %v7310
    %v7365 = vmul.f32 %v7311, %v7311
    %v7366 = vmul.f32 %v7312, %v7312
    %v7367 = vmul.f32 %v7313, %v7313
    %v7368 = vmul.f32 %v7314, %v7314
    %v7369 = vmul.f32 %v7315, %v7315
    %v7370 = vsel %vm2016, %v7354, 0.0
    %v7371 = vsel %vm2016, %v7355, 0.0
    %v7372 = vadd.f32 %v7370, %v7371
    %v7373 = vsel %vm2016, %v7356, 0.0
    %v7374 = vadd.f32 %v7372, %v7373
    %v7375 = vsel %vm2016, %v7357, 0.0
    %v7376 = vadd.f32 %v7374, %v7375
    %v7377 = vsel %vm2016, %v7358, 0.0
    %v7378 = vadd.f32 %v7376, %v7377
    %v7379 = vsel %vm2016, %v7359, 0.0
    %v7380 = vadd.f32 %v7378, %v7379
    %v7381 = vsel %vm2016, %v7360, 0.0
    %v7382 = vadd.f32 %v7380, %v7381
    %v7383 = vsel %vm2016, %v7361, 0.0
    %v7384 = vadd.f32 %v7382, %v7383
    %v7385 = vsel %vm2016, %v7362, 0.0
    %v7386 = vadd.f32 %v7384, %v7385
    %v7387 = vsel %vm2016, %v7363, 0.0
    %v7388 = vadd.f32 %v7386, %v7387
    %v7389 = vsel %vm2016, %v7364, 0.0
    %v7390 = vadd.f32 %v7388, %v7389
    %v7391 = vsel %vm2016, %v7365, 0.0
    %v7392 = vadd.f32 %v7390, %v7391
    %v7393 = vsel %vm2016, %v7366, 0.0
    %v7394 = vadd.f32 %v7392, %v7393
    %v7395 = vsel %vm2016, %v7367, 0.0
    %v7396 = vadd.f32 %v7394, %v7395
    %v7397 = vsel %vm2016, %v7368, 0.0
    %v7398 = vadd.f32 %v7396, %v7397
    %v7399 = vsel %vm2016, %v7369, 0.0
    %v7400 = vadd.f32 %v7398, %v7399
    %v7401 = vrot.slane %v7400, 4
    %v7402 = vadd.f32 %v7400, %v7401
    %v7403 = vrot.slane %v7402, 2
    %v7404 = vadd.f32 %v7402, %v7403
    %v7405 = vrot.slane %v7404, 1
    %v7406 = vadd.f32 %v7404, %v7405
    %v7407 = vmul.f32 %v7406, 0.0078125
    %v7408 = vmul.f32 %v7353, %v7353
    %v7409 = vsub.f32 %v7407, %v7408
    %v7410 = vmax.f32 %v7409, 0.0
    %v7411 = vsub.f32 %v7300, %v7353
    %v7412 = vsub.f32 %v7301, %v7353
    %v7413 = vsub.f32 %v7302, %v7353
    %v7414 = vsub.f32 %v7303, %v7353
    %v7415 = vsub.f32 %v7304, %v7353
    %v7416 = vsub.f32 %v7305, %v7353
    %v7417 = vsub.f32 %v7306, %v7353
    %v7418 = vsub.f32 %v7307, %v7353
    %v7419 = vsub.f32 %v7308, %v7353
    %v7420 = vsub.f32 %v7309, %v7353
    %v7421 = vsub.f32 %v7310, %v7353
    %v7422 = vsub.f32 %v7311, %v7353
    %v7423 = vsub.f32 %v7312, %v7353
    %v7424 = vsub.f32 %v7313, %v7353
    %v7425 = vsub.f32 %v7314, %v7353
    %v7426 = vsub.f32 %v7315, %v7353
    %v7427 = vadd.f32 %v7410, 1e-05
    %v7428 = vrsqrt.pop %v7427
    %v7429 = vmul.f32 %v7411, %v7428
    %v7430 = vmul.f32 %v7412, %v7428
    %v7431 = vmul.f32 %v7413, %v7428
    %v7432 = vmul.f32 %v7414, %v7428
    %v7433 = vmul.f32 %v7415, %v7428
    %v7434 = vmul.f32 %v7416, %v7428
    %v7435 = vmul.f32 %v7417, %v7428
    %v7436 = vmul.f32 %v7418, %v7428
    %v7437 = vmul.f32 %v7419, %v7428
    %v7438 = vmul.f32 %v7420, %v7428
    %v7439 = vmul.f32 %v7421, %v7428
    %v7440 = vmul.f32 %v7422, %v7428
    %v7441 = vmul.f32 %v7423, %v7428
    %v7442 = vmul.f32 %v7424, %v7428
    %v7443 = vmul.f32 %v7425, %v7428
    %v7444 = vmul.f32 %v7426, %v7428
    %v7446 = vlaneseq
    %v7447 = vshrl.u32 %v7446, 7
    %v7448 = vsub.s32 0, %v7447
    %v7449 = vrot.slane %v4411, %v7448
    %v7451 = vmul.f32 %v7429, %v7449
    %v7452 = vmul.f32 %v7430, %v7449
    %v7453 = vmul.f32 %v7431, %v7449
    %v7454 = vmul.f32 %v7432, %v7449
    %v7455 = vmul.f32 %v7433, %v7449
    %v7456 = vmul.f32 %v7434, %v7449
    %v7457 = vmul.f32 %v7435, %v7449
    %v7458 = vmul.f32 %v7436, %v7449
    %v7459 = vmul.f32 %v7437, %v7449
    %v7460 = vmul.f32 %v7438, %v7449
    %v7461 = vmul.f32 %v7439, %v7449
    %v7462 = vmul.f32 %v7440, %v7449
    %v7463 = vmul.f32 %v7441, %v7449
    %v7464 = vmul.f32 %v7442, %v7449
    %v7465 = vmul.f32 %v7443, %v7449
    %v7466 = vmul.f32 %v7444, %v7449
    %v7468 = vlaneseq
    %v7469 = vshrl.u32 %v7468, 7
    %v7470 = vsub.s32 0, %v7469
    %v7471 = vrot.slane %v4412, %v7470
    %v7473 = vadd.f32 %v7451, %v7471
    %v7474 = vadd.f32 %v7452, %v7471
    %v7475 = vadd.f32 %v7453, %v7471
    %v7476 = vadd.f32 %v7454, %v7471
    %v7477 = vadd.f32 %v7455, %v7471
    %v7478 = vadd.f32 %v7456, %v7471
    %v7479 = vadd.f32 %v7457, %v7471
    %v7480 = vadd.f32 %v7458, %v7471
    %v7481 = vadd.f32 %v7459, %v7471
    %v7482 = vadd.f32 %v7460, %v7471
    %v7483 = vadd.f32 %v7461, %v7471
    %v7484 = vadd.f32 %v7462, %v7471
    %v7485 = vadd.f32 %v7463, %v7471
    %v7486 = vadd.f32 %v7464, %v7471
    %v7487 = vadd.f32 %v7465, %v7471
    %v7488 = vadd.f32 %v7466, %v7471
    %v7489 = vmax.f32 %v7473, 0.0
    %v7490 = vmax.f32 %v7474, 0.0
    %v7491 = vmax.f32 %v7475, 0.0
    %v7492 = vmax.f32 %v7476, 0.0
    %v7493 = vmax.f32 %v7477, 0.0
    %v7494 = vmax.f32 %v7478, 0.0
    %v7495 = vmax.f32 %v7479, 0.0
    %v7496 = vmax.f32 %v7480, 0.0
    %v7497 = vmax.f32 %v7481, 0.0
    %v7498 = vmax.f32 %v7482, 0.0
    %v7499 = vmax.f32 %v7483, 0.0
    %v7500 = vmax.f32 %v7484, 0.0
    %v7501 = vmax.f32 %v7485, 0.0
    %v7502 = vmax.f32 %v7486, 0.0
    %v7503 = vmax.f32 %v7487, 0.0
    %v7504 = vmax.f32 %v7488, 0.0
    %v7505 = vpack.c.bf16 %v7490, %v7489
    %v7506 = vpack.c.bf16 %v7492, %v7491
    %v7507 = vpack.c.bf16 %v7494, %v7493
    %v7508 = vpack.c.bf16 %v7496, %v7495
    %v7509 = vpack.c.bf16 %v7498, %v7497
    %v7510 = vpack.c.bf16 %v7500, %v7499
    %v7511 = vpack.c.bf16 %v7502, %v7501
    %v7512 = vpack.c.bf16 %v7504, %v7503
    %v7514 = vlaneseq
    %v7515 = vshrl.u32 %v7514, 7
    %v7516 = vsub.s32 0, %v7515
    %v7517 = vrot.slane %v4421, %v7516
    %v7527 = vunpack.c.l.b16 %v4413
    %v7528 = vunpack.c.l.b16 %v4414
    %v7529 = vunpack.c.l.b16 %v4415
    %v7530 = vunpack.c.l.b16 %v4416
    %v7531 = vunpack.c.l.b16 %v4417
    %v7532 = vunpack.c.l.b16 %v4418
    %v7533 = vunpack.c.l.b16 %v4419
    %v7534 = vunpack.c.l.b16 %v4420
    %v7535 = vpack.c.b16 %v7528, %v7527
    %v7536 = vpack.c.b16 %v7530, %v7529
    %v7537 = vpack.c.b16 %v7532, %v7531
    %v7538 = vpack.c.b16 %v7534, %v7533
    %v7544 = vsel %vm2016, %v7505, 0
    %v7547 = vsel %vm2016, %v7506, 0
    %v7550 = vsel %vm2016, %v7507, 0
    %v7553 = vsel %vm2016, %v7508, 0
    %v7556 = vsel %vm2016, %v7509, 0
    %v7559 = vsel %vm2016, %v7510, 0
    %v7562 = vsel %vm2016, %v7511, 0
    %v7565 = vsel %vm2016, %v7512, 0
    %7567 = vmatprep.subr.bf16.mxu0 0
    %7568 = vmatpush1.bf16.msra.mxu0 0
    %7569 = vmatprep.subr.bf16.mxu0 0
    %7570 = vmatpush1.bf16.msra.mxu0 0
    %7571 = vmatprep.subr.bf16.mxu0 0
    %7572 = vmatpush1.bf16.msra.mxu0 0
    %7573 = vmatprep.subr.bf16.mxu0 0
    %7574 = vmatpush1.bf16.msra.mxu0 0
    %7575 = vmatprep.subr.bf16.mxu0 0
    %7576 = vmatpush1.bf16.msra.mxu0 %v7538
    %7577 = vmatprep.subr.bf16.mxu0 0
    %7578 = vmatpush1.bf16.msra.mxu0 %v7537
    %7579 = vmatprep.subr.bf16.mxu0 0
    %7580 = vmatpush1.bf16.msra.mxu0 %v7536
    %7581 = vmatprep.subr.bf16.mxu0 0
    %7582 = vmatpush1.bf16.msra.mxu0 %v7535
    %7583 = vmatprep.subr.bf16.mxu0 0
    %7584 = vmatpush2.bf16.msra.mxu0 0
    %7585 = vmatprep.subr.bf16.mxu0 0
    %7586 = vmatpush2.bf16.msra.mxu0 0
    %7587 = vmatprep.subr.bf16.mxu0 0
    %7588 = vmatpush2.bf16.msra.mxu0 0
    %7589 = vmatprep.subr.bf16.mxu0 0
    %7590 = vmatpush2.bf16.msra.mxu0 0
    %7591 = vmatprep.subr.bf16.mxu0 0
    %7592 = vmatpush2.bf16.msra.mxu0 0
    %7593 = vmatprep.subr.bf16.mxu0 0
    %7594 = vmatpush2.bf16.msra.mxu0 0
    %7595 = vmatprep.subr.bf16.mxu0 0
    %7596 = vmatpush2.bf16.msra.mxu0 0
    %7597 = vmatprep.subr.bf16.mxu0 0
    %7598 = vmatpush2.bf16.msra.mxu0 0
    %7599 = vmatprep.mubr.bf16.mxu0 0
    %7600 = vmatmul.mubr.bf16.gmra.mxu0 %v7544
    %v7601 = vpop.f32.mrf.mxu0
    %v7602 = vadd.f32 %v7517, %v7601
    %v7603 = vpop.f32.mrf.mxu0
    %v7604 = vpop.f32.mrf.mxu0
    %v7605 = vadd.f32 %v7517, %v7604
    %v7606 = vpop.f32.mrf.mxu0
    %7607 = vmatprep.mubr.bf16.mxu0 0
    %7608 = vmatmul.mubr.bf16.gmra.mxu0 %v7547
    %v7609 = vpop.f32.mrf.mxu0
    %v7610 = vadd.f32 %v7517, %v7609
    %v7611 = vpop.f32.mrf.mxu0
    %v7612 = vpop.f32.mrf.mxu0
    %v7613 = vadd.f32 %v7517, %v7612
    %v7614 = vpop.f32.mrf.mxu0
    %7615 = vmatprep.mubr.bf16.mxu0 0
    %7616 = vmatmul.mubr.bf16.gmra.mxu0 %v7550
    %v7617 = vpop.f32.mrf.mxu0
    %v7618 = vadd.f32 %v7517, %v7617
    %v7619 = vpop.f32.mrf.mxu0
    %v7620 = vpop.f32.mrf.mxu0
    %v7621 = vadd.f32 %v7517, %v7620
    %v7622 = vpop.f32.mrf.mxu0
    %7623 = vmatprep.mubr.bf16.mxu0 0
    %7624 = vmatmul.mubr.bf16.gmra.mxu0 %v7553
    %v7625 = vpop.f32.mrf.mxu0
    %v7626 = vadd.f32 %v7517, %v7625
    %v7627 = vpop.f32.mrf.mxu0
    %v7628 = vpop.f32.mrf.mxu0
    %v7629 = vadd.f32 %v7517, %v7628
    %v7630 = vpop.f32.mrf.mxu0
    %7631 = vmatprep.mubr.bf16.mxu0 0
    %7632 = vmatmul.mubr.bf16.gmra.mxu0 %v7556
    %v7633 = vpop.f32.mrf.mxu0
    %v7634 = vadd.f32 %v7517, %v7633
    %v7635 = vpop.f32.mrf.mxu0
    %v7636 = vpop.f32.mrf.mxu0
    %v7637 = vadd.f32 %v7517, %v7636
    %v7638 = vpop.f32.mrf.mxu0
    %7639 = vmatprep.mubr.bf16.mxu0 0
    %7640 = vmatmul.mubr.bf16.gmra.mxu0 %v7559
    %v7641 = vpop.f32.mrf.mxu0
    %v7642 = vadd.f32 %v7517, %v7641
    %v7643 = vpop.f32.mrf.mxu0
    %v7644 = vpop.f32.mrf.mxu0
    %v7645 = vadd.f32 %v7517, %v7644
    %v7646 = vpop.f32.mrf.mxu0
    %7647 = vmatprep.mubr.bf16.mxu0 0
    %7648 = vmatmul.mubr.bf16.gmra.mxu0 %v7562
    %v7649 = vpop.f32.mrf.mxu0
    %v7650 = vadd.f32 %v7517, %v7649
    %v7651 = vpop.f32.mrf.mxu0
    %v7652 = vpop.f32.mrf.mxu0
    %v7653 = vadd.f32 %v7517, %v7652
    %v7654 = vpop.f32.mrf.mxu0
    %7655 = vmatprep.mubr.bf16.mxu0 0
    %7656 = vmatmul.mubr.bf16.gmra.mxu0 %v7565
    %v7657 = vpop.f32.mrf.mxu0
    %v7658 = vadd.f32 %v7517, %v7657
    %v7659 = vpop.f32.mrf.mxu0
    %v7660 = vpop.f32.mrf.mxu0
    %v7661 = vadd.f32 %v7517, %v7660
    %v7662 = vpop.f32.mrf.mxu0
    %7663 = vdwg.mxu0
    %v7664 = vadd.f32 %v4376, %v7602
    %v7665 = vadd.f32 %v4377, %v7605
    %v7666 = vadd.f32 %v4378, %v7610
    %v7667 = vadd.f32 %v4379, %v7613
    %v7668 = vadd.f32 %v4380, %v7618
    %v7669 = vadd.f32 %v4381, %v7621
    %v7670 = vadd.f32 %v4382, %v7626
    %v7671 = vadd.f32 %v4383, %v7629
    %v7672 = vadd.f32 %v4384, %v7634
    %v7673 = vadd.f32 %v4385, %v7637
    %v7674 = vadd.f32 %v4386, %v7642
    %v7675 = vadd.f32 %v4387, %v7645
    %v7676 = vadd.f32 %v4388, %v7650
    %v7677 = vadd.f32 %v4389, %v7653
    %v7678 = vadd.f32 %v4390, %v7658
    %v7679 = vadd.f32 %v4391, %v7661
    %v7680 = vpack.c.bf16 %v7665, %v7664
    %v7681 = vpack.c.bf16 %v7667, %v7666
    %v7682 = vpack.c.bf16 %v7669, %v7668
    %v7683 = vpack.c.bf16 %v7671, %v7670
    %v7684 = vpack.c.bf16 %v7673, %v7672
    %v7685 = vpack.c.bf16 %v7675, %v7674
    %v7686 = vpack.c.bf16 %v7677, %v7676
    %v7687 = vpack.c.bf16 %v7679, %v7678
    %v7688 = vld [vmem:[%s69] sm:$0xf]
    %v7689 = vld [vmem:[%s69 + $0x4] sm:$0xf]
    %v7690 = vld [vmem:[%s69 + $0x8] sm:$0xf]
    %v7691 = vld [vmem:[%s69 + $0xc] sm:$0xf]
    %v7692 = vld [vmem:[%s71] sm:$0x1]
    %v7693 = vld [vmem:[%s73] sm:$0x1]
    %v7694 = vld [vmem:[%s75] sm:$0x1]
    %v7696 = vlaneseq
    %v7697 = vshrl.u32 %v7696, 7
    %v7698 = vsub.s32 0, %v7697
    %v7699 = vrot.slane %v7692, %v7698
    %v7705 = vunpack.c.l.b16 %v7688
    %v7706 = vunpack.c.l.b16 %v7689
    %v7707 = vunpack.c.l.b16 %v7690
    %v7708 = vunpack.c.l.b16 %v7691
    %v7709 = vpack.c.b16 %v7706, %v7705
    %v7710 = vpack.c.b16 %v7708, %v7707
    %v7714 = vsel %vm374, %v7680, 0
    %v7717 = vsel %vm374, %v7681, 0
    %v7720 = vsel %vm374, %v7682, 0
    %v7723 = vsel %vm374, %v7683, 0
    %v7726 = vsel %vm374, %v7684, 0
    %v7729 = vsel %vm374, %v7685, 0
    %v7732 = vsel %vm374, %v7686, 0
    %v7735 = vsel %vm374, %v7687, 0
    %7737 = vmatprep.subr.bf16.mxu0 0
    %7738 = vmatpush1.bf16.msra.mxu0 0
    %7739 = vmatprep.subr.bf16.mxu0 0
    %7740 = vmatpush1.bf16.msra.mxu0 0
    %7741 = vmatprep.subr.bf16.mxu0 0
    %7742 = vmatpush1.bf16.msra.mxu0 0
    %7743 = vmatprep.subr.bf16.mxu0 0
    %7744 = vmatpush1.bf16.msra.mxu0 0
    %7745 = vmatprep.subr.bf16.mxu0 0
    %7746 = vmatpush1.bf16.msra.mxu0 0
    %7747 = vmatprep.subr.bf16.mxu0 0
    %7748 = vmatpush1.bf16.msra.mxu0 0
    %7749 = vmatprep.subr.bf16.mxu0 0
    %7750 = vmatpush1.bf16.msra.mxu0 %v7710
    %7751 = vmatprep.subr.bf16.mxu0 0
    %7752 = vmatpush1.bf16.msra.mxu0 %v7709
    %7753 = vmatprep.subr.bf16.mxu0 0
    %7754 = vmatpush2.bf16.msra.mxu0 0
    %7755 = vmatprep.subr.bf16.mxu0 0
    %7756 = vmatpush2.bf16.msra.mxu0 0
    %7757 = vmatprep.subr.bf16.mxu0 0
    %7758 = vmatpush2.bf16.msra.mxu0 0
    %7759 = vmatprep.subr.bf16.mxu0 0
    %7760 = vmatpush2.bf16.msra.mxu0 0
    %7761 = vmatprep.subr.bf16.mxu0 0
    %7762 = vmatpush2.bf16.msra.mxu0 0
    %7763 = vmatprep.subr.bf16.mxu0 0
    %7764 = vmatpush2.bf16.msra.mxu0 0
    %7765 = vmatprep.subr.bf16.mxu0 0
    %7766 = vmatpush2.bf16.msra.mxu0 0
    %7767 = vmatprep.subr.bf16.mxu0 0
    %7768 = vmatpush2.bf16.msra.mxu0 0
    %7769 = vmatprep.mubr.bf16.mxu0 0
    %7770 = vmatmul.mubr.bf16.gmra.mxu0 %v7714
    %v7771 = vpop.f32.mrf.mxu0
    %v7772 = vadd.f32 %v7699, %v7771
    %v7773 = vpop.f32.mrf.mxu0
    %v7774 = vpop.f32.mrf.mxu0
    %v7775 = vadd.f32 %v7699, %v7774
    %v7776 = vpop.f32.mrf.mxu0
    %7777 = vmatprep.mubr.bf16.mxu0 0
    %7778 = vmatmul.mubr.bf16.gmra.mxu0 %v7717
    %v7779 = vpop.f32.mrf.mxu0
    %v7780 = vadd.f32 %v7699, %v7779
    %v7781 = vpop.f32.mrf.mxu0
    %v7782 = vpop.f32.mrf.mxu0
    %v7783 = vadd.f32 %v7699, %v7782
    %v7784 = vpop.f32.mrf.mxu0
    %7785 = vmatprep.mubr.bf16.mxu0 0
    %7786 = vmatmul.mubr.bf16.gmra.mxu0 %v7720
    %v7787 = vpop.f32.mrf.mxu0
    %v7788 = vadd.f32 %v7699, %v7787
    %v7789 = vpop.f32.mrf.mxu0
    %v7790 = vpop.f32.mrf.mxu0
    %v7791 = vadd.f32 %v7699, %v7790
    %v7792 = vpop.f32.mrf.mxu0
    %7793 = vmatprep.mubr.bf16.mxu0 0
    %7794 = vmatmul.mubr.bf16.gmra.mxu0 %v7723
    %v7795 = vpop.f32.mrf.mxu0
    %v7796 = vadd.f32 %v7699, %v7795
    %v7797 = vpop.f32.mrf.mxu0
    %v7798 = vpop.f32.mrf.mxu0
    %v7799 = vadd.f32 %v7699, %v7798
    %v7800 = vpop.f32.mrf.mxu0
    %7801 = vmatprep.mubr.bf16.mxu0 0
    %7802 = vmatmul.mubr.bf16.gmra.mxu0 %v7726
    %v7803 = vpop.f32.mrf.mxu0
    %v7804 = vadd.f32 %v7699, %v7803
    %v7805 = vpop.f32.mrf.mxu0
    %v7806 = vpop.f32.mrf.mxu0
    %v7807 = vadd.f32 %v7699, %v7806
    %v7808 = vpop.f32.mrf.mxu0
    %7809 = vmatprep.mubr.bf16.mxu0 0
    %7810 = vmatmul.mubr.bf16.gmra.mxu0 %v7729
    %v7811 = vpop.f32.mrf.mxu0
    %v7812 = vadd.f32 %v7699, %v7811
    %v7813 = vpop.f32.mrf.mxu0
    %v7814 = vpop.f32.mrf.mxu0
    %v7815 = vadd.f32 %v7699, %v7814
    %v7816 = vpop.f32.mrf.mxu0
    %7817 = vmatprep.mubr.bf16.mxu0 0
    %7818 = vmatmul.mubr.bf16.gmra.mxu0 %v7732
    %v7819 = vpop.f32.mrf.mxu0
    %v7820 = vadd.f32 %v7699, %v7819
    %v7821 = vpop.f32.mrf.mxu0
    %v7822 = vpop.f32.mrf.mxu0
    %v7823 = vadd.f32 %v7699, %v7822
    %v7824 = vpop.f32.mrf.mxu0
    %7825 = vmatprep.mubr.bf16.mxu0 0
    %7826 = vmatmul.mubr.bf16.gmra.mxu0 %v7735
    %v7827 = vpop.f32.mrf.mxu0
    %v7828 = vadd.f32 %v7699, %v7827
    %v7829 = vpop.f32.mrf.mxu0
    %v7830 = vpop.f32.mrf.mxu0
    %v7831 = vadd.f32 %v7699, %v7830
    %v7832 = vpop.f32.mrf.mxu0
    %7833 = vdwg.mxu0
    %v7834 = vsel %vm2016, %v7772, 0.0
    %v7835 = vsel %vm2016, %v7775, 0.0
    %v7836 = vadd.f32 %v7834, %v7835
    %v7837 = vsel %vm2016, %v7780, 0.0
    %v7838 = vadd.f32 %v7836, %v7837
    %v7839 = vsel %vm2016, %v7783, 0.0
    %v7840 = vadd.f32 %v7838, %v7839
    %v7841 = vsel %vm2016, %v7788, 0.0
    %v7842 = vadd.f32 %v7840, %v7841
    %v7843 = vsel %vm2016, %v7791, 0.0
    %v7844 = vadd.f32 %v7842, %v7843
    %v7845 = vsel %vm2016, %v7796, 0.0
    %v7846 = vadd.f32 %v7844, %v7845
    %v7847 = vsel %vm2016, %v7799, 0.0
    %v7848 = vadd.f32 %v7846, %v7847
    %v7849 = vsel %vm2016, %v7804, 0.0
    %v7850 = vadd.f32 %v7848, %v7849
    %v7851 = vsel %vm2016, %v7807, 0.0
    %v7852 = vadd.f32 %v7850, %v7851
    %v7853 = vsel %vm2016, %v7812, 0.0
    %v7854 = vadd.f32 %v7852, %v7853
    %v7855 = vsel %vm2016, %v7815, 0.0
    %v7856 = vadd.f32 %v7854, %v7855
    %v7857 = vsel %vm2016, %v7820, 0.0
    %v7858 = vadd.f32 %v7856, %v7857
    %v7859 = vsel %vm2016, %v7823, 0.0
    %v7860 = vadd.f32 %v7858, %v7859
    %v7861 = vsel %vm2016, %v7828, 0.0
    %v7862 = vadd.f32 %v7860, %v7861
    %v7863 = vsel %vm2016, %v7831, 0.0
    %v7864 = vadd.f32 %v7862, %v7863
    %v7865 = vrot.slane %v7864, 4
    %v7866 = vadd.f32 %v7864, %v7865
    %v7867 = vrot.slane %v7866, 2
    %v7868 = vadd.f32 %v7866, %v7867
    %v7869 = vrot.slane %v7868, 1
    %v7870 = vadd.f32 %v7868, %v7869
    %v7871 = vmul.f32 %v7870, 0.0078125
    %v7872 = vmul.f32 %v7772, %v7772
    %v7873 = vmul.f32 %v7775, %v7775
    %v7874 = vmul.f32 %v7780, %v7780
    %v7875 = vmul.f32 %v7783, %v7783
    %v7876 = vmul.f32 %v7788, %v7788
    %v7877 = vmul.f32 %v7791, %v7791
    %v7878 = vmul.f32 %v7796, %v7796
    %v7879 = vmul.f32 %v7799, %v7799
    %v7880 = vmul.f32 %v7804, %v7804
    %v7881 = vmul.f32 %v7807, %v7807
    %v7882 = vmul.f32 %v7812, %v7812
    %v7883 = vmul.f32 %v7815, %v7815
    %v7884 = vmul.f32 %v7820, %v7820
    %v7885 = vmul.f32 %v7823, %v7823
    %v7886 = vmul.f32 %v7828, %v7828
    %v7887 = vmul.f32 %v7831, %v7831
    %v7888 = vsel %vm2016, %v7872, 0.0
    %v7889 = vsel %vm2016, %v7873, 0.0
    %v7890 = vadd.f32 %v7888, %v7889
    %v7891 = vsel %vm2016, %v7874, 0.0
    %v7892 = vadd.f32 %v7890, %v7891
    %v7893 = vsel %vm2016, %v7875, 0.0
    %v7894 = vadd.f32 %v7892, %v7893
    %v7895 = vsel %vm2016, %v7876, 0.0
    %v7896 = vadd.f32 %v7894, %v7895
    %v7897 = vsel %vm2016, %v7877, 0.0
    %v7898 = vadd.f32 %v7896, %v7897
    %v7899 = vsel %vm2016, %v7878, 0.0
    %v7900 = vadd.f32 %v7898, %v7899
    %v7901 = vsel %vm2016, %v7879, 0.0
    %v7902 = vadd.f32 %v7900, %v7901
    %v7903 = vsel %vm2016, %v7880, 0.0
    %v7904 = vadd.f32 %v7902, %v7903
    %v7905 = vsel %vm2016, %v7881, 0.0
    %v7906 = vadd.f32 %v7904, %v7905
    %v7907 = vsel %vm2016, %v7882, 0.0
    %v7908 = vadd.f32 %v7906, %v7907
    %v7909 = vsel %vm2016, %v7883, 0.0
    %v7910 = vadd.f32 %v7908, %v7909
    %v7911 = vsel %vm2016, %v7884, 0.0
    %v7912 = vadd.f32 %v7910, %v7911
    %v7913 = vsel %vm2016, %v7885, 0.0
    %v7914 = vadd.f32 %v7912, %v7913
    %v7915 = vsel %vm2016, %v7886, 0.0
    %v7916 = vadd.f32 %v7914, %v7915
    %v7917 = vsel %vm2016, %v7887, 0.0
    %v7918 = vadd.f32 %v7916, %v7917
    %v7919 = vrot.slane %v7918, 4
    %v7920 = vadd.f32 %v7918, %v7919
    %v7921 = vrot.slane %v7920, 2
    %v7922 = vadd.f32 %v7920, %v7921
    %v7923 = vrot.slane %v7922, 1
    %v7924 = vadd.f32 %v7922, %v7923
    %v7925 = vmul.f32 %v7924, 0.0078125
    %v7926 = vmul.f32 %v7871, %v7871
    %v7927 = vsub.f32 %v7925, %v7926
    %v7928 = vmax.f32 %v7927, 0.0
    %v7929 = vsub.f32 %v7772, %v7871
    %v7930 = vsub.f32 %v7775, %v7871
    %v7931 = vsub.f32 %v7780, %v7871
    %v7932 = vsub.f32 %v7783, %v7871
    %v7933 = vsub.f32 %v7788, %v7871
    %v7934 = vsub.f32 %v7791, %v7871
    %v7935 = vsub.f32 %v7796, %v7871
    %v7936 = vsub.f32 %v7799, %v7871
    %v7937 = vsub.f32 %v7804, %v7871
    %v7938 = vsub.f32 %v7807, %v7871
    %v7939 = vsub.f32 %v7812, %v7871
    %v7940 = vsub.f32 %v7815, %v7871
    %v7941 = vsub.f32 %v7820, %v7871
    %v7942 = vsub.f32 %v7823, %v7871
    %v7943 = vsub.f32 %v7828, %v7871
    %v7944 = vsub.f32 %v7831, %v7871
    %v7945 = vadd.f32 %v7928, 1e-05
    %v7946 = vrsqrt.pop %v7945
    %v7947 = vmul.f32 %v7929, %v7946
    %v7948 = vmul.f32 %v7930, %v7946
    %v7949 = vmul.f32 %v7931, %v7946
    %v7950 = vmul.f32 %v7932, %v7946
    %v7951 = vmul.f32 %v7933, %v7946
    %v7952 = vmul.f32 %v7934, %v7946
    %v7953 = vmul.f32 %v7935, %v7946
    %v7954 = vmul.f32 %v7936, %v7946
    %v7955 = vmul.f32 %v7937, %v7946
    %v7956 = vmul.f32 %v7938, %v7946
    %v7957 = vmul.f32 %v7939, %v7946
    %v7958 = vmul.f32 %v7940, %v7946
    %v7959 = vmul.f32 %v7941, %v7946
    %v7960 = vmul.f32 %v7942, %v7946
    %v7961 = vmul.f32 %v7943, %v7946
    %v7962 = vmul.f32 %v7944, %v7946
    %v7964 = vlaneseq
    %v7965 = vshrl.u32 %v7964, 7
    %v7966 = vsub.s32 0, %v7965
    %v7967 = vrot.slane %v7693, %v7966
    %v7969 = vmul.f32 %v7947, %v7967
    %v7970 = vmul.f32 %v7948, %v7967
    %v7971 = vmul.f32 %v7949, %v7967
    %v7972 = vmul.f32 %v7950, %v7967
    %v7973 = vmul.f32 %v7951, %v7967
    %v7974 = vmul.f32 %v7952, %v7967
    %v7975 = vmul.f32 %v7953, %v7967
    %v7976 = vmul.f32 %v7954, %v7967
    %v7977 = vmul.f32 %v7955, %v7967
    %v7978 = vmul.f32 %v7956, %v7967
    %v7979 = vmul.f32 %v7957, %v7967
    %v7980 = vmul.f32 %v7958, %v7967
    %v7981 = vmul.f32 %v7959, %v7967
    %v7982 = vmul.f32 %v7960, %v7967
    %v7983 = vmul.f32 %v7961, %v7967
    %v7984 = vmul.f32 %v7962, %v7967
    %v7986 = vlaneseq
    %v7987 = vshrl.u32 %v7986, 7
    %v7988 = vsub.s32 0, %v7987
    %v7989 = vrot.slane %v7694, %v7988
    %v7991 = vadd.f32 %v7969, %v7989
    %v7992 = vadd.f32 %v7970, %v7989
    %v7993 = vadd.f32 %v7971, %v7989
    %v7994 = vadd.f32 %v7972, %v7989
    %v7995 = vadd.f32 %v7973, %v7989
    %v7996 = vadd.f32 %v7974, %v7989
    %v7997 = vadd.f32 %v7975, %v7989
    %v7998 = vadd.f32 %v7976, %v7989
    %v7999 = vadd.f32 %v7977, %v7989
    %v8000 = vadd.f32 %v7978, %v7989
    %v8001 = vadd.f32 %v7979, %v7989
    %v8002 = vadd.f32 %v7980, %v7989
    %v8003 = vadd.f32 %v7981, %v7989
    %v8004 = vadd.f32 %v7982, %v7989
    %v8005 = vadd.f32 %v7983, %v7989
    %v8006 = vadd.f32 %v7984, %v7989
    %v8007 = vmax.f32 %v7991, 0.0
    %v8008 = vmax.f32 %v7992, 0.0
    %v8009 = vmax.f32 %v7993, 0.0
    %v8010 = vmax.f32 %v7994, 0.0
    %v8011 = vmax.f32 %v7995, 0.0
    %v8012 = vmax.f32 %v7996, 0.0
    %v8013 = vmax.f32 %v7997, 0.0
    %v8014 = vmax.f32 %v7998, 0.0
    %v8015 = vmax.f32 %v7999, 0.0
    %v8016 = vmax.f32 %v8000, 0.0
    %v8017 = vmax.f32 %v8001, 0.0
    %v8018 = vmax.f32 %v8002, 0.0
    %v8019 = vmax.f32 %v8003, 0.0
    %v8020 = vmax.f32 %v8004, 0.0
    %v8021 = vmax.f32 %v8005, 0.0
    %v8022 = vmax.f32 %v8006, 0.0
    %v8023 = vld [vmem:[%s77] sm:$0xf]
    %v8024 = vld [vmem:[%s77 + $0x4] sm:$0xf]
    %v8025 = vld [vmem:[%s77 + $0x8] sm:$0xf]
    %v8026 = vld [vmem:[%s77 + $0xc] sm:$0xf]
    %v8027 = vld [vmem:[%s77 + $0x10] sm:$0xf]
    %v8028 = vld [vmem:[%s77 + $0x14] sm:$0xf]
    %v8029 = vld [vmem:[%s77 + $0x18] sm:$0xf]
    %v8030 = vld [vmem:[%s77 + $0x1c] sm:$0xf]
    %v8031 = vld [vmem:[%s79] sm:$0x1]
    %v8032 = vld [vmem:[%s81] sm:$0x1]
    %v8033 = vld [vmem:[#allocation2] sm:$0x1]
    %v8034 = vpack.c.bf16 %v8008, %v8007
    %v8035 = vpack.c.bf16 %v8010, %v8009
    %v8036 = vpack.c.bf16 %v8012, %v8011
    %v8037 = vpack.c.bf16 %v8014, %v8013
    %v8038 = vpack.c.bf16 %v8016, %v8015
    %v8039 = vpack.c.bf16 %v8018, %v8017
    %v8040 = vpack.c.bf16 %v8020, %v8019
    %v8041 = vpack.c.bf16 %v8022, %v8021
    %v8043 = vlaneseq
    %v8044 = vshrl.u32 %v8043, 7
    %v8045 = vsub.s32 0, %v8044
    %v8046 = vrot.slane %v8031, %v8045
    %v8056 = vunpack.c.l.b16 %v8023
    %v8057 = vunpack.c.l.b16 %v8024
    %v8058 = vunpack.c.l.b16 %v8025
    %v8059 = vunpack.c.l.b16 %v8026
    %v8060 = vunpack.c.l.b16 %v8027
    %v8061 = vunpack.c.l.b16 %v8028
    %v8062 = vunpack.c.l.b16 %v8029
    %v8063 = vunpack.c.l.b16 %v8030
    %v8064 = vpack.c.b16 %v8057, %v8056
    %v8065 = vpack.c.b16 %v8059, %v8058
    %v8066 = vpack.c.b16 %v8061, %v8060
    %v8067 = vpack.c.b16 %v8063, %v8062
    %v8073 = vsel %vm2016, %v8034, 0
    %v8076 = vsel %vm2016, %v8035, 0
    %v8079 = vsel %vm2016, %v8036, 0
    %v8082 = vsel %vm2016, %v8037, 0
    %v8085 = vsel %vm2016, %v8038, 0
    %v8088 = vsel %vm2016, %v8039, 0
    %v8091 = vsel %vm2016, %v8040, 0
    %v8094 = vsel %vm2016, %v8041, 0
    %8096 = vmatprep.subr.bf16.mxu0 0
    %8097 = vmatpush1.bf16.msra.mxu0 0
    %8098 = vmatprep.subr.bf16.mxu0 0
    %8099 = vmatpush1.bf16.msra.mxu0 0
    %8100 = vmatprep.subr.bf16.mxu0 0
    %8101 = vmatpush1.bf16.msra.mxu0 0
    %8102 = vmatprep.subr.bf16.mxu0 0
    %8103 = vmatpush1.bf16.msra.mxu0 0
    %8104 = vmatprep.subr.bf16.mxu0 0
    %8105 = vmatpush1.bf16.msra.mxu0 %v8067
    %8106 = vmatprep.subr.bf16.mxu0 0
    %8107 = vmatpush1.bf16.msra.mxu0 %v8066
    %8108 = vmatprep.subr.bf16.mxu0 0
    %8109 = vmatpush1.bf16.msra.mxu0 %v8065
    %8110 = vmatprep.subr.bf16.mxu0 0
    %8111 = vmatpush1.bf16.msra.mxu0 %v8064
    %8112 = vmatprep.subr.bf16.mxu0 0
    %8113 = vmatpush2.bf16.msra.mxu0 0
    %8114 = vmatprep.subr.bf16.mxu0 0
    %8115 = vmatpush2.bf16.msra.mxu0 0
    %8116 = vmatprep.subr.bf16.mxu0 0
    %8117 = vmatpush2.bf16.msra.mxu0 0
    %8118 = vmatprep.subr.bf16.mxu0 0
    %8119 = vmatpush2.bf16.msra.mxu0 0
    %8120 = vmatprep.subr.bf16.mxu0 0
    %8121 = vmatpush2.bf16.msra.mxu0 0
    %8122 = vmatprep.subr.bf16.mxu0 0
    %8123 = vmatpush2.bf16.msra.mxu0 0
    %8124 = vmatprep.subr.bf16.mxu0 0
    %8125 = vmatpush2.bf16.msra.mxu0 0
    %8126 = vmatprep.subr.bf16.mxu0 0
    %8127 = vmatpush2.bf16.msra.mxu0 0
    %8128 = vmatprep.mubr.bf16.mxu0 0
    %8129 = vmatmul.mubr.bf16.gmra.mxu0 %v8073
    %v8130 = vpop.f32.mrf.mxu0
    %v8131 = vadd.f32 %v8046, %v8130
    %v8132 = vpop.f32.mrf.mxu0
    %v8133 = vpop.f32.mrf.mxu0
    %v8134 = vadd.f32 %v8046, %v8133
    %v8135 = vpop.f32.mrf.mxu0
    %8136 = vmatprep.mubr.bf16.mxu0 0
    %8137 = vmatmul.mubr.bf16.gmra.mxu0 %v8076
    %v8138 = vpop.f32.mrf.mxu0
    %v8139 = vadd.f32 %v8046, %v8138
    %v8140 = vpop.f32.mrf.mxu0
    %v8141 = vpop.f32.mrf.mxu0
    %v8142 = vadd.f32 %v8046, %v8141
    %v8143 = vpop.f32.mrf.mxu0
    %8144 = vmatprep.mubr.bf16.mxu0 0
    %8145 = vmatmul.mubr.bf16.gmra.mxu0 %v8079
    %v8146 = vpop.f32.mrf.mxu0
    %v8147 = vadd.f32 %v8046, %v8146
    %v8148 = vpop.f32.mrf.mxu0
    %v8149 = vpop.f32.mrf.mxu0
    %v8150 = vadd.f32 %v8046, %v8149
    %v8151 = vpop.f32.mrf.mxu0
    %8152 = vmatprep.mubr.bf16.mxu0 0
    %8153 = vmatmul.mubr.bf16.gmra.mxu0 %v8082
    %v8154 = vpop.f32.mrf.mxu0
    %v8155 = vadd.f32 %v8046, %v8154
    %v8156 = vpop.f32.mrf.mxu0
    %v8157 = vpop.f32.mrf.mxu0
    %v8158 = vadd.f32 %v8046, %v8157
    %v8159 = vpop.f32.mrf.mxu0
    %8160 = vmatprep.mubr.bf16.mxu0 0
    %8161 = vmatmul.mubr.bf16.gmra.mxu0 %v8085
    %v8162 = vpop.f32.mrf.mxu0
    %v8163 = vadd.f32 %v8046, %v8162
    %v8164 = vpop.f32.mrf.mxu0
    %v8165 = vpop.f32.mrf.mxu0
    %v8166 = vadd.f32 %v8046, %v8165
    %v8167 = vpop.f32.mrf.mxu0
    %8168 = vmatprep.mubr.bf16.mxu0 0
    %8169 = vmatmul.mubr.bf16.gmra.mxu0 %v8088
    %v8170 = vpop.f32.mrf.mxu0
    %v8171 = vadd.f32 %v8046, %v8170
    %v8172 = vpop.f32.mrf.mxu0
    %v8173 = vpop.f32.mrf.mxu0
    %v8174 = vadd.f32 %v8046, %v8173
    %v8175 = vpop.f32.mrf.mxu0
    %8176 = vmatprep.mubr.bf16.mxu0 0
    %8177 = vmatmul.mubr.bf16.gmra.mxu0 %v8091
    %v8178 = vpop.f32.mrf.mxu0
    %v8179 = vadd.f32 %v8046, %v8178
    %v8180 = vpop.f32.mrf.mxu0
    %v8181 = vpop.f32.mrf.mxu0
    %v8182 = vadd.f32 %v8046, %v8181
    %v8183 = vpop.f32.mrf.mxu0
    %8184 = vmatprep.mubr.bf16.mxu0 0
    %8185 = vmatmul.mubr.bf16.gmra.mxu0 %v8094
    %v8186 = vpop.f32.mrf.mxu0
    %v8187 = vadd.f32 %v8046, %v8186
    %v8188 = vpop.f32.mrf.mxu0
    %v8189 = vpop.f32.mrf.mxu0
    %v8190 = vadd.f32 %v8046, %v8189
    %v8191 = vpop.f32.mrf.mxu0
    %8192 = vdwg.mxu0
    %v8193 = vsel %vm2016, %v8131, 0.0
    %v8194 = vsel %vm2016, %v8134, 0.0
    %v8195 = vadd.f32 %v8193, %v8194
    %v8196 = vsel %vm2016, %v8139, 0.0
    %v8197 = vadd.f32 %v8195, %v8196
    %v8198 = vsel %vm2016, %v8142, 0.0
    %v8199 = vadd.f32 %v8197, %v8198
    %v8200 = vsel %vm2016, %v8147, 0.0
    %v8201 = vadd.f32 %v8199, %v8200
    %v8202 = vsel %vm2016, %v8150, 0.0
    %v8203 = vadd.f32 %v8201, %v8202
    %v8204 = vsel %vm2016, %v8155, 0.0
    %v8205 = vadd.f32 %v8203, %v8204
    %v8206 = vsel %vm2016, %v8158, 0.0
    %v8207 = vadd.f32 %v8205, %v8206
    %v8208 = vsel %vm2016, %v8163, 0.0
    %v8209 = vadd.f32 %v8207, %v8208
    %v8210 = vsel %vm2016, %v8166, 0.0
    %v8211 = vadd.f32 %v8209, %v8210
    %v8212 = vsel %vm2016, %v8171, 0.0
    %v8213 = vadd.f32 %v8211, %v8212
    %v8214 = vsel %vm2016, %v8174, 0.0
    %v8215 = vadd.f32 %v8213, %v8214
    %v8216 = vsel %vm2016, %v8179, 0.0
    %v8217 = vadd.f32 %v8215, %v8216
    %v8218 = vsel %vm2016, %v8182, 0.0
    %v8219 = vadd.f32 %v8217, %v8218
    %v8220 = vsel %vm2016, %v8187, 0.0
    %v8221 = vadd.f32 %v8219, %v8220
    %v8222 = vsel %vm2016, %v8190, 0.0
    %v8223 = vadd.f32 %v8221, %v8222
    %v8224 = vrot.slane %v8223, 4
    %v8225 = vadd.f32 %v8223, %v8224
    %v8226 = vrot.slane %v8225, 2
    %v8227 = vadd.f32 %v8225, %v8226
    %v8228 = vrot.slane %v8227, 1
    %v8229 = vadd.f32 %v8227, %v8228
    %v8230 = vmul.f32 %v8229, 0.0078125
    %v8231 = vmul.f32 %v8131, %v8131
    %v8232 = vmul.f32 %v8134, %v8134
    %v8233 = vmul.f32 %v8139, %v8139
    %v8234 = vmul.f32 %v8142, %v8142
    %v8235 = vmul.f32 %v8147, %v8147
    %v8236 = vmul.f32 %v8150, %v8150
    %v8237 = vmul.f32 %v8155, %v8155
    %v8238 = vmul.f32 %v8158, %v8158
    %v8239 = vmul.f32 %v8163, %v8163
    %v8240 = vmul.f32 %v8166, %v8166
    %v8241 = vmul.f32 %v8171, %v8171
    %v8242 = vmul.f32 %v8174, %v8174
    %v8243 = vmul.f32 %v8179, %v8179
    %v8244 = vmul.f32 %v8182, %v8182
    %v8245 = vmul.f32 %v8187, %v8187
    %v8246 = vmul.f32 %v8190, %v8190
    %v8247 = vsel %vm2016, %v8231, 0.0
    %v8248 = vsel %vm2016, %v8232, 0.0
    %v8249 = vadd.f32 %v8247, %v8248
    %v8250 = vsel %vm2016, %v8233, 0.0
    %v8251 = vadd.f32 %v8249, %v8250
    %v8252 = vsel %vm2016, %v8234, 0.0
    %v8253 = vadd.f32 %v8251, %v8252
    %v8254 = vsel %vm2016, %v8235, 0.0
    %v8255 = vadd.f32 %v8253, %v8254
    %v8256 = vsel %vm2016, %v8236, 0.0
    %v8257 = vadd.f32 %v8255, %v8256
    %v8258 = vsel %vm2016, %v8237, 0.0
    %v8259 = vadd.f32 %v8257, %v8258
    %v8260 = vsel %vm2016, %v8238, 0.0
    %v8261 = vadd.f32 %v8259, %v8260
    %v8262 = vsel %vm2016, %v8239, 0.0
    %v8263 = vadd.f32 %v8261, %v8262
    %v8264 = vsel %vm2016, %v8240, 0.0
    %v8265 = vadd.f32 %v8263, %v8264
    %v8266 = vsel %vm2016, %v8241, 0.0
    %v8267 = vadd.f32 %v8265, %v8266
    %v8268 = vsel %vm2016, %v8242, 0.0
    %v8269 = vadd.f32 %v8267, %v8268
    %v8270 = vsel %vm2016, %v8243, 0.0
    %v8271 = vadd.f32 %v8269, %v8270
    %v8272 = vsel %vm2016, %v8244, 0.0
    %v8273 = vadd.f32 %v8271, %v8272
    %v8274 = vsel %vm2016, %v8245, 0.0
    %v8275 = vadd.f32 %v8273, %v8274
    %v8276 = vsel %vm2016, %v8246, 0.0
    %v8277 = vadd.f32 %v8275, %v8276
    %v8278 = vrot.slane %v8277, 4
    %v8279 = vadd.f32 %v8277, %v8278
    %v8280 = vrot.slane %v8279, 2
    %v8281 = vadd.f32 %v8279, %v8280
    %v8282 = vrot.slane %v8281, 1
    %v8283 = vadd.f32 %v8281, %v8282
    %v8284 = vmul.f32 %v8283, 0.0078125
    %v8285 = vmul.f32 %v8230, %v8230
    %v8286 = vsub.f32 %v8284, %v8285
    %v8287 = vmax.f32 %v8286, 0.0
    %v8288 = vsub.f32 %v8131, %v8230
    %v8289 = vsub.f32 %v8134, %v8230
    %v8290 = vsub.f32 %v8139, %v8230
    %v8291 = vsub.f32 %v8142, %v8230
    %v8292 = vsub.f32 %v8147, %v8230
    %v8293 = vsub.f32 %v8150, %v8230
    %v8294 = vsub.f32 %v8155, %v8230
    %v8295 = vsub.f32 %v8158, %v8230
    %v8296 = vsub.f32 %v8163, %v8230
    %v8297 = vsub.f32 %v8166, %v8230
    %v8298 = vsub.f32 %v8171, %v8230
    %v8299 = vsub.f32 %v8174, %v8230
    %v8300 = vsub.f32 %v8179, %v8230
    %v8301 = vsub.f32 %v8182, %v8230
    %v8302 = vsub.f32 %v8187, %v8230
    %v8303 = vsub.f32 %v8190, %v8230
    %v8304 = vadd.f32 %v8287, 1e-05
    %v8305 = vrsqrt.pop %v8304
    %v8306 = vmul.f32 %v8288, %v8305
    %v8307 = vmul.f32 %v8289, %v8305
    %v8308 = vmul.f32 %v8290, %v8305
    %v8309 = vmul.f32 %v8291, %v8305
    %v8310 = vmul.f32 %v8292, %v8305
    %v8311 = vmul.f32 %v8293, %v8305
    %v8312 = vmul.f32 %v8294, %v8305
    %v8313 = vmul.f32 %v8295, %v8305
    %v8314 = vmul.f32 %v8296, %v8305
    %v8315 = vmul.f32 %v8297, %v8305
    %v8316 = vmul.f32 %v8298, %v8305
    %v8317 = vmul.f32 %v8299, %v8305
    %v8318 = vmul.f32 %v8300, %v8305
    %v8319 = vmul.f32 %v8301, %v8305
    %v8320 = vmul.f32 %v8302, %v8305
    %v8321 = vmul.f32 %v8303, %v8305
    %v8323 = vlaneseq
    %v8324 = vshrl.u32 %v8323, 7
    %v8325 = vsub.s32 0, %v8324
    %v8326 = vrot.slane %v8032, %v8325
    %v8328 = vmul.f32 %v8306, %v8326
    %v8329 = vmul.f32 %v8307, %v8326
    %v8330 = vmul.f32 %v8308, %v8326
    %v8331 = vmul.f32 %v8309, %v8326
    %v8332 = vmul.f32 %v8310, %v8326
    %v8333 = vmul.f32 %v8311, %v8326
    %v8334 = vmul.f32 %v8312, %v8326
    %v8335 = vmul.f32 %v8313, %v8326
    %v8336 = vmul.f32 %v8314, %v8326
    %v8337 = vmul.f32 %v8315, %v8326
    %v8338 = vmul.f32 %v8316, %v8326
    %v8339 = vmul.f32 %v8317, %v8326
    %v8340 = vmul.f32 %v8318, %v8326
    %v8341 = vmul.f32 %v8319, %v8326
    %v8342 = vmul.f32 %v8320, %v8326
    %v8343 = vmul.f32 %v8321, %v8326
    %v8345 = vlaneseq
    %v8346 = vshrl.u32 %v8345, 7
    %v8347 = vsub.s32 0, %v8346
    %v8348 = vrot.slane %v8033, %v8347
    %v8350 = vadd.f32 %v8328, %v8348
    %v8351 = vadd.f32 %v8329, %v8348
    %v8352 = vadd.f32 %v8330, %v8348
    %v8353 = vadd.f32 %v8331, %v8348
    %v8354 = vadd.f32 %v8332, %v8348
    %v8355 = vadd.f32 %v8333, %v8348
    %v8356 = vadd.f32 %v8334, %v8348
    %v8357 = vadd.f32 %v8335, %v8348
    %v8358 = vadd.f32 %v8336, %v8348
    %v8359 = vadd.f32 %v8337, %v8348
    %v8360 = vadd.f32 %v8338, %v8348
    %v8361 = vadd.f32 %v8339, %v8348
    %v8362 = vadd.f32 %v8340, %v8348
    %v8363 = vadd.f32 %v8341, %v8348
    %v8364 = vadd.f32 %v8342, %v8348
    %v8365 = vadd.f32 %v8343, %v8348
    %v8366 = vmax.f32 %v8350, 0.0
    %v8367 = vmax.f32 %v8351, 0.0
    %v8368 = vmax.f32 %v8352, 0.0
    %v8369 = vmax.f32 %v8353, 0.0
    %v8370 = vmax.f32 %v8354, 0.0
    %v8371 = vmax.f32 %v8355, 0.0
    %v8372 = vmax.f32 %v8356, 0.0
    %v8373 = vmax.f32 %v8357, 0.0
    %v8374 = vmax.f32 %v8358, 0.0
    %v8375 = vmax.f32 %v8359, 0.0
    %v8376 = vmax.f32 %v8360, 0.0
    %v8377 = vmax.f32 %v8361, 0.0
    %v8378 = vmax.f32 %v8362, 0.0
    %v8379 = vmax.f32 %v8363, 0.0
    %v8380 = vmax.f32 %v8364, 0.0
    %v8381 = vmax.f32 %v8365, 0.0
    %v8382 = vld [vmem:[%s85] sm:$0xf]
    %v8383 = vld [vmem:[%s85 + $0x4] sm:$0xf]
    %v8384 = vld [vmem:[%s85 + $0x8] sm:$0xf]
    %v8385 = vld [vmem:[%s85 + $0xc] sm:$0xf]
    %v8386 = vld [vmem:[%s85 + $0x10] sm:$0xf]
    %v8387 = vld [vmem:[%s85 + $0x14] sm:$0xf]
    %v8388 = vld [vmem:[%s85 + $0x18] sm:$0xf]
    %v8389 = vld [vmem:[%s85 + $0x1c] sm:$0xf]
    %v8390 = vld [vmem:[#allocation4] sm:$0x1]
    %v8391 = vpack.c.bf16 %v8367, %v8366
    %v8392 = vpack.c.bf16 %v8369, %v8368
    %v8393 = vpack.c.bf16 %v8371, %v8370
    %v8394 = vpack.c.bf16 %v8373, %v8372
    %v8395 = vpack.c.bf16 %v8375, %v8374
    %v8396 = vpack.c.bf16 %v8377, %v8376
    %v8397 = vpack.c.bf16 %v8379, %v8378
    %v8398 = vpack.c.bf16 %v8381, %v8380
    %v8400 = vlaneseq
    %v8401 = vshrl.u32 %v8400, 7
    %v8402 = vsub.s32 0, %v8401
    %v8403 = vrot.slane %v8390, %v8402
    %v8413 = vunpack.c.l.b16 %v8382
    %v8414 = vunpack.c.l.b16 %v8383
    %v8415 = vunpack.c.l.b16 %v8384
    %v8416 = vunpack.c.l.b16 %v8385
    %v8417 = vunpack.c.l.b16 %v8386
    %v8418 = vunpack.c.l.b16 %v8387
    %v8419 = vunpack.c.l.b16 %v8388
    %v8420 = vunpack.c.l.b16 %v8389
    %v8421 = vpack.c.b16 %v8414, %v8413
    %v8422 = vpack.c.b16 %v8416, %v8415
    %v8423 = vpack.c.b16 %v8418, %v8417
    %v8424 = vpack.c.b16 %v8420, %v8419
    %v8430 = vsel %vm2016, %v8391, 0
    %v8433 = vsel %vm2016, %v8392, 0
    %v8436 = vsel %vm2016, %v8393, 0
    %v8439 = vsel %vm2016, %v8394, 0
    %v8442 = vsel %vm2016, %v8395, 0
    %v8445 = vsel %vm2016, %v8396, 0
    %v8448 = vsel %vm2016, %v8397, 0
    %v8451 = vsel %vm2016, %v8398, 0
    %8453 = vmatprep.subr.bf16.mxu0 0
    %8454 = vmatpush1.bf16.msra.mxu0 0
    %8455 = vmatprep.subr.bf16.mxu0 0
    %8456 = vmatpush1.bf16.msra.mxu0 0
    %8457 = vmatprep.subr.bf16.mxu0 0
    %8458 = vmatpush1.bf16.msra.mxu0 0
    %8459 = vmatprep.subr.bf16.mxu0 0
    %8460 = vmatpush1.bf16.msra.mxu0 0
    %8461 = vmatprep.subr.bf16.mxu0 0
    %8462 = vmatpush1.bf16.msra.mxu0 %v8424
    %8463 = vmatprep.subr.bf16.mxu0 0
    %8464 = vmatpush1.bf16.msra.mxu0 %v8423
    %8465 = vmatprep.subr.bf16.mxu0 0
    %8466 = vmatpush1.bf16.msra.mxu0 %v8422
    %8467 = vmatprep.subr.bf16.mxu0 0
    %8468 = vmatpush1.bf16.msra.mxu0 %v8421
    %8469 = vmatprep.subr.bf16.mxu0 0
    %8470 = vmatpush2.bf16.msra.mxu0 0
    %8471 = vmatprep.subr.bf16.mxu0 0
    %8472 = vmatpush2.bf16.msra.mxu0 0
    %8473 = vmatprep.subr.bf16.mxu0 0
    %8474 = vmatpush2.bf16.msra.mxu0 0
    %8475 = vmatprep.subr.bf16.mxu0 0
    %8476 = vmatpush2.bf16.msra.mxu0 0
    %8477 = vmatprep.subr.bf16.mxu0 0
    %8478 = vmatpush2.bf16.msra.mxu0 0
    %8479 = vmatprep.subr.bf16.mxu0 0
    %8480 = vmatpush2.bf16.msra.mxu0 0
    %8481 = vmatprep.subr.bf16.mxu0 0
    %8482 = vmatpush2.bf16.msra.mxu0 0
    %8483 = vmatprep.subr.bf16.mxu0 0
    %8484 = vmatpush2.bf16.msra.mxu0 0
    %8485 = vmatprep.mubr.bf16.mxu0 0
    %8486 = vmatmul.mubr.bf16.gmra.mxu0 %v8430
    %v8487 = vpop.f32.mrf.mxu0
    %v8488 = vadd.f32 %v8403, %v8487
    %v8489 = vpop.f32.mrf.mxu0
    %v8490 = vpop.f32.mrf.mxu0
    %v8491 = vadd.f32 %v8403, %v8490
    %v8492 = vpop.f32.mrf.mxu0
    %8493 = vmatprep.mubr.bf16.mxu0 0
    %8494 = vmatmul.mubr.bf16.gmra.mxu0 %v8433
    %v8495 = vpop.f32.mrf.mxu0
    %v8496 = vadd.f32 %v8403, %v8495
    %v8497 = vpop.f32.mrf.mxu0
    %v8498 = vpop.f32.mrf.mxu0
    %v8499 = vadd.f32 %v8403, %v8498
    %v8500 = vpop.f32.mrf.mxu0
    %8501 = vmatprep.mubr.bf16.mxu0 0
    %8502 = vmatmul.mubr.bf16.gmra.mxu0 %v8436
    %v8503 = vpop.f32.mrf.mxu0
    %v8504 = vadd.f32 %v8403, %v8503
    %v8505 = vpop.f32.mrf.mxu0
    %v8506 = vpop.f32.mrf.mxu0
    %v8507 = vadd.f32 %v8403, %v8506
    %v8508 = vpop.f32.mrf.mxu0
    %8509 = vmatprep.mubr.bf16.mxu0 0
    %8510 = vmatmul.mubr.bf16.gmra.mxu0 %v8439
    %v8511 = vpop.f32.mrf.mxu0
    %v8512 = vadd.f32 %v8403, %v8511
    %v8513 = vpop.f32.mrf.mxu0
    %v8514 = vpop.f32.mrf.mxu0
    %v8515 = vadd.f32 %v8403, %v8514
    %v8516 = vpop.f32.mrf.mxu0
    %8517 = vmatprep.mubr.bf16.mxu0 0
    %8518 = vmatmul.mubr.bf16.gmra.mxu0 %v8442
    %v8519 = vpop.f32.mrf.mxu0
    %v8520 = vadd.f32 %v8403, %v8519
    %v8521 = vpop.f32.mrf.mxu0
    %v8522 = vpop.f32.mrf.mxu0
    %v8523 = vadd.f32 %v8403, %v8522
    %v8524 = vpop.f32.mrf.mxu0
    %8525 = vmatprep.mubr.bf16.mxu0 0
    %8526 = vmatmul.mubr.bf16.gmra.mxu0 %v8445
    %v8527 = vpop.f32.mrf.mxu0
    %v8528 = vadd.f32 %v8403, %v8527
    %v8529 = vpop.f32.mrf.mxu0
    %v8530 = vpop.f32.mrf.mxu0
    %v8531 = vadd.f32 %v8403, %v8530
    %v8532 = vpop.f32.mrf.mxu0
    %8533 = vmatprep.mubr.bf16.mxu0 0
    %8534 = vmatmul.mubr.bf16.gmra.mxu0 %v8448
    %v8535 = vpop.f32.mrf.mxu0
    %v8536 = vadd.f32 %v8403, %v8535
    %v8537 = vpop.f32.mrf.mxu0
    %v8538 = vpop.f32.mrf.mxu0
    %v8539 = vadd.f32 %v8403, %v8538
    %v8540 = vpop.f32.mrf.mxu0
    %8541 = vmatprep.mubr.bf16.mxu0 0
    %8542 = vmatmul.mubr.bf16.gmra.mxu0 %v8451
    %v8543 = vpop.f32.mrf.mxu0
    %v8544 = vadd.f32 %v8403, %v8543
    %v8545 = vpop.f32.mrf.mxu0
    %v8546 = vpop.f32.mrf.mxu0
    %v8547 = vadd.f32 %v8403, %v8546
    %v8548 = vpop.f32.mrf.mxu0
    %8549 = vdwg.mxu0
    %8550 = vst.msk [vmem:[%s89] sm:$0xff] %vm374, %v8366
    %8551 = vst.msk [vmem:[%s89 + $0x8] sm:$0xff] %vm374, %v8367
    %8552 = vst.msk [vmem:[%s89 + $0x10] sm:$0xff] %vm374, %v8368
    %8553 = vst.msk [vmem:[%s89 + $0x18] sm:$0xff] %vm374, %v8369
    %8554 = vst.msk [vmem:[%s89 + $0x20] sm:$0xff] %vm374, %v8370
    %8555 = vst.msk [vmem:[%s89 + $0x28] sm:$0xff] %vm374, %v8371
    %8556 = vst.msk [vmem:[%s89 + $0x30] sm:$0xff] %vm374, %v8372
    %8557 = vst.msk [vmem:[%s89 + $0x38] sm:$0xff] %vm374, %v8373
    %8558 = vst.msk [vmem:[%s89 + $0x40] sm:$0xff] %vm374, %v8374
    %8559 = vst.msk [vmem:[%s89 + $0x48] sm:$0xff] %vm374, %v8375
    %8560 = vst.msk [vmem:[%s89 + $0x50] sm:$0xff] %vm374, %v8376
    %8561 = vst.msk [vmem:[%s89 + $0x58] sm:$0xff] %vm374, %v8377
    %8562 = vst.msk [vmem:[%s89 + $0x60] sm:$0xff] %vm374, %v8378
    %8563 = vst.msk [vmem:[%s89 + $0x68] sm:$0xff] %vm374, %v8379
    %8564 = vst.msk [vmem:[%s89 + $0x70] sm:$0xff] %vm374, %v8380
    %8565 = vst.msk [vmem:[%s89 + $0x78] sm:$0xff] %vm374, %v8381
    %v8566 = vmax.f32 %v8488, -1.0
    %v8567 = vmax.f32 %v8491, -1.0
    %v8568 = vmax.f32 %v8496, -1.0
    %v8569 = vmax.f32 %v8499, -1.0
    %v8570 = vmax.f32 %v8504, -1.0
    %v8571 = vmax.f32 %v8507, -1.0
    %v8572 = vmax.f32 %v8512, -1.0
    %v8573 = vmax.f32 %v8515, -1.0
    %v8574 = vmax.f32 %v8520, -1.0
    %v8575 = vmax.f32 %v8523, -1.0
    %v8576 = vmax.f32 %v8528, -1.0
    %v8577 = vmax.f32 %v8531, -1.0
    %v8578 = vmax.f32 %v8536, -1.0
    %v8579 = vmax.f32 %v8539, -1.0
    %v8580 = vmax.f32 %v8544, -1.0
    %v8581 = vmax.f32 %v8547, -1.0
    %v8582 = vmin.f32 %v8566, 1.0
    %v8583 = vmin.f32 %v8567, 1.0
    %v8584 = vmin.f32 %v8568, 1.0
    %v8585 = vmin.f32 %v8569, 1.0
    %v8586 = vmin.f32 %v8570, 1.0
    %v8587 = vmin.f32 %v8571, 1.0
    %v8588 = vmin.f32 %v8572, 1.0
    %v8589 = vmin.f32 %v8573, 1.0
    %v8590 = vmin.f32 %v8574, 1.0
    %v8591 = vmin.f32 %v8575, 1.0
    %v8592 = vmin.f32 %v8576, 1.0
    %v8593 = vmin.f32 %v8577, 1.0
    %v8594 = vmin.f32 %v8578, 1.0
    %v8595 = vmin.f32 %v8579, 1.0
    %v8596 = vmin.f32 %v8580, 1.0
    %v8597 = vmin.f32 %v8581, 1.0
    %vm8598 = vcmask 15360
    %8599 = vst.msk [vmem:[%s91] sm:$0xff] %vm8598, %v8582
    %8600 = vst.msk [vmem:[%s91 + $0x8] sm:$0xff] %vm8598, %v8583
    %8601 = vst.msk [vmem:[%s91 + $0x10] sm:$0xff] %vm8598, %v8584
    %8602 = vst.msk [vmem:[%s91 + $0x18] sm:$0xff] %vm8598, %v8585
    %8603 = vst.msk [vmem:[%s91 + $0x20] sm:$0xff] %vm8598, %v8586
    %8604 = vst.msk [vmem:[%s91 + $0x28] sm:$0xff] %vm8598, %v8587
    %8605 = vst.msk [vmem:[%s91 + $0x30] sm:$0xff] %vm8598, %v8588
    %8606 = vst.msk [vmem:[%s91 + $0x38] sm:$0xff] %vm8598, %v8589
    %8607 = vst.msk [vmem:[%s91 + $0x40] sm:$0xff] %vm8598, %v8590
    %8608 = vst.msk [vmem:[%s91 + $0x48] sm:$0xff] %vm8598, %v8591
    %8609 = vst.msk [vmem:[%s91 + $0x50] sm:$0xff] %vm8598, %v8592
    %8610 = vst.msk [vmem:[%s91 + $0x58] sm:$0xff] %vm8598, %v8593
    %8611 = vst.msk [vmem:[%s91 + $0x60] sm:$0xff] %vm8598, %v8594
    %8612 = vst.msk [vmem:[%s91 + $0x68] sm:$0xff] %vm8598, %v8595
    %8613 = vst.msk [vmem:[%s91 + $0x70] sm:$0xff] %vm8598, %v8596
    %8614 = vst.msk [vmem:[%s91 + $0x78] sm:$0xff] %vm8598, %v8597
    // Predicated region
    $region186: #{attentional_gnn_forward.1} parent=1 // pred_check
      _
    $region187: #{attentional_gnn_forward.1} parent=1 // pred_check_branch
      %8616 = sbr.rel (0) target = $region189
    $region188: #{attentional_gnn_forward.1} parent=1 // pred_region
      _
    $region189: #{attentional_gnn_forward.1} parent=1 // pred_fallthru
      _
    // Predicated region
    $region190: #{attentional_gnn_forward.1} parent=1 // pred_check
      _
    $region191: #{attentional_gnn_forward.1} parent=1 // pred_check_branch
      %8618 = sbr.rel (0) target = $region193
    $region192: #{attentional_gnn_forward.1} parent=1 // pred_region
      _
    $region193: #{attentional_gnn_forward.1} parent=1 // pred_fallthru
      _
    // Predicated region
    $region194: #{attentional_gnn_forward.1} parent=1 // pred_check
      _
    $region195: #{attentional_gnn_forward.1} parent=1 // pred_check_branch
      %8620 = sbr.rel (0) target = $region197
    $region196: #{attentional_gnn_forward.1} parent=1 // pred_region
      _
    $region197: #{attentional_gnn_forward.1} parent=1 // pred_fallthru
      _
    // Predicated region
    $region198: #{attentional_gnn_forward.1} parent=1 // pred_check
      _
    $region199: #{attentional_gnn_forward.1} parent=1 // pred_check_branch
      %8622 = sbr.rel (0) target = $region201
    $region200: #{attentional_gnn_forward.1} parent=1 // pred_region
      _
    $region201: #{attentional_gnn_forward.1} parent=1 // pred_fallthru
      _
    %8623 = vsyncpa [#allocation3], 1
    %8624 = vsyncpa [#allocation5], 1

</llo_original>
